<compile_context>
chip_gen: v7x
topology: tpu7x:2x2x1
jax: 0.10.0
libtpu: 0.0.40
codegen_flags: <defaults>
</compile_context>

<pallas_src>
import jax
import jax.numpy as jnp
from jax.experimental import pallas as pl
from jax.experimental.pallas import tpu as pltpu

PIC = 200
CONV_K = 5
CROP = 4
H1 = (PIC - CROP) // 2          # 98  : pool1 output
H2 = H1 - CONV_K + 1            # 94  : conv output
H3 = H2 // 2                    # 47  : pool2 output
H4 = H3 // 2                    # 23  : pool3 output
FINAL = H4 * H4                 # 529 : flattened feature size


# ----------------------- in-kernel pooling helpers ---------------------------
def _row_sel(out_dim, in_dim, offset):
    """S (out_dim, in_dim), S[i, 2*i+offset] = 1  =>  (S @ v)[i,:] = v[2*i+offset,:]."""
    i = jax.lax.broadcasted_iota(jnp.int32, (out_dim, in_dim), 0)
    r = jax.lax.broadcasted_iota(jnp.int32, (out_dim, in_dim), 1)
    return (r == 2 * i + offset).astype(jnp.float32)


def _col_sel(in_dim, out_dim, offset):
    """S (in_dim, out_dim), S[2*j+offset, j] = 1  =>  (v @ S)[:,j] = v[:, 2*j+offset]."""
    c = jax.lax.broadcasted_iota(jnp.int32, (in_dim, out_dim), 0)
    j = jax.lax.broadcasted_iota(jnp.int32, (in_dim, out_dim), 1)
    return (c == 2 * j + offset).astype(jnp.float32)


def _pool2x2(v, sre, sro, sce, sco):
    """MaxPool2d(2,2) (crop offset folded into the selection matrices).

    Row-pair max via two exact row-selection matmuls, column-pair max via two
    exact column-selection matmuls.  The selection matmuls run on the otherwise
    idle MXU and avoid strided lane/sublane gathers."""
    rows = jnp.maximum(
        jnp.dot(sre, v, preferred_element_type=jnp.float32),
        jnp.dot(sro, v, preferred_element_type=jnp.float32),
    )
    return jnp.maximum(
        jnp.dot(rows, sce, preferred_element_type=jnp.float32),
        jnp.dot(rows, sco, preferred_element_type=jnp.float32),
    )


# ------------------- fused crop/pool/conv/pool/pool kernel -------------------
def _features_kernel(x_ref, w_ref, b_ref, o_ref):
    # x_ref: (Nb, 1, 200, 200) VMEM; w_ref: (5,5) SMEM; b_ref: (1,) SMEM
    # o_ref: (Nb, 23, 23) VMEM
    nb = x_ref.shape[0]

    # Hoisted once per grid step (shared across the Nb images of this block).
    sre1, sro1 = _row_sel(H1, PIC, CROP), _row_sel(H1, PIC, CROP + 1)
    sce1, sco1 = _col_sel(PIC, H1, CROP), _col_sel(PIC, H1, CROP + 1)
    sre2, sro2 = _row_sel(H3, H2, 0), _row_sel(H3, H2, 1)
    sce2, sco2 = _col_sel(H2, H3, 0), _col_sel(H2, H3, 1)
    sre3, sro3 = _row_sel(H4, H3, 0), _row_sel(H4, H3, 1)
    sce3, sco3 = _col_sel(H3, H4, 0), _col_sel(H3, H4, 1)
    wv = [[w_ref[i, j] for j in range(CONV_K)] for i in range(CONV_K)]
    bias = b_ref[0]

    for b in range(nb):                       # static unroll over block images
        v = x_ref[b, 0]                       # (200, 200)

        # crop[4:,4:] + MaxPool2d(2,2) -> (98, 98)  (crop folded into pool-1 sel)
        p1 = _pool2x2(v, sre1, sro1, sce1, sco1)

        # Conv2d(1, 1, 5), VALID -> (94, 94); 5 column-shift slices, grouped taps.
        cols = [p1[:, dj:dj + H2] for dj in range(CONV_K)]   # (98, 94) x5
        acc = None
        for di in range(CONV_K):
            q = wv[di][0] * cols[0]
            for dj in range(1, CONV_K):
                q = q + wv[di][dj] * cols[dj]
            term = q[di:di + H2, :]                          # (94, 94)
            acc = term if acc is None else acc + term
        conv = acc + bias

        # MaxPool2d(2,2) -> (47, 47); MaxPool2d(2,2) -> (23, 23)
        p2 = _pool2x2(conv, sre2, sro2, sce2, sco2)
        p3 = _pool2x2(p2, sre3, sro3, sce3, sco3)

        o_ref[b] = p3.astype(o_ref.dtype)


def net3_features(x, conv_w, conv_b, *, block_n=8):
    """x: (N, 1, 200, 200) -> flattened features (N, 529)."""
    n = x.shape[0]
    nb = min(n, block_n)
    out = pl.pallas_call(
        _features_kernel,
        out_shape=jax.ShapeDtypeStruct((n, H4, H4), x.dtype),
        grid=(pl.cdiv(n, nb),),
        in_specs=[
            pl.BlockSpec((nb, 1, PIC, PIC), lambda i: (i, 0, 0, 0)),
            pl.BlockSpec(memory_space=pltpu.MemorySpace.SMEM),
            pl.BlockSpec(memory_space=pltpu.MemorySpace.SMEM),
        ],
        out_specs=pl.BlockSpec((nb, H4, H4), lambda i: (i, 0, 0)),
        compiler_params=pltpu.CompilerParams(
            dimension_semantics=("parallel",)),
    )(x, conv_w, conv_b)
    # (N,23,23) -> (N,529): trailing-dims flatten, metadata-only reshape in XLA.
    return out.reshape(n, FINAL)


# --------------- head: relu.weight = 0.2*x ; linear ; affine -----------------
def _head_kernel(xr_ref, xc_ref, o_ref):
    # (x @ (0.2*x).T - 0.29) * 2  ==  0.4 * (x @ x.T) - 0.58  (scale folded in epilogue)
    y = jax.lax.dot_general(
        xr_ref[...], xc_ref[...], (((1,), (1,)), ((), ())),
        preferred_element_type=jnp.float32)
    o_ref[...] = (y * jnp.float32(0.4) - jnp.float32(0.58)).astype(o_ref.dtype)


def net3_head(xf, *, tile=128):
    n, f = xf.shape
    tm = n if n <= tile else tile
    return pl.pallas_call(
        _head_kernel,
        out_shape=jax.ShapeDtypeStruct((n, n), xf.dtype),
        grid=(pl.cdiv(n, tm), pl.cdiv(n, tm)),
        in_specs=[pl.BlockSpec((tm, f), lambda i, j: (i, 0)),
                  pl.BlockSpec((tm, f), lambda i, j: (j, 0))],
        out_specs=pl.BlockSpec((tm, tm), lambda i, j: (i, j)),
        compiler_params=pltpu.CompilerParams(
            dimension_semantics=("parallel", "parallel")),
    )(xf, xf)


# ------------------------------ full forward ---------------------------------
def net3_forward(x, conv_w, conv_b):
    feats = net3_features(x, conv_w, conv_b)   # (N, 529); intermediates never hit HBM
    return net3_head(feats)                    # (N, N)


# --------------------------- pure-JAX reference -------------------------------
def net3_reference(x, conv_w, conv_b):
    def pool(v):
        n, h, w = v.shape
        ho, wo = h // 2, w // 2
        v = v[:, : 2 * ho, : 2 * wo].reshape(n, ho, 2, wo, 2)
        return v.max(axis=(2, 4))

    v = x[:, 0, 4:, 4:]
    v = pool(v)
    v = jax.lax.conv_general_dilated(
        v[:, None], conv_w[None, None], (1, 1), "VALID"
    )[:, 0] + conv_b[0]
    v = pool(pool(v))
    vf = v.reshape(v.shape[0], -1)
    y = vf @ (vf * 0.2).T
    return (y - 0.29) * 2.0


if __name__ == "__main__":
    key = jax.random.PRNGKey(0)
    kx, kw, kb = jax.random.split(key, 3)

    N = 2
    x = jax.random.normal(kx, (N, 1, PIC, PIC), dtype=jnp.float32)

    # Deterministic conv params (PyTorch-default-like scale: 1/sqrt(fan_in) = 0.2)
    conv_w = jax.random.uniform(kw, (CONV_K, CONV_K), jnp.float32, -0.2, 0.2)
    conv_b = jax.random.uniform(kb, (1,), jnp.float32, -0.2, 0.2)

    out = jax.jit(net3_forward)(x, conv_w, conv_b)
    out = jax.block_until_ready(out)

    ref = net3_reference(x, conv_w, conv_b)
    assert out.shape == (N, N), out.shape
    assert jnp.allclose(out, ref, rtol=1e-2, atol=1e-2), (out, ref)

    print("KERNEL_OK")
</pallas_src>

<mosaic_0001>
module attributes {stable_mosaic.version = 11 : i64} {
  func.func @_features_kernel(%arg0: i32, %arg1: memref<2x1x200x200xf32, #tpu.memory_space<vmem>>, %arg2: memref<5x5xf32, #tpu.memory_space<smem>>, %arg3: memref<1xf32, #tpu.memory_space<smem>>, %arg4: memref<2x23x23xf32, #tpu.memory_space<vmem>>) attributes {dimension_semantics = [#tpu.dimension_semantics<parallel>], iteration_bounds = array<i64: 1>, scalar_prefetch = 0 : i64, scratch_operands = 0 : i64, tpu.core_type = #tpu.core_type<tc>, window_params = [{transform_indices = @transform_0, window_bounds = array<i64: 2, 1, 200, 200>}, {transform_indices = @transform_1, window_bounds = array<i64: 5, 5>}, {transform_indices = @transform_2, window_bounds = array<i64: 1>}, {transform_indices = @transform_3, window_bounds = array<i64: 2, 23, 23>}]} {
    %0 = tpu.iota {dimensions = array<i32: 0>} : vector<98x200xi32>
    %1 = tpu.iota {dimensions = array<i32: 1>} : vector<98x200xi32>
    %c2_i32 = arith.constant 2 : i32
    %2 = vector.broadcast %c2_i32 : i32 to vector<98x200xi32>
    %3 = arith.muli %2, %0 : vector<98x200xi32>
    %c4_i32 = arith.constant 4 : i32
    %4 = vector.broadcast %c4_i32 : i32 to vector<98x200xi32>
    %5 = arith.addi %3, %4 : vector<98x200xi32>
    %6 = arith.cmpi eq, %1, %5 : vector<98x200xi32>
    %7 = arith.extui %6 : vector<98x200xi1> to vector<98x200xi32>
    %8 = arith.sitofp %7 : vector<98x200xi32> to vector<98x200xf32>
    %9 = tpu.iota {dimensions = array<i32: 0>} : vector<98x200xi32>
    %10 = tpu.iota {dimensions = array<i32: 1>} : vector<98x200xi32>
    %c2_i32_0 = arith.constant 2 : i32
    %11 = vector.broadcast %c2_i32_0 : i32 to vector<98x200xi32>
    %12 = arith.muli %11, %9 : vector<98x200xi32>
    %c5_i32 = arith.constant 5 : i32
    %13 = vector.broadcast %c5_i32 : i32 to vector<98x200xi32>
    %14 = arith.addi %12, %13 : vector<98x200xi32>
    %15 = arith.cmpi eq, %10, %14 : vector<98x200xi32>
    %16 = arith.extui %15 : vector<98x200xi1> to vector<98x200xi32>
    %17 = arith.sitofp %16 : vector<98x200xi32> to vector<98x200xf32>
    %18 = tpu.iota {dimensions = array<i32: 0>} : vector<200x98xi32>
    %19 = tpu.iota {dimensions = array<i32: 1>} : vector<200x98xi32>
    %c2_i32_1 = arith.constant 2 : i32
    %20 = vector.broadcast %c2_i32_1 : i32 to vector<200x98xi32>
    %21 = arith.muli %20, %19 : vector<200x98xi32>
    %c4_i32_2 = arith.constant 4 : i32
    %22 = vector.broadcast %c4_i32_2 : i32 to vector<200x98xi32>
    %23 = arith.addi %21, %22 : vector<200x98xi32>
    %24 = arith.cmpi eq, %18, %23 : vector<200x98xi32>
    %25 = arith.extui %24 : vector<200x98xi1> to vector<200x98xi32>
    %26 = arith.sitofp %25 : vector<200x98xi32> to vector<200x98xf32>
    %27 = tpu.iota {dimensions = array<i32: 0>} : vector<200x98xi32>
    %28 = tpu.iota {dimensions = array<i32: 1>} : vector<200x98xi32>
    %c2_i32_3 = arith.constant 2 : i32
    %29 = vector.broadcast %c2_i32_3 : i32 to vector<200x98xi32>
    %30 = arith.muli %29, %28 : vector<200x98xi32>
    %c5_i32_4 = arith.constant 5 : i32
    %31 = vector.broadcast %c5_i32_4 : i32 to vector<200x98xi32>
    %32 = arith.addi %30, %31 : vector<200x98xi32>
    %33 = arith.cmpi eq, %27, %32 : vector<200x98xi32>
    %34 = arith.extui %33 : vector<200x98xi1> to vector<200x98xi32>
    %35 = arith.sitofp %34 : vector<200x98xi32> to vector<200x98xf32>
    %36 = tpu.iota {dimensions = array<i32: 0>} : vector<47x94xi32>
    %37 = tpu.iota {dimensions = array<i32: 1>} : vector<47x94xi32>
    %c2_i32_5 = arith.constant 2 : i32
    %38 = vector.broadcast %c2_i32_5 : i32 to vector<47x94xi32>
    %39 = arith.muli %38, %36 : vector<47x94xi32>
    %c0_i32 = arith.constant 0 : i32
    %40 = vector.broadcast %c0_i32 : i32 to vector<47x94xi32>
    %41 = arith.addi %39, %40 : vector<47x94xi32>
    %42 = arith.cmpi eq, %37, %41 : vector<47x94xi32>
    %43 = arith.extui %42 : vector<47x94xi1> to vector<47x94xi32>
    %44 = arith.sitofp %43 : vector<47x94xi32> to vector<47x94xf32>
    %45 = tpu.iota {dimensions = array<i32: 0>} : vector<47x94xi32>
    %46 = tpu.iota {dimensions = array<i32: 1>} : vector<47x94xi32>
    %c2_i32_6 = arith.constant 2 : i32
    %47 = vector.broadcast %c2_i32_6 : i32 to vector<47x94xi32>
    %48 = arith.muli %47, %45 : vector<47x94xi32>
    %c1_i32 = arith.constant 1 : i32
    %49 = vector.broadcast %c1_i32 : i32 to vector<47x94xi32>
    %50 = arith.addi %48, %49 : vector<47x94xi32>
    %51 = arith.cmpi eq, %46, %50 : vector<47x94xi32>
    %52 = arith.extui %51 : vector<47x94xi1> to vector<47x94xi32>
    %53 = arith.sitofp %52 : vector<47x94xi32> to vector<47x94xf32>
    %54 = tpu.iota {dimensions = array<i32: 0>} : vector<94x47xi32>
    %55 = tpu.iota {dimensions = array<i32: 1>} : vector<94x47xi32>
    %c2_i32_7 = arith.constant 2 : i32
    %56 = vector.broadcast %c2_i32_7 : i32 to vector<94x47xi32>
    %57 = arith.muli %56, %55 : vector<94x47xi32>
    %c0_i32_8 = arith.constant 0 : i32
    %58 = vector.broadcast %c0_i32_8 : i32 to vector<94x47xi32>
    %59 = arith.addi %57, %58 : vector<94x47xi32>
    %60 = arith.cmpi eq, %54, %59 : vector<94x47xi32>
    %61 = arith.extui %60 : vector<94x47xi1> to vector<94x47xi32>
    %62 = arith.sitofp %61 : vector<94x47xi32> to vector<94x47xf32>
    %63 = tpu.iota {dimensions = array<i32: 0>} : vector<94x47xi32>
    %64 = tpu.iota {dimensions = array<i32: 1>} : vector<94x47xi32>
    %c2_i32_9 = arith.constant 2 : i32
    %65 = vector.broadcast %c2_i32_9 : i32 to vector<94x47xi32>
    %66 = arith.muli %65, %64 : vector<94x47xi32>
    %c1_i32_10 = arith.constant 1 : i32
    %67 = vector.broadcast %c1_i32_10 : i32 to vector<94x47xi32>
    %68 = arith.addi %66, %67 : vector<94x47xi32>
    %69 = arith.cmpi eq, %63, %68 : vector<94x47xi32>
    %70 = arith.extui %69 : vector<94x47xi1> to vector<94x47xi32>
    %71 = arith.sitofp %70 : vector<94x47xi32> to vector<94x47xf32>
    %72 = tpu.iota {dimensions = array<i32: 0>} : vector<23x47xi32>
    %73 = tpu.iota {dimensions = array<i32: 1>} : vector<23x47xi32>
    %c2_i32_11 = arith.constant 2 : i32
    %74 = vector.broadcast %c2_i32_11 : i32 to vector<23x47xi32>
    %75 = arith.muli %74, %72 : vector<23x47xi32>
    %c0_i32_12 = arith.constant 0 : i32
    %76 = vector.broadcast %c0_i32_12 : i32 to vector<23x47xi32>
    %77 = arith.addi %75, %76 : vector<23x47xi32>
    %78 = arith.cmpi eq, %73, %77 : vector<23x47xi32>
    %79 = arith.extui %78 : vector<23x47xi1> to vector<23x47xi32>
    %80 = arith.sitofp %79 : vector<23x47xi32> to vector<23x47xf32>
    %81 = tpu.iota {dimensions = array<i32: 0>} : vector<23x47xi32>
    %82 = tpu.iota {dimensions = array<i32: 1>} : vector<23x47xi32>
    %c2_i32_13 = arith.constant 2 : i32
    %83 = vector.broadcast %c2_i32_13 : i32 to vector<23x47xi32>
    %84 = arith.muli %83, %81 : vector<23x47xi32>
    %c1_i32_14 = arith.constant 1 : i32
    %85 = vector.broadcast %c1_i32_14 : i32 to vector<23x47xi32>
    %86 = arith.addi %84, %85 : vector<23x47xi32>
    %87 = arith.cmpi eq, %82, %86 : vector<23x47xi32>
    %88 = arith.extui %87 : vector<23x47xi1> to vector<23x47xi32>
    %89 = arith.sitofp %88 : vector<23x47xi32> to vector<23x47xf32>
    %90 = tpu.iota {dimensions = array<i32: 0>} : vector<47x23xi32>
    %91 = tpu.iota {dimensions = array<i32: 1>} : vector<47x23xi32>
    %c2_i32_15 = arith.constant 2 : i32
    %92 = vector.broadcast %c2_i32_15 : i32 to vector<47x23xi32>
    %93 = arith.muli %92, %91 : vector<47x23xi32>
    %c0_i32_16 = arith.constant 0 : i32
    %94 = vector.broadcast %c0_i32_16 : i32 to vector<47x23xi32>
    %95 = arith.addi %93, %94 : vector<47x23xi32>
    %96 = arith.cmpi eq, %90, %95 : vector<47x23xi32>
    %97 = arith.extui %96 : vector<47x23xi1> to vector<47x23xi32>
    %98 = arith.sitofp %97 : vector<47x23xi32> to vector<47x23xf32>
    %99 = tpu.iota {dimensions = array<i32: 0>} : vector<47x23xi32>
    %100 = tpu.iota {dimensions = array<i32: 1>} : vector<47x23xi32>
    %c2_i32_17 = arith.constant 2 : i32
    %101 = vector.broadcast %c2_i32_17 : i32 to vector<47x23xi32>
    %102 = arith.muli %101, %100 : vector<47x23xi32>
    %c1_i32_18 = arith.constant 1 : i32
    %103 = vector.broadcast %c1_i32_18 : i32 to vector<47x23xi32>
    %104 = arith.addi %102, %103 : vector<47x23xi32>
    %105 = arith.cmpi eq, %99, %104 : vector<47x23xi32>
    %106 = arith.extui %105 : vector<47x23xi1> to vector<47x23xi32>
    %107 = arith.sitofp %106 : vector<47x23xi32> to vector<47x23xf32>
    %c0 = arith.constant 0 : index
    %c0_19 = arith.constant 0 : index
    %108 = memref.load %arg2[%c0, %c0_19] : memref<5x5xf32, #tpu.memory_space<smem>>
    %c0_20 = arith.constant 0 : index
    %c1 = arith.constant 1 : index
    %109 = memref.load %arg2[%c0_20, %c1] : memref<5x5xf32, #tpu.memory_space<smem>>
    %c0_21 = arith.constant 0 : index
    %c2 = arith.constant 2 : index
    %110 = memref.load %arg2[%c0_21, %c2] : memref<5x5xf32, #tpu.memory_space<smem>>
    %c0_22 = arith.constant 0 : index
    %c3 = arith.constant 3 : index
    %111 = memref.load %arg2[%c0_22, %c3] : memref<5x5xf32, #tpu.memory_space<smem>>
    %c0_23 = arith.constant 0 : index
    %c4 = arith.constant 4 : index
    %112 = memref.load %arg2[%c0_23, %c4] : memref<5x5xf32, #tpu.memory_space<smem>>
    %c1_24 = arith.constant 1 : index
    %c0_25 = arith.constant 0 : index
    %113 = memref.load %arg2[%c1_24, %c0_25] : memref<5x5xf32, #tpu.memory_space<smem>>
    %c1_26 = arith.constant 1 : index
    %c1_27 = arith.constant 1 : index
    %114 = memref.load %arg2[%c1_26, %c1_27] : memref<5x5xf32, #tpu.memory_space<smem>>
    %c1_28 = arith.constant 1 : index
    %c2_29 = arith.constant 2 : index
    %115 = memref.load %arg2[%c1_28, %c2_29] : memref<5x5xf32, #tpu.memory_space<smem>>
    %c1_30 = arith.constant 1 : index
    %c3_31 = arith.constant 3 : index
    %116 = memref.load %arg2[%c1_30, %c3_31] : memref<5x5xf32, #tpu.memory_space<smem>>
    %c1_32 = arith.constant 1 : index
    %c4_33 = arith.constant 4 : index
    %117 = memref.load %arg2[%c1_32, %c4_33] : memref<5x5xf32, #tpu.memory_space<smem>>
    %c2_34 = arith.constant 2 : index
    %c0_35 = arith.constant 0 : index
    %118 = memref.load %arg2[%c2_34, %c0_35] : memref<5x5xf32, #tpu.memory_space<smem>>
    %c2_36 = arith.constant 2 : index
    %c1_37 = arith.constant 1 : index
    %119 = memref.load %arg2[%c2_36, %c1_37] : memref<5x5xf32, #tpu.memory_space<smem>>
    %c2_38 = arith.constant 2 : index
    %c2_39 = arith.constant 2 : index
    %120 = memref.load %arg2[%c2_38, %c2_39] : memref<5x5xf32, #tpu.memory_space<smem>>
    %c2_40 = arith.constant 2 : index
    %c3_41 = arith.constant 3 : index
    %121 = memref.load %arg2[%c2_40, %c3_41] : memref<5x5xf32, #tpu.memory_space<smem>>
    %c2_42 = arith.constant 2 : index
    %c4_43 = arith.constant 4 : index
    %122 = memref.load %arg2[%c2_42, %c4_43] : memref<5x5xf32, #tpu.memory_space<smem>>
    %c3_44 = arith.constant 3 : index
    %c0_45 = arith.constant 0 : index
    %123 = memref.load %arg2[%c3_44, %c0_45] : memref<5x5xf32, #tpu.memory_space<smem>>
    %c3_46 = arith.constant 3 : index
    %c1_47 = arith.constant 1 : index
    %124 = memref.load %arg2[%c3_46, %c1_47] : memref<5x5xf32, #tpu.memory_space<smem>>
    %c3_48 = arith.constant 3 : index
    %c2_49 = arith.constant 2 : index
    %125 = memref.load %arg2[%c3_48, %c2_49] : memref<5x5xf32, #tpu.memory_space<smem>>
    %c3_50 = arith.constant 3 : index
    %c3_51 = arith.constant 3 : index
    %126 = memref.load %arg2[%c3_50, %c3_51] : memref<5x5xf32, #tpu.memory_space<smem>>
    %c3_52 = arith.constant 3 : index
    %c4_53 = arith.constant 4 : index
    %127 = memref.load %arg2[%c3_52, %c4_53] : memref<5x5xf32, #tpu.memory_space<smem>>
    %c4_54 = arith.constant 4 : index
    %c0_55 = arith.constant 0 : index
    %128 = memref.load %arg2[%c4_54, %c0_55] : memref<5x5xf32, #tpu.memory_space<smem>>
    %c4_56 = arith.constant 4 : index
    %c1_57 = arith.constant 1 : index
    %129 = memref.load %arg2[%c4_56, %c1_57] : memref<5x5xf32, #tpu.memory_space<smem>>
    %c4_58 = arith.constant 4 : index
    %c2_59 = arith.constant 2 : index
    %130 = memref.load %arg2[%c4_58, %c2_59] : memref<5x5xf32, #tpu.memory_space<smem>>
    %c4_60 = arith.constant 4 : index
    %c3_61 = arith.constant 3 : index
    %131 = memref.load %arg2[%c4_60, %c3_61] : memref<5x5xf32, #tpu.memory_space<smem>>
    %c4_62 = arith.constant 4 : index
    %c4_63 = arith.constant 4 : index
    %132 = memref.load %arg2[%c4_62, %c4_63] : memref<5x5xf32, #tpu.memory_space<smem>>
    %c0_64 = arith.constant 0 : index
    %133 = memref.load %arg3[%c0_64] : memref<1xf32, #tpu.memory_space<smem>>
    %c0_65 = arith.constant 0 : index
    %c0_66 = arith.constant 0 : index
    %c0_67 = arith.constant 0 : index
    %c0_68 = arith.constant 0 : index
    %134 = vector.load %arg1[%c0_65, %c0_66, %c0_67, %c0_68] : memref<2x1x200x200xf32, #tpu.memory_space<vmem>>, vector<1x1x200x200xf32>
    %135 = vector.shape_cast %134 : vector<1x1x200x200xf32> to vector<200x200xf32>
    %cst = arith.constant dense<0.000000e+00> : vector<98x200xf32>
    %136 = tpu.matmul %8, %135, %cst {dimension_numbers = #tpu.dot_dimension_numbers<[1], [0], [0], [1], [0, 0, 1, 1], [], []>} : vector<98x200xf32>, vector<200x200xf32>, vector<98x200xf32> -> vector<98x200xf32>
    %cst_69 = arith.constant dense<0.000000e+00> : vector<98x200xf32>
    %137 = tpu.matmul %17, %135, %cst_69 {dimension_numbers = #tpu.dot_dimension_numbers<[1], [0], [0], [1], [0, 0, 1, 1], [], []>} : vector<98x200xf32>, vector<200x200xf32>, vector<98x200xf32> -> vector<98x200xf32>
    %138 = arith.maximumf %136, %137 : vector<98x200xf32>
    %cst_70 = arith.constant dense<0.000000e+00> : vector<98x98xf32>
    %139 = tpu.matmul %138, %26, %cst_70 {dimension_numbers = #tpu.dot_dimension_numbers<[1], [0], [0], [1], [0, 0, 1, 1], [], []>} : vector<98x200xf32>, vector<200x98xf32>, vector<98x98xf32> -> vector<98x98xf32>
    %cst_71 = arith.constant dense<0.000000e+00> : vector<98x98xf32>
    %140 = tpu.matmul %138, %35, %cst_71 {dimension_numbers = #tpu.dot_dimension_numbers<[1], [0], [0], [1], [0, 0, 1, 1], [], []>} : vector<98x200xf32>, vector<200x98xf32>, vector<98x98xf32> -> vector<98x98xf32>
    %141 = arith.maximumf %139, %140 : vector<98x98xf32>
    %142 = vector.extract_strided_slice %141 {offsets = [0, 0], sizes = [98, 94], strides = [1, 1]} : vector<98x98xf32> to vector<98x94xf32>
    %143 = vector.extract_strided_slice %141 {offsets = [0, 1], sizes = [98, 94], strides = [1, 1]} : vector<98x98xf32> to vector<98x94xf32>
    %144 = vector.extract_strided_slice %141 {offsets = [0, 2], sizes = [98, 94], strides = [1, 1]} : vector<98x98xf32> to vector<98x94xf32>
    %145 = vector.extract_strided_slice %141 {offsets = [0, 3], sizes = [98, 94], strides = [1, 1]} : vector<98x98xf32> to vector<98x94xf32>
    %146 = vector.extract_strided_slice %141 {offsets = [0, 4], sizes = [98, 94], strides = [1, 1]} : vector<98x98xf32> to vector<98x94xf32>
    %147 = vector.broadcast %108 : f32 to vector<98x94xf32>
    %148 = arith.mulf %147, %142 : vector<98x94xf32>
    %149 = vector.broadcast %109 : f32 to vector<98x94xf32>
    %150 = arith.mulf %149, %143 : vector<98x94xf32>
    %151 = arith.addf %148, %150 : vector<98x94xf32>
    %152 = vector.broadcast %110 : f32 to vector<98x94xf32>
    %153 = arith.mulf %152, %144 : vector<98x94xf32>
    %154 = arith.addf %151, %153 : vector<98x94xf32>
    %155 = vector.broadcast %111 : f32 to vector<98x94xf32>
    %156 = arith.mulf %155, %145 : vector<98x94xf32>
    %157 = arith.addf %154, %156 : vector<98x94xf32>
    %158 = vector.broadcast %112 : f32 to vector<98x94xf32>
    %159 = arith.mulf %158, %146 : vector<98x94xf32>
    %160 = arith.addf %157, %159 : vector<98x94xf32>
    %161 = vector.extract_strided_slice %160 {offsets = [0, 0], sizes = [94, 94], strides = [1, 1]} : vector<98x94xf32> to vector<94x94xf32>
    %162 = vector.broadcast %113 : f32 to vector<98x94xf32>
    %163 = arith.mulf %162, %142 : vector<98x94xf32>
    %164 = vector.broadcast %114 : f32 to vector<98x94xf32>
    %165 = arith.mulf %164, %143 : vector<98x94xf32>
    %166 = arith.addf %163, %165 : vector<98x94xf32>
    %167 = vector.broadcast %115 : f32 to vector<98x94xf32>
    %168 = arith.mulf %167, %144 : vector<98x94xf32>
    %169 = arith.addf %166, %168 : vector<98x94xf32>
    %170 = vector.broadcast %116 : f32 to vector<98x94xf32>
    %171 = arith.mulf %170, %145 : vector<98x94xf32>
    %172 = arith.addf %169, %171 : vector<98x94xf32>
    %173 = vector.broadcast %117 : f32 to vector<98x94xf32>
    %174 = arith.mulf %173, %146 : vector<98x94xf32>
    %175 = arith.addf %172, %174 : vector<98x94xf32>
    %176 = vector.extract_strided_slice %175 {offsets = [1, 0], sizes = [94, 94], strides = [1, 1]} : vector<98x94xf32> to vector<94x94xf32>
    %177 = arith.addf %161, %176 : vector<94x94xf32>
    %178 = vector.broadcast %118 : f32 to vector<98x94xf32>
    %179 = arith.mulf %178, %142 : vector<98x94xf32>
    %180 = vector.broadcast %119 : f32 to vector<98x94xf32>
    %181 = arith.mulf %180, %143 : vector<98x94xf32>
    %182 = arith.addf %179, %181 : vector<98x94xf32>
    %183 = vector.broadcast %120 : f32 to vector<98x94xf32>
    %184 = arith.mulf %183, %144 : vector<98x94xf32>
    %185 = arith.addf %182, %184 : vector<98x94xf32>
    %186 = vector.broadcast %121 : f32 to vector<98x94xf32>
    %187 = arith.mulf %186, %145 : vector<98x94xf32>
    %188 = arith.addf %185, %187 : vector<98x94xf32>
    %189 = vector.broadcast %122 : f32 to vector<98x94xf32>
    %190 = arith.mulf %189, %146 : vector<98x94xf32>
    %191 = arith.addf %188, %190 : vector<98x94xf32>
    %192 = vector.extract_strided_slice %191 {offsets = [2, 0], sizes = [94, 94], strides = [1, 1]} : vector<98x94xf32> to vector<94x94xf32>
    %193 = arith.addf %177, %192 : vector<94x94xf32>
    %194 = vector.broadcast %123 : f32 to vector<98x94xf32>
    %195 = arith.mulf %194, %142 : vector<98x94xf32>
    %196 = vector.broadcast %124 : f32 to vector<98x94xf32>
    %197 = arith.mulf %196, %143 : vector<98x94xf32>
    %198 = arith.addf %195, %197 : vector<98x94xf32>
    %199 = vector.broadcast %125 : f32 to vector<98x94xf32>
    %200 = arith.mulf %199, %144 : vector<98x94xf32>
    %201 = arith.addf %198, %200 : vector<98x94xf32>
    %202 = vector.broadcast %126 : f32 to vector<98x94xf32>
    %203 = arith.mulf %202, %145 : vector<98x94xf32>
    %204 = arith.addf %201, %203 : vector<98x94xf32>
    %205 = vector.broadcast %127 : f32 to vector<98x94xf32>
    %206 = arith.mulf %205, %146 : vector<98x94xf32>
    %207 = arith.addf %204, %206 : vector<98x94xf32>
    %208 = vector.extract_strided_slice %207 {offsets = [3, 0], sizes = [94, 94], strides = [1, 1]} : vector<98x94xf32> to vector<94x94xf32>
    %209 = arith.addf %193, %208 : vector<94x94xf32>
    %210 = vector.broadcast %128 : f32 to vector<98x94xf32>
    %211 = arith.mulf %210, %142 : vector<98x94xf32>
    %212 = vector.broadcast %129 : f32 to vector<98x94xf32>
    %213 = arith.mulf %212, %143 : vector<98x94xf32>
    %214 = arith.addf %211, %213 : vector<98x94xf32>
    %215 = vector.broadcast %130 : f32 to vector<98x94xf32>
    %216 = arith.mulf %215, %144 : vector<98x94xf32>
    %217 = arith.addf %214, %216 : vector<98x94xf32>
    %218 = vector.broadcast %131 : f32 to vector<98x94xf32>
    %219 = arith.mulf %218, %145 : vector<98x94xf32>
    %220 = arith.addf %217, %219 : vector<98x94xf32>
    %221 = vector.broadcast %132 : f32 to vector<98x94xf32>
    %222 = arith.mulf %221, %146 : vector<98x94xf32>
    %223 = arith.addf %220, %222 : vector<98x94xf32>
    %224 = vector.extract_strided_slice %223 {offsets = [4, 0], sizes = [94, 94], strides = [1, 1]} : vector<98x94xf32> to vector<94x94xf32>
    %225 = arith.addf %209, %224 : vector<94x94xf32>
    %226 = vector.broadcast %133 : f32 to vector<94x94xf32>
    %227 = arith.addf %225, %226 : vector<94x94xf32>
    %cst_72 = arith.constant dense<0.000000e+00> : vector<47x94xf32>
    %228 = tpu.matmul %44, %227, %cst_72 {dimension_numbers = #tpu.dot_dimension_numbers<[1], [0], [0], [1], [0, 0, 1, 1], [], []>} : vector<47x94xf32>, vector<94x94xf32>, vector<47x94xf32> -> vector<47x94xf32>
    %cst_73 = arith.constant dense<0.000000e+00> : vector<47x94xf32>
    %229 = tpu.matmul %53, %227, %cst_73 {dimension_numbers = #tpu.dot_dimension_numbers<[1], [0], [0], [1], [0, 0, 1, 1], [], []>} : vector<47x94xf32>, vector<94x94xf32>, vector<47x94xf32> -> vector<47x94xf32>
    %230 = arith.maximumf %228, %229 : vector<47x94xf32>
    %cst_74 = arith.constant dense<0.000000e+00> : vector<47x47xf32>
    %231 = tpu.matmul %230, %62, %cst_74 {dimension_numbers = #tpu.dot_dimension_numbers<[1], [0], [0], [1], [0, 0, 1, 1], [], []>} : vector<47x94xf32>, vector<94x47xf32>, vector<47x47xf32> -> vector<47x47xf32>
    %cst_75 = arith.constant dense<0.000000e+00> : vector<47x47xf32>
    %232 = tpu.matmul %230, %71, %cst_75 {dimension_numbers = #tpu.dot_dimension_numbers<[1], [0], [0], [1], [0, 0, 1, 1], [], []>} : vector<47x94xf32>, vector<94x47xf32>, vector<47x47xf32> -> vector<47x47xf32>
    %233 = arith.maximumf %231, %232 : vector<47x47xf32>
    %cst_76 = arith.constant dense<0.000000e+00> : vector<23x47xf32>
    %234 = tpu.matmul %80, %233, %cst_76 {dimension_numbers = #tpu.dot_dimension_numbers<[1], [0], [0], [1], [0, 0, 1, 1], [], []>} : vector<23x47xf32>, vector<47x47xf32>, vector<23x47xf32> -> vector<23x47xf32>
    %cst_77 = arith.constant dense<0.000000e+00> : vector<23x47xf32>
    %235 = tpu.matmul %89, %233, %cst_77 {dimension_numbers = #tpu.dot_dimension_numbers<[1], [0], [0], [1], [0, 0, 1, 1], [], []>} : vector<23x47xf32>, vector<47x47xf32>, vector<23x47xf32> -> vector<23x47xf32>
    %236 = arith.maximumf %234, %235 : vector<23x47xf32>
    %cst_78 = arith.constant dense<0.000000e+00> : vector<23x23xf32>
    %237 = tpu.matmul %236, %98, %cst_78 {dimension_numbers = #tpu.dot_dimension_numbers<[1], [0], [0], [1], [0, 0, 1, 1], [], []>} : vector<23x47xf32>, vector<47x23xf32>, vector<23x23xf32> -> vector<23x23xf32>
    %cst_79 = arith.constant dense<0.000000e+00> : vector<23x23xf32>
    %238 = tpu.matmul %236, %107, %cst_79 {dimension_numbers = #tpu.dot_dimension_numbers<[1], [0], [0], [1], [0, 0, 1, 1], [], []>} : vector<23x47xf32>, vector<47x23xf32>, vector<23x23xf32> -> vector<23x23xf32>
    %239 = arith.maximumf %237, %238 : vector<23x23xf32>
    %c0_80 = arith.constant 0 : index
    %c0_81 = arith.constant 0 : index
    %c0_82 = arith.constant 0 : index
    %240 = vector.load %arg4[%c0_80, %c0_81, %c0_82] : memref<2x23x23xf32, #tpu.memory_space<vmem>>, vector<1x23x23xf32>
    %241 = vector.shape_cast %240 : vector<1x23x23xf32> to vector<23x23xf32>
    %242 = vector.shape_cast %239 : vector<23x23xf32> to vector<1x23x23xf32>
    tpu.vector_store %arg4[%c0_80, %c0_81, %c0_82], %242 {strides = array<i32>} : memref<2x23x23xf32, #tpu.memory_space<vmem>>, vector<1x23x23xf32>,
    %c1_83 = arith.constant 1 : index
    %c0_84 = arith.constant 0 : index
    %c0_85 = arith.constant 0 : index
    %c0_86 = arith.constant 0 : index
    %243 = vector.load %arg1[%c1_83, %c0_84, %c0_85, %c0_86] : memref<2x1x200x200xf32, #tpu.memory_space<vmem>>, vector<1x1x200x200xf32>
    %244 = vector.shape_cast %243 : vector<1x1x200x200xf32> to vector<200x200xf32>
    %cst_87 = arith.constant dense<0.000000e+00> : vector<98x200xf32>
    %245 = tpu.matmul %8, %244, %cst_87 {dimension_numbers = #tpu.dot_dimension_numbers<[1], [0], [0], [1], [0, 0, 1, 1], [], []>} : vector<98x200xf32>, vector<200x200xf32>, vector<98x200xf32> -> vector<98x200xf32>
    %cst_88 = arith.constant dense<0.000000e+00> : vector<98x200xf32>
    %246 = tpu.matmul %17, %244, %cst_88 {dimension_numbers = #tpu.dot_dimension_numbers<[1], [0], [0], [1], [0, 0, 1, 1], [], []>} : vector<98x200xf32>, vector<200x200xf32>, vector<98x200xf32> -> vector<98x200xf32>
    %247 = arith.maximumf %245, %246 : vector<98x200xf32>
    %cst_89 = arith.constant dense<0.000000e+00> : vector<98x98xf32>
    %248 = tpu.matmul %247, %26, %cst_89 {dimension_numbers = #tpu.dot_dimension_numbers<[1], [0], [0], [1], [0, 0, 1, 1], [], []>} : vector<98x200xf32>, vector<200x98xf32>, vector<98x98xf32> -> vector<98x98xf32>
    %cst_90 = arith.constant dense<0.000000e+00> : vector<98x98xf32>
    %249 = tpu.matmul %247, %35, %cst_90 {dimension_numbers = #tpu.dot_dimension_numbers<[1], [0], [0], [1], [0, 0, 1, 1], [], []>} : vector<98x200xf32>, vector<200x98xf32>, vector<98x98xf32> -> vector<98x98xf32>
    %250 = arith.maximumf %248, %249 : vector<98x98xf32>
    %251 = vector.extract_strided_slice %250 {offsets = [0, 0], sizes = [98, 94], strides = [1, 1]} : vector<98x98xf32> to vector<98x94xf32>
    %252 = vector.extract_strided_slice %250 {offsets = [0, 1], sizes = [98, 94], strides = [1, 1]} : vector<98x98xf32> to vector<98x94xf32>
    %253 = vector.extract_strided_slice %250 {offsets = [0, 2], sizes = [98, 94], strides = [1, 1]} : vector<98x98xf32> to vector<98x94xf32>
    %254 = vector.extract_strided_slice %250 {offsets = [0, 3], sizes = [98, 94], strides = [1, 1]} : vector<98x98xf32> to vector<98x94xf32>
    %255 = vector.extract_strided_slice %250 {offsets = [0, 4], sizes = [98, 94], strides = [1, 1]} : vector<98x98xf32> to vector<98x94xf32>
    %256 = vector.broadcast %108 : f32 to vector<98x94xf32>
    %257 = arith.mulf %256, %251 : vector<98x94xf32>
    %258 = vector.broadcast %109 : f32 to vector<98x94xf32>
    %259 = arith.mulf %258, %252 : vector<98x94xf32>
    %260 = arith.addf %257, %259 : vector<98x94xf32>
    %261 = vector.broadcast %110 : f32 to vector<98x94xf32>
    %262 = arith.mulf %261, %253 : vector<98x94xf32>
    %263 = arith.addf %260, %262 : vector<98x94xf32>
    %264 = vector.broadcast %111 : f32 to vector<98x94xf32>
    %265 = arith.mulf %264, %254 : vector<98x94xf32>
    %266 = arith.addf %263, %265 : vector<98x94xf32>
    %267 = vector.broadcast %112 : f32 to vector<98x94xf32>
    %268 = arith.mulf %267, %255 : vector<98x94xf32>
    %269 = arith.addf %266, %268 : vector<98x94xf32>
    %270 = vector.extract_strided_slice %269 {offsets = [0, 0], sizes = [94, 94], strides = [1, 1]} : vector<98x94xf32> to vector<94x94xf32>
    %271 = vector.broadcast %113 : f32 to vector<98x94xf32>
    %272 = arith.mulf %271, %251 : vector<98x94xf32>
    %273 = vector.broadcast %114 : f32 to vector<98x94xf32>
    %274 = arith.mulf %273, %252 : vector<98x94xf32>
    %275 = arith.addf %272, %274 : vector<98x94xf32>
    %276 = vector.broadcast %115 : f32 to vector<98x94xf32>
    %277 = arith.mulf %276, %253 : vector<98x94xf32>
    %278 = arith.addf %275, %277 : vector<98x94xf32>
    %279 = vector.broadcast %116 : f32 to vector<98x94xf32>
    %280 = arith.mulf %279, %254 : vector<98x94xf32>
    %281 = arith.addf %278, %280 : vector<98x94xf32>
    %282 = vector.broadcast %117 : f32 to vector<98x94xf32>
    %283 = arith.mulf %282, %255 : vector<98x94xf32>
    %284 = arith.addf %281, %283 : vector<98x94xf32>
    %285 = vector.extract_strided_slice %284 {offsets = [1, 0], sizes = [94, 94], strides = [1, 1]} : vector<98x94xf32> to vector<94x94xf32>
    %286 = arith.addf %270, %285 : vector<94x94xf32>
    %287 = vector.broadcast %118 : f32 to vector<98x94xf32>
    %288 = arith.mulf %287, %251 : vector<98x94xf32>
    %289 = vector.broadcast %119 : f32 to vector<98x94xf32>
    %290 = arith.mulf %289, %252 : vector<98x94xf32>
    %291 = arith.addf %288, %290 : vector<98x94xf32>
    %292 = vector.broadcast %120 : f32 to vector<98x94xf32>
    %293 = arith.mulf %292, %253 : vector<98x94xf32>
    %294 = arith.addf %291, %293 : vector<98x94xf32>
    %295 = vector.broadcast %121 : f32 to vector<98x94xf32>
    %296 = arith.mulf %295, %254 : vector<98x94xf32>
    %297 = arith.addf %294, %296 : vector<98x94xf32>
    %298 = vector.broadcast %122 : f32 to vector<98x94xf32>
    %299 = arith.mulf %298, %255 : vector<98x94xf32>
    %300 = arith.addf %297, %299 : vector<98x94xf32>
    %301 = vector.extract_strided_slice %300 {offsets = [2, 0], sizes = [94, 94], strides = [1, 1]} : vector<98x94xf32> to vector<94x94xf32>
    %302 = arith.addf %286, %301 : vector<94x94xf32>
    %303 = vector.broadcast %123 : f32 to vector<98x94xf32>
    %304 = arith.mulf %303, %251 : vector<98x94xf32>
    %305 = vector.broadcast %124 : f32 to vector<98x94xf32>
    %306 = arith.mulf %305, %252 : vector<98x94xf32>
    %307 = arith.addf %304, %306 : vector<98x94xf32>
    %308 = vector.broadcast %125 : f32 to vector<98x94xf32>
    %309 = arith.mulf %308, %253 : vector<98x94xf32>
    %310 = arith.addf %307, %309 : vector<98x94xf32>
    %311 = vector.broadcast %126 : f32 to vector<98x94xf32>
    %312 = arith.mulf %311, %254 : vector<98x94xf32>
    %313 = arith.addf %310, %312 : vector<98x94xf32>
    %314 = vector.broadcast %127 : f32 to vector<98x94xf32>
    %315 = arith.mulf %314, %255 : vector<98x94xf32>
    %316 = arith.addf %313, %315 : vector<98x94xf32>
    %317 = vector.extract_strided_slice %316 {offsets = [3, 0], sizes = [94, 94], strides = [1, 1]} : vector<98x94xf32> to vector<94x94xf32>
    %318 = arith.addf %302, %317 : vector<94x94xf32>
    %319 = vector.broadcast %128 : f32 to vector<98x94xf32>
    %320 = arith.mulf %319, %251 : vector<98x94xf32>
    %321 = vector.broadcast %129 : f32 to vector<98x94xf32>
    %322 = arith.mulf %321, %252 : vector<98x94xf32>
    %323 = arith.addf %320, %322 : vector<98x94xf32>
    %324 = vector.broadcast %130 : f32 to vector<98x94xf32>
    %325 = arith.mulf %324, %253 : vector<98x94xf32>
    %326 = arith.addf %323, %325 : vector<98x94xf32>
    %327 = vector.broadcast %131 : f32 to vector<98x94xf32>
    %328 = arith.mulf %327, %254 : vector<98x94xf32>
    %329 = arith.addf %326, %328 : vector<98x94xf32>
    %330 = vector.broadcast %132 : f32 to vector<98x94xf32>
    %331 = arith.mulf %330, %255 : vector<98x94xf32>
    %332 = arith.addf %329, %331 : vector<98x94xf32>
    %333 = vector.extract_strided_slice %332 {offsets = [4, 0], sizes = [94, 94], strides = [1, 1]} : vector<98x94xf32> to vector<94x94xf32>
    %334 = arith.addf %318, %333 : vector<94x94xf32>
    %335 = vector.broadcast %133 : f32 to vector<94x94xf32>
    %336 = arith.addf %334, %335 : vector<94x94xf32>
    %cst_91 = arith.constant dense<0.000000e+00> : vector<47x94xf32>
    %337 = tpu.matmul %44, %336, %cst_91 {dimension_numbers = #tpu.dot_dimension_numbers<[1], [0], [0], [1], [0, 0, 1, 1], [], []>} : vector<47x94xf32>, vector<94x94xf32>, vector<47x94xf32> -> vector<47x94xf32>
    %cst_92 = arith.constant dense<0.000000e+00> : vector<47x94xf32>
    %338 = tpu.matmul %53, %336, %cst_92 {dimension_numbers = #tpu.dot_dimension_numbers<[1], [0], [0], [1], [0, 0, 1, 1], [], []>} : vector<47x94xf32>, vector<94x94xf32>, vector<47x94xf32> -> vector<47x94xf32>
    %339 = arith.maximumf %337, %338 : vector<47x94xf32>
    %cst_93 = arith.constant dense<0.000000e+00> : vector<47x47xf32>
    %340 = tpu.matmul %339, %62, %cst_93 {dimension_numbers = #tpu.dot_dimension_numbers<[1], [0], [0], [1], [0, 0, 1, 1], [], []>} : vector<47x94xf32>, vector<94x47xf32>, vector<47x47xf32> -> vector<47x47xf32>
    %cst_94 = arith.constant dense<0.000000e+00> : vector<47x47xf32>
    %341 = tpu.matmul %339, %71, %cst_94 {dimension_numbers = #tpu.dot_dimension_numbers<[1], [0], [0], [1], [0, 0, 1, 1], [], []>} : vector<47x94xf32>, vector<94x47xf32>, vector<47x47xf32> -> vector<47x47xf32>
    %342 = arith.maximumf %340, %341 : vector<47x47xf32>
    %cst_95 = arith.constant dense<0.000000e+00> : vector<23x47xf32>
    %343 = tpu.matmul %80, %342, %cst_95 {dimension_numbers = #tpu.dot_dimension_numbers<[1], [0], [0], [1], [0, 0, 1, 1], [], []>} : vector<23x47xf32>, vector<47x47xf32>, vector<23x47xf32> -> vector<23x47xf32>
    %cst_96 = arith.constant dense<0.000000e+00> : vector<23x47xf32>
    %344 = tpu.matmul %89, %342, %cst_96 {dimension_numbers = #tpu.dot_dimension_numbers<[1], [0], [0], [1], [0, 0, 1, 1], [], []>} : vector<23x47xf32>, vector<47x47xf32>, vector<23x47xf32> -> vector<23x47xf32>
    %345 = arith.maximumf %343, %344 : vector<23x47xf32>
    %cst_97 = arith.constant dense<0.000000e+00> : vector<23x23xf32>
    %346 = tpu.matmul %345, %98, %cst_97 {dimension_numbers = #tpu.dot_dimension_numbers<[1], [0], [0], [1], [0, 0, 1, 1], [], []>} : vector<23x47xf32>, vector<47x23xf32>, vector<23x23xf32> -> vector<23x23xf32>
    %cst_98 = arith.constant dense<0.000000e+00> : vector<23x23xf32>
    %347 = tpu.matmul %345, %107, %cst_98 {dimension_numbers = #tpu.dot_dimension_numbers<[1], [0], [0], [1], [0, 0, 1, 1], [], []>} : vector<23x47xf32>, vector<47x23xf32>, vector<23x23xf32> -> vector<23x23xf32>
    %348 = arith.maximumf %346, %347 : vector<23x23xf32>
    %c1_99 = arith.constant 1 : index
    %c0_100 = arith.constant 0 : index
    %c0_101 = arith.constant 0 : index
    %349 = vector.load %arg4[%c1_99, %c0_100, %c0_101] : memref<2x23x23xf32, #tpu.memory_space<vmem>>, vector<1x23x23xf32>
    %350 = vector.shape_cast %349 : vector<1x23x23xf32> to vector<23x23xf32>
    %351 = vector.shape_cast %348 : vector<23x23xf32> to vector<1x23x23xf32>
    tpu.vector_store %arg4[%c1_99, %c0_100, %c0_101], %351 {strides = array<i32>} : memref<2x23x23xf32, #tpu.memory_space<vmem>>, vector<1x23x23xf32>,
    return
  }
  func.func @transform_0(%arg0: i32) -> (i32, i32, i32, i32) {
    %c0_i32 = arith.constant 0 : i32
    %c0_i32_0 = arith.constant 0 : i32
    %c0_i32_1 = arith.constant 0 : i32
    %c0_i32_2 = arith.constant 0 : i32
    return %arg0, %c0_i32, %c0_i32_0, %c0_i32_1 : i32, i32, i32, i32
  }
  func.func @transform_1(%arg0: i32) -> (i32, i32) {
    %c0_i32 = arith.constant 0 : i32
    %c0_i32_0 = arith.constant 0 : i32
    %c0_i32_1 = arith.constant 0 : i32
    return %c0_i32, %c0_i32_0 : i32, i32
  }
  func.func @transform_2(%arg0: i32) -> i32 {
    %c0_i32 = arith.constant 0 : i32
    %c0_i32_0 = arith.constant 0 : i32
    return %c0_i32 : i32
  }
  func.func @transform_3(%arg0: i32) -> (i32, i32, i32) {
    %c0_i32 = arith.constant 0 : i32
    %c0_i32_0 = arith.constant 0 : i32
    %c0_i32_1 = arith.constant 0 : i32
    return %arg0, %c0_i32, %c0_i32_0 : i32, i32, i32
  }
}

module attributes {stable_mosaic.version = 11 : i64} {
  func.func @_head_kernel(%arg0: i32, %arg1: i32, %arg2: memref<2x529xf32, #tpu.memory_space<vmem>>, %arg3: memref<2x529xf32, #tpu.memory_space<vmem>>, %arg4: memref<2x2xf32, #tpu.memory_space<vmem>>) attributes {dimension_semantics = [#tpu.dimension_semantics<parallel>, #tpu.dimension_semantics<parallel>], iteration_bounds = array<i64: 1, 1>, scalar_prefetch = 0 : i64, scratch_operands = 0 : i64, tpu.core_type = #tpu.core_type<tc>, window_params = [{transform_indices = @transform_0, window_bounds = array<i64: 2, 529>}, {transform_indices = @transform_1, window_bounds = array<i64: 2, 529>}, {transform_indices = @transform_2, window_bounds = array<i64: 2, 2>}]} {
    %c0 = arith.constant 0 : index
    %c0_0 = arith.constant 0 : index
    %0 = vector.load %arg2[%c0, %c0_0] : memref<2x529xf32, #tpu.memory_space<vmem>>, vector<2x529xf32>
    %c0_1 = arith.constant 0 : index
    %c0_2 = arith.constant 0 : index
    %1 = vector.load %arg3[%c0_1, %c0_2] : memref<2x529xf32, #tpu.memory_space<vmem>>, vector<2x529xf32>
    %cst = arith.constant dense<0.000000e+00> : vector<2x2xf32>
    %2 = tpu.matmul %0, %1, %cst {dimension_numbers = #tpu.dot_dimension_numbers<[1], [1], [0], [0], [0, 0, 1, 0], [], []>} : vector<2x529xf32>, vector<2x529xf32>, vector<2x2xf32> -> vector<2x2xf32>
    %cst_3 = arith.constant 4.000000e-01 : f32
    %3 = vector.broadcast %cst_3 : f32 to vector<2x2xf32>
    %4 = arith.mulf %2, %3 : vector<2x2xf32>
    %cst_4 = arith.constant 5.800000e-01 : f32
    %5 = vector.broadcast %cst_4 : f32 to vector<2x2xf32>
    %6 = arith.subf %4, %5 : vector<2x2xf32>
    %c0_5 = arith.constant 0 : index
    %c0_6 = arith.constant 0 : index
    %7 = vector.load %arg4[%c0_5, %c0_6] : memref<2x2xf32, #tpu.memory_space<vmem>>, vector<2x2xf32>
    tpu.vector_store %arg4[%c0_5, %c0_6], %6 {strides = array<i32>} : memref<2x2xf32, #tpu.memory_space<vmem>>, vector<2x2xf32>,
    return
  }
  func.func @transform_0(%arg0: i32, %arg1: i32) -> (i32, i32) {
    %c0_i32 = arith.constant 0 : i32
    %c0_i32_0 = arith.constant 0 : i32
    return %arg0, %c0_i32 : i32, i32
  }
  func.func @transform_1(%arg0: i32, %arg1: i32) -> (i32, i32) {
    %c0_i32 = arith.constant 0 : i32
    %c0_i32_0 = arith.constant 0 : i32
    return %arg1, %c0_i32 : i32, i32
  }
  func.func @transform_2(%arg0: i32, %arg1: i32) -> (i32, i32) {
    %c0_i32 = arith.constant 0 : i32
    return %arg0, %arg1 : i32, i32
  }
}

</mosaic_0001>

<llo_original>
// kernel: net3_forward.3
$region0: #{net3_forward.3}
  #allocation0 [shape = 'u32[]', space=smem, size = 0x4, offset = 0x4, fixed_abs, tag = 'smem constant byte address 0x4 - core index']
  #allocation1 [shape = 'u32[144,128]{1,0:T(1,128)}', space=vmem, size = 0x12000, scoped, tag = 'internal scratch']
  %s0 = inlined_call_operand.vmem [shape: f32[2,529], index: 0, kind: input, shape index: {}, may-alias: {0,1}]
  %s1 = inlined_call_operand.vmem [shape: f32[2,529], index: 1, kind: input, shape index: {}, may-alias: {0,1}]
  %s2 = inlined_call_operand.hbm [shape: f32[2,2], index: 2, kind: output, shape index: {}]
  %s3 = sld [smem:[#allocation0]]
  $region18: #{net3_forward.3} parent=0
    _
  %s5 = ssub.s32 1, %s3
  %s6 = scalar_select 0, %s5, %s3
  $region1: #{net3_forward.3} parent=0
    #allocation2 [shape = 'u8[1024]{0}', space=vmem, size = 0x400, scoped, tag = 'output window, operand 0, single buffered']
    #allocation3 [shape = 's32[1]{0}', space=sflag, size = 0x4, scoped, tag = 'scoped memory for net3_forward.3']
    %7 = vsyncpa [#allocation3], 0
    // Predicated region
    $region2: #{net3_forward.3} parent=1 // pred_check
      _
    $region3: #{net3_forward.3} parent=1 // pred_check_branch
      %9 = sbr.rel (0) target = $region5
    $region4: #{net3_forward.3} parent=1 // pred_region
      _
    $region5: #{net3_forward.3} parent=1 // pred_fallthru
      _
    // Predicated region
    $region6: #{net3_forward.3} parent=1 // pred_check
      _
    $region7: #{net3_forward.3} parent=1 // pred_check_branch
      %11 = sbr.rel (0) target = $region9
    $region8: #{net3_forward.3} parent=1 // pred_region
      _
    $region9: #{net3_forward.3} parent=1 // pred_fallthru
      _
    %v12 = vld [vmem:[%s0] sm:$0xff]
    %v13 = vld [vmem:[%s0 + $0x8] sm:$0x3]
    %v14 = vld [vmem:[%s1] sm:$0xff]
    %v15 = vld [vmem:[%s1 + $0x8] sm:$0x3]
    %v18 = vcombine.high %v12, %v12
    %v20 = vunpack.c.l.s4 1983009808
    %v21 = vunpack.c.0.s8 %v20
    %v22 = vlaneseq
    %v23 = vshrl.u32 %v22, 7
    %v24 = vsub.s32 %v21, %v23
    %v25 = vrot.slane %v12, %v24
    %v27 = vunpack.c.l.s4 1983009808
    %v28 = vunpack.c.0.s8 %v27
    %v29 = vlaneseq
    %v30 = vshrl.u32 %v29, 7
    %v31 = vsub.s32 %v28, %v30
    %v32 = vrot.slane %v18, %v31
    %v33 = vcombine.high %v25, %v25
    %v34 = vcombine.high %v32, %v32
    %v36 = vunpack.c.l.s4 1983009808
    %v37 = vunpack.c.0.s8 %v36
    %v38 = vlaneseq
    %v39 = vshrl.u32 %v38, 7
    %v40 = vsub.s32 %v37, %v39
    %v41 = vrot.slane %v13, %v40
    %v48 = vcombine.high %v14, %v14
    %v50 = vunpack.c.l.s4 1983009808
    %v51 = vunpack.c.0.s8 %v50
    %v52 = vlaneseq
    %v53 = vshrl.u32 %v52, 7
    %v54 = vsub.s32 %v51, %v53
    %v55 = vrot.slane %v14, %v54
    %v57 = vunpack.c.l.s4 1983009808
    %v58 = vunpack.c.0.s8 %v57
    %v59 = vlaneseq
    %v60 = vshrl.u32 %v59, 7
    %v61 = vsub.s32 %v58, %v60
    %v62 = vrot.slane %v48, %v61
    %v63 = vcombine.high %v55, %v55
    %v64 = vcombine.high %v62, %v62
    %v66 = vunpack.c.l.s4 1983009808
    %v67 = vunpack.c.0.s8 %v66
    %v68 = vlaneseq
    %v69 = vshrl.u32 %v68, 7
    %v70 = vsub.s32 %v67, %v69
    %v71 = vrot.slane %v15, %v70
    %vm76 = vcmask 138240
    %v77 = vsel %vm76, %v41, 0
    %v79 = vsel %vm76, %v71, 0
    %81 = vmatprep.subr.mxu0 %v63
    %82 = vmatpush1.xpose.msra.mxu0 %v55
    %83 = vmatprep.subr.mxu0 0.0
    %84 = vmatpush1.xpose.msra.mxu0 0.0
    %85 = vmatprep.subr.mxu0 0.0
    %86 = vmatpush1.xpose.msra.mxu0 0.0
    %87 = vmatprep.subr.mxu0 0.0
    %88 = vmatpush1.xpose.msra.mxu0 0.0
    %89 = vmatprep.subr.mxu0 0.0
    %90 = vmatpush1.xpose.msra.mxu0 0.0
    %91 = vmatprep.subr.mxu0 0.0
    %92 = vmatpush1.xpose.msra.mxu0 0.0
    %93 = vmatprep.subr.mxu0 0.0
    %94 = vmatpush1.xpose.msra.mxu0 0.0
    %95 = vmatprep.subr.mxu0 0.0
    %96 = vmatpush1.xpose.msra.mxu0 0.0
    %97 = vmatprep.subr.mxu0 0.0
    %98 = vmatpush1.xpose.msra.mxu0 0.0
    %99 = vmatprep.subr.mxu0 0.0
    %100 = vmatpush1.xpose.msra.mxu0 0.0
    %101 = vmatprep.subr.mxu0 0.0
    %102 = vmatpush1.xpose.msra.mxu0 0.0
    %103 = vmatprep.subr.mxu0 0.0
    %104 = vmatpush1.xpose.msra.mxu0 0.0
    %105 = vmatprep.subr.mxu0 0.0
    %106 = vmatpush1.xpose.msra.mxu0 0.0
    %107 = vmatprep.subr.mxu0 0.0
    %108 = vmatpush1.xpose.msra.mxu0 0.0
    %109 = vmatprep.subr.mxu0 0.0
    %110 = vmatpush1.xpose.msra.mxu0 0.0
    %111 = vmatprep.subr.mxu0 0.0
    %112 = vmatpush1.xpose.msra.mxu0 0.0
    %113 = vmatprep.subr.mxu0 0.0
    %114 = vmatpush1.xpose.msra.mxu0 0.0
    %115 = vmatprep.subr.mxu0 0.0
    %116 = vmatpush1.xpose.msra.mxu0 0.0
    %117 = vmatprep.subr.mxu0 0.0
    %118 = vmatpush1.xpose.msra.mxu0 0.0
    %119 = vmatprep.subr.mxu0 0.0
    %120 = vmatpush1.xpose.msra.mxu0 0.0
    %121 = vmatprep.subr.mxu0 0.0
    %122 = vmatpush1.xpose.msra.mxu0 0.0
    %123 = vmatprep.subr.mxu0 0.0
    %124 = vmatpush1.xpose.msra.mxu0 0.0
    %125 = vmatprep.subr.mxu0 0.0
    %126 = vmatpush1.xpose.msra.mxu0 0.0
    %127 = vmatprep.subr.mxu0 0.0
    %128 = vmatpush1.xpose.msra.mxu0 0.0
    %129 = vmatprep.subr.mxu0 0.0
    %130 = vmatpush1.xpose.msra.mxu0 0.0
    %131 = vmatprep.subr.mxu0 0.0
    %132 = vmatpush1.xpose.msra.mxu0 0.0
    %133 = vmatprep.subr.mxu0 0.0
    %134 = vmatpush1.xpose.msra.mxu0 0.0
    %135 = vmatprep.subr.mxu0 0.0
    %136 = vmatpush1.xpose.msra.mxu0 0.0
    %137 = vmatprep.subr.mxu0 0.0
    %138 = vmatpush1.xpose.msra.mxu0 0.0
    %139 = vmatprep.subr.mxu0 0.0
    %140 = vmatpush1.xpose.msra.mxu0 0.0
    %141 = vmatprep.subr.mxu0 0.0
    %142 = vmatpush1.xpose.msra.mxu0 0.0
    %143 = vmatprep.subr.mxu0 0.0
    %144 = vmatpush1.xpose.msra.mxu0 0.0
    %145 = vmatprep.mubr.f32.mxu0 %v33
    %146 = vmatmul.mubr.f32.gmra.mrb[0].mxu0 %v25
    %v147 = vpop.f32.mrb[0].mxu0
    %v148 = vadd.f32 0.0, %v147
    %v149 = vpop.f32.mrb[0].mxu0
    %150 = vdwg.mxu0
    %151 = vmatprep.subr.mxu0 %v64
    %152 = vmatpush1.xpose.msra.mxu0 %v62
    %153 = vmatprep.subr.mxu0 0.0
    %154 = vmatpush1.xpose.msra.mxu0 0.0
    %155 = vmatprep.subr.mxu0 0.0
    %156 = vmatpush1.xpose.msra.mxu0 0.0
    %157 = vmatprep.subr.mxu0 0.0
    %158 = vmatpush1.xpose.msra.mxu0 0.0
    %159 = vmatprep.subr.mxu0 0.0
    %160 = vmatpush1.xpose.msra.mxu0 0.0
    %161 = vmatprep.subr.mxu0 0.0
    %162 = vmatpush1.xpose.msra.mxu0 0.0
    %163 = vmatprep.subr.mxu0 0.0
    %164 = vmatpush1.xpose.msra.mxu0 0.0
    %165 = vmatprep.subr.mxu0 0.0
    %166 = vmatpush1.xpose.msra.mxu0 0.0
    %167 = vmatprep.subr.mxu0 0.0
    %168 = vmatpush1.xpose.msra.mxu0 0.0
    %169 = vmatprep.subr.mxu0 0.0
    %170 = vmatpush1.xpose.msra.mxu0 0.0
    %171 = vmatprep.subr.mxu0 0.0
    %172 = vmatpush1.xpose.msra.mxu0 0.0
    %173 = vmatprep.subr.mxu0 0.0
    %174 = vmatpush1.xpose.msra.mxu0 0.0
    %175 = vmatprep.subr.mxu0 0.0
    %176 = vmatpush1.xpose.msra.mxu0 0.0
    %177 = vmatprep.subr.mxu0 0.0
    %178 = vmatpush1.xpose.msra.mxu0 0.0
    %179 = vmatprep.subr.mxu0 0.0
    %180 = vmatpush1.xpose.msra.mxu0 0.0
    %181 = vmatprep.subr.mxu0 0.0
    %182 = vmatpush1.xpose.msra.mxu0 0.0
    %183 = vmatprep.subr.mxu0 0.0
    %184 = vmatpush1.xpose.msra.mxu0 0.0
    %185 = vmatprep.subr.mxu0 0.0
    %186 = vmatpush1.xpose.msra.mxu0 0.0
    %187 = vmatprep.subr.mxu0 0.0
    %188 = vmatpush1.xpose.msra.mxu0 0.0
    %189 = vmatprep.subr.mxu0 0.0
    %190 = vmatpush1.xpose.msra.mxu0 0.0
    %191 = vmatprep.subr.mxu0 0.0
    %192 = vmatpush1.xpose.msra.mxu0 0.0
    %193 = vmatprep.subr.mxu0 0.0
    %194 = vmatpush1.xpose.msra.mxu0 0.0
    %195 = vmatprep.subr.mxu0 0.0
    %196 = vmatpush1.xpose.msra.mxu0 0.0
    %197 = vmatprep.subr.mxu0 0.0
    %198 = vmatpush1.xpose.msra.mxu0 0.0
    %199 = vmatprep.subr.mxu0 0.0
    %200 = vmatpush1.xpose.msra.mxu0 0.0
    %201 = vmatprep.subr.mxu0 0.0
    %202 = vmatpush1.xpose.msra.mxu0 0.0
    %203 = vmatprep.subr.mxu0 0.0
    %204 = vmatpush1.xpose.msra.mxu0 0.0
    %205 = vmatprep.subr.mxu0 0.0
    %206 = vmatpush1.xpose.msra.mxu0 0.0
    %207 = vmatprep.subr.mxu0 0.0
    %208 = vmatpush1.xpose.msra.mxu0 0.0
    %209 = vmatprep.subr.mxu0 0.0
    %210 = vmatpush1.xpose.msra.mxu0 0.0
    %211 = vmatprep.subr.mxu0 0.0
    %212 = vmatpush1.xpose.msra.mxu0 0.0
    %213 = vmatprep.subr.mxu0 0.0
    %214 = vmatpush1.xpose.msra.mxu0 0.0
    %215 = vmatprep.mubr.f32.mxu0 %v34
    %216 = vmatmul.mubr.f32.gmra.mrb[0].mxu0 %v32
    %v217 = vpop.f32.mrb[0].mxu0
    %v218 = vadd.f32 %v148, %v217
    %v219 = vpop.f32.mrb[0].mxu0
    %220 = vdwg.mxu0
    %221 = vmatprep.subr.mxu0 0.0
    %222 = vmatpush1.xpose.msra.mxu0 %v79
    %223 = vmatprep.subr.mxu0 0.0
    %224 = vmatpush1.xpose.msra.mxu0 0.0
    %225 = vmatprep.subr.mxu0 0.0
    %226 = vmatpush1.xpose.msra.mxu0 0.0
    %227 = vmatprep.subr.mxu0 0.0
    %228 = vmatpush1.xpose.msra.mxu0 0.0
    %229 = vmatprep.subr.mxu0 0.0
    %230 = vmatpush1.xpose.msra.mxu0 0.0
    %231 = vmatprep.subr.mxu0 0.0
    %232 = vmatpush1.xpose.msra.mxu0 0.0
    %233 = vmatprep.subr.mxu0 0.0
    %234 = vmatpush1.xpose.msra.mxu0 0.0
    %235 = vmatprep.subr.mxu0 0.0
    %236 = vmatpush1.xpose.msra.mxu0 0.0
    %237 = vmatprep.subr.mxu0 0.0
    %238 = vmatpush1.xpose.msra.mxu0 0.0
    %239 = vmatprep.subr.mxu0 0.0
    %240 = vmatpush1.xpose.msra.mxu0 0.0
    %241 = vmatprep.subr.mxu0 0.0
    %242 = vmatpush1.xpose.msra.mxu0 0.0
    %243 = vmatprep.subr.mxu0 0.0
    %244 = vmatpush1.xpose.msra.mxu0 0.0
    %245 = vmatprep.subr.mxu0 0.0
    %246 = vmatpush1.xpose.msra.mxu0 0.0
    %247 = vmatprep.subr.mxu0 0.0
    %248 = vmatpush1.xpose.msra.mxu0 0.0
    %249 = vmatprep.subr.mxu0 0.0
    %250 = vmatpush1.xpose.msra.mxu0 0.0
    %251 = vmatprep.subr.mxu0 0.0
    %252 = vmatpush1.xpose.msra.mxu0 0.0
    %253 = vmatprep.subr.mxu0 0.0
    %254 = vmatpush1.xpose.msra.mxu0 0.0
    %255 = vmatprep.subr.mxu0 0.0
    %256 = vmatpush1.xpose.msra.mxu0 0.0
    %257 = vmatprep.subr.mxu0 0.0
    %258 = vmatpush1.xpose.msra.mxu0 0.0
    %259 = vmatprep.subr.mxu0 0.0
    %260 = vmatpush1.xpose.msra.mxu0 0.0
    %261 = vmatprep.subr.mxu0 0.0
    %262 = vmatpush1.xpose.msra.mxu0 0.0
    %263 = vmatprep.subr.mxu0 0.0
    %264 = vmatpush1.xpose.msra.mxu0 0.0
    %265 = vmatprep.subr.mxu0 0.0
    %266 = vmatpush1.xpose.msra.mxu0 0.0
    %267 = vmatprep.subr.mxu0 0.0
    %268 = vmatpush1.xpose.msra.mxu0 0.0
    %269 = vmatprep.subr.mxu0 0.0
    %270 = vmatpush1.xpose.msra.mxu0 0.0
    %271 = vmatprep.subr.mxu0 0.0
    %272 = vmatpush1.xpose.msra.mxu0 0.0
    %273 = vmatprep.subr.mxu0 0.0
    %274 = vmatpush1.xpose.msra.mxu0 0.0
    %275 = vmatprep.subr.mxu0 0.0
    %276 = vmatpush1.xpose.msra.mxu0 0.0
    %277 = vmatprep.subr.mxu0 0.0
    %278 = vmatpush1.xpose.msra.mxu0 0.0
    %279 = vmatprep.subr.mxu0 0.0
    %280 = vmatpush1.xpose.msra.mxu0 0.0
    %281 = vmatprep.subr.mxu0 0.0
    %282 = vmatpush1.xpose.msra.mxu0 0.0
    %283 = vmatprep.subr.mxu0 0.0
    %284 = vmatpush1.xpose.msra.mxu0 0.0
    %285 = vmatprep.mubr.f32.mxu0 0.0
    %286 = vmatmul.mubr.f32.gmra.mrb[0].mxu0 %v77
    %v287 = vpop.f32.mrb[0].mxu0
    %v288 = vadd.f32 %v218, %v287
    %v289 = vpop.f32.mrb[0].mxu0
    %290 = vdwg.mxu0
    %v291 = vmul.f32 %v288, 0.4
    %v292 = vsub.f32 %v291, 0.58
    %vm293 = vcmask 9216
    %294 = vst.msk [vmem:[#allocation2] sm:$0x3] %vm293, %v292
    // Predicated region
    $region10: #{net3_forward.3} parent=1 // pred_check
      _
    $region11: #{net3_forward.3} parent=1 // pred_check_branch
      %296 = sbr.rel (0) target = $region13
    $region12: #{net3_forward.3} parent=1 // pred_region
      %s298 = ssub.s32 32, 32
      %299 = vsyncadd [#allocation3], %s298
      %s301 = sshll.u32 [#allocation2], 4
      %s302 = int_to_ptr.vmem [resolvable:$true] %s301
      %304 = dma.vmem_to_hbm [thread:$0]  %s302, 32, %s2, [#allocation3]
    $region13: #{net3_forward.3} parent=1 // pred_fallthru
      _
    // Predicated region
    $region14: #{net3_forward.3} parent=1 // pred_check
      _
    $region15: #{net3_forward.3} parent=1 // pred_check_branch
      %306 = sbr.rel (0) target = $region17
    $region16: #{net3_forward.3} parent=1 // pred_region
      %307 = dma.done [#allocation3], 32
    $region17: #{net3_forward.3} parent=1 // pred_fallthru
      _
    %308 = vsyncpa [#allocation3], 1

// kernel: net3_forward.2
$region0: #{net3_forward.2}
  #allocation0 [shape = 'u32[]', space=smem, size = 0x4, offset = 0x4, fixed_abs, tag = 'smem constant byte address 0x4 - core index']
  #allocation1 [shape = 'u32[144,128]{1,0:T(1,128)}', space=vmem, size = 0x12000, scoped, tag = 'internal scratch']
  #allocation2 [shape = 'f32[1]{0:T(128)S(6)}', space=smem, size = 0x200, scoped, tag = 'scoped memory for net3_forward.2']
  %s0 = inlined_call_operand.hbm [shape: f32[2,1,200,200], index: 0, kind: input, shape index: {}]
  %s1 = inlined_call_operand.hbm [shape: f32[5,5], index: 1, kind: input, shape index: {}]
  %s2 = inlined_call_operand.<no memory space> [shape: f32[1], index: 2, kind: input, shape index: {}]
  %s3 = inlined_call_operand.vmem [shape: f32[2,23,23], index: 3, kind: output, shape index: {}]
  %s4 = sld [smem:[#allocation0]]
  $region30: #{net3_forward.2} parent=0
    _
  %s6 = ssub.s32 1, %s4
  %s7 = scalar_select 0, %s6, %s4
  %8 = sst [smem:[#allocation2]] %s2
  $region1: #{net3_forward.2} parent=0
    #allocation3 [shape = 'u8[409600]{0}', space=vmem, size = 0x64000, scoped, tag = 'input window, operand 0, single buffered']
    #allocation4 [shape = 's32[1]{0}', space=sflag, size = 0x4, scoped, tag = 'scoped memory for net3_forward.2']
    #allocation5 [shape = 's32[1]{0}', space=sflag, size = 0x4, scoped, tag = 'scoped memory for net3_forward.2']
    #allocation6 [shape = 'u8[4096]{0}', space=smem, size = 0x1000, scoped, tag = 'input window, operand 1, single buffered']
    %9 = vsyncpa [#allocation4], 0
    %10 = vsyncpa [#allocation5], 0
    // Predicated region
    $region2: #{net3_forward.2} parent=1 // pred_check
      _
    $region3: #{net3_forward.2} parent=1 // pred_check_branch
      %12 = sbr.rel (0) target = $region5
    $region4: #{net3_forward.2} parent=1 // pred_region
      %s14 = ssub.s32 12800, 12800
      %15 = vsyncadd [#allocation4], %s14
      %s16 = sshll.u32 [#allocation3], 4
      %s17 = int_to_ptr.vmem [resolvable:$true] %s16
      %22 = dma.hbm_to_vmem [thread:$0]  %s0, 12800, %s17, [#allocation4], 256, 256, 16
    $region5: #{net3_forward.2} parent=1 // pred_fallthru
      _
    // Predicated region
    $region6: #{net3_forward.2} parent=1 // pred_check
      _
    $region7: #{net3_forward.2} parent=1 // pred_check_branch
      %24 = sbr.rel (0) target = $region9
    $region8: #{net3_forward.2} parent=1 // pred_region
      %s26 = ssub.s32 128, 128
      %27 = vsyncadd [#allocation5], %s26
      %30 = dma.hbm_to_smem %s1, 128, [#allocation6], [#allocation5]
    $region9: #{net3_forward.2} parent=1 // pred_fallthru
      _
    // Predicated region
    $region10: #{net3_forward.2} parent=1 // pred_check
      _
    $region11: #{net3_forward.2} parent=1 // pred_check_branch
      %32 = sbr.rel (0) target = $region13
    $region12: #{net3_forward.2} parent=1 // pred_region
      _
    $region13: #{net3_forward.2} parent=1 // pred_fallthru
      _
    // Predicated region
    $region14: #{net3_forward.2} parent=1 // pred_check
      _
    $region15: #{net3_forward.2} parent=1 // pred_check_branch
      %34 = sbr.rel (0) target = $region17
    $region16: #{net3_forward.2} parent=1 // pred_region
      %35 = dma.done [#allocation4], 12800
    $region17: #{net3_forward.2} parent=1 // pred_fallthru
      _
    // Predicated region
    $region18: #{net3_forward.2} parent=1 // pred_check
      _
    $region19: #{net3_forward.2} parent=1 // pred_check_branch
      %37 = sbr.rel (0) target = $region21
    $region20: #{net3_forward.2} parent=1 // pred_region
      %38 = dma.done [#allocation5], 128
    $region21: #{net3_forward.2} parent=1 // pred_fallthru
      _
    %39 = sfence
    %v40 = vlaneseq
    %v41 = vshrl.u32 %v40, 7
    %v42 = vadd.s32 %v41, 8
    %v43 = vadd.s32 %v41, 16
    %v44 = vadd.s32 %v41, 24
    %v45 = vadd.s32 %v41, 32
    %v46 = vadd.s32 %v41, 40
    %v47 = vadd.s32 %v41, 48
    %v48 = vadd.s32 %v41, 56
    %v49 = vadd.s32 %v41, 64
    %v50 = vadd.s32 %v41, 72
    %v51 = vadd.s32 %v41, 80
    %v52 = vadd.s32 %v41, 88
    %v53 = vadd.s32 %v41, 96
    %v54 = vlaneseq
    %v55 = vand.u32 %v54, 127
    %v56 = vadd.s32 %v55, 128
    %v57 = vmul.u32 %v41, 2
    %v58 = vmul.u32 %v42, 2
    %v59 = vmul.u32 %v43, 2
    %v60 = vmul.u32 %v44, 2
    %v61 = vmul.u32 %v45, 2
    %v62 = vmul.u32 %v46, 2
    %v63 = vmul.u32 %v47, 2
    %v64 = vmul.u32 %v48, 2
    %v65 = vmul.u32 %v49, 2
    %v66 = vmul.u32 %v50, 2
    %v67 = vmul.u32 %v51, 2
    %v68 = vmul.u32 %v52, 2
    %v69 = vmul.u32 %v53, 2
    %v70 = vadd.s32 %v57, 4
    %v71 = vadd.s32 %v58, 4
    %v72 = vadd.s32 %v59, 4
    %v73 = vadd.s32 %v60, 4
    %v74 = vadd.s32 %v61, 4
    %v75 = vadd.s32 %v62, 4
    %v76 = vadd.s32 %v63, 4
    %v77 = vadd.s32 %v64, 4
    %v78 = vadd.s32 %v65, 4
    %v79 = vadd.s32 %v66, 4
    %v80 = vadd.s32 %v67, 4
    %v81 = vadd.s32 %v68, 4
    %v82 = vadd.s32 %v69, 4
    %vm83 = vcmp.eq.s32.totalorder %v55, %v70
    %vm84 = vcmp.eq.s32.totalorder %v56, %v70
    %vm85 = vcmp.eq.s32.totalorder %v55, %v71
    %vm86 = vcmp.eq.s32.totalorder %v56, %v71
    %vm87 = vcmp.eq.s32.totalorder %v55, %v72
    %vm88 = vcmp.eq.s32.totalorder %v56, %v72
    %vm89 = vcmp.eq.s32.totalorder %v55, %v73
    %vm90 = vcmp.eq.s32.totalorder %v56, %v73
    %vm91 = vcmp.eq.s32.totalorder %v55, %v74
    %vm92 = vcmp.eq.s32.totalorder %v56, %v74
    %vm93 = vcmp.eq.s32.totalorder %v55, %v75
    %vm94 = vcmp.eq.s32.totalorder %v56, %v75
    %vm95 = vcmp.eq.s32.totalorder %v55, %v76
    %vm96 = vcmp.eq.s32.totalorder %v56, %v76
    %vm97 = vcmp.eq.s32.totalorder %v55, %v77
    %vm98 = vcmp.eq.s32.totalorder %v56, %v77
    %vm99 = vcmp.eq.s32.totalorder %v55, %v78
    %vm100 = vcmp.eq.s32.totalorder %v56, %v78
    %vm101 = vcmp.eq.s32.totalorder %v55, %v79
    %vm102 = vcmp.eq.s32.totalorder %v56, %v79
    %vm103 = vcmp.eq.s32.totalorder %v55, %v80
    %vm104 = vcmp.eq.s32.totalorder %v56, %v80
    %vm105 = vcmp.eq.s32.totalorder %v55, %v81
    %vm106 = vcmp.eq.s32.totalorder %v56, %v81
    %vm107 = vcmp.eq.s32.totalorder %v55, %v82
    %vm108 = vcmp.eq.s32.totalorder %v56, %v82
    %v109 = vsel %vm83, 1, 0
    %v110 = vsel %vm84, 1, 0
    %v111 = vsel %vm85, 1, 0
    %v112 = vsel %vm86, 1, 0
    %v113 = vsel %vm87, 1, 0
    %v114 = vsel %vm88, 1, 0
    %v115 = vsel %vm89, 1, 0
    %v116 = vsel %vm90, 1, 0
    %v117 = vsel %vm91, 1, 0
    %v118 = vsel %vm92, 1, 0
    %v119 = vsel %vm93, 1, 0
    %v120 = vsel %vm94, 1, 0
    %v121 = vsel %vm95, 1, 0
    %v122 = vsel %vm96, 1, 0
    %v123 = vsel %vm97, 1, 0
    %v124 = vsel %vm98, 1, 0
    %v125 = vsel %vm99, 1, 0
    %v126 = vsel %vm100, 1, 0
    %v127 = vsel %vm101, 1, 0
    %v128 = vsel %vm102, 1, 0
    %v129 = vsel %vm103, 1, 0
    %v130 = vsel %vm104, 1, 0
    %v131 = vsel %vm105, 1, 0
    %v132 = vsel %vm106, 1, 0
    %v133 = vsel %vm107, 1, 0
    %v134 = vsel %vm108, 1, 0
    %v135 = vcvt.s32.f32 %v109
    %v136 = vcvt.s32.f32 %v110
    %v137 = vcvt.s32.f32 %v111
    %v138 = vcvt.s32.f32 %v112
    %v139 = vcvt.s32.f32 %v113
    %v140 = vcvt.s32.f32 %v114
    %v141 = vcvt.s32.f32 %v115
    %v142 = vcvt.s32.f32 %v116
    %v143 = vcvt.s32.f32 %v117
    %v144 = vcvt.s32.f32 %v118
    %v145 = vcvt.s32.f32 %v119
    %v146 = vcvt.s32.f32 %v120
    %v147 = vcvt.s32.f32 %v121
    %v148 = vcvt.s32.f32 %v122
    %v149 = vcvt.s32.f32 %v123
    %v150 = vcvt.s32.f32 %v124
    %v151 = vcvt.s32.f32 %v125
    %v152 = vcvt.s32.f32 %v126
    %v153 = vcvt.s32.f32 %v127
    %v154 = vcvt.s32.f32 %v128
    %v155 = vcvt.s32.f32 %v129
    %v156 = vcvt.s32.f32 %v130
    %v157 = vcvt.s32.f32 %v131
    %v158 = vcvt.s32.f32 %v132
    %v159 = vcvt.s32.f32 %v133
    %v160 = vcvt.s32.f32 %v134
    %v161 = vadd.s32 %v57, 5
    %v162 = vadd.s32 %v58, 5
    %v163 = vadd.s32 %v59, 5
    %v164 = vadd.s32 %v60, 5
    %v165 = vadd.s32 %v61, 5
    %v166 = vadd.s32 %v62, 5
    %v167 = vadd.s32 %v63, 5
    %v168 = vadd.s32 %v64, 5
    %v169 = vadd.s32 %v65, 5
    %v170 = vadd.s32 %v66, 5
    %v171 = vadd.s32 %v67, 5
    %v172 = vadd.s32 %v68, 5
    %v173 = vadd.s32 %v69, 5
    %vm174 = vcmp.eq.s32.totalorder %v55, %v161
    %vm175 = vcmp.eq.s32.totalorder %v56, %v161
    %vm176 = vcmp.eq.s32.totalorder %v55, %v162
    %vm177 = vcmp.eq.s32.totalorder %v56, %v162
    %vm178 = vcmp.eq.s32.totalorder %v55, %v163
    %vm179 = vcmp.eq.s32.totalorder %v56, %v163
    %vm180 = vcmp.eq.s32.totalorder %v55, %v164
    %vm181 = vcmp.eq.s32.totalorder %v56, %v164
    %vm182 = vcmp.eq.s32.totalorder %v55, %v165
    %vm183 = vcmp.eq.s32.totalorder %v56, %v165
    %vm184 = vcmp.eq.s32.totalorder %v55, %v166
    %vm185 = vcmp.eq.s32.totalorder %v56, %v166
    %vm186 = vcmp.eq.s32.totalorder %v55, %v167
    %vm187 = vcmp.eq.s32.totalorder %v56, %v167
    %vm188 = vcmp.eq.s32.totalorder %v55, %v168
    %vm189 = vcmp.eq.s32.totalorder %v56, %v168
    %vm190 = vcmp.eq.s32.totalorder %v55, %v169
    %vm191 = vcmp.eq.s32.totalorder %v56, %v169
    %vm192 = vcmp.eq.s32.totalorder %v55, %v170
    %vm193 = vcmp.eq.s32.totalorder %v56, %v170
    %vm194 = vcmp.eq.s32.totalorder %v55, %v171
    %vm195 = vcmp.eq.s32.totalorder %v56, %v171
    %vm196 = vcmp.eq.s32.totalorder %v55, %v172
    %vm197 = vcmp.eq.s32.totalorder %v56, %v172
    %vm198 = vcmp.eq.s32.totalorder %v55, %v173
    %vm199 = vcmp.eq.s32.totalorder %v56, %v173
    %v200 = vsel %vm174, 1, 0
    %v201 = vsel %vm175, 1, 0
    %v202 = vsel %vm176, 1, 0
    %v203 = vsel %vm177, 1, 0
    %v204 = vsel %vm178, 1, 0
    %v205 = vsel %vm179, 1, 0
    %v206 = vsel %vm180, 1, 0
    %v207 = vsel %vm181, 1, 0
    %v208 = vsel %vm182, 1, 0
    %v209 = vsel %vm183, 1, 0
    %v210 = vsel %vm184, 1, 0
    %v211 = vsel %vm185, 1, 0
    %v212 = vsel %vm186, 1, 0
    %v213 = vsel %vm187, 1, 0
    %v214 = vsel %vm188, 1, 0
    %v215 = vsel %vm189, 1, 0
    %v216 = vsel %vm190, 1, 0
    %v217 = vsel %vm191, 1, 0
    %v218 = vsel %vm192, 1, 0
    %v219 = vsel %vm193, 1, 0
    %v220 = vsel %vm194, 1, 0
    %v221 = vsel %vm195, 1, 0
    %v222 = vsel %vm196, 1, 0
    %v223 = vsel %vm197, 1, 0
    %v224 = vsel %vm198, 1, 0
    %v225 = vsel %vm199, 1, 0
    %v226 = vcvt.s32.f32 %v200
    %v227 = vcvt.s32.f32 %v201
    %v228 = vcvt.s32.f32 %v202
    %v229 = vcvt.s32.f32 %v203
    %v230 = vcvt.s32.f32 %v204
    %v231 = vcvt.s32.f32 %v205
    %v232 = vcvt.s32.f32 %v206
    %v233 = vcvt.s32.f32 %v207
    %v234 = vcvt.s32.f32 %v208
    %v235 = vcvt.s32.f32 %v209
    %v236 = vcvt.s32.f32 %v210
    %v237 = vcvt.s32.f32 %v211
    %v238 = vcvt.s32.f32 %v212
    %v239 = vcvt.s32.f32 %v213
    %v240 = vcvt.s32.f32 %v214
    %v241 = vcvt.s32.f32 %v215
    %v242 = vcvt.s32.f32 %v216
    %v243 = vcvt.s32.f32 %v217
    %v244 = vcvt.s32.f32 %v218
    %v245 = vcvt.s32.f32 %v219
    %v246 = vcvt.s32.f32 %v220
    %v247 = vcvt.s32.f32 %v221
    %v248 = vcvt.s32.f32 %v222
    %v249 = vcvt.s32.f32 %v223
    %v250 = vcvt.s32.f32 %v224
    %v251 = vcvt.s32.f32 %v225
    %v252 = vadd.s32 %v41, 104
    %v253 = vadd.s32 %v41, 112
    %v254 = vadd.s32 %v41, 120
    %v255 = vadd.s32 %v41, 128
    %v256 = vadd.s32 %v41, 136
    %v257 = vadd.s32 %v41, 144
    %v258 = vadd.s32 %v41, 152
    %v259 = vadd.s32 %v41, 160
    %v260 = vadd.s32 %v41, 168
    %v261 = vadd.s32 %v41, 176
    %v262 = vadd.s32 %v41, 184
    %v263 = vadd.s32 %v41, 192
    %v264 = vmul.u32 %v55, 2
    %v265 = vadd.s32 %v264, 4
    %vm266 = vcmp.eq.s32.totalorder %v41, %v265
    %vm267 = vcmp.eq.s32.totalorder %v42, %v265
    %vm268 = vcmp.eq.s32.totalorder %v43, %v265
    %vm269 = vcmp.eq.s32.totalorder %v44, %v265
    %vm270 = vcmp.eq.s32.totalorder %v45, %v265
    %vm271 = vcmp.eq.s32.totalorder %v46, %v265
    %vm272 = vcmp.eq.s32.totalorder %v47, %v265
    %vm273 = vcmp.eq.s32.totalorder %v48, %v265
    %vm274 = vcmp.eq.s32.totalorder %v49, %v265
    %vm275 = vcmp.eq.s32.totalorder %v50, %v265
    %vm276 = vcmp.eq.s32.totalorder %v51, %v265
    %vm277 = vcmp.eq.s32.totalorder %v52, %v265
    %vm278 = vcmp.eq.s32.totalorder %v53, %v265
    %vm279 = vcmp.eq.s32.totalorder %v252, %v265
    %vm280 = vcmp.eq.s32.totalorder %v253, %v265
    %vm281 = vcmp.eq.s32.totalorder %v254, %v265
    %vm282 = vcmp.eq.s32.totalorder %v255, %v265
    %vm283 = vcmp.eq.s32.totalorder %v256, %v265
    %vm284 = vcmp.eq.s32.totalorder %v257, %v265
    %vm285 = vcmp.eq.s32.totalorder %v258, %v265
    %vm286 = vcmp.eq.s32.totalorder %v259, %v265
    %vm287 = vcmp.eq.s32.totalorder %v260, %v265
    %vm288 = vcmp.eq.s32.totalorder %v261, %v265
    %vm289 = vcmp.eq.s32.totalorder %v262, %v265
    %vm290 = vcmp.eq.s32.totalorder %v263, %v265
    %v291 = vsel %vm266, 1, 0
    %v292 = vsel %vm267, 1, 0
    %v293 = vsel %vm268, 1, 0
    %v294 = vsel %vm269, 1, 0
    %v295 = vsel %vm270, 1, 0
    %v296 = vsel %vm271, 1, 0
    %v297 = vsel %vm272, 1, 0
    %v298 = vsel %vm273, 1, 0
    %v299 = vsel %vm274, 1, 0
    %v300 = vsel %vm275, 1, 0
    %v301 = vsel %vm276, 1, 0
    %v302 = vsel %vm277, 1, 0
    %v303 = vsel %vm278, 1, 0
    %v304 = vsel %vm279, 1, 0
    %v305 = vsel %vm280, 1, 0
    %v306 = vsel %vm281, 1, 0
    %v307 = vsel %vm282, 1, 0
    %v308 = vsel %vm283, 1, 0
    %v309 = vsel %vm284, 1, 0
    %v310 = vsel %vm285, 1, 0
    %v311 = vsel %vm286, 1, 0
    %v312 = vsel %vm287, 1, 0
    %v313 = vsel %vm288, 1, 0
    %v314 = vsel %vm289, 1, 0
    %v315 = vsel %vm290, 1, 0
    %v316 = vcvt.s32.f32 %v291
    %v317 = vcvt.s32.f32 %v292
    %v318 = vcvt.s32.f32 %v293
    %v319 = vcvt.s32.f32 %v294
    %v320 = vcvt.s32.f32 %v295
    %v321 = vcvt.s32.f32 %v296
    %v322 = vcvt.s32.f32 %v297
    %v323 = vcvt.s32.f32 %v298
    %v324 = vcvt.s32.f32 %v299
    %v325 = vcvt.s32.f32 %v300
    %v326 = vcvt.s32.f32 %v301
    %v327 = vcvt.s32.f32 %v302
    %v328 = vcvt.s32.f32 %v303
    %v329 = vcvt.s32.f32 %v304
    %v330 = vcvt.s32.f32 %v305
    %v331 = vcvt.s32.f32 %v306
    %v332 = vcvt.s32.f32 %v307
    %v333 = vcvt.s32.f32 %v308
    %v334 = vcvt.s32.f32 %v309
    %v335 = vcvt.s32.f32 %v310
    %v336 = vcvt.s32.f32 %v311
    %v337 = vcvt.s32.f32 %v312
    %v338 = vcvt.s32.f32 %v313
    %v339 = vcvt.s32.f32 %v314
    %v340 = vcvt.s32.f32 %v315
    %v341 = vadd.s32 %v264, 5
    %vm342 = vcmp.eq.s32.totalorder %v41, %v341
    %vm343 = vcmp.eq.s32.totalorder %v42, %v341
    %vm344 = vcmp.eq.s32.totalorder %v43, %v341
    %vm345 = vcmp.eq.s32.totalorder %v44, %v341
    %vm346 = vcmp.eq.s32.totalorder %v45, %v341
    %vm347 = vcmp.eq.s32.totalorder %v46, %v341
    %vm348 = vcmp.eq.s32.totalorder %v47, %v341
    %vm349 = vcmp.eq.s32.totalorder %v48, %v341
    %vm350 = vcmp.eq.s32.totalorder %v49, %v341
    %vm351 = vcmp.eq.s32.totalorder %v50, %v341
    %vm352 = vcmp.eq.s32.totalorder %v51, %v341
    %vm353 = vcmp.eq.s32.totalorder %v52, %v341
    %vm354 = vcmp.eq.s32.totalorder %v53, %v341
    %vm355 = vcmp.eq.s32.totalorder %v252, %v341
    %vm356 = vcmp.eq.s32.totalorder %v253, %v341
    %vm357 = vcmp.eq.s32.totalorder %v254, %v341
    %vm358 = vcmp.eq.s32.totalorder %v255, %v341
    %vm359 = vcmp.eq.s32.totalorder %v256, %v341
    %vm360 = vcmp.eq.s32.totalorder %v257, %v341
    %vm361 = vcmp.eq.s32.totalorder %v258, %v341
    %vm362 = vcmp.eq.s32.totalorder %v259, %v341
    %vm363 = vcmp.eq.s32.totalorder %v260, %v341
    %vm364 = vcmp.eq.s32.totalorder %v261, %v341
    %vm365 = vcmp.eq.s32.totalorder %v262, %v341
    %vm366 = vcmp.eq.s32.totalorder %v263, %v341
    %v367 = vsel %vm342, 1, 0
    %v368 = vsel %vm343, 1, 0
    %v369 = vsel %vm344, 1, 0
    %v370 = vsel %vm345, 1, 0
    %v371 = vsel %vm346, 1, 0
    %v372 = vsel %vm347, 1, 0
    %v373 = vsel %vm348, 1, 0
    %v374 = vsel %vm349, 1, 0
    %v375 = vsel %vm350, 1, 0
    %v376 = vsel %vm351, 1, 0
    %v377 = vsel %vm352, 1, 0
    %v378 = vsel %vm353, 1, 0
    %v379 = vsel %vm354, 1, 0
    %v380 = vsel %vm355, 1, 0
    %v381 = vsel %vm356, 1, 0
    %v382 = vsel %vm357, 1, 0
    %v383 = vsel %vm358, 1, 0
    %v384 = vsel %vm359, 1, 0
    %v385 = vsel %vm360, 1, 0
    %v386 = vsel %vm361, 1, 0
    %v387 = vsel %vm362, 1, 0
    %v388 = vsel %vm363, 1, 0
    %v389 = vsel %vm364, 1, 0
    %v390 = vsel %vm365, 1, 0
    %v391 = vsel %vm366, 1, 0
    %v392 = vcvt.s32.f32 %v367
    %v393 = vcvt.s32.f32 %v368
    %v394 = vcvt.s32.f32 %v369
    %v395 = vcvt.s32.f32 %v370
    %v396 = vcvt.s32.f32 %v371
    %v397 = vcvt.s32.f32 %v372
    %v398 = vcvt.s32.f32 %v373
    %v399 = vcvt.s32.f32 %v374
    %v400 = vcvt.s32.f32 %v375
    %v401 = vcvt.s32.f32 %v376
    %v402 = vcvt.s32.f32 %v377
    %v403 = vcvt.s32.f32 %v378
    %v404 = vcvt.s32.f32 %v379
    %v405 = vcvt.s32.f32 %v380
    %v406 = vcvt.s32.f32 %v381
    %v407 = vcvt.s32.f32 %v382
    %v408 = vcvt.s32.f32 %v383
    %v409 = vcvt.s32.f32 %v384
    %v410 = vcvt.s32.f32 %v385
    %v411 = vcvt.s32.f32 %v386
    %v412 = vcvt.s32.f32 %v387
    %v413 = vcvt.s32.f32 %v388
    %v414 = vcvt.s32.f32 %v389
    %v415 = vcvt.s32.f32 %v390
    %v416 = vcvt.s32.f32 %v391
    %vm417 = vcmp.eq.s32.totalorder %v55, %v57
    %vm418 = vcmp.eq.s32.totalorder %v55, %v58
    %vm419 = vcmp.eq.s32.totalorder %v55, %v59
    %vm420 = vcmp.eq.s32.totalorder %v55, %v60
    %vm421 = vcmp.eq.s32.totalorder %v55, %v61
    %vm422 = vcmp.eq.s32.totalorder %v55, %v62
    %v423 = vsel %vm417, 1, 0
    %v424 = vsel %vm418, 1, 0
    %v425 = vsel %vm419, 1, 0
    %v426 = vsel %vm420, 1, 0
    %v427 = vsel %vm421, 1, 0
    %v428 = vsel %vm422, 1, 0
    %v429 = vcvt.s32.f32 %v423
    %v430 = vcvt.s32.f32 %v424
    %v431 = vcvt.s32.f32 %v425
    %v432 = vcvt.s32.f32 %v426
    %v433 = vcvt.s32.f32 %v427
    %v434 = vcvt.s32.f32 %v428
    %v435 = vadd.s32 %v57, 1
    %v436 = vadd.s32 %v58, 1
    %v437 = vadd.s32 %v59, 1
    %v438 = vadd.s32 %v60, 1
    %v439 = vadd.s32 %v61, 1
    %v440 = vadd.s32 %v62, 1
    %vm441 = vcmp.eq.s32.totalorder %v55, %v435
    %vm442 = vcmp.eq.s32.totalorder %v55, %v436
    %vm443 = vcmp.eq.s32.totalorder %v55, %v437
    %vm444 = vcmp.eq.s32.totalorder %v55, %v438
    %vm445 = vcmp.eq.s32.totalorder %v55, %v439
    %vm446 = vcmp.eq.s32.totalorder %v55, %v440
    %v447 = vsel %vm441, 1, 0
    %v448 = vsel %vm442, 1, 0
    %v449 = vsel %vm443, 1, 0
    %v450 = vsel %vm444, 1, 0
    %v451 = vsel %vm445, 1, 0
    %v452 = vsel %vm446, 1, 0
    %v453 = vcvt.s32.f32 %v447
    %v454 = vcvt.s32.f32 %v448
    %v455 = vcvt.s32.f32 %v449
    %v456 = vcvt.s32.f32 %v450
    %v457 = vcvt.s32.f32 %v451
    %v458 = vcvt.s32.f32 %v452
    %vm459 = vcmp.eq.s32.totalorder %v41, %v264
    %vm460 = vcmp.eq.s32.totalorder %v42, %v264
    %vm461 = vcmp.eq.s32.totalorder %v43, %v264
    %vm462 = vcmp.eq.s32.totalorder %v44, %v264
    %vm463 = vcmp.eq.s32.totalorder %v45, %v264
    %vm464 = vcmp.eq.s32.totalorder %v46, %v264
    %vm465 = vcmp.eq.s32.totalorder %v47, %v264
    %vm466 = vcmp.eq.s32.totalorder %v48, %v264
    %vm467 = vcmp.eq.s32.totalorder %v49, %v264
    %vm468 = vcmp.eq.s32.totalorder %v50, %v264
    %vm469 = vcmp.eq.s32.totalorder %v51, %v264
    %vm470 = vcmp.eq.s32.totalorder %v52, %v264
    %v471 = vsel %vm459, 1, 0
    %v472 = vsel %vm460, 1, 0
    %v473 = vsel %vm461, 1, 0
    %v474 = vsel %vm462, 1, 0
    %v475 = vsel %vm463, 1, 0
    %v476 = vsel %vm464, 1, 0
    %v477 = vsel %vm465, 1, 0
    %v478 = vsel %vm466, 1, 0
    %v479 = vsel %vm467, 1, 0
    %v480 = vsel %vm468, 1, 0
    %v481 = vsel %vm469, 1, 0
    %v482 = vsel %vm470, 1, 0
    %v483 = vcvt.s32.f32 %v471
    %v484 = vcvt.s32.f32 %v472
    %v485 = vcvt.s32.f32 %v473
    %v486 = vcvt.s32.f32 %v474
    %v487 = vcvt.s32.f32 %v475
    %v488 = vcvt.s32.f32 %v476
    %v489 = vcvt.s32.f32 %v477
    %v490 = vcvt.s32.f32 %v478
    %v491 = vcvt.s32.f32 %v479
    %v492 = vcvt.s32.f32 %v480
    %v493 = vcvt.s32.f32 %v481
    %v494 = vcvt.s32.f32 %v482
    %v495 = vadd.s32 %v264, 1
    %vm496 = vcmp.eq.s32.totalorder %v41, %v495
    %vm497 = vcmp.eq.s32.totalorder %v42, %v495
    %vm498 = vcmp.eq.s32.totalorder %v43, %v495
    %vm499 = vcmp.eq.s32.totalorder %v44, %v495
    %vm500 = vcmp.eq.s32.totalorder %v45, %v495
    %vm501 = vcmp.eq.s32.totalorder %v46, %v495
    %vm502 = vcmp.eq.s32.totalorder %v47, %v495
    %vm503 = vcmp.eq.s32.totalorder %v48, %v495
    %vm504 = vcmp.eq.s32.totalorder %v49, %v495
    %vm505 = vcmp.eq.s32.totalorder %v50, %v495
    %vm506 = vcmp.eq.s32.totalorder %v51, %v495
    %vm507 = vcmp.eq.s32.totalorder %v52, %v495
    %v508 = vsel %vm496, 1, 0
    %v509 = vsel %vm497, 1, 0
    %v510 = vsel %vm498, 1, 0
    %v511 = vsel %vm499, 1, 0
    %v512 = vsel %vm500, 1, 0
    %v513 = vsel %vm501, 1, 0
    %v514 = vsel %vm502, 1, 0
    %v515 = vsel %vm503, 1, 0
    %v516 = vsel %vm504, 1, 0
    %v517 = vsel %vm505, 1, 0
    %v518 = vsel %vm506, 1, 0
    %v519 = vsel %vm507, 1, 0
    %v520 = vcvt.s32.f32 %v508
    %v521 = vcvt.s32.f32 %v509
    %v522 = vcvt.s32.f32 %v510
    %v523 = vcvt.s32.f32 %v511
    %v524 = vcvt.s32.f32 %v512
    %v525 = vcvt.s32.f32 %v513
    %v526 = vcvt.s32.f32 %v514
    %v527 = vcvt.s32.f32 %v515
    %v528 = vcvt.s32.f32 %v516
    %v529 = vcvt.s32.f32 %v517
    %v530 = vcvt.s32.f32 %v518
    %v531 = vcvt.s32.f32 %v519
    %s532 = sld [smem:[#allocation6]]
    %s533 = sld [smem:[#allocation6 + $0x1]]
    %s534 = sld [smem:[#allocation6 + $0x2]]
    %s535 = sld [smem:[#allocation6 + $0x3]]
    %s536 = sld [smem:[#allocation6 + $0x4]]
    %s537 = sld [smem:[#allocation6 + $0x80]]
    %s538 = sld [smem:[#allocation6 + $0x81]]
    %s539 = sld [smem:[#allocation6 + $0x82]]
    %s540 = sld [smem:[#allocation6 + $0x83]]
    %s541 = sld [smem:[#allocation6 + $0x84]]
    %s542 = sld [smem:[#allocation6 + $0x100]]
    %s543 = sld [smem:[#allocation6 + $0x101]]
    %s544 = sld [smem:[#allocation6 + $0x102]]
    %s545 = sld [smem:[#allocation6 + $0x103]]
    %s546 = sld [smem:[#allocation6 + $0x104]]
    %s547 = sld [smem:[#allocation6 + $0x180]]
    %s548 = sld [smem:[#allocation6 + $0x181]]
    %s549 = sld [smem:[#allocation6 + $0x182]]
    %s550 = sld [smem:[#allocation6 + $0x183]]
    %s551 = sld [smem:[#allocation6 + $0x184]]
    %s552 = sld [smem:[#allocation6 + $0x200]]
    %s553 = sld [smem:[#allocation6 + $0x201]]
    %s554 = sld [smem:[#allocation6 + $0x202]]
    %s555 = sld [smem:[#allocation6 + $0x203]]
    %s556 = sld [smem:[#allocation6 + $0x204]]
    %s557 = sld [smem:[#allocation2]]
    %v558 = vld [vmem:[#allocation3] sm:$0xff]
    %v559 = vld [vmem:[#allocation3 + $0x8] sm:$0xff]
    %v560 = vld [vmem:[#allocation3 + $0x10] sm:$0xff]
    %v561 = vld [vmem:[#allocation3 + $0x18] sm:$0xff]
    %v562 = vld [vmem:[#allocation3 + $0x20] sm:$0xff]
    %v563 = vld [vmem:[#allocation3 + $0x28] sm:$0xff]
    %v564 = vld [vmem:[#allocation3 + $0x30] sm:$0xff]
    %v565 = vld [vmem:[#allocation3 + $0x38] sm:$0xff]
    %v566 = vld [vmem:[#allocation3 + $0x40] sm:$0xff]
    %v567 = vld [vmem:[#allocation3 + $0x48] sm:$0xff]
    %v568 = vld [vmem:[#allocation3 + $0x50] sm:$0xff]
    %v569 = vld [vmem:[#allocation3 + $0x58] sm:$0xff]
    %v570 = vld [vmem:[#allocation3 + $0x60] sm:$0xff]
    %v571 = vld [vmem:[#allocation3 + $0x68] sm:$0xff]
    %v572 = vld [vmem:[#allocation3 + $0x70] sm:$0xff]
    %v573 = vld [vmem:[#allocation3 + $0x78] sm:$0xff]
    %v574 = vld [vmem:[#allocation3 + $0x80] sm:$0xff]
    %v575 = vld [vmem:[#allocation3 + $0x88] sm:$0xff]
    %v576 = vld [vmem:[#allocation3 + $0x90] sm:$0xff]
    %v577 = vld [vmem:[#allocation3 + $0x98] sm:$0xff]
    %v578 = vld [vmem:[#allocation3 + $0xa0] sm:$0xff]
    %v579 = vld [vmem:[#allocation3 + $0xa8] sm:$0xff]
    %v580 = vld [vmem:[#allocation3 + $0xb0] sm:$0xff]
    %v581 = vld [vmem:[#allocation3 + $0xb8] sm:$0xff]
    %v582 = vld [vmem:[#allocation3 + $0xc0] sm:$0xff]
    %v583 = vld [vmem:[#allocation3 + $0xc8] sm:$0xff]
    %v584 = vld [vmem:[#allocation3 + $0xd0] sm:$0xff]
    %v585 = vld [vmem:[#allocation3 + $0xd8] sm:$0xff]
    %v586 = vld [vmem:[#allocation3 + $0xe0] sm:$0xff]
    %v587 = vld [vmem:[#allocation3 + $0xe8] sm:$0xff]
    %v588 = vld [vmem:[#allocation3 + $0xf0] sm:$0xff]
    %v589 = vld [vmem:[#allocation3 + $0xf8] sm:$0xff]
    %v590 = vld [vmem:[#allocation3 + $0x100] sm:$0xff]
    %v591 = vld [vmem:[#allocation3 + $0x108] sm:$0xff]
    %v592 = vld [vmem:[#allocation3 + $0x110] sm:$0xff]
    %v593 = vld [vmem:[#allocation3 + $0x118] sm:$0xff]
    %v594 = vld [vmem:[#allocation3 + $0x120] sm:$0xff]
    %v595 = vld [vmem:[#allocation3 + $0x128] sm:$0xff]
    %v596 = vld [vmem:[#allocation3 + $0x130] sm:$0xff]
    %v597 = vld [vmem:[#allocation3 + $0x138] sm:$0xff]
    %v598 = vld [vmem:[#allocation3 + $0x140] sm:$0xff]
    %v599 = vld [vmem:[#allocation3 + $0x148] sm:$0xff]
    %v600 = vld [vmem:[#allocation3 + $0x150] sm:$0xff]
    %v601 = vld [vmem:[#allocation3 + $0x158] sm:$0xff]
    %v602 = vld [vmem:[#allocation3 + $0x160] sm:$0xff]
    %v603 = vld [vmem:[#allocation3 + $0x168] sm:$0xff]
    %v604 = vld [vmem:[#allocation3 + $0x170] sm:$0xff]
    %v605 = vld [vmem:[#allocation3 + $0x178] sm:$0xff]
    %v606 = vld [vmem:[#allocation3 + $0x180] sm:$0xff]
    %v607 = vld [vmem:[#allocation3 + $0x188] sm:$0xff]
    %vm608 = vcmask 588800
    %v610 = vsel %vm608, %v136, 0
    %v613 = vsel %vm608, %v138, 0
    %v616 = vsel %vm608, %v140, 0
    %v619 = vsel %vm608, %v142, 0
    %v622 = vsel %vm608, %v144, 0
    %v625 = vsel %vm608, %v146, 0
    %v628 = vsel %vm608, %v148, 0
    %v631 = vsel %vm608, %v150, 0
    %v634 = vsel %vm608, %v152, 0
    %v637 = vsel %vm608, %v154, 0
    %v640 = vsel %vm608, %v156, 0
    %v643 = vsel %vm608, %v158, 0
    %v646 = vsel %vm608, %v160, 0
    %648 = vmatprep.subr.mxu0 %v559
    %649 = vmatpush1.msra.mxu0 %v558
    %650 = vmatprep.subr.mxu0 %v561
    %651 = vmatpush1.msra.mxu0 %v560
    %652 = vmatprep.subr.mxu0 %v563
    %653 = vmatpush1.msra.mxu0 %v562
    %654 = vmatprep.subr.mxu0 %v565
    %655 = vmatpush1.msra.mxu0 %v564
    %656 = vmatprep.subr.mxu0 %v567
    %657 = vmatpush1.msra.mxu0 %v566
    %658 = vmatprep.subr.mxu0 %v569
    %659 = vmatpush1.msra.mxu0 %v568
    %660 = vmatprep.subr.mxu0 %v571
    %661 = vmatpush1.msra.mxu0 %v570
    %662 = vmatprep.subr.mxu0 %v573
    %663 = vmatpush1.msra.mxu0 %v572
    %664 = vmatprep.subr.mxu0 %v575
    %665 = vmatpush1.msra.mxu0 %v574
    %666 = vmatprep.subr.mxu0 %v577
    %667 = vmatpush1.msra.mxu0 %v576
    %668 = vmatprep.subr.mxu0 %v579
    %669 = vmatpush1.msra.mxu0 %v578
    %670 = vmatprep.subr.mxu0 %v581
    %671 = vmatpush1.msra.mxu0 %v580
    %672 = vmatprep.subr.mxu0 %v583
    %673 = vmatpush1.msra.mxu0 %v582
    %674 = vmatprep.subr.mxu0 %v585
    %675 = vmatpush1.msra.mxu0 %v584
    %676 = vmatprep.subr.mxu0 %v587
    %677 = vmatpush1.msra.mxu0 %v586
    %678 = vmatprep.subr.mxu0 %v589
    %679 = vmatpush1.msra.mxu0 %v588
    %680 = vmatprep.subr.mxu0 %v591
    %681 = vmatpush1.msra.mxu0 %v590
    %682 = vmatprep.subr.mxu0 %v593
    %683 = vmatpush1.msra.mxu0 %v592
    %684 = vmatprep.subr.mxu0 %v595
    %685 = vmatpush1.msra.mxu0 %v594
    %686 = vmatprep.subr.mxu0 %v597
    %687 = vmatpush1.msra.mxu0 %v596
    %688 = vmatprep.subr.mxu0 %v599
    %689 = vmatpush1.msra.mxu0 %v598
    %690 = vmatprep.subr.mxu0 %v601
    %691 = vmatpush1.msra.mxu0 %v600
    %692 = vmatprep.subr.mxu0 %v603
    %693 = vmatpush1.msra.mxu0 %v602
    %694 = vmatprep.subr.mxu0 %v605
    %695 = vmatpush1.msra.mxu0 %v604
    %696 = vmatprep.subr.mxu0 %v607
    %697 = vmatpush1.msra.mxu0 %v606
    %698 = vmatprep.subr.mxu0 0.0
    %699 = vmatpush1.msra.mxu0 0.0
    %700 = vmatprep.subr.mxu0 0.0
    %701 = vmatpush1.msra.mxu0 0.0
    %702 = vmatprep.subr.mxu0 0.0
    %703 = vmatpush1.msra.mxu0 0.0
    %704 = vmatprep.subr.mxu0 0.0
    %705 = vmatpush1.msra.mxu0 0.0
    %706 = vmatprep.subr.mxu0 0.0
    %707 = vmatpush1.msra.mxu0 0.0
    %708 = vmatprep.subr.mxu0 0.0
    %709 = vmatpush1.msra.mxu0 0.0
    %710 = vmatprep.subr.mxu0 0.0
    %711 = vmatpush1.msra.mxu0 0.0
    %712 = vmatprep.mubr.f32.mxu0 %v610
    %713 = vmatmul.mubr.f32.gmra.mrb[0].mxu0 %v135
    %v714 = vpop.f32.mrb[0].mxu0
    %v715 = vadd.f32 0.0, %v714
    %v716 = vpop.f32.mrb[0].mxu0
    %v717 = vadd.f32 0.0, %v716
    %718 = vmatprep.mubr.f32.mxu0 %v613
    %719 = vmatmul.mubr.f32.gmra.mrb[0].mxu0 %v137
    %v720 = vpop.f32.mrb[0].mxu0
    %v721 = vadd.f32 0.0, %v720
    %v722 = vpop.f32.mrb[0].mxu0
    %v723 = vadd.f32 0.0, %v722
    %724 = vmatprep.mubr.f32.mxu0 %v616
    %725 = vmatmul.mubr.f32.gmra.mrb[0].mxu0 %v139
    %v726 = vpop.f32.mrb[0].mxu0
    %v727 = vadd.f32 0.0, %v726
    %v728 = vpop.f32.mrb[0].mxu0
    %v729 = vadd.f32 0.0, %v728
    %730 = vmatprep.mubr.f32.mxu0 %v619
    %731 = vmatmul.mubr.f32.gmra.mrb[0].mxu0 %v141
    %v732 = vpop.f32.mrb[0].mxu0
    %v733 = vadd.f32 0.0, %v732
    %v734 = vpop.f32.mrb[0].mxu0
    %v735 = vadd.f32 0.0, %v734
    %736 = vmatprep.mubr.f32.mxu0 %v622
    %737 = vmatmul.mubr.f32.gmra.mrb[0].mxu0 %v143
    %v738 = vpop.f32.mrb[0].mxu0
    %v739 = vadd.f32 0.0, %v738
    %v740 = vpop.f32.mrb[0].mxu0
    %v741 = vadd.f32 0.0, %v740
    %742 = vmatprep.mubr.f32.mxu0 %v625
    %743 = vmatmul.mubr.f32.gmra.mrb[0].mxu0 %v145
    %v744 = vpop.f32.mrb[0].mxu0
    %v745 = vadd.f32 0.0, %v744
    %v746 = vpop.f32.mrb[0].mxu0
    %v747 = vadd.f32 0.0, %v746
    %748 = vmatprep.mubr.f32.mxu0 %v628
    %749 = vmatmul.mubr.f32.gmra.mrb[0].mxu0 %v147
    %v750 = vpop.f32.mrb[0].mxu0
    %v751 = vadd.f32 0.0, %v750
    %v752 = vpop.f32.mrb[0].mxu0
    %v753 = vadd.f32 0.0, %v752
    %754 = vmatprep.mubr.f32.mxu0 %v631
    %755 = vmatmul.mubr.f32.gmra.mrb[0].mxu0 %v149
    %v756 = vpop.f32.mrb[0].mxu0
    %v757 = vadd.f32 0.0, %v756
    %v758 = vpop.f32.mrb[0].mxu0
    %v759 = vadd.f32 0.0, %v758
    %760 = vmatprep.mubr.f32.mxu0 %v634
    %761 = vmatmul.mubr.f32.gmra.mrb[0].mxu0 %v151
    %v762 = vpop.f32.mrb[0].mxu0
    %v763 = vadd.f32 0.0, %v762
    %v764 = vpop.f32.mrb[0].mxu0
    %v765 = vadd.f32 0.0, %v764
    %766 = vmatprep.mubr.f32.mxu0 %v637
    %767 = vmatmul.mubr.f32.gmra.mrb[0].mxu0 %v153
    %v768 = vpop.f32.mrb[0].mxu0
    %v769 = vadd.f32 0.0, %v768
    %v770 = vpop.f32.mrb[0].mxu0
    %v771 = vadd.f32 0.0, %v770
    %772 = vmatprep.mubr.f32.mxu0 %v640
    %773 = vmatmul.mubr.f32.gmra.mrb[0].mxu0 %v155
    %v774 = vpop.f32.mrb[0].mxu0
    %v775 = vadd.f32 0.0, %v774
    %v776 = vpop.f32.mrb[0].mxu0
    %v777 = vadd.f32 0.0, %v776
    %778 = vmatprep.mubr.f32.mxu0 %v643
    %779 = vmatmul.mubr.f32.gmra.mrb[0].mxu0 %v157
    %v780 = vpop.f32.mrb[0].mxu0
    %v781 = vadd.f32 0.0, %v780
    %v782 = vpop.f32.mrb[0].mxu0
    %v783 = vadd.f32 0.0, %v782
    %784 = vmatprep.mubr.f32.mxu0 %v646
    %785 = vmatmul.mubr.f32.gmra.mrb[0].mxu0 %v159
    %v786 = vpop.f32.mrb[0].mxu0
    %v787 = vadd.f32 0.0, %v786
    %v788 = vpop.f32.mrb[0].mxu0
    %v789 = vadd.f32 0.0, %v788
    %790 = vdwg.mxu0
    %v792 = vsel %vm608, %v227, 0
    %v795 = vsel %vm608, %v229, 0
    %v798 = vsel %vm608, %v231, 0
    %v801 = vsel %vm608, %v233, 0
    %v804 = vsel %vm608, %v235, 0
    %v807 = vsel %vm608, %v237, 0
    %v810 = vsel %vm608, %v239, 0
    %v813 = vsel %vm608, %v241, 0
    %v816 = vsel %vm608, %v243, 0
    %v819 = vsel %vm608, %v245, 0
    %v822 = vsel %vm608, %v247, 0
    %v825 = vsel %vm608, %v249, 0
    %v828 = vsel %vm608, %v251, 0
    %830 = vmatprep.subr.mxu0 %v559
    %831 = vmatpush1.msra.mxu0 %v558
    %832 = vmatprep.subr.mxu0 %v561
    %833 = vmatpush1.msra.mxu0 %v560
    %834 = vmatprep.subr.mxu0 %v563
    %835 = vmatpush1.msra.mxu0 %v562
    %836 = vmatprep.subr.mxu0 %v565
    %837 = vmatpush1.msra.mxu0 %v564
    %838 = vmatprep.subr.mxu0 %v567
    %839 = vmatpush1.msra.mxu0 %v566
    %840 = vmatprep.subr.mxu0 %v569
    %841 = vmatpush1.msra.mxu0 %v568
    %842 = vmatprep.subr.mxu0 %v571
    %843 = vmatpush1.msra.mxu0 %v570
    %844 = vmatprep.subr.mxu0 %v573
    %845 = vmatpush1.msra.mxu0 %v572
    %846 = vmatprep.subr.mxu0 %v575
    %847 = vmatpush1.msra.mxu0 %v574
    %848 = vmatprep.subr.mxu0 %v577
    %849 = vmatpush1.msra.mxu0 %v576
    %850 = vmatprep.subr.mxu0 %v579
    %851 = vmatpush1.msra.mxu0 %v578
    %852 = vmatprep.subr.mxu0 %v581
    %853 = vmatpush1.msra.mxu0 %v580
    %854 = vmatprep.subr.mxu0 %v583
    %855 = vmatpush1.msra.mxu0 %v582
    %856 = vmatprep.subr.mxu0 %v585
    %857 = vmatpush1.msra.mxu0 %v584
    %858 = vmatprep.subr.mxu0 %v587
    %859 = vmatpush1.msra.mxu0 %v586
    %860 = vmatprep.subr.mxu0 %v589
    %861 = vmatpush1.msra.mxu0 %v588
    %862 = vmatprep.subr.mxu0 %v591
    %863 = vmatpush1.msra.mxu0 %v590
    %864 = vmatprep.subr.mxu0 %v593
    %865 = vmatpush1.msra.mxu0 %v592
    %866 = vmatprep.subr.mxu0 %v595
    %867 = vmatpush1.msra.mxu0 %v594
    %868 = vmatprep.subr.mxu0 %v597
    %869 = vmatpush1.msra.mxu0 %v596
    %870 = vmatprep.subr.mxu0 %v599
    %871 = vmatpush1.msra.mxu0 %v598
    %872 = vmatprep.subr.mxu0 %v601
    %873 = vmatpush1.msra.mxu0 %v600
    %874 = vmatprep.subr.mxu0 %v603
    %875 = vmatpush1.msra.mxu0 %v602
    %876 = vmatprep.subr.mxu0 %v605
    %877 = vmatpush1.msra.mxu0 %v604
    %878 = vmatprep.subr.mxu0 %v607
    %879 = vmatpush1.msra.mxu0 %v606
    %880 = vmatprep.subr.mxu0 0.0
    %881 = vmatpush1.msra.mxu0 0.0
    %882 = vmatprep.subr.mxu0 0.0
    %883 = vmatpush1.msra.mxu0 0.0
    %884 = vmatprep.subr.mxu0 0.0
    %885 = vmatpush1.msra.mxu0 0.0
    %886 = vmatprep.subr.mxu0 0.0
    %887 = vmatpush1.msra.mxu0 0.0
    %888 = vmatprep.subr.mxu0 0.0
    %889 = vmatpush1.msra.mxu0 0.0
    %890 = vmatprep.subr.mxu0 0.0
    %891 = vmatpush1.msra.mxu0 0.0
    %892 = vmatprep.subr.mxu0 0.0
    %893 = vmatpush1.msra.mxu0 0.0
    %894 = vmatprep.mubr.f32.mxu0 %v792
    %895 = vmatmul.mubr.f32.gmra.mrb[0].mxu0 %v226
    %v896 = vpop.f32.mrb[0].mxu0
    %v897 = vadd.f32 0.0, %v896
    %v898 = vpop.f32.mrb[0].mxu0
    %v899 = vadd.f32 0.0, %v898
    %900 = vmatprep.mubr.f32.mxu0 %v795
    %901 = vmatmul.mubr.f32.gmra.mrb[0].mxu0 %v228
    %v902 = vpop.f32.mrb[0].mxu0
    %v903 = vadd.f32 0.0, %v902
    %v904 = vpop.f32.mrb[0].mxu0
    %v905 = vadd.f32 0.0, %v904
    %906 = vmatprep.mubr.f32.mxu0 %v798
    %907 = vmatmul.mubr.f32.gmra.mrb[0].mxu0 %v230
    %v908 = vpop.f32.mrb[0].mxu0
    %v909 = vadd.f32 0.0, %v908
    %v910 = vpop.f32.mrb[0].mxu0
    %v911 = vadd.f32 0.0, %v910
    %912 = vmatprep.mubr.f32.mxu0 %v801
    %913 = vmatmul.mubr.f32.gmra.mrb[0].mxu0 %v232
    %v914 = vpop.f32.mrb[0].mxu0
    %v915 = vadd.f32 0.0, %v914
    %v916 = vpop.f32.mrb[0].mxu0
    %v917 = vadd.f32 0.0, %v916
    %918 = vmatprep.mubr.f32.mxu0 %v804
    %919 = vmatmul.mubr.f32.gmra.mrb[0].mxu0 %v234
    %v920 = vpop.f32.mrb[0].mxu0
    %v921 = vadd.f32 0.0, %v920
    %v922 = vpop.f32.mrb[0].mxu0
    %v923 = vadd.f32 0.0, %v922
    %924 = vmatprep.mubr.f32.mxu0 %v807
    %925 = vmatmul.mubr.f32.gmra.mrb[0].mxu0 %v236
    %v926 = vpop.f32.mrb[0].mxu0
    %v927 = vadd.f32 0.0, %v926
    %v928 = vpop.f32.mrb[0].mxu0
    %v929 = vadd.f32 0.0, %v928
    %930 = vmatprep.mubr.f32.mxu0 %v810
    %931 = vmatmul.mubr.f32.gmra.mrb[0].mxu0 %v238
    %v932 = vpop.f32.mrb[0].mxu0
    %v933 = vadd.f32 0.0, %v932
    %v934 = vpop.f32.mrb[0].mxu0
    %v935 = vadd.f32 0.0, %v934
    %936 = vmatprep.mubr.f32.mxu0 %v813
    %937 = vmatmul.mubr.f32.gmra.mrb[0].mxu0 %v240
    %v938 = vpop.f32.mrb[0].mxu0
    %v939 = vadd.f32 0.0, %v938
    %v940 = vpop.f32.mrb[0].mxu0
    %v941 = vadd.f32 0.0, %v940
    %942 = vmatprep.mubr.f32.mxu0 %v816
    %943 = vmatmul.mubr.f32.gmra.mrb[0].mxu0 %v242
    %v944 = vpop.f32.mrb[0].mxu0
    %v945 = vadd.f32 0.0, %v944
    %v946 = vpop.f32.mrb[0].mxu0
    %v947 = vadd.f32 0.0, %v946
    %948 = vmatprep.mubr.f32.mxu0 %v819
    %949 = vmatmul.mubr.f32.gmra.mrb[0].mxu0 %v244
    %v950 = vpop.f32.mrb[0].mxu0
    %v951 = vadd.f32 0.0, %v950
    %v952 = vpop.f32.mrb[0].mxu0
    %v953 = vadd.f32 0.0, %v952
    %954 = vmatprep.mubr.f32.mxu0 %v822
    %955 = vmatmul.mubr.f32.gmra.mrb[0].mxu0 %v246
    %v956 = vpop.f32.mrb[0].mxu0
    %v957 = vadd.f32 0.0, %v956
    %v958 = vpop.f32.mrb[0].mxu0
    %v959 = vadd.f32 0.0, %v958
    %960 = vmatprep.mubr.f32.mxu0 %v825
    %961 = vmatmul.mubr.f32.gmra.mrb[0].mxu0 %v248
    %v962 = vpop.f32.mrb[0].mxu0
    %v963 = vadd.f32 0.0, %v962
    %v964 = vpop.f32.mrb[0].mxu0
    %v965 = vadd.f32 0.0, %v964
    %966 = vmatprep.mubr.f32.mxu0 %v828
    %967 = vmatmul.mubr.f32.gmra.mrb[0].mxu0 %v250
    %v968 = vpop.f32.mrb[0].mxu0
    %v969 = vadd.f32 0.0, %v968
    %v970 = vpop.f32.mrb[0].mxu0
    %v971 = vadd.f32 0.0, %v970
    %972 = vdwg.mxu0
    %v973 = vmax.f32 %v715, %v897
    %v974 = vmax.f32 %v717, %v899
    %v975 = vmax.f32 %v721, %v903
    %v976 = vmax.f32 %v723, %v905
    %v977 = vmax.f32 %v727, %v909
    %v978 = vmax.f32 %v729, %v911
    %v979 = vmax.f32 %v733, %v915
    %v980 = vmax.f32 %v735, %v917
    %v981 = vmax.f32 %v739, %v921
    %v982 = vmax.f32 %v741, %v923
    %v983 = vmax.f32 %v745, %v927
    %v984 = vmax.f32 %v747, %v929
    %v985 = vmax.f32 %v751, %v933
    %v986 = vmax.f32 %v753, %v935
    %v987 = vmax.f32 %v757, %v939
    %v988 = vmax.f32 %v759, %v941
    %v989 = vmax.f32 %v763, %v945
    %v990 = vmax.f32 %v765, %v947
    %v991 = vmax.f32 %v769, %v951
    %v992 = vmax.f32 %v771, %v953
    %v993 = vmax.f32 %v775, %v957
    %v994 = vmax.f32 %v777, %v959
    %v995 = vmax.f32 %v781, %v963
    %v996 = vmax.f32 %v783, %v965
    %v997 = vmax.f32 %v787, %v969
    %v998 = vmax.f32 %v789, %v971
    %v1000 = vsel %vm608, %v974, 0
    %v1003 = vsel %vm608, %v976, 0
    %v1006 = vsel %vm608, %v978, 0
    %v1009 = vsel %vm608, %v980, 0
    %v1012 = vsel %vm608, %v982, 0
    %v1015 = vsel %vm608, %v984, 0
    %v1018 = vsel %vm608, %v986, 0
    %v1021 = vsel %vm608, %v988, 0
    %v1024 = vsel %vm608, %v990, 0
    %v1027 = vsel %vm608, %v992, 0
    %v1030 = vsel %vm608, %v994, 0
    %v1033 = vsel %vm608, %v996, 0
    %v1036 = vsel %vm608, %v998, 0
    %1038 = vmatprep.subr.mxu0 0.0
    %1039 = vmatpush1.msra.mxu0 %v316
    %1040 = vmatprep.subr.mxu0 0.0
    %1041 = vmatpush1.msra.mxu0 %v317
    %1042 = vmatprep.subr.mxu0 0.0
    %1043 = vmatpush1.msra.mxu0 %v318
    %1044 = vmatprep.subr.mxu0 0.0
    %1045 = vmatpush1.msra.mxu0 %v319
    %1046 = vmatprep.subr.mxu0 0.0
    %1047 = vmatpush1.msra.mxu0 %v320
    %1048 = vmatprep.subr.mxu0 0.0
    %1049 = vmatpush1.msra.mxu0 %v321
    %1050 = vmatprep.subr.mxu0 0.0
    %1051 = vmatpush1.msra.mxu0 %v322
    %1052 = vmatprep.subr.mxu0 0.0
    %1053 = vmatpush1.msra.mxu0 %v323
    %1054 = vmatprep.subr.mxu0 0.0
    %1055 = vmatpush1.msra.mxu0 %v324
    %1056 = vmatprep.subr.mxu0 0.0
    %1057 = vmatpush1.msra.mxu0 %v325
    %1058 = vmatprep.subr.mxu0 0.0
    %1059 = vmatpush1.msra.mxu0 %v326
    %1060 = vmatprep.subr.mxu0 0.0
    %1061 = vmatpush1.msra.mxu0 %v327
    %1062 = vmatprep.subr.mxu0 0.0
    %1063 = vmatpush1.msra.mxu0 %v328
    %1064 = vmatprep.subr.mxu0 0.0
    %1065 = vmatpush1.msra.mxu0 %v329
    %1066 = vmatprep.subr.mxu0 0.0
    %1067 = vmatpush1.msra.mxu0 %v330
    %1068 = vmatprep.subr.mxu0 0.0
    %1069 = vmatpush1.msra.mxu0 %v331
    %1070 = vmatprep.subr.mxu0 0.0
    %1071 = vmatpush1.msra.mxu0 %v332
    %1072 = vmatprep.subr.mxu0 0.0
    %1073 = vmatpush1.msra.mxu0 %v333
    %1074 = vmatprep.subr.mxu0 0.0
    %1075 = vmatpush1.msra.mxu0 %v334
    %1076 = vmatprep.subr.mxu0 0.0
    %1077 = vmatpush1.msra.mxu0 %v335
    %1078 = vmatprep.subr.mxu0 0.0
    %1079 = vmatpush1.msra.mxu0 %v336
    %1080 = vmatprep.subr.mxu0 0.0
    %1081 = vmatpush1.msra.mxu0 %v337
    %1082 = vmatprep.subr.mxu0 0.0
    %1083 = vmatpush1.msra.mxu0 %v338
    %1084 = vmatprep.subr.mxu0 0.0
    %1085 = vmatpush1.msra.mxu0 %v339
    %1086 = vmatprep.subr.mxu0 0.0
    %1087 = vmatpush1.msra.mxu0 %v340
    %1088 = vmatprep.subr.mxu0 0.0
    %1089 = vmatpush1.msra.mxu0 0.0
    %1090 = vmatprep.subr.mxu0 0.0
    %1091 = vmatpush1.msra.mxu0 0.0
    %1092 = vmatprep.subr.mxu0 0.0
    %1093 = vmatpush1.msra.mxu0 0.0
    %1094 = vmatprep.subr.mxu0 0.0
    %1095 = vmatpush1.msra.mxu0 0.0
    %1096 = vmatprep.subr.mxu0 0.0
    %1097 = vmatpush1.msra.mxu0 0.0
    %1098 = vmatprep.subr.mxu0 0.0
    %1099 = vmatpush1.msra.mxu0 0.0
    %1100 = vmatprep.subr.mxu0 0.0
    %1101 = vmatpush1.msra.mxu0 0.0
    %1102 = vmatprep.mubr.f32.mxu0 %v1000
    %1103 = vmatmul.mubr.f32.gmra.mrb[0].mxu0 %v973
    %v1104 = vpop.f32.mrb[0].mxu0
    %v1105 = vadd.f32 0.0, %v1104
    %v1106 = vpop.f32.mrb[0].mxu0
    %1107 = vmatprep.mubr.f32.mxu0 %v1003
    %1108 = vmatmul.mubr.f32.gmra.mrb[0].mxu0 %v975
    %v1109 = vpop.f32.mrb[0].mxu0
    %v1110 = vadd.f32 0.0, %v1109
    %v1111 = vpop.f32.mrb[0].mxu0
    %1112 = vmatprep.mubr.f32.mxu0 %v1006
    %1113 = vmatmul.mubr.f32.gmra.mrb[0].mxu0 %v977
    %v1114 = vpop.f32.mrb[0].mxu0
    %v1115 = vadd.f32 0.0, %v1114
    %v1116 = vpop.f32.mrb[0].mxu0
    %1117 = vmatprep.mubr.f32.mxu0 %v1009
    %1118 = vmatmul.mubr.f32.gmra.mrb[0].mxu0 %v979
    %v1119 = vpop.f32.mrb[0].mxu0
    %v1120 = vadd.f32 0.0, %v1119
    %v1121 = vpop.f32.mrb[0].mxu0
    %1122 = vmatprep.mubr.f32.mxu0 %v1012
    %1123 = vmatmul.mubr.f32.gmra.mrb[0].mxu0 %v981
    %v1124 = vpop.f32.mrb[0].mxu0
    %v1125 = vadd.f32 0.0, %v1124
    %v1126 = vpop.f32.mrb[0].mxu0
    %1127 = vmatprep.mubr.f32.mxu0 %v1015
    %1128 = vmatmul.mubr.f32.gmra.mrb[0].mxu0 %v983
    %v1129 = vpop.f32.mrb[0].mxu0
    %v1130 = vadd.f32 0.0, %v1129
    %v1131 = vpop.f32.mrb[0].mxu0
    %1132 = vmatprep.mubr.f32.mxu0 %v1018
    %1133 = vmatmul.mubr.f32.gmra.mrb[0].mxu0 %v985
    %v1134 = vpop.f32.mrb[0].mxu0
    %v1135 = vadd.f32 0.0, %v1134
    %v1136 = vpop.f32.mrb[0].mxu0
    %1137 = vmatprep.mubr.f32.mxu0 %v1021
    %1138 = vmatmul.mubr.f32.gmra.mrb[0].mxu0 %v987
    %v1139 = vpop.f32.mrb[0].mxu0
    %v1140 = vadd.f32 0.0, %v1139
    %v1141 = vpop.f32.mrb[0].mxu0
    %1142 = vmatprep.mubr.f32.mxu0 %v1024
    %1143 = vmatmul.mubr.f32.gmra.mrb[0].mxu0 %v989
    %v1144 = vpop.f32.mrb[0].mxu0
    %v1145 = vadd.f32 0.0, %v1144
    %v1146 = vpop.f32.mrb[0].mxu0
    %1147 = vmatprep.mubr.f32.mxu0 %v1027
    %1148 = vmatmul.mubr.f32.gmra.mrb[0].mxu0 %v991
    %v1149 = vpop.f32.mrb[0].mxu0
    %v1150 = vadd.f32 0.0, %v1149
    %v1151 = vpop.f32.mrb[0].mxu0
    %1152 = vmatprep.mubr.f32.mxu0 %v1030
    %1153 = vmatmul.mubr.f32.gmra.mrb[0].mxu0 %v993
    %v1154 = vpop.f32.mrb[0].mxu0
    %v1155 = vadd.f32 0.0, %v1154
    %v1156 = vpop.f32.mrb[0].mxu0
    %1157 = vmatprep.mubr.f32.mxu0 %v1033
    %1158 = vmatmul.mubr.f32.gmra.mrb[0].mxu0 %v995
    %v1159 = vpop.f32.mrb[0].mxu0
    %v1160 = vadd.f32 0.0, %v1159
    %v1161 = vpop.f32.mrb[0].mxu0
    %1162 = vmatprep.mubr.f32.mxu0 %v1036
    %1163 = vmatmul.mubr.f32.gmra.mrb[0].mxu0 %v997
    %v1164 = vpop.f32.mrb[0].mxu0
    %v1165 = vadd.f32 0.0, %v1164
    %v1166 = vpop.f32.mrb[0].mxu0
    %1167 = vdwg.mxu0
    %1168 = vmatprep.subr.mxu0 0.0
    %1169 = vmatpush1.msra.mxu0 %v392
    %1170 = vmatprep.subr.mxu0 0.0
    %1171 = vmatpush1.msra.mxu0 %v393
    %1172 = vmatprep.subr.mxu0 0.0
    %1173 = vmatpush1.msra.mxu0 %v394
    %1174 = vmatprep.subr.mxu0 0.0
    %1175 = vmatpush1.msra.mxu0 %v395
    %1176 = vmatprep.subr.mxu0 0.0
    %1177 = vmatpush1.msra.mxu0 %v396
    %1178 = vmatprep.subr.mxu0 0.0
    %1179 = vmatpush1.msra.mxu0 %v397
    %1180 = vmatprep.subr.mxu0 0.0
    %1181 = vmatpush1.msra.mxu0 %v398
    %1182 = vmatprep.subr.mxu0 0.0
    %1183 = vmatpush1.msra.mxu0 %v399
    %1184 = vmatprep.subr.mxu0 0.0
    %1185 = vmatpush1.msra.mxu0 %v400
    %1186 = vmatprep.subr.mxu0 0.0
    %1187 = vmatpush1.msra.mxu0 %v401
    %1188 = vmatprep.subr.mxu0 0.0
    %1189 = vmatpush1.msra.mxu0 %v402
    %1190 = vmatprep.subr.mxu0 0.0
    %1191 = vmatpush1.msra.mxu0 %v403
    %1192 = vmatprep.subr.mxu0 0.0
    %1193 = vmatpush1.msra.mxu0 %v404
    %1194 = vmatprep.subr.mxu0 0.0
    %1195 = vmatpush1.msra.mxu0 %v405
    %1196 = vmatprep.subr.mxu0 0.0
    %1197 = vmatpush1.msra.mxu0 %v406
    %1198 = vmatprep.subr.mxu0 0.0
    %1199 = vmatpush1.msra.mxu0 %v407
    %1200 = vmatprep.subr.mxu0 0.0
    %1201 = vmatpush1.msra.mxu0 %v408
    %1202 = vmatprep.subr.mxu0 0.0
    %1203 = vmatpush1.msra.mxu0 %v409
    %1204 = vmatprep.subr.mxu0 0.0
    %1205 = vmatpush1.msra.mxu0 %v410
    %1206 = vmatprep.subr.mxu0 0.0
    %1207 = vmatpush1.msra.mxu0 %v411
    %1208 = vmatprep.subr.mxu0 0.0
    %1209 = vmatpush1.msra.mxu0 %v412
    %1210 = vmatprep.subr.mxu0 0.0
    %1211 = vmatpush1.msra.mxu0 %v413
    %1212 = vmatprep.subr.mxu0 0.0
    %1213 = vmatpush1.msra.mxu0 %v414
    %1214 = vmatprep.subr.mxu0 0.0
    %1215 = vmatpush1.msra.mxu0 %v415
    %1216 = vmatprep.subr.mxu0 0.0
    %1217 = vmatpush1.msra.mxu0 %v416
    %1218 = vmatprep.subr.mxu0 0.0
    %1219 = vmatpush1.msra.mxu0 0.0
    %1220 = vmatprep.subr.mxu0 0.0
    %1221 = vmatpush1.msra.mxu0 0.0
    %1222 = vmatprep.subr.mxu0 0.0
    %1223 = vmatpush1.msra.mxu0 0.0
    %1224 = vmatprep.subr.mxu0 0.0
    %1225 = vmatpush1.msra.mxu0 0.0
    %1226 = vmatprep.subr.mxu0 0.0
    %1227 = vmatpush1.msra.mxu0 0.0
    %1228 = vmatprep.subr.mxu0 0.0
    %1229 = vmatpush1.msra.mxu0 0.0
    %1230 = vmatprep.subr.mxu0 0.0
    %1231 = vmatpush1.msra.mxu0 0.0
    %1232 = vmatprep.mubr.f32.mxu0 %v1000
    %1233 = vmatmul.mubr.f32.gmra.mrb[0].mxu0 %v973
    %v1234 = vpop.f32.mrb[0].mxu0
    %v1235 = vadd.f32 0.0, %v1234
    %v1236 = vpop.f32.mrb[0].mxu0
    %1237 = vmatprep.mubr.f32.mxu0 %v1003
    %1238 = vmatmul.mubr.f32.gmra.mrb[0].mxu0 %v975
    %v1239 = vpop.f32.mrb[0].mxu0
    %v1240 = vadd.f32 0.0, %v1239
    %v1241 = vpop.f32.mrb[0].mxu0
    %1242 = vmatprep.mubr.f32.mxu0 %v1006
    %1243 = vmatmul.mubr.f32.gmra.mrb[0].mxu0 %v977
    %v1244 = vpop.f32.mrb[0].mxu0
    %v1245 = vadd.f32 0.0, %v1244
    %v1246 = vpop.f32.mrb[0].mxu0
    %1247 = vmatprep.mubr.f32.mxu0 %v1009
    %1248 = vmatmul.mubr.f32.gmra.mrb[0].mxu0 %v979
    %v1249 = vpop.f32.mrb[0].mxu0
    %v1250 = vadd.f32 0.0, %v1249
    %v1251 = vpop.f32.mrb[0].mxu0
    %1252 = vmatprep.mubr.f32.mxu0 %v1012
    %1253 = vmatmul.mubr.f32.gmra.mrb[0].mxu0 %v981
    %v1254 = vpop.f32.mrb[0].mxu0
    %v1255 = vadd.f32 0.0, %v1254
    %v1256 = vpop.f32.mrb[0].mxu0
    %1257 = vmatprep.mubr.f32.mxu0 %v1015
    %1258 = vmatmul.mubr.f32.gmra.mrb[0].mxu0 %v983
    %v1259 = vpop.f32.mrb[0].mxu0
    %v1260 = vadd.f32 0.0, %v1259
    %v1261 = vpop.f32.mrb[0].mxu0
    %1262 = vmatprep.mubr.f32.mxu0 %v1018
    %1263 = vmatmul.mubr.f32.gmra.mrb[0].mxu0 %v985
    %v1264 = vpop.f32.mrb[0].mxu0
    %v1265 = vadd.f32 0.0, %v1264
    %v1266 = vpop.f32.mrb[0].mxu0
    %1267 = vmatprep.mubr.f32.mxu0 %v1021
    %1268 = vmatmul.mubr.f32.gmra.mrb[0].mxu0 %v987
    %v1269 = vpop.f32.mrb[0].mxu0
    %v1270 = vadd.f32 0.0, %v1269
    %v1271 = vpop.f32.mrb[0].mxu0
    %1272 = vmatprep.mubr.f32.mxu0 %v1024
    %1273 = vmatmul.mubr.f32.gmra.mrb[0].mxu0 %v989
    %v1274 = vpop.f32.mrb[0].mxu0
    %v1275 = vadd.f32 0.0, %v1274
    %v1276 = vpop.f32.mrb[0].mxu0
    %1277 = vmatprep.mubr.f32.mxu0 %v1027
    %1278 = vmatmul.mubr.f32.gmra.mrb[0].mxu0 %v991
    %v1279 = vpop.f32.mrb[0].mxu0
    %v1280 = vadd.f32 0.0, %v1279
    %v1281 = vpop.f32.mrb[0].mxu0
    %1282 = vmatprep.mubr.f32.mxu0 %v1030
    %1283 = vmatmul.mubr.f32.gmra.mrb[0].mxu0 %v993
    %v1284 = vpop.f32.mrb[0].mxu0
    %v1285 = vadd.f32 0.0, %v1284
    %v1286 = vpop.f32.mrb[0].mxu0
    %1287 = vmatprep.mubr.f32.mxu0 %v1033
    %1288 = vmatmul.mubr.f32.gmra.mrb[0].mxu0 %v995
    %v1289 = vpop.f32.mrb[0].mxu0
    %v1290 = vadd.f32 0.0, %v1289
    %v1291 = vpop.f32.mrb[0].mxu0
    %1292 = vmatprep.mubr.f32.mxu0 %v1036
    %1293 = vmatmul.mubr.f32.gmra.mrb[0].mxu0 %v997
    %v1294 = vpop.f32.mrb[0].mxu0
    %v1295 = vadd.f32 0.0, %v1294
    %v1296 = vpop.f32.mrb[0].mxu0
    %1297 = vdwg.mxu0
    %v1298 = vmax.f32 %v1105, %v1235
    %v1299 = vmax.f32 %v1110, %v1240
    %v1300 = vmax.f32 %v1115, %v1245
    %v1301 = vmax.f32 %v1120, %v1250
    %v1302 = vmax.f32 %v1125, %v1255
    %v1303 = vmax.f32 %v1130, %v1260
    %v1304 = vmax.f32 %v1135, %v1265
    %v1305 = vmax.f32 %v1140, %v1270
    %v1306 = vmax.f32 %v1145, %v1275
    %v1307 = vmax.f32 %v1150, %v1280
    %v1308 = vmax.f32 %v1155, %v1285
    %v1309 = vmax.f32 %v1160, %v1290
    %v1310 = vmax.f32 %v1165, %v1295
    %v1311 = vstv %s532
    %v1312 = vmul.f32 %v1311, %v1298
    %v1313 = vmul.f32 %v1311, %v1299
    %v1314 = vmul.f32 %v1311, %v1300
    %v1315 = vmul.f32 %v1311, %v1301
    %v1316 = vmul.f32 %v1311, %v1302
    %v1317 = vmul.f32 %v1311, %v1303
    %v1318 = vmul.f32 %v1311, %v1304
    %v1319 = vmul.f32 %v1311, %v1305
    %v1320 = vmul.f32 %v1311, %v1306
    %v1321 = vmul.f32 %v1311, %v1307
    %v1322 = vmul.f32 %v1311, %v1308
    %v1323 = vmul.f32 %v1311, %v1309
    %v1324 = vstv %s533
    %v1325 = vmul.f32 %v1324, %v1298
    %v1326 = vmul.f32 %v1324, %v1299
    %v1327 = vmul.f32 %v1324, %v1300
    %v1328 = vmul.f32 %v1324, %v1301
    %v1329 = vmul.f32 %v1324, %v1302
    %v1330 = vmul.f32 %v1324, %v1303
    %v1331 = vmul.f32 %v1324, %v1304
    %v1332 = vmul.f32 %v1324, %v1305
    %v1333 = vmul.f32 %v1324, %v1306
    %v1334 = vmul.f32 %v1324, %v1307
    %v1335 = vmul.f32 %v1324, %v1308
    %v1336 = vmul.f32 %v1324, %v1309
    %1349 = vrot.lane.b32.xlu0 %v1325, 127
    %v1350 = vpop.permute.xlu0 %1349
    %1351 = vrot.lane.b32.xlu0 %v1326, 127
    %v1352 = vpop.permute.xlu0 %1351
    %1353 = vrot.lane.b32.xlu0 %v1327, 127
    %v1354 = vpop.permute.xlu0 %1353
    %1355 = vrot.lane.b32.xlu0 %v1328, 127
    %v1356 = vpop.permute.xlu0 %1355
    %1357 = vrot.lane.b32.xlu0 %v1329, 127
    %v1358 = vpop.permute.xlu0 %1357
    %1359 = vrot.lane.b32.xlu0 %v1330, 127
    %v1360 = vpop.permute.xlu0 %1359
    %1361 = vrot.lane.b32.xlu0 %v1331, 127
    %v1362 = vpop.permute.xlu0 %1361
    %1363 = vrot.lane.b32.xlu0 %v1332, 127
    %v1364 = vpop.permute.xlu0 %1363
    %1365 = vrot.lane.b32.xlu0 %v1333, 127
    %v1366 = vpop.permute.xlu0 %1365
    %1367 = vrot.lane.b32.xlu0 %v1334, 127
    %v1368 = vpop.permute.xlu0 %1367
    %1369 = vrot.lane.b32.xlu0 %v1335, 127
    %v1370 = vpop.permute.xlu0 %1369
    %1371 = vrot.lane.b32.xlu0 %v1336, 127
    %v1372 = vpop.permute.xlu0 %1371
    %v1385 = vadd.f32 %v1312, %v1350
    %v1386 = vadd.f32 %v1313, %v1352
    %v1387 = vadd.f32 %v1314, %v1354
    %v1388 = vadd.f32 %v1315, %v1356
    %v1389 = vadd.f32 %v1316, %v1358
    %v1390 = vadd.f32 %v1317, %v1360
    %v1391 = vadd.f32 %v1318, %v1362
    %v1392 = vadd.f32 %v1319, %v1364
    %v1393 = vadd.f32 %v1320, %v1366
    %v1394 = vadd.f32 %v1321, %v1368
    %v1395 = vadd.f32 %v1322, %v1370
    %v1396 = vadd.f32 %v1323, %v1372
    %v1397 = vstv %s534
    %v1398 = vmul.f32 %v1397, %v1298
    %v1399 = vmul.f32 %v1397, %v1299
    %v1400 = vmul.f32 %v1397, %v1300
    %v1401 = vmul.f32 %v1397, %v1301
    %v1402 = vmul.f32 %v1397, %v1302
    %v1403 = vmul.f32 %v1397, %v1303
    %v1404 = vmul.f32 %v1397, %v1304
    %v1405 = vmul.f32 %v1397, %v1305
    %v1406 = vmul.f32 %v1397, %v1306
    %v1407 = vmul.f32 %v1397, %v1307
    %v1408 = vmul.f32 %v1397, %v1308
    %v1409 = vmul.f32 %v1397, %v1309
    %1422 = vrot.lane.b32.xlu0 %v1398, 126
    %v1423 = vpop.permute.xlu0 %1422
    %1424 = vrot.lane.b32.xlu0 %v1399, 126
    %v1425 = vpop.permute.xlu0 %1424
    %1426 = vrot.lane.b32.xlu0 %v1400, 126
    %v1427 = vpop.permute.xlu0 %1426
    %1428 = vrot.lane.b32.xlu0 %v1401, 126
    %v1429 = vpop.permute.xlu0 %1428
    %1430 = vrot.lane.b32.xlu0 %v1402, 126
    %v1431 = vpop.permute.xlu0 %1430
    %1432 = vrot.lane.b32.xlu0 %v1403, 126
    %v1433 = vpop.permute.xlu0 %1432
    %1434 = vrot.lane.b32.xlu0 %v1404, 126
    %v1435 = vpop.permute.xlu0 %1434
    %1436 = vrot.lane.b32.xlu0 %v1405, 126
    %v1437 = vpop.permute.xlu0 %1436
    %1438 = vrot.lane.b32.xlu0 %v1406, 126
    %v1439 = vpop.permute.xlu0 %1438
    %1440 = vrot.lane.b32.xlu0 %v1407, 126
    %v1441 = vpop.permute.xlu0 %1440
    %1442 = vrot.lane.b32.xlu0 %v1408, 126
    %v1443 = vpop.permute.xlu0 %1442
    %1444 = vrot.lane.b32.xlu0 %v1409, 126
    %v1445 = vpop.permute.xlu0 %1444
    %v1458 = vadd.f32 %v1385, %v1423
    %v1459 = vadd.f32 %v1386, %v1425
    %v1460 = vadd.f32 %v1387, %v1427
    %v1461 = vadd.f32 %v1388, %v1429
    %v1462 = vadd.f32 %v1389, %v1431
    %v1463 = vadd.f32 %v1390, %v1433
    %v1464 = vadd.f32 %v1391, %v1435
    %v1465 = vadd.f32 %v1392, %v1437
    %v1466 = vadd.f32 %v1393, %v1439
    %v1467 = vadd.f32 %v1394, %v1441
    %v1468 = vadd.f32 %v1395, %v1443
    %v1469 = vadd.f32 %v1396, %v1445
    %v1470 = vstv %s535
    %v1471 = vmul.f32 %v1470, %v1298
    %v1472 = vmul.f32 %v1470, %v1299
    %v1473 = vmul.f32 %v1470, %v1300
    %v1474 = vmul.f32 %v1470, %v1301
    %v1475 = vmul.f32 %v1470, %v1302
    %v1476 = vmul.f32 %v1470, %v1303
    %v1477 = vmul.f32 %v1470, %v1304
    %v1478 = vmul.f32 %v1470, %v1305
    %v1479 = vmul.f32 %v1470, %v1306
    %v1480 = vmul.f32 %v1470, %v1307
    %v1481 = vmul.f32 %v1470, %v1308
    %v1482 = vmul.f32 %v1470, %v1309
    %1495 = vrot.lane.b32.xlu0 %v1471, 125
    %v1496 = vpop.permute.xlu0 %1495
    %1497 = vrot.lane.b32.xlu0 %v1472, 125
    %v1498 = vpop.permute.xlu0 %1497
    %1499 = vrot.lane.b32.xlu0 %v1473, 125
    %v1500 = vpop.permute.xlu0 %1499
    %1501 = vrot.lane.b32.xlu0 %v1474, 125
    %v1502 = vpop.permute.xlu0 %1501
    %1503 = vrot.lane.b32.xlu0 %v1475, 125
    %v1504 = vpop.permute.xlu0 %1503
    %1505 = vrot.lane.b32.xlu0 %v1476, 125
    %v1506 = vpop.permute.xlu0 %1505
    %1507 = vrot.lane.b32.xlu0 %v1477, 125
    %v1508 = vpop.permute.xlu0 %1507
    %1509 = vrot.lane.b32.xlu0 %v1478, 125
    %v1510 = vpop.permute.xlu0 %1509
    %1511 = vrot.lane.b32.xlu0 %v1479, 125
    %v1512 = vpop.permute.xlu0 %1511
    %1513 = vrot.lane.b32.xlu0 %v1480, 125
    %v1514 = vpop.permute.xlu0 %1513
    %1515 = vrot.lane.b32.xlu0 %v1481, 125
    %v1516 = vpop.permute.xlu0 %1515
    %1517 = vrot.lane.b32.xlu0 %v1482, 125
    %v1518 = vpop.permute.xlu0 %1517
    %v1531 = vadd.f32 %v1458, %v1496
    %v1532 = vadd.f32 %v1459, %v1498
    %v1533 = vadd.f32 %v1460, %v1500
    %v1534 = vadd.f32 %v1461, %v1502
    %v1535 = vadd.f32 %v1462, %v1504
    %v1536 = vadd.f32 %v1463, %v1506
    %v1537 = vadd.f32 %v1464, %v1508
    %v1538 = vadd.f32 %v1465, %v1510
    %v1539 = vadd.f32 %v1466, %v1512
    %v1540 = vadd.f32 %v1467, %v1514
    %v1541 = vadd.f32 %v1468, %v1516
    %v1542 = vadd.f32 %v1469, %v1518
    %v1543 = vstv %s536
    %v1544 = vmul.f32 %v1543, %v1298
    %v1545 = vmul.f32 %v1543, %v1299
    %v1546 = vmul.f32 %v1543, %v1300
    %v1547 = vmul.f32 %v1543, %v1301
    %v1548 = vmul.f32 %v1543, %v1302
    %v1549 = vmul.f32 %v1543, %v1303
    %v1550 = vmul.f32 %v1543, %v1304
    %v1551 = vmul.f32 %v1543, %v1305
    %v1552 = vmul.f32 %v1543, %v1306
    %v1553 = vmul.f32 %v1543, %v1307
    %v1554 = vmul.f32 %v1543, %v1308
    %v1555 = vmul.f32 %v1543, %v1309
    %1568 = vrot.lane.b32.xlu0 %v1544, 124
    %v1569 = vpop.permute.xlu0 %1568
    %1570 = vrot.lane.b32.xlu0 %v1545, 124
    %v1571 = vpop.permute.xlu0 %1570
    %1572 = vrot.lane.b32.xlu0 %v1546, 124
    %v1573 = vpop.permute.xlu0 %1572
    %1574 = vrot.lane.b32.xlu0 %v1547, 124
    %v1575 = vpop.permute.xlu0 %1574
    %1576 = vrot.lane.b32.xlu0 %v1548, 124
    %v1577 = vpop.permute.xlu0 %1576
    %1578 = vrot.lane.b32.xlu0 %v1549, 124
    %v1579 = vpop.permute.xlu0 %1578
    %1580 = vrot.lane.b32.xlu0 %v1550, 124
    %v1581 = vpop.permute.xlu0 %1580
    %1582 = vrot.lane.b32.xlu0 %v1551, 124
    %v1583 = vpop.permute.xlu0 %1582
    %1584 = vrot.lane.b32.xlu0 %v1552, 124
    %v1585 = vpop.permute.xlu0 %1584
    %1586 = vrot.lane.b32.xlu0 %v1553, 124
    %v1587 = vpop.permute.xlu0 %1586
    %1588 = vrot.lane.b32.xlu0 %v1554, 124
    %v1589 = vpop.permute.xlu0 %1588
    %1590 = vrot.lane.b32.xlu0 %v1555, 124
    %v1591 = vpop.permute.xlu0 %1590
    %v1604 = vadd.f32 %v1531, %v1569
    %v1605 = vadd.f32 %v1532, %v1571
    %v1606 = vadd.f32 %v1533, %v1573
    %v1607 = vadd.f32 %v1534, %v1575
    %v1608 = vadd.f32 %v1535, %v1577
    %v1609 = vadd.f32 %v1536, %v1579
    %v1610 = vadd.f32 %v1537, %v1581
    %v1611 = vadd.f32 %v1538, %v1583
    %v1612 = vadd.f32 %v1539, %v1585
    %v1613 = vadd.f32 %v1540, %v1587
    %v1614 = vadd.f32 %v1541, %v1589
    %v1615 = vadd.f32 %v1542, %v1591
    %v1616 = vstv %s537
    %v1617 = vmul.f32 %v1616, %v1298
    %v1618 = vmul.f32 %v1616, %v1299
    %v1619 = vmul.f32 %v1616, %v1300
    %v1620 = vmul.f32 %v1616, %v1301
    %v1621 = vmul.f32 %v1616, %v1302
    %v1622 = vmul.f32 %v1616, %v1303
    %v1623 = vmul.f32 %v1616, %v1304
    %v1624 = vmul.f32 %v1616, %v1305
    %v1625 = vmul.f32 %v1616, %v1306
    %v1626 = vmul.f32 %v1616, %v1307
    %v1627 = vmul.f32 %v1616, %v1308
    %v1628 = vmul.f32 %v1616, %v1309
    %v1629 = vstv %s538
    %v1630 = vmul.f32 %v1629, %v1298
    %v1631 = vmul.f32 %v1629, %v1299
    %v1632 = vmul.f32 %v1629, %v1300
    %v1633 = vmul.f32 %v1629, %v1301
    %v1634 = vmul.f32 %v1629, %v1302
    %v1635 = vmul.f32 %v1629, %v1303
    %v1636 = vmul.f32 %v1629, %v1304
    %v1637 = vmul.f32 %v1629, %v1305
    %v1638 = vmul.f32 %v1629, %v1306
    %v1639 = vmul.f32 %v1629, %v1307
    %v1640 = vmul.f32 %v1629, %v1308
    %v1641 = vmul.f32 %v1629, %v1309
    %1654 = vrot.lane.b32.xlu0 %v1630, 127
    %v1655 = vpop.permute.xlu0 %1654
    %1656 = vrot.lane.b32.xlu0 %v1631, 127
    %v1657 = vpop.permute.xlu0 %1656
    %1658 = vrot.lane.b32.xlu0 %v1632, 127
    %v1659 = vpop.permute.xlu0 %1658
    %1660 = vrot.lane.b32.xlu0 %v1633, 127
    %v1661 = vpop.permute.xlu0 %1660
    %1662 = vrot.lane.b32.xlu0 %v1634, 127
    %v1663 = vpop.permute.xlu0 %1662
    %1664 = vrot.lane.b32.xlu0 %v1635, 127
    %v1665 = vpop.permute.xlu0 %1664
    %1666 = vrot.lane.b32.xlu0 %v1636, 127
    %v1667 = vpop.permute.xlu0 %1666
    %1668 = vrot.lane.b32.xlu0 %v1637, 127
    %v1669 = vpop.permute.xlu0 %1668
    %1670 = vrot.lane.b32.xlu0 %v1638, 127
    %v1671 = vpop.permute.xlu0 %1670
    %1672 = vrot.lane.b32.xlu0 %v1639, 127
    %v1673 = vpop.permute.xlu0 %1672
    %1674 = vrot.lane.b32.xlu0 %v1640, 127
    %v1675 = vpop.permute.xlu0 %1674
    %1676 = vrot.lane.b32.xlu0 %v1641, 127
    %v1677 = vpop.permute.xlu0 %1676
    %v1690 = vadd.f32 %v1617, %v1655
    %v1691 = vadd.f32 %v1618, %v1657
    %v1692 = vadd.f32 %v1619, %v1659
    %v1693 = vadd.f32 %v1620, %v1661
    %v1694 = vadd.f32 %v1621, %v1663
    %v1695 = vadd.f32 %v1622, %v1665
    %v1696 = vadd.f32 %v1623, %v1667
    %v1697 = vadd.f32 %v1624, %v1669
    %v1698 = vadd.f32 %v1625, %v1671
    %v1699 = vadd.f32 %v1626, %v1673
    %v1700 = vadd.f32 %v1627, %v1675
    %v1701 = vadd.f32 %v1628, %v1677
    %v1702 = vstv %s539
    %v1703 = vmul.f32 %v1702, %v1298
    %v1704 = vmul.f32 %v1702, %v1299
    %v1705 = vmul.f32 %v1702, %v1300
    %v1706 = vmul.f32 %v1702, %v1301
    %v1707 = vmul.f32 %v1702, %v1302
    %v1708 = vmul.f32 %v1702, %v1303
    %v1709 = vmul.f32 %v1702, %v1304
    %v1710 = vmul.f32 %v1702, %v1305
    %v1711 = vmul.f32 %v1702, %v1306
    %v1712 = vmul.f32 %v1702, %v1307
    %v1713 = vmul.f32 %v1702, %v1308
    %v1714 = vmul.f32 %v1702, %v1309
    %1727 = vrot.lane.b32.xlu0 %v1703, 126
    %v1728 = vpop.permute.xlu0 %1727
    %1729 = vrot.lane.b32.xlu0 %v1704, 126
    %v1730 = vpop.permute.xlu0 %1729
    %1731 = vrot.lane.b32.xlu0 %v1705, 126
    %v1732 = vpop.permute.xlu0 %1731
    %1733 = vrot.lane.b32.xlu0 %v1706, 126
    %v1734 = vpop.permute.xlu0 %1733
    %1735 = vrot.lane.b32.xlu0 %v1707, 126
    %v1736 = vpop.permute.xlu0 %1735
    %1737 = vrot.lane.b32.xlu0 %v1708, 126
    %v1738 = vpop.permute.xlu0 %1737
    %1739 = vrot.lane.b32.xlu0 %v1709, 126
    %v1740 = vpop.permute.xlu0 %1739
    %1741 = vrot.lane.b32.xlu0 %v1710, 126
    %v1742 = vpop.permute.xlu0 %1741
    %1743 = vrot.lane.b32.xlu0 %v1711, 126
    %v1744 = vpop.permute.xlu0 %1743
    %1745 = vrot.lane.b32.xlu0 %v1712, 126
    %v1746 = vpop.permute.xlu0 %1745
    %1747 = vrot.lane.b32.xlu0 %v1713, 126
    %v1748 = vpop.permute.xlu0 %1747
    %1749 = vrot.lane.b32.xlu0 %v1714, 126
    %v1750 = vpop.permute.xlu0 %1749
    %v1763 = vadd.f32 %v1690, %v1728
    %v1764 = vadd.f32 %v1691, %v1730
    %v1765 = vadd.f32 %v1692, %v1732
    %v1766 = vadd.f32 %v1693, %v1734
    %v1767 = vadd.f32 %v1694, %v1736
    %v1768 = vadd.f32 %v1695, %v1738
    %v1769 = vadd.f32 %v1696, %v1740
    %v1770 = vadd.f32 %v1697, %v1742
    %v1771 = vadd.f32 %v1698, %v1744
    %v1772 = vadd.f32 %v1699, %v1746
    %v1773 = vadd.f32 %v1700, %v1748
    %v1774 = vadd.f32 %v1701, %v1750
    %v1775 = vstv %s540
    %v1776 = vmul.f32 %v1775, %v1298
    %v1777 = vmul.f32 %v1775, %v1299
    %v1778 = vmul.f32 %v1775, %v1300
    %v1779 = vmul.f32 %v1775, %v1301
    %v1780 = vmul.f32 %v1775, %v1302
    %v1781 = vmul.f32 %v1775, %v1303
    %v1782 = vmul.f32 %v1775, %v1304
    %v1783 = vmul.f32 %v1775, %v1305
    %v1784 = vmul.f32 %v1775, %v1306
    %v1785 = vmul.f32 %v1775, %v1307
    %v1786 = vmul.f32 %v1775, %v1308
    %v1787 = vmul.f32 %v1775, %v1309
    %1800 = vrot.lane.b32.xlu0 %v1776, 125
    %v1801 = vpop.permute.xlu0 %1800
    %1802 = vrot.lane.b32.xlu0 %v1777, 125
    %v1803 = vpop.permute.xlu0 %1802
    %1804 = vrot.lane.b32.xlu0 %v1778, 125
    %v1805 = vpop.permute.xlu0 %1804
    %1806 = vrot.lane.b32.xlu0 %v1779, 125
    %v1807 = vpop.permute.xlu0 %1806
    %1808 = vrot.lane.b32.xlu0 %v1780, 125
    %v1809 = vpop.permute.xlu0 %1808
    %1810 = vrot.lane.b32.xlu0 %v1781, 125
    %v1811 = vpop.permute.xlu0 %1810
    %1812 = vrot.lane.b32.xlu0 %v1782, 125
    %v1813 = vpop.permute.xlu0 %1812
    %1814 = vrot.lane.b32.xlu0 %v1783, 125
    %v1815 = vpop.permute.xlu0 %1814
    %1816 = vrot.lane.b32.xlu0 %v1784, 125
    %v1817 = vpop.permute.xlu0 %1816
    %1818 = vrot.lane.b32.xlu0 %v1785, 125
    %v1819 = vpop.permute.xlu0 %1818
    %1820 = vrot.lane.b32.xlu0 %v1786, 125
    %v1821 = vpop.permute.xlu0 %1820
    %1822 = vrot.lane.b32.xlu0 %v1787, 125
    %v1823 = vpop.permute.xlu0 %1822
    %v1836 = vadd.f32 %v1763, %v1801
    %v1837 = vadd.f32 %v1764, %v1803
    %v1838 = vadd.f32 %v1765, %v1805
    %v1839 = vadd.f32 %v1766, %v1807
    %v1840 = vadd.f32 %v1767, %v1809
    %v1841 = vadd.f32 %v1768, %v1811
    %v1842 = vadd.f32 %v1769, %v1813
    %v1843 = vadd.f32 %v1770, %v1815
    %v1844 = vadd.f32 %v1771, %v1817
    %v1845 = vadd.f32 %v1772, %v1819
    %v1846 = vadd.f32 %v1773, %v1821
    %v1847 = vadd.f32 %v1774, %v1823
    %v1848 = vstv %s541
    %v1849 = vmul.f32 %v1848, %v1298
    %v1850 = vmul.f32 %v1848, %v1299
    %v1851 = vmul.f32 %v1848, %v1300
    %v1852 = vmul.f32 %v1848, %v1301
    %v1853 = vmul.f32 %v1848, %v1302
    %v1854 = vmul.f32 %v1848, %v1303
    %v1855 = vmul.f32 %v1848, %v1304
    %v1856 = vmul.f32 %v1848, %v1305
    %v1857 = vmul.f32 %v1848, %v1306
    %v1858 = vmul.f32 %v1848, %v1307
    %v1859 = vmul.f32 %v1848, %v1308
    %v1860 = vmul.f32 %v1848, %v1309
    %1873 = vrot.lane.b32.xlu0 %v1849, 124
    %v1874 = vpop.permute.xlu0 %1873
    %1875 = vrot.lane.b32.xlu0 %v1850, 124
    %v1876 = vpop.permute.xlu0 %1875
    %1877 = vrot.lane.b32.xlu0 %v1851, 124
    %v1878 = vpop.permute.xlu0 %1877
    %1879 = vrot.lane.b32.xlu0 %v1852, 124
    %v1880 = vpop.permute.xlu0 %1879
    %1881 = vrot.lane.b32.xlu0 %v1853, 124
    %v1882 = vpop.permute.xlu0 %1881
    %1883 = vrot.lane.b32.xlu0 %v1854, 124
    %v1884 = vpop.permute.xlu0 %1883
    %1885 = vrot.lane.b32.xlu0 %v1855, 124
    %v1886 = vpop.permute.xlu0 %1885
    %1887 = vrot.lane.b32.xlu0 %v1856, 124
    %v1888 = vpop.permute.xlu0 %1887
    %1889 = vrot.lane.b32.xlu0 %v1857, 124
    %v1890 = vpop.permute.xlu0 %1889
    %1891 = vrot.lane.b32.xlu0 %v1858, 124
    %v1892 = vpop.permute.xlu0 %1891
    %1893 = vrot.lane.b32.xlu0 %v1859, 124
    %v1894 = vpop.permute.xlu0 %1893
    %1895 = vrot.lane.b32.xlu0 %v1860, 124
    %v1896 = vpop.permute.xlu0 %1895
    %v1909 = vadd.f32 %v1836, %v1874
    %v1910 = vadd.f32 %v1837, %v1876
    %v1911 = vadd.f32 %v1838, %v1878
    %v1912 = vadd.f32 %v1839, %v1880
    %v1913 = vadd.f32 %v1840, %v1882
    %v1914 = vadd.f32 %v1841, %v1884
    %v1915 = vadd.f32 %v1842, %v1886
    %v1916 = vadd.f32 %v1843, %v1888
    %v1917 = vadd.f32 %v1844, %v1890
    %v1918 = vadd.f32 %v1845, %v1892
    %v1919 = vadd.f32 %v1846, %v1894
    %v1920 = vadd.f32 %v1847, %v1896
    %vm1933 = vcmask 1046528
    %v1934 = vrot.slane %v1909, 1
    %v1935 = vrot.slane %v1910, 1
    %v1936 = vsel %vm1933, %v1934, %v1935
    %v1937 = vrot.slane %v1911, 1
    %v1938 = vsel %vm1933, %v1935, %v1937
    %v1939 = vrot.slane %v1912, 1
    %v1940 = vsel %vm1933, %v1937, %v1939
    %v1941 = vrot.slane %v1913, 1
    %v1942 = vsel %vm1933, %v1939, %v1941
    %v1943 = vrot.slane %v1914, 1
    %v1944 = vsel %vm1933, %v1941, %v1943
    %v1945 = vrot.slane %v1915, 1
    %v1946 = vsel %vm1933, %v1943, %v1945
    %v1947 = vrot.slane %v1916, 1
    %v1948 = vsel %vm1933, %v1945, %v1947
    %v1949 = vrot.slane %v1917, 1
    %v1950 = vsel %vm1933, %v1947, %v1949
    %v1951 = vrot.slane %v1918, 1
    %v1952 = vsel %vm1933, %v1949, %v1951
    %v1953 = vrot.slane %v1919, 1
    %v1954 = vsel %vm1933, %v1951, %v1953
    %v1955 = vrot.slane %v1920, 1
    %v1956 = vsel %vm1933, %v1953, %v1955
    %v1969 = vadd.f32 %v1604, %v1936
    %v1970 = vadd.f32 %v1605, %v1938
    %v1971 = vadd.f32 %v1606, %v1940
    %v1972 = vadd.f32 %v1607, %v1942
    %v1973 = vadd.f32 %v1608, %v1944
    %v1974 = vadd.f32 %v1609, %v1946
    %v1975 = vadd.f32 %v1610, %v1948
    %v1976 = vadd.f32 %v1611, %v1950
    %v1977 = vadd.f32 %v1612, %v1952
    %v1978 = vadd.f32 %v1613, %v1954
    %v1979 = vadd.f32 %v1614, %v1956
    %v1980 = vadd.f32 %v1615, %v1955
    %v1981 = vstv %s542
    %v1982 = vmul.f32 %v1981, %v1298
    %v1983 = vmul.f32 %v1981, %v1299
    %v1984 = vmul.f32 %v1981, %v1300
    %v1985 = vmul.f32 %v1981, %v1301
    %v1986 = vmul.f32 %v1981, %v1302
    %v1987 = vmul.f32 %v1981, %v1303
    %v1988 = vmul.f32 %v1981, %v1304
    %v1989 = vmul.f32 %v1981, %v1305
    %v1990 = vmul.f32 %v1981, %v1306
    %v1991 = vmul.f32 %v1981, %v1307
    %v1992 = vmul.f32 %v1981, %v1308
    %v1993 = vmul.f32 %v1981, %v1309
    %v1994 = vstv %s543
    %v1995 = vmul.f32 %v1994, %v1298
    %v1996 = vmul.f32 %v1994, %v1299
    %v1997 = vmul.f32 %v1994, %v1300
    %v1998 = vmul.f32 %v1994, %v1301
    %v1999 = vmul.f32 %v1994, %v1302
    %v2000 = vmul.f32 %v1994, %v1303
    %v2001 = vmul.f32 %v1994, %v1304
    %v2002 = vmul.f32 %v1994, %v1305
    %v2003 = vmul.f32 %v1994, %v1306
    %v2004 = vmul.f32 %v1994, %v1307
    %v2005 = vmul.f32 %v1994, %v1308
    %v2006 = vmul.f32 %v1994, %v1309
    %2019 = vrot.lane.b32.xlu0 %v1995, 127
    %v2020 = vpop.permute.xlu0 %2019
    %2021 = vrot.lane.b32.xlu0 %v1996, 127
    %v2022 = vpop.permute.xlu0 %2021
    %2023 = vrot.lane.b32.xlu0 %v1997, 127
    %v2024 = vpop.permute.xlu0 %2023
    %2025 = vrot.lane.b32.xlu0 %v1998, 127
    %v2026 = vpop.permute.xlu0 %2025
    %2027 = vrot.lane.b32.xlu0 %v1999, 127
    %v2028 = vpop.permute.xlu0 %2027
    %2029 = vrot.lane.b32.xlu0 %v2000, 127
    %v2030 = vpop.permute.xlu0 %2029
    %2031 = vrot.lane.b32.xlu0 %v2001, 127
    %v2032 = vpop.permute.xlu0 %2031
    %2033 = vrot.lane.b32.xlu0 %v2002, 127
    %v2034 = vpop.permute.xlu0 %2033
    %2035 = vrot.lane.b32.xlu0 %v2003, 127
    %v2036 = vpop.permute.xlu0 %2035
    %2037 = vrot.lane.b32.xlu0 %v2004, 127
    %v2038 = vpop.permute.xlu0 %2037
    %2039 = vrot.lane.b32.xlu0 %v2005, 127
    %v2040 = vpop.permute.xlu0 %2039
    %2041 = vrot.lane.b32.xlu0 %v2006, 127
    %v2042 = vpop.permute.xlu0 %2041
    %v2055 = vadd.f32 %v1982, %v2020
    %v2056 = vadd.f32 %v1983, %v2022
    %v2057 = vadd.f32 %v1984, %v2024
    %v2058 = vadd.f32 %v1985, %v2026
    %v2059 = vadd.f32 %v1986, %v2028
    %v2060 = vadd.f32 %v1987, %v2030
    %v2061 = vadd.f32 %v1988, %v2032
    %v2062 = vadd.f32 %v1989, %v2034
    %v2063 = vadd.f32 %v1990, %v2036
    %v2064 = vadd.f32 %v1991, %v2038
    %v2065 = vadd.f32 %v1992, %v2040
    %v2066 = vadd.f32 %v1993, %v2042
    %v2067 = vstv %s544
    %v2068 = vmul.f32 %v2067, %v1298
    %v2069 = vmul.f32 %v2067, %v1299
    %v2070 = vmul.f32 %v2067, %v1300
    %v2071 = vmul.f32 %v2067, %v1301
    %v2072 = vmul.f32 %v2067, %v1302
    %v2073 = vmul.f32 %v2067, %v1303
    %v2074 = vmul.f32 %v2067, %v1304
    %v2075 = vmul.f32 %v2067, %v1305
    %v2076 = vmul.f32 %v2067, %v1306
    %v2077 = vmul.f32 %v2067, %v1307
    %v2078 = vmul.f32 %v2067, %v1308
    %v2079 = vmul.f32 %v2067, %v1309
    %2092 = vrot.lane.b32.xlu0 %v2068, 126
    %v2093 = vpop.permute.xlu0 %2092
    %2094 = vrot.lane.b32.xlu0 %v2069, 126
    %v2095 = vpop.permute.xlu0 %2094
    %2096 = vrot.lane.b32.xlu0 %v2070, 126
    %v2097 = vpop.permute.xlu0 %2096
    %2098 = vrot.lane.b32.xlu0 %v2071, 126
    %v2099 = vpop.permute.xlu0 %2098
    %2100 = vrot.lane.b32.xlu0 %v2072, 126
    %v2101 = vpop.permute.xlu0 %2100
    %2102 = vrot.lane.b32.xlu0 %v2073, 126
    %v2103 = vpop.permute.xlu0 %2102
    %2104 = vrot.lane.b32.xlu0 %v2074, 126
    %v2105 = vpop.permute.xlu0 %2104
    %2106 = vrot.lane.b32.xlu0 %v2075, 126
    %v2107 = vpop.permute.xlu0 %2106
    %2108 = vrot.lane.b32.xlu0 %v2076, 126
    %v2109 = vpop.permute.xlu0 %2108
    %2110 = vrot.lane.b32.xlu0 %v2077, 126
    %v2111 = vpop.permute.xlu0 %2110
    %2112 = vrot.lane.b32.xlu0 %v2078, 126
    %v2113 = vpop.permute.xlu0 %2112
    %2114 = vrot.lane.b32.xlu0 %v2079, 126
    %v2115 = vpop.permute.xlu0 %2114
    %v2128 = vadd.f32 %v2055, %v2093
    %v2129 = vadd.f32 %v2056, %v2095
    %v2130 = vadd.f32 %v2057, %v2097
    %v2131 = vadd.f32 %v2058, %v2099
    %v2132 = vadd.f32 %v2059, %v2101
    %v2133 = vadd.f32 %v2060, %v2103
    %v2134 = vadd.f32 %v2061, %v2105
    %v2135 = vadd.f32 %v2062, %v2107
    %v2136 = vadd.f32 %v2063, %v2109
    %v2137 = vadd.f32 %v2064, %v2111
    %v2138 = vadd.f32 %v2065, %v2113
    %v2139 = vadd.f32 %v2066, %v2115
    %v2140 = vstv %s545
    %v2141 = vmul.f32 %v2140, %v1298
    %v2142 = vmul.f32 %v2140, %v1299
    %v2143 = vmul.f32 %v2140, %v1300
    %v2144 = vmul.f32 %v2140, %v1301
    %v2145 = vmul.f32 %v2140, %v1302
    %v2146 = vmul.f32 %v2140, %v1303
    %v2147 = vmul.f32 %v2140, %v1304
    %v2148 = vmul.f32 %v2140, %v1305
    %v2149 = vmul.f32 %v2140, %v1306
    %v2150 = vmul.f32 %v2140, %v1307
    %v2151 = vmul.f32 %v2140, %v1308
    %v2152 = vmul.f32 %v2140, %v1309
    %2165 = vrot.lane.b32.xlu0 %v2141, 125
    %v2166 = vpop.permute.xlu0 %2165
    %2167 = vrot.lane.b32.xlu0 %v2142, 125
    %v2168 = vpop.permute.xlu0 %2167
    %2169 = vrot.lane.b32.xlu0 %v2143, 125
    %v2170 = vpop.permute.xlu0 %2169
    %2171 = vrot.lane.b32.xlu0 %v2144, 125
    %v2172 = vpop.permute.xlu0 %2171
    %2173 = vrot.lane.b32.xlu0 %v2145, 125
    %v2174 = vpop.permute.xlu0 %2173
    %2175 = vrot.lane.b32.xlu0 %v2146, 125
    %v2176 = vpop.permute.xlu0 %2175
    %2177 = vrot.lane.b32.xlu0 %v2147, 125
    %v2178 = vpop.permute.xlu0 %2177
    %2179 = vrot.lane.b32.xlu0 %v2148, 125
    %v2180 = vpop.permute.xlu0 %2179
    %2181 = vrot.lane.b32.xlu0 %v2149, 125
    %v2182 = vpop.permute.xlu0 %2181
    %2183 = vrot.lane.b32.xlu0 %v2150, 125
    %v2184 = vpop.permute.xlu0 %2183
    %2185 = vrot.lane.b32.xlu0 %v2151, 125
    %v2186 = vpop.permute.xlu0 %2185
    %2187 = vrot.lane.b32.xlu0 %v2152, 125
    %v2188 = vpop.permute.xlu0 %2187
    %v2201 = vadd.f32 %v2128, %v2166
    %v2202 = vadd.f32 %v2129, %v2168
    %v2203 = vadd.f32 %v2130, %v2170
    %v2204 = vadd.f32 %v2131, %v2172
    %v2205 = vadd.f32 %v2132, %v2174
    %v2206 = vadd.f32 %v2133, %v2176
    %v2207 = vadd.f32 %v2134, %v2178
    %v2208 = vadd.f32 %v2135, %v2180
    %v2209 = vadd.f32 %v2136, %v2182
    %v2210 = vadd.f32 %v2137, %v2184
    %v2211 = vadd.f32 %v2138, %v2186
    %v2212 = vadd.f32 %v2139, %v2188
    %v2213 = vstv %s546
    %v2214 = vmul.f32 %v2213, %v1298
    %v2215 = vmul.f32 %v2213, %v1299
    %v2216 = vmul.f32 %v2213, %v1300
    %v2217 = vmul.f32 %v2213, %v1301
    %v2218 = vmul.f32 %v2213, %v1302
    %v2219 = vmul.f32 %v2213, %v1303
    %v2220 = vmul.f32 %v2213, %v1304
    %v2221 = vmul.f32 %v2213, %v1305
    %v2222 = vmul.f32 %v2213, %v1306
    %v2223 = vmul.f32 %v2213, %v1307
    %v2224 = vmul.f32 %v2213, %v1308
    %v2225 = vmul.f32 %v2213, %v1309
    %2238 = vrot.lane.b32.xlu0 %v2214, 124
    %v2239 = vpop.permute.xlu0 %2238
    %2240 = vrot.lane.b32.xlu0 %v2215, 124
    %v2241 = vpop.permute.xlu0 %2240
    %2242 = vrot.lane.b32.xlu0 %v2216, 124
    %v2243 = vpop.permute.xlu0 %2242
    %2244 = vrot.lane.b32.xlu0 %v2217, 124
    %v2245 = vpop.permute.xlu0 %2244
    %2246 = vrot.lane.b32.xlu0 %v2218, 124
    %v2247 = vpop.permute.xlu0 %2246
    %2248 = vrot.lane.b32.xlu0 %v2219, 124
    %v2249 = vpop.permute.xlu0 %2248
    %2250 = vrot.lane.b32.xlu0 %v2220, 124
    %v2251 = vpop.permute.xlu0 %2250
    %2252 = vrot.lane.b32.xlu0 %v2221, 124
    %v2253 = vpop.permute.xlu0 %2252
    %2254 = vrot.lane.b32.xlu0 %v2222, 124
    %v2255 = vpop.permute.xlu0 %2254
    %2256 = vrot.lane.b32.xlu0 %v2223, 124
    %v2257 = vpop.permute.xlu0 %2256
    %2258 = vrot.lane.b32.xlu0 %v2224, 124
    %v2259 = vpop.permute.xlu0 %2258
    %2260 = vrot.lane.b32.xlu0 %v2225, 124
    %v2261 = vpop.permute.xlu0 %2260
    %v2274 = vadd.f32 %v2201, %v2239
    %v2275 = vadd.f32 %v2202, %v2241
    %v2276 = vadd.f32 %v2203, %v2243
    %v2277 = vadd.f32 %v2204, %v2245
    %v2278 = vadd.f32 %v2205, %v2247
    %v2279 = vadd.f32 %v2206, %v2249
    %v2280 = vadd.f32 %v2207, %v2251
    %v2281 = vadd.f32 %v2208, %v2253
    %v2282 = vadd.f32 %v2209, %v2255
    %v2283 = vadd.f32 %v2210, %v2257
    %v2284 = vadd.f32 %v2211, %v2259
    %v2285 = vadd.f32 %v2212, %v2261
    %vm2298 = vcmask 1045504
    %v2299 = vrot.slane %v2274, 2
    %v2300 = vrot.slane %v2275, 2
    %v2301 = vsel %vm2298, %v2299, %v2300
    %v2302 = vrot.slane %v2276, 2
    %v2303 = vsel %vm2298, %v2300, %v2302
    %v2304 = vrot.slane %v2277, 2
    %v2305 = vsel %vm2298, %v2302, %v2304
    %v2306 = vrot.slane %v2278, 2
    %v2307 = vsel %vm2298, %v2304, %v2306
    %v2308 = vrot.slane %v2279, 2
    %v2309 = vsel %vm2298, %v2306, %v2308
    %v2310 = vrot.slane %v2280, 2
    %v2311 = vsel %vm2298, %v2308, %v2310
    %v2312 = vrot.slane %v2281, 2
    %v2313 = vsel %vm2298, %v2310, %v2312
    %v2314 = vrot.slane %v2282, 2
    %v2315 = vsel %vm2298, %v2312, %v2314
    %v2316 = vrot.slane %v2283, 2
    %v2317 = vsel %vm2298, %v2314, %v2316
    %v2318 = vrot.slane %v2284, 2
    %v2319 = vsel %vm2298, %v2316, %v2318
    %v2320 = vrot.slane %v2285, 2
    %v2321 = vsel %vm2298, %v2318, %v2320
    %v2334 = vadd.f32 %v1969, %v2301
    %v2335 = vadd.f32 %v1970, %v2303
    %v2336 = vadd.f32 %v1971, %v2305
    %v2337 = vadd.f32 %v1972, %v2307
    %v2338 = vadd.f32 %v1973, %v2309
    %v2339 = vadd.f32 %v1974, %v2311
    %v2340 = vadd.f32 %v1975, %v2313
    %v2341 = vadd.f32 %v1976, %v2315
    %v2342 = vadd.f32 %v1977, %v2317
    %v2343 = vadd.f32 %v1978, %v2319
    %v2344 = vadd.f32 %v1979, %v2321
    %v2345 = vadd.f32 %v1980, %v2320
    %v2346 = vstv %s547
    %v2347 = vmul.f32 %v2346, %v1298
    %v2348 = vmul.f32 %v2346, %v1299
    %v2349 = vmul.f32 %v2346, %v1300
    %v2350 = vmul.f32 %v2346, %v1301
    %v2351 = vmul.f32 %v2346, %v1302
    %v2352 = vmul.f32 %v2346, %v1303
    %v2353 = vmul.f32 %v2346, %v1304
    %v2354 = vmul.f32 %v2346, %v1305
    %v2355 = vmul.f32 %v2346, %v1306
    %v2356 = vmul.f32 %v2346, %v1307
    %v2357 = vmul.f32 %v2346, %v1308
    %v2358 = vmul.f32 %v2346, %v1309
    %v2359 = vmul.f32 %v2346, %v1310
    %v2360 = vstv %s548
    %v2361 = vmul.f32 %v2360, %v1298
    %v2362 = vmul.f32 %v2360, %v1299
    %v2363 = vmul.f32 %v2360, %v1300
    %v2364 = vmul.f32 %v2360, %v1301
    %v2365 = vmul.f32 %v2360, %v1302
    %v2366 = vmul.f32 %v2360, %v1303
    %v2367 = vmul.f32 %v2360, %v1304
    %v2368 = vmul.f32 %v2360, %v1305
    %v2369 = vmul.f32 %v2360, %v1306
    %v2370 = vmul.f32 %v2360, %v1307
    %v2371 = vmul.f32 %v2360, %v1308
    %v2372 = vmul.f32 %v2360, %v1309
    %v2373 = vmul.f32 %v2360, %v1310
    %2387 = vrot.lane.b32.xlu0 %v2361, 127
    %v2388 = vpop.permute.xlu0 %2387
    %2389 = vrot.lane.b32.xlu0 %v2362, 127
    %v2390 = vpop.permute.xlu0 %2389
    %2391 = vrot.lane.b32.xlu0 %v2363, 127
    %v2392 = vpop.permute.xlu0 %2391
    %2393 = vrot.lane.b32.xlu0 %v2364, 127
    %v2394 = vpop.permute.xlu0 %2393
    %2395 = vrot.lane.b32.xlu0 %v2365, 127
    %v2396 = vpop.permute.xlu0 %2395
    %2397 = vrot.lane.b32.xlu0 %v2366, 127
    %v2398 = vpop.permute.xlu0 %2397
    %2399 = vrot.lane.b32.xlu0 %v2367, 127
    %v2400 = vpop.permute.xlu0 %2399
    %2401 = vrot.lane.b32.xlu0 %v2368, 127
    %v2402 = vpop.permute.xlu0 %2401
    %2403 = vrot.lane.b32.xlu0 %v2369, 127
    %v2404 = vpop.permute.xlu0 %2403
    %2405 = vrot.lane.b32.xlu0 %v2370, 127
    %v2406 = vpop.permute.xlu0 %2405
    %2407 = vrot.lane.b32.xlu0 %v2371, 127
    %v2408 = vpop.permute.xlu0 %2407
    %2409 = vrot.lane.b32.xlu0 %v2372, 127
    %v2410 = vpop.permute.xlu0 %2409
    %2411 = vrot.lane.b32.xlu0 %v2373, 127
    %v2412 = vpop.permute.xlu0 %2411
    %v2426 = vadd.f32 %v2347, %v2388
    %v2427 = vadd.f32 %v2348, %v2390
    %v2428 = vadd.f32 %v2349, %v2392
    %v2429 = vadd.f32 %v2350, %v2394
    %v2430 = vadd.f32 %v2351, %v2396
    %v2431 = vadd.f32 %v2352, %v2398
    %v2432 = vadd.f32 %v2353, %v2400
    %v2433 = vadd.f32 %v2354, %v2402
    %v2434 = vadd.f32 %v2355, %v2404
    %v2435 = vadd.f32 %v2356, %v2406
    %v2436 = vadd.f32 %v2357, %v2408
    %v2437 = vadd.f32 %v2358, %v2410
    %v2438 = vadd.f32 %v2359, %v2412
    %v2439 = vstv %s549
    %v2440 = vmul.f32 %v2439, %v1298
    %v2441 = vmul.f32 %v2439, %v1299
    %v2442 = vmul.f32 %v2439, %v1300
    %v2443 = vmul.f32 %v2439, %v1301
    %v2444 = vmul.f32 %v2439, %v1302
    %v2445 = vmul.f32 %v2439, %v1303
    %v2446 = vmul.f32 %v2439, %v1304
    %v2447 = vmul.f32 %v2439, %v1305
    %v2448 = vmul.f32 %v2439, %v1306
    %v2449 = vmul.f32 %v2439, %v1307
    %v2450 = vmul.f32 %v2439, %v1308
    %v2451 = vmul.f32 %v2439, %v1309
    %v2452 = vmul.f32 %v2439, %v1310
    %2466 = vrot.lane.b32.xlu0 %v2440, 126
    %v2467 = vpop.permute.xlu0 %2466
    %2468 = vrot.lane.b32.xlu0 %v2441, 126
    %v2469 = vpop.permute.xlu0 %2468
    %2470 = vrot.lane.b32.xlu0 %v2442, 126
    %v2471 = vpop.permute.xlu0 %2470
    %2472 = vrot.lane.b32.xlu0 %v2443, 126
    %v2473 = vpop.permute.xlu0 %2472
    %2474 = vrot.lane.b32.xlu0 %v2444, 126
    %v2475 = vpop.permute.xlu0 %2474
    %2476 = vrot.lane.b32.xlu0 %v2445, 126
    %v2477 = vpop.permute.xlu0 %2476
    %2478 = vrot.lane.b32.xlu0 %v2446, 126
    %v2479 = vpop.permute.xlu0 %2478
    %2480 = vrot.lane.b32.xlu0 %v2447, 126
    %v2481 = vpop.permute.xlu0 %2480
    %2482 = vrot.lane.b32.xlu0 %v2448, 126
    %v2483 = vpop.permute.xlu0 %2482
    %2484 = vrot.lane.b32.xlu0 %v2449, 126
    %v2485 = vpop.permute.xlu0 %2484
    %2486 = vrot.lane.b32.xlu0 %v2450, 126
    %v2487 = vpop.permute.xlu0 %2486
    %2488 = vrot.lane.b32.xlu0 %v2451, 126
    %v2489 = vpop.permute.xlu0 %2488
    %2490 = vrot.lane.b32.xlu0 %v2452, 126
    %v2491 = vpop.permute.xlu0 %2490
    %v2505 = vadd.f32 %v2426, %v2467
    %v2506 = vadd.f32 %v2427, %v2469
    %v2507 = vadd.f32 %v2428, %v2471
    %v2508 = vadd.f32 %v2429, %v2473
    %v2509 = vadd.f32 %v2430, %v2475
    %v2510 = vadd.f32 %v2431, %v2477
    %v2511 = vadd.f32 %v2432, %v2479
    %v2512 = vadd.f32 %v2433, %v2481
    %v2513 = vadd.f32 %v2434, %v2483
    %v2514 = vadd.f32 %v2435, %v2485
    %v2515 = vadd.f32 %v2436, %v2487
    %v2516 = vadd.f32 %v2437, %v2489
    %v2517 = vadd.f32 %v2438, %v2491
    %v2518 = vstv %s550
    %v2519 = vmul.f32 %v2518, %v1298
    %v2520 = vmul.f32 %v2518, %v1299
    %v2521 = vmul.f32 %v2518, %v1300
    %v2522 = vmul.f32 %v2518, %v1301
    %v2523 = vmul.f32 %v2518, %v1302
    %v2524 = vmul.f32 %v2518, %v1303
    %v2525 = vmul.f32 %v2518, %v1304
    %v2526 = vmul.f32 %v2518, %v1305
    %v2527 = vmul.f32 %v2518, %v1306
    %v2528 = vmul.f32 %v2518, %v1307
    %v2529 = vmul.f32 %v2518, %v1308
    %v2530 = vmul.f32 %v2518, %v1309
    %v2531 = vmul.f32 %v2518, %v1310
    %2545 = vrot.lane.b32.xlu0 %v2519, 125
    %v2546 = vpop.permute.xlu0 %2545
    %2547 = vrot.lane.b32.xlu0 %v2520, 125
    %v2548 = vpop.permute.xlu0 %2547
    %2549 = vrot.lane.b32.xlu0 %v2521, 125
    %v2550 = vpop.permute.xlu0 %2549
    %2551 = vrot.lane.b32.xlu0 %v2522, 125
    %v2552 = vpop.permute.xlu0 %2551
    %2553 = vrot.lane.b32.xlu0 %v2523, 125
    %v2554 = vpop.permute.xlu0 %2553
    %2555 = vrot.lane.b32.xlu0 %v2524, 125
    %v2556 = vpop.permute.xlu0 %2555
    %2557 = vrot.lane.b32.xlu0 %v2525, 125
    %v2558 = vpop.permute.xlu0 %2557
    %2559 = vrot.lane.b32.xlu0 %v2526, 125
    %v2560 = vpop.permute.xlu0 %2559
    %2561 = vrot.lane.b32.xlu0 %v2527, 125
    %v2562 = vpop.permute.xlu0 %2561
    %2563 = vrot.lane.b32.xlu0 %v2528, 125
    %v2564 = vpop.permute.xlu0 %2563
    %2565 = vrot.lane.b32.xlu0 %v2529, 125
    %v2566 = vpop.permute.xlu0 %2565
    %2567 = vrot.lane.b32.xlu0 %v2530, 125
    %v2568 = vpop.permute.xlu0 %2567
    %2569 = vrot.lane.b32.xlu0 %v2531, 125
    %v2570 = vpop.permute.xlu0 %2569
    %v2584 = vadd.f32 %v2505, %v2546
    %v2585 = vadd.f32 %v2506, %v2548
    %v2586 = vadd.f32 %v2507, %v2550
    %v2587 = vadd.f32 %v2508, %v2552
    %v2588 = vadd.f32 %v2509, %v2554
    %v2589 = vadd.f32 %v2510, %v2556
    %v2590 = vadd.f32 %v2511, %v2558
    %v2591 = vadd.f32 %v2512, %v2560
    %v2592 = vadd.f32 %v2513, %v2562
    %v2593 = vadd.f32 %v2514, %v2564
    %v2594 = vadd.f32 %v2515, %v2566
    %v2595 = vadd.f32 %v2516, %v2568
    %v2596 = vadd.f32 %v2517, %v2570
    %v2597 = vstv %s551
    %v2598 = vmul.f32 %v2597, %v1298
    %v2599 = vmul.f32 %v2597, %v1299
    %v2600 = vmul.f32 %v2597, %v1300
    %v2601 = vmul.f32 %v2597, %v1301
    %v2602 = vmul.f32 %v2597, %v1302
    %v2603 = vmul.f32 %v2597, %v1303
    %v2604 = vmul.f32 %v2597, %v1304
    %v2605 = vmul.f32 %v2597, %v1305
    %v2606 = vmul.f32 %v2597, %v1306
    %v2607 = vmul.f32 %v2597, %v1307
    %v2608 = vmul.f32 %v2597, %v1308
    %v2609 = vmul.f32 %v2597, %v1309
    %v2610 = vmul.f32 %v2597, %v1310
    %2624 = vrot.lane.b32.xlu0 %v2598, 124
    %v2625 = vpop.permute.xlu0 %2624
    %2626 = vrot.lane.b32.xlu0 %v2599, 124
    %v2627 = vpop.permute.xlu0 %2626
    %2628 = vrot.lane.b32.xlu0 %v2600, 124
    %v2629 = vpop.permute.xlu0 %2628
    %2630 = vrot.lane.b32.xlu0 %v2601, 124
    %v2631 = vpop.permute.xlu0 %2630
    %2632 = vrot.lane.b32.xlu0 %v2602, 124
    %v2633 = vpop.permute.xlu0 %2632
    %2634 = vrot.lane.b32.xlu0 %v2603, 124
    %v2635 = vpop.permute.xlu0 %2634
    %2636 = vrot.lane.b32.xlu0 %v2604, 124
    %v2637 = vpop.permute.xlu0 %2636
    %2638 = vrot.lane.b32.xlu0 %v2605, 124
    %v2639 = vpop.permute.xlu0 %2638
    %2640 = vrot.lane.b32.xlu0 %v2606, 124
    %v2641 = vpop.permute.xlu0 %2640
    %2642 = vrot.lane.b32.xlu0 %v2607, 124
    %v2643 = vpop.permute.xlu0 %2642
    %2644 = vrot.lane.b32.xlu0 %v2608, 124
    %v2645 = vpop.permute.xlu0 %2644
    %2646 = vrot.lane.b32.xlu0 %v2609, 124
    %v2647 = vpop.permute.xlu0 %2646
    %2648 = vrot.lane.b32.xlu0 %v2610, 124
    %v2649 = vpop.permute.xlu0 %2648
    %v2663 = vadd.f32 %v2584, %v2625
    %v2664 = vadd.f32 %v2585, %v2627
    %v2665 = vadd.f32 %v2586, %v2629
    %v2666 = vadd.f32 %v2587, %v2631
    %v2667 = vadd.f32 %v2588, %v2633
    %v2668 = vadd.f32 %v2589, %v2635
    %v2669 = vadd.f32 %v2590, %v2637
    %v2670 = vadd.f32 %v2591, %v2639
    %v2671 = vadd.f32 %v2592, %v2641
    %v2672 = vadd.f32 %v2593, %v2643
    %v2673 = vadd.f32 %v2594, %v2645
    %v2674 = vadd.f32 %v2595, %v2647
    %v2675 = vadd.f32 %v2596, %v2649
    %vm2689 = vcmask 1044480
    %v2690 = vrot.slane %v2663, 3
    %v2691 = vrot.slane %v2664, 3
    %v2692 = vsel %vm2689, %v2690, %v2691
    %v2693 = vrot.slane %v2665, 3
    %v2694 = vsel %vm2689, %v2691, %v2693
    %v2695 = vrot.slane %v2666, 3
    %v2696 = vsel %vm2689, %v2693, %v2695
    %v2697 = vrot.slane %v2667, 3
    %v2698 = vsel %vm2689, %v2695, %v2697
    %v2699 = vrot.slane %v2668, 3
    %v2700 = vsel %vm2689, %v2697, %v2699
    %v2701 = vrot.slane %v2669, 3
    %v2702 = vsel %vm2689, %v2699, %v2701
    %v2703 = vrot.slane %v2670, 3
    %v2704 = vsel %vm2689, %v2701, %v2703
    %v2705 = vrot.slane %v2671, 3
    %v2706 = vsel %vm2689, %v2703, %v2705
    %v2707 = vrot.slane %v2672, 3
    %v2708 = vsel %vm2689, %v2705, %v2707
    %v2709 = vrot.slane %v2673, 3
    %v2710 = vsel %vm2689, %v2707, %v2709
    %v2711 = vrot.slane %v2674, 3
    %v2712 = vsel %vm2689, %v2709, %v2711
    %v2713 = vrot.slane %v2675, 3
    %v2714 = vsel %vm2689, %v2711, %v2713
    %v2727 = vadd.f32 %v2334, %v2692
    %v2728 = vadd.f32 %v2335, %v2694
    %v2729 = vadd.f32 %v2336, %v2696
    %v2730 = vadd.f32 %v2337, %v2698
    %v2731 = vadd.f32 %v2338, %v2700
    %v2732 = vadd.f32 %v2339, %v2702
    %v2733 = vadd.f32 %v2340, %v2704
    %v2734 = vadd.f32 %v2341, %v2706
    %v2735 = vadd.f32 %v2342, %v2708
    %v2736 = vadd.f32 %v2343, %v2710
    %v2737 = vadd.f32 %v2344, %v2712
    %v2738 = vadd.f32 %v2345, %v2714
    %v2739 = vstv %s552
    %v2740 = vmul.f32 %v2739, %v1298
    %v2741 = vmul.f32 %v2739, %v1299
    %v2742 = vmul.f32 %v2739, %v1300
    %v2743 = vmul.f32 %v2739, %v1301
    %v2744 = vmul.f32 %v2739, %v1302
    %v2745 = vmul.f32 %v2739, %v1303
    %v2746 = vmul.f32 %v2739, %v1304
    %v2747 = vmul.f32 %v2739, %v1305
    %v2748 = vmul.f32 %v2739, %v1306
    %v2749 = vmul.f32 %v2739, %v1307
    %v2750 = vmul.f32 %v2739, %v1308
    %v2751 = vmul.f32 %v2739, %v1309
    %v2752 = vmul.f32 %v2739, %v1310
    %v2753 = vstv %s553
    %v2754 = vmul.f32 %v2753, %v1298
    %v2755 = vmul.f32 %v2753, %v1299
    %v2756 = vmul.f32 %v2753, %v1300
    %v2757 = vmul.f32 %v2753, %v1301
    %v2758 = vmul.f32 %v2753, %v1302
    %v2759 = vmul.f32 %v2753, %v1303
    %v2760 = vmul.f32 %v2753, %v1304
    %v2761 = vmul.f32 %v2753, %v1305
    %v2762 = vmul.f32 %v2753, %v1306
    %v2763 = vmul.f32 %v2753, %v1307
    %v2764 = vmul.f32 %v2753, %v1308
    %v2765 = vmul.f32 %v2753, %v1309
    %v2766 = vmul.f32 %v2753, %v1310
    %2780 = vrot.lane.b32.xlu0 %v2754, 127
    %v2781 = vpop.permute.xlu0 %2780
    %2782 = vrot.lane.b32.xlu0 %v2755, 127
    %v2783 = vpop.permute.xlu0 %2782
    %2784 = vrot.lane.b32.xlu0 %v2756, 127
    %v2785 = vpop.permute.xlu0 %2784
    %2786 = vrot.lane.b32.xlu0 %v2757, 127
    %v2787 = vpop.permute.xlu0 %2786
    %2788 = vrot.lane.b32.xlu0 %v2758, 127
    %v2789 = vpop.permute.xlu0 %2788
    %2790 = vrot.lane.b32.xlu0 %v2759, 127
    %v2791 = vpop.permute.xlu0 %2790
    %2792 = vrot.lane.b32.xlu0 %v2760, 127
    %v2793 = vpop.permute.xlu0 %2792
    %2794 = vrot.lane.b32.xlu0 %v2761, 127
    %v2795 = vpop.permute.xlu0 %2794
    %2796 = vrot.lane.b32.xlu0 %v2762, 127
    %v2797 = vpop.permute.xlu0 %2796
    %2798 = vrot.lane.b32.xlu0 %v2763, 127
    %v2799 = vpop.permute.xlu0 %2798
    %2800 = vrot.lane.b32.xlu0 %v2764, 127
    %v2801 = vpop.permute.xlu0 %2800
    %2802 = vrot.lane.b32.xlu0 %v2765, 127
    %v2803 = vpop.permute.xlu0 %2802
    %2804 = vrot.lane.b32.xlu0 %v2766, 127
    %v2805 = vpop.permute.xlu0 %2804
    %v2819 = vadd.f32 %v2740, %v2781
    %v2820 = vadd.f32 %v2741, %v2783
    %v2821 = vadd.f32 %v2742, %v2785
    %v2822 = vadd.f32 %v2743, %v2787
    %v2823 = vadd.f32 %v2744, %v2789
    %v2824 = vadd.f32 %v2745, %v2791
    %v2825 = vadd.f32 %v2746, %v2793
    %v2826 = vadd.f32 %v2747, %v2795
    %v2827 = vadd.f32 %v2748, %v2797
    %v2828 = vadd.f32 %v2749, %v2799
    %v2829 = vadd.f32 %v2750, %v2801
    %v2830 = vadd.f32 %v2751, %v2803
    %v2831 = vadd.f32 %v2752, %v2805
    %v2832 = vstv %s554
    %v2833 = vmul.f32 %v2832, %v1298
    %v2834 = vmul.f32 %v2832, %v1299
    %v2835 = vmul.f32 %v2832, %v1300
    %v2836 = vmul.f32 %v2832, %v1301
    %v2837 = vmul.f32 %v2832, %v1302
    %v2838 = vmul.f32 %v2832, %v1303
    %v2839 = vmul.f32 %v2832, %v1304
    %v2840 = vmul.f32 %v2832, %v1305
    %v2841 = vmul.f32 %v2832, %v1306
    %v2842 = vmul.f32 %v2832, %v1307
    %v2843 = vmul.f32 %v2832, %v1308
    %v2844 = vmul.f32 %v2832, %v1309
    %v2845 = vmul.f32 %v2832, %v1310
    %2859 = vrot.lane.b32.xlu0 %v2833, 126
    %v2860 = vpop.permute.xlu0 %2859
    %2861 = vrot.lane.b32.xlu0 %v2834, 126
    %v2862 = vpop.permute.xlu0 %2861
    %2863 = vrot.lane.b32.xlu0 %v2835, 126
    %v2864 = vpop.permute.xlu0 %2863
    %2865 = vrot.lane.b32.xlu0 %v2836, 126
    %v2866 = vpop.permute.xlu0 %2865
    %2867 = vrot.lane.b32.xlu0 %v2837, 126
    %v2868 = vpop.permute.xlu0 %2867
    %2869 = vrot.lane.b32.xlu0 %v2838, 126
    %v2870 = vpop.permute.xlu0 %2869
    %2871 = vrot.lane.b32.xlu0 %v2839, 126
    %v2872 = vpop.permute.xlu0 %2871
    %2873 = vrot.lane.b32.xlu0 %v2840, 126
    %v2874 = vpop.permute.xlu0 %2873
    %2875 = vrot.lane.b32.xlu0 %v2841, 126
    %v2876 = vpop.permute.xlu0 %2875
    %2877 = vrot.lane.b32.xlu0 %v2842, 126
    %v2878 = vpop.permute.xlu0 %2877
    %2879 = vrot.lane.b32.xlu0 %v2843, 126
    %v2880 = vpop.permute.xlu0 %2879
    %2881 = vrot.lane.b32.xlu0 %v2844, 126
    %v2882 = vpop.permute.xlu0 %2881
    %2883 = vrot.lane.b32.xlu0 %v2845, 126
    %v2884 = vpop.permute.xlu0 %2883
    %v2898 = vadd.f32 %v2819, %v2860
    %v2899 = vadd.f32 %v2820, %v2862
    %v2900 = vadd.f32 %v2821, %v2864
    %v2901 = vadd.f32 %v2822, %v2866
    %v2902 = vadd.f32 %v2823, %v2868
    %v2903 = vadd.f32 %v2824, %v2870
    %v2904 = vadd.f32 %v2825, %v2872
    %v2905 = vadd.f32 %v2826, %v2874
    %v2906 = vadd.f32 %v2827, %v2876
    %v2907 = vadd.f32 %v2828, %v2878
    %v2908 = vadd.f32 %v2829, %v2880
    %v2909 = vadd.f32 %v2830, %v2882
    %v2910 = vadd.f32 %v2831, %v2884
    %v2911 = vstv %s555
    %v2912 = vmul.f32 %v2911, %v1298
    %v2913 = vmul.f32 %v2911, %v1299
    %v2914 = vmul.f32 %v2911, %v1300
    %v2915 = vmul.f32 %v2911, %v1301
    %v2916 = vmul.f32 %v2911, %v1302
    %v2917 = vmul.f32 %v2911, %v1303
    %v2918 = vmul.f32 %v2911, %v1304
    %v2919 = vmul.f32 %v2911, %v1305
    %v2920 = vmul.f32 %v2911, %v1306
    %v2921 = vmul.f32 %v2911, %v1307
    %v2922 = vmul.f32 %v2911, %v1308
    %v2923 = vmul.f32 %v2911, %v1309
    %v2924 = vmul.f32 %v2911, %v1310
    %2938 = vrot.lane.b32.xlu0 %v2912, 125
    %v2939 = vpop.permute.xlu0 %2938
    %2940 = vrot.lane.b32.xlu0 %v2913, 125
    %v2941 = vpop.permute.xlu0 %2940
    %2942 = vrot.lane.b32.xlu0 %v2914, 125
    %v2943 = vpop.permute.xlu0 %2942
    %2944 = vrot.lane.b32.xlu0 %v2915, 125
    %v2945 = vpop.permute.xlu0 %2944
    %2946 = vrot.lane.b32.xlu0 %v2916, 125
    %v2947 = vpop.permute.xlu0 %2946
    %2948 = vrot.lane.b32.xlu0 %v2917, 125
    %v2949 = vpop.permute.xlu0 %2948
    %2950 = vrot.lane.b32.xlu0 %v2918, 125
    %v2951 = vpop.permute.xlu0 %2950
    %2952 = vrot.lane.b32.xlu0 %v2919, 125
    %v2953 = vpop.permute.xlu0 %2952
    %2954 = vrot.lane.b32.xlu0 %v2920, 125
    %v2955 = vpop.permute.xlu0 %2954
    %2956 = vrot.lane.b32.xlu0 %v2921, 125
    %v2957 = vpop.permute.xlu0 %2956
    %2958 = vrot.lane.b32.xlu0 %v2922, 125
    %v2959 = vpop.permute.xlu0 %2958
    %2960 = vrot.lane.b32.xlu0 %v2923, 125
    %v2961 = vpop.permute.xlu0 %2960
    %2962 = vrot.lane.b32.xlu0 %v2924, 125
    %v2963 = vpop.permute.xlu0 %2962
    %v2977 = vadd.f32 %v2898, %v2939
    %v2978 = vadd.f32 %v2899, %v2941
    %v2979 = vadd.f32 %v2900, %v2943
    %v2980 = vadd.f32 %v2901, %v2945
    %v2981 = vadd.f32 %v2902, %v2947
    %v2982 = vadd.f32 %v2903, %v2949
    %v2983 = vadd.f32 %v2904, %v2951
    %v2984 = vadd.f32 %v2905, %v2953
    %v2985 = vadd.f32 %v2906, %v2955
    %v2986 = vadd.f32 %v2907, %v2957
    %v2987 = vadd.f32 %v2908, %v2959
    %v2988 = vadd.f32 %v2909, %v2961
    %v2989 = vadd.f32 %v2910, %v2963
    %v2990 = vstv %s556
    %v2991 = vmul.f32 %v2990, %v1298
    %v2992 = vmul.f32 %v2990, %v1299
    %v2993 = vmul.f32 %v2990, %v1300
    %v2994 = vmul.f32 %v2990, %v1301
    %v2995 = vmul.f32 %v2990, %v1302
    %v2996 = vmul.f32 %v2990, %v1303
    %v2997 = vmul.f32 %v2990, %v1304
    %v2998 = vmul.f32 %v2990, %v1305
    %v2999 = vmul.f32 %v2990, %v1306
    %v3000 = vmul.f32 %v2990, %v1307
    %v3001 = vmul.f32 %v2990, %v1308
    %v3002 = vmul.f32 %v2990, %v1309
    %v3003 = vmul.f32 %v2990, %v1310
    %3017 = vrot.lane.b32.xlu0 %v2991, 124
    %v3018 = vpop.permute.xlu0 %3017
    %3019 = vrot.lane.b32.xlu0 %v2992, 124
    %v3020 = vpop.permute.xlu0 %3019
    %3021 = vrot.lane.b32.xlu0 %v2993, 124
    %v3022 = vpop.permute.xlu0 %3021
    %3023 = vrot.lane.b32.xlu0 %v2994, 124
    %v3024 = vpop.permute.xlu0 %3023
    %3025 = vrot.lane.b32.xlu0 %v2995, 124
    %v3026 = vpop.permute.xlu0 %3025
    %3027 = vrot.lane.b32.xlu0 %v2996, 124
    %v3028 = vpop.permute.xlu0 %3027
    %3029 = vrot.lane.b32.xlu0 %v2997, 124
    %v3030 = vpop.permute.xlu0 %3029
    %3031 = vrot.lane.b32.xlu0 %v2998, 124
    %v3032 = vpop.permute.xlu0 %3031
    %3033 = vrot.lane.b32.xlu0 %v2999, 124
    %v3034 = vpop.permute.xlu0 %3033
    %3035 = vrot.lane.b32.xlu0 %v3000, 124
    %v3036 = vpop.permute.xlu0 %3035
    %3037 = vrot.lane.b32.xlu0 %v3001, 124
    %v3038 = vpop.permute.xlu0 %3037
    %3039 = vrot.lane.b32.xlu0 %v3002, 124
    %v3040 = vpop.permute.xlu0 %3039
    %3041 = vrot.lane.b32.xlu0 %v3003, 124
    %v3042 = vpop.permute.xlu0 %3041
    %v3056 = vadd.f32 %v2977, %v3018
    %v3057 = vadd.f32 %v2978, %v3020
    %v3058 = vadd.f32 %v2979, %v3022
    %v3059 = vadd.f32 %v2980, %v3024
    %v3060 = vadd.f32 %v2981, %v3026
    %v3061 = vadd.f32 %v2982, %v3028
    %v3062 = vadd.f32 %v2983, %v3030
    %v3063 = vadd.f32 %v2984, %v3032
    %v3064 = vadd.f32 %v2985, %v3034
    %v3065 = vadd.f32 %v2986, %v3036
    %v3066 = vadd.f32 %v2987, %v3038
    %v3067 = vadd.f32 %v2988, %v3040
    %v3068 = vadd.f32 %v2989, %v3042
    %vm3082 = vcmask 1043456
    %v3083 = vrot.slane %v3056, 4
    %v3084 = vrot.slane %v3057, 4
    %v3085 = vsel %vm3082, %v3083, %v3084
    %v3086 = vrot.slane %v3058, 4
    %v3087 = vsel %vm3082, %v3084, %v3086
    %v3088 = vrot.slane %v3059, 4
    %v3089 = vsel %vm3082, %v3086, %v3088
    %v3090 = vrot.slane %v3060, 4
    %v3091 = vsel %vm3082, %v3088, %v3090
    %v3092 = vrot.slane %v3061, 4
    %v3093 = vsel %vm3082, %v3090, %v3092
    %v3094 = vrot.slane %v3062, 4
    %v3095 = vsel %vm3082, %v3092, %v3094
    %v3096 = vrot.slane %v3063, 4
    %v3097 = vsel %vm3082, %v3094, %v3096
    %v3098 = vrot.slane %v3064, 4
    %v3099 = vsel %vm3082, %v3096, %v3098
    %v3100 = vrot.slane %v3065, 4
    %v3101 = vsel %vm3082, %v3098, %v3100
    %v3102 = vrot.slane %v3066, 4
    %v3103 = vsel %vm3082, %v3100, %v3102
    %v3104 = vrot.slane %v3067, 4
    %v3105 = vsel %vm3082, %v3102, %v3104
    %v3106 = vrot.slane %v3068, 4
    %v3107 = vsel %vm3082, %v3104, %v3106
    %v3120 = vadd.f32 %v2727, %v3085
    %v3121 = vadd.f32 %v2728, %v3087
    %v3122 = vadd.f32 %v2729, %v3089
    %v3123 = vadd.f32 %v2730, %v3091
    %v3124 = vadd.f32 %v2731, %v3093
    %v3125 = vadd.f32 %v2732, %v3095
    %v3126 = vadd.f32 %v2733, %v3097
    %v3127 = vadd.f32 %v2734, %v3099
    %v3128 = vadd.f32 %v2735, %v3101
    %v3129 = vadd.f32 %v2736, %v3103
    %v3130 = vadd.f32 %v2737, %v3105
    %v3131 = vadd.f32 %v2738, %v3107
    %v3132 = vstv %s557
    %v3133 = vadd.f32 %v3120, %v3132
    %v3134 = vadd.f32 %v3121, %v3132
    %v3135 = vadd.f32 %v3122, %v3132
    %v3136 = vadd.f32 %v3123, %v3132
    %v3137 = vadd.f32 %v3124, %v3132
    %v3138 = vadd.f32 %v3125, %v3132
    %v3139 = vadd.f32 %v3126, %v3132
    %v3140 = vadd.f32 %v3127, %v3132
    %v3141 = vadd.f32 %v3128, %v3132
    %v3142 = vadd.f32 %v3129, %v3132
    %v3143 = vadd.f32 %v3130, %v3132
    %v3144 = vadd.f32 %v3131, %v3132
    %vm3145 = vcmask 769024
    %v3147 = vsel %vm3145, %v429, 0
    %v3150 = vsel %vm3145, %v430, 0
    %v3153 = vsel %vm3145, %v431, 0
    %v3156 = vsel %vm3145, %v432, 0
    %v3159 = vsel %vm3145, %v433, 0
    %v3162 = vsel %vm3145, %v434, 0
    %v3165 = vsel %vm2298, %v3144, 0
    %3167 = vmatprep.subr.mxu0 0.0
    %3168 = vmatpush1.msra.mxu0 %v3133
    %3169 = vmatprep.subr.mxu0 0.0
    %3170 = vmatpush1.msra.mxu0 %v3134
    %3171 = vmatprep.subr.mxu0 0.0
    %3172 = vmatpush1.msra.mxu0 %v3135
    %3173 = vmatprep.subr.mxu0 0.0
    %3174 = vmatpush1.msra.mxu0 %v3136
    %3175 = vmatprep.subr.mxu0 0.0
    %3176 = vmatpush1.msra.mxu0 %v3137
    %3177 = vmatprep.subr.mxu0 0.0
    %3178 = vmatpush1.msra.mxu0 %v3138
    %3179 = vmatprep.subr.mxu0 0.0
    %3180 = vmatpush1.msra.mxu0 %v3139
    %3181 = vmatprep.subr.mxu0 0.0
    %3182 = vmatpush1.msra.mxu0 %v3140
    %3183 = vmatprep.subr.mxu0 0.0
    %3184 = vmatpush1.msra.mxu0 %v3141
    %3185 = vmatprep.subr.mxu0 0.0
    %3186 = vmatpush1.msra.mxu0 %v3142
    %3187 = vmatprep.subr.mxu0 0.0
    %3188 = vmatpush1.msra.mxu0 %v3143
    %3189 = vmatprep.subr.mxu0 0.0
    %3190 = vmatpush1.msra.mxu0 %v3165
    %3191 = vmatprep.subr.mxu0 0.0
    %3192 = vmatpush1.msra.mxu0 0.0
    %3193 = vmatprep.subr.mxu0 0.0
    %3194 = vmatpush1.msra.mxu0 0.0
    %3195 = vmatprep.subr.mxu0 0.0
    %3196 = vmatpush1.msra.mxu0 0.0
    %3197 = vmatprep.subr.mxu0 0.0
    %3198 = vmatpush1.msra.mxu0 0.0
    %3199 = vmatprep.subr.mxu0 0.0
    %3200 = vmatpush1.msra.mxu0 0.0
    %3201 = vmatprep.subr.mxu0 0.0
    %3202 = vmatpush1.msra.mxu0 0.0
    %3203 = vmatprep.subr.mxu0 0.0
    %3204 = vmatpush1.msra.mxu0 0.0
    %3205 = vmatprep.subr.mxu0 0.0
    %3206 = vmatpush1.msra.mxu0 0.0
    %3207 = vmatprep.subr.mxu0 0.0
    %3208 = vmatpush1.msra.mxu0 0.0
    %3209 = vmatprep.subr.mxu0 0.0
    %3210 = vmatpush1.msra.mxu0 0.0
    %3211 = vmatprep.subr.mxu0 0.0
    %3212 = vmatpush1.msra.mxu0 0.0
    %3213 = vmatprep.subr.mxu0 0.0
    %3214 = vmatpush1.msra.mxu0 0.0
    %3215 = vmatprep.subr.mxu0 0.0
    %3216 = vmatpush1.msra.mxu0 0.0
    %3217 = vmatprep.subr.mxu0 0.0
    %3218 = vmatpush1.msra.mxu0 0.0
    %3219 = vmatprep.subr.mxu0 0.0
    %3220 = vmatpush1.msra.mxu0 0.0
    %3221 = vmatprep.subr.mxu0 0.0
    %3222 = vmatpush1.msra.mxu0 0.0
    %3223 = vmatprep.subr.mxu0 0.0
    %3224 = vmatpush1.msra.mxu0 0.0
    %3225 = vmatprep.subr.mxu0 0.0
    %3226 = vmatpush1.msra.mxu0 0.0
    %3227 = vmatprep.subr.mxu0 0.0
    %3228 = vmatpush1.msra.mxu0 0.0
    %3229 = vmatprep.subr.mxu0 0.0
    %3230 = vmatpush1.msra.mxu0 0.0
    %3231 = vmatprep.mubr.f32.mxu0 0.0
    %3232 = vmatmul.mubr.f32.gmra.mrb[0].mxu0 %v3147
    %v3233 = vpop.f32.mrb[0].mxu0
    %v3234 = vadd.f32 0.0, %v3233
    %v3235 = vpop.f32.mrb[0].mxu0
    %3236 = vmatprep.mubr.f32.mxu0 0.0
    %3237 = vmatmul.mubr.f32.gmra.mrb[0].mxu0 %v3150
    %v3238 = vpop.f32.mrb[0].mxu0
    %v3239 = vadd.f32 0.0, %v3238
    %v3240 = vpop.f32.mrb[0].mxu0
    %3241 = vmatprep.mubr.f32.mxu0 0.0
    %3242 = vmatmul.mubr.f32.gmra.mrb[0].mxu0 %v3153
    %v3243 = vpop.f32.mrb[0].mxu0
    %v3244 = vadd.f32 0.0, %v3243
    %v3245 = vpop.f32.mrb[0].mxu0
    %3246 = vmatprep.mubr.f32.mxu0 0.0
    %3247 = vmatmul.mubr.f32.gmra.mrb[0].mxu0 %v3156
    %v3248 = vpop.f32.mrb[0].mxu0
    %v3249 = vadd.f32 0.0, %v3248
    %v3250 = vpop.f32.mrb[0].mxu0
    %3251 = vmatprep.mubr.f32.mxu0 0.0
    %3252 = vmatmul.mubr.f32.gmra.mrb[0].mxu0 %v3159
    %v3253 = vpop.f32.mrb[0].mxu0
    %v3254 = vadd.f32 0.0, %v3253
    %v3255 = vpop.f32.mrb[0].mxu0
    %3256 = vmatprep.mubr.f32.mxu0 0.0
    %3257 = vmatmul.mubr.f32.gmra.mrb[0].mxu0 %v3162
    %v3258 = vpop.f32.mrb[0].mxu0
    %v3259 = vadd.f32 0.0, %v3258
    %v3260 = vpop.f32.mrb[0].mxu0
    %3261 = vdwg.mxu0
    %v3263 = vsel %vm3145, %v453, 0
    %v3266 = vsel %vm3145, %v454, 0
    %v3269 = vsel %vm3145, %v455, 0
    %v3272 = vsel %vm3145, %v456, 0
    %v3275 = vsel %vm3145, %v457, 0
    %v3278 = vsel %vm3145, %v458, 0
    %3280 = vmatprep.subr.mxu0 0.0
    %3281 = vmatpush1.msra.mxu0 %v3133
    %3282 = vmatprep.subr.mxu0 0.0
    %3283 = vmatpush1.msra.mxu0 %v3134
    %3284 = vmatprep.subr.mxu0 0.0
    %3285 = vmatpush1.msra.mxu0 %v3135
    %3286 = vmatprep.subr.mxu0 0.0
    %3287 = vmatpush1.msra.mxu0 %v3136
    %3288 = vmatprep.subr.mxu0 0.0
    %3289 = vmatpush1.msra.mxu0 %v3137
    %3290 = vmatprep.subr.mxu0 0.0
    %3291 = vmatpush1.msra.mxu0 %v3138
    %3292 = vmatprep.subr.mxu0 0.0
    %3293 = vmatpush1.msra.mxu0 %v3139
    %3294 = vmatprep.subr.mxu0 0.0
    %3295 = vmatpush1.msra.mxu0 %v3140
    %3296 = vmatprep.subr.mxu0 0.0
    %3297 = vmatpush1.msra.mxu0 %v3141
    %3298 = vmatprep.subr.mxu0 0.0
    %3299 = vmatpush1.msra.mxu0 %v3142
    %3300 = vmatprep.subr.mxu0 0.0
    %3301 = vmatpush1.msra.mxu0 %v3143
    %3302 = vmatprep.subr.mxu0 0.0
    %3303 = vmatpush1.msra.mxu0 %v3165
    %3304 = vmatprep.subr.mxu0 0.0
    %3305 = vmatpush1.msra.mxu0 0.0
    %3306 = vmatprep.subr.mxu0 0.0
    %3307 = vmatpush1.msra.mxu0 0.0
    %3308 = vmatprep.subr.mxu0 0.0
    %3309 = vmatpush1.msra.mxu0 0.0
    %3310 = vmatprep.subr.mxu0 0.0
    %3311 = vmatpush1.msra.mxu0 0.0
    %3312 = vmatprep.subr.mxu0 0.0
    %3313 = vmatpush1.msra.mxu0 0.0
    %3314 = vmatprep.subr.mxu0 0.0
    %3315 = vmatpush1.msra.mxu0 0.0
    %3316 = vmatprep.subr.mxu0 0.0
    %3317 = vmatpush1.msra.mxu0 0.0
    %3318 = vmatprep.subr.mxu0 0.0
    %3319 = vmatpush1.msra.mxu0 0.0
    %3320 = vmatprep.subr.mxu0 0.0
    %3321 = vmatpush1.msra.mxu0 0.0
    %3322 = vmatprep.subr.mxu0 0.0
    %3323 = vmatpush1.msra.mxu0 0.0
    %3324 = vmatprep.subr.mxu0 0.0
    %3325 = vmatpush1.msra.mxu0 0.0
    %3326 = vmatprep.subr.mxu0 0.0
    %3327 = vmatpush1.msra.mxu0 0.0
    %3328 = vmatprep.subr.mxu0 0.0
    %3329 = vmatpush1.msra.mxu0 0.0
    %3330 = vmatprep.subr.mxu0 0.0
    %3331 = vmatpush1.msra.mxu0 0.0
    %3332 = vmatprep.subr.mxu0 0.0
    %3333 = vmatpush1.msra.mxu0 0.0
    %3334 = vmatprep.subr.mxu0 0.0
    %3335 = vmatpush1.msra.mxu0 0.0
    %3336 = vmatprep.subr.mxu0 0.0
    %3337 = vmatpush1.msra.mxu0 0.0
    %3338 = vmatprep.subr.mxu0 0.0
    %3339 = vmatpush1.msra.mxu0 0.0
    %3340 = vmatprep.subr.mxu0 0.0
    %3341 = vmatpush1.msra.mxu0 0.0
    %3342 = vmatprep.subr.mxu0 0.0
    %3343 = vmatpush1.msra.mxu0 0.0
    %3344 = vmatprep.mubr.f32.mxu0 0.0
    %3345 = vmatmul.mubr.f32.gmra.mrb[0].mxu0 %v3263
    %v3346 = vpop.f32.mrb[0].mxu0
    %v3347 = vadd.f32 0.0, %v3346
    %v3348 = vpop.f32.mrb[0].mxu0
    %3349 = vmatprep.mubr.f32.mxu0 0.0
    %3350 = vmatmul.mubr.f32.gmra.mrb[0].mxu0 %v3266
    %v3351 = vpop.f32.mrb[0].mxu0
    %v3352 = vadd.f32 0.0, %v3351
    %v3353 = vpop.f32.mrb[0].mxu0
    %3354 = vmatprep.mubr.f32.mxu0 0.0
    %3355 = vmatmul.mubr.f32.gmra.mrb[0].mxu0 %v3269
    %v3356 = vpop.f32.mrb[0].mxu0
    %v3357 = vadd.f32 0.0, %v3356
    %v3358 = vpop.f32.mrb[0].mxu0
    %3359 = vmatprep.mubr.f32.mxu0 0.0
    %3360 = vmatmul.mubr.f32.gmra.mrb[0].mxu0 %v3272
    %v3361 = vpop.f32.mrb[0].mxu0
    %v3362 = vadd.f32 0.0, %v3361
    %v3363 = vpop.f32.mrb[0].mxu0
    %3364 = vmatprep.mubr.f32.mxu0 0.0
    %3365 = vmatmul.mubr.f32.gmra.mrb[0].mxu0 %v3275
    %v3366 = vpop.f32.mrb[0].mxu0
    %v3367 = vadd.f32 0.0, %v3366
    %v3368 = vpop.f32.mrb[0].mxu0
    %3369 = vmatprep.mubr.f32.mxu0 0.0
    %3370 = vmatmul.mubr.f32.gmra.mrb[0].mxu0 %v3278
    %v3371 = vpop.f32.mrb[0].mxu0
    %v3372 = vadd.f32 0.0, %v3371
    %v3373 = vpop.f32.mrb[0].mxu0
    %3374 = vdwg.mxu0
    %v3375 = vmax.f32 %v3234, %v3347
    %v3376 = vmax.f32 %v3239, %v3352
    %v3377 = vmax.f32 %v3244, %v3357
    %v3378 = vmax.f32 %v3249, %v3362
    %v3379 = vmax.f32 %v3254, %v3367
    %v3380 = vmax.f32 %v3259, %v3372
    %v3382 = vsel %vm3145, %v3375, 0
    %v3385 = vsel %vm3145, %v3376, 0
    %v3388 = vsel %vm3145, %v3377, 0
    %v3391 = vsel %vm3145, %v3378, 0
    %v3394 = vsel %vm3145, %v3379, 0
    %v3397 = vsel %vm3145, %v3380, 0
    %v3400 = vsel %vm2298, %v494, 0
    %3402 = vmatprep.subr.mxu0 0.0
    %3403 = vmatpush1.msra.mxu0 %v483
    %3404 = vmatprep.subr.mxu0 0.0
    %3405 = vmatpush1.msra.mxu0 %v484
    %3406 = vmatprep.subr.mxu0 0.0
    %3407 = vmatpush1.msra.mxu0 %v485
    %3408 = vmatprep.subr.mxu0 0.0
    %3409 = vmatpush1.msra.mxu0 %v486
    %3410 = vmatprep.subr.mxu0 0.0
    %3411 = vmatpush1.msra.mxu0 %v487
    %3412 = vmatprep.subr.mxu0 0.0
    %3413 = vmatpush1.msra.mxu0 %v488
    %3414 = vmatprep.subr.mxu0 0.0
    %3415 = vmatpush1.msra.mxu0 %v489
    %3416 = vmatprep.subr.mxu0 0.0
    %3417 = vmatpush1.msra.mxu0 %v490
    %3418 = vmatprep.subr.mxu0 0.0
    %3419 = vmatpush1.msra.mxu0 %v491
    %3420 = vmatprep.subr.mxu0 0.0
    %3421 = vmatpush1.msra.mxu0 %v492
    %3422 = vmatprep.subr.mxu0 0.0
    %3423 = vmatpush1.msra.mxu0 %v493
    %3424 = vmatprep.subr.mxu0 0.0
    %3425 = vmatpush1.msra.mxu0 %v3400
    %3426 = vmatprep.subr.mxu0 0.0
    %3427 = vmatpush1.msra.mxu0 0.0
    %3428 = vmatprep.subr.mxu0 0.0
    %3429 = vmatpush1.msra.mxu0 0.0
    %3430 = vmatprep.subr.mxu0 0.0
    %3431 = vmatpush1.msra.mxu0 0.0
    %3432 = vmatprep.subr.mxu0 0.0
    %3433 = vmatpush1.msra.mxu0 0.0
    %3434 = vmatprep.subr.mxu0 0.0
    %3435 = vmatpush1.msra.mxu0 0.0
    %3436 = vmatprep.subr.mxu0 0.0
    %3437 = vmatpush1.msra.mxu0 0.0
    %3438 = vmatprep.subr.mxu0 0.0
    %3439 = vmatpush1.msra.mxu0 0.0
    %3440 = vmatprep.subr.mxu0 0.0
    %3441 = vmatpush1.msra.mxu0 0.0
    %3442 = vmatprep.subr.mxu0 0.0
    %3443 = vmatpush1.msra.mxu0 0.0
    %3444 = vmatprep.subr.mxu0 0.0
    %3445 = vmatpush1.msra.mxu0 0.0
    %3446 = vmatprep.subr.mxu0 0.0
    %3447 = vmatpush1.msra.mxu0 0.0
    %3448 = vmatprep.subr.mxu0 0.0
    %3449 = vmatpush1.msra.mxu0 0.0
    %3450 = vmatprep.subr.mxu0 0.0
    %3451 = vmatpush1.msra.mxu0 0.0
    %3452 = vmatprep.subr.mxu0 0.0
    %3453 = vmatpush1.msra.mxu0 0.0
    %3454 = vmatprep.subr.mxu0 0.0
    %3455 = vmatpush1.msra.mxu0 0.0
    %3456 = vmatprep.subr.mxu0 0.0
    %3457 = vmatpush1.msra.mxu0 0.0
    %3458 = vmatprep.subr.mxu0 0.0
    %3459 = vmatpush1.msra.mxu0 0.0
    %3460 = vmatprep.subr.mxu0 0.0
    %3461 = vmatpush1.msra.mxu0 0.0
    %3462 = vmatprep.subr.mxu0 0.0
    %3463 = vmatpush1.msra.mxu0 0.0
    %3464 = vmatprep.subr.mxu0 0.0
    %3465 = vmatpush1.msra.mxu0 0.0
    %3466 = vmatprep.mubr.f32.mxu0 0.0
    %3467 = vmatmul.mubr.f32.gmra.mrb[0].mxu0 %v3382
    %v3468 = vpop.f32.mrb[0].mxu0
    %v3469 = vadd.f32 0.0, %v3468
    %v3470 = vpop.f32.mrb[0].mxu0
    %3471 = vmatprep.mubr.f32.mxu0 0.0
    %3472 = vmatmul.mubr.f32.gmra.mrb[0].mxu0 %v3385
    %v3473 = vpop.f32.mrb[0].mxu0
    %v3474 = vadd.f32 0.0, %v3473
    %v3475 = vpop.f32.mrb[0].mxu0
    %3476 = vmatprep.mubr.f32.mxu0 0.0
    %3477 = vmatmul.mubr.f32.gmra.mrb[0].mxu0 %v3388
    %v3478 = vpop.f32.mrb[0].mxu0
    %v3479 = vadd.f32 0.0, %v3478
    %v3480 = vpop.f32.mrb[0].mxu0
    %3481 = vmatprep.mubr.f32.mxu0 0.0
    %3482 = vmatmul.mubr.f32.gmra.mrb[0].mxu0 %v3391
    %v3483 = vpop.f32.mrb[0].mxu0
    %v3484 = vadd.f32 0.0, %v3483
    %v3485 = vpop.f32.mrb[0].mxu0
    %3486 = vmatprep.mubr.f32.mxu0 0.0
    %3487 = vmatmul.mubr.f32.gmra.mrb[0].mxu0 %v3394
    %v3488 = vpop.f32.mrb[0].mxu0
    %v3489 = vadd.f32 0.0, %v3488
    %v3490 = vpop.f32.mrb[0].mxu0
    %3491 = vmatprep.mubr.f32.mxu0 0.0
    %3492 = vmatmul.mubr.f32.gmra.mrb[0].mxu0 %v3397
    %v3493 = vpop.f32.mrb[0].mxu0
    %v3494 = vadd.f32 0.0, %v3493
    %v3495 = vpop.f32.mrb[0].mxu0
    %3496 = vdwg.mxu0
    %v3498 = vsel %vm2298, %v531, 0
    %3500 = vmatprep.subr.mxu0 0.0
    %3501 = vmatpush1.msra.mxu0 %v520
    %3502 = vmatprep.subr.mxu0 0.0
    %3503 = vmatpush1.msra.mxu0 %v521
    %3504 = vmatprep.subr.mxu0 0.0
    %3505 = vmatpush1.msra.mxu0 %v522
    %3506 = vmatprep.subr.mxu0 0.0
    %3507 = vmatpush1.msra.mxu0 %v523
    %3508 = vmatprep.subr.mxu0 0.0
    %3509 = vmatpush1.msra.mxu0 %v524
    %3510 = vmatprep.subr.mxu0 0.0
    %3511 = vmatpush1.msra.mxu0 %v525
    %3512 = vmatprep.subr.mxu0 0.0
    %3513 = vmatpush1.msra.mxu0 %v526
    %3514 = vmatprep.subr.mxu0 0.0
    %3515 = vmatpush1.msra.mxu0 %v527
    %3516 = vmatprep.subr.mxu0 0.0
    %3517 = vmatpush1.msra.mxu0 %v528
    %3518 = vmatprep.subr.mxu0 0.0
    %3519 = vmatpush1.msra.mxu0 %v529
    %3520 = vmatprep.subr.mxu0 0.0
    %3521 = vmatpush1.msra.mxu0 %v530
    %3522 = vmatprep.subr.mxu0 0.0
    %3523 = vmatpush1.msra.mxu0 %v3498
    %3524 = vmatprep.subr.mxu0 0.0
    %3525 = vmatpush1.msra.mxu0 0.0
    %3526 = vmatprep.subr.mxu0 0.0
    %3527 = vmatpush1.msra.mxu0 0.0
    %3528 = vmatprep.subr.mxu0 0.0
    %3529 = vmatpush1.msra.mxu0 0.0
    %3530 = vmatprep.subr.mxu0 0.0
    %3531 = vmatpush1.msra.mxu0 0.0
    %3532 = vmatprep.subr.mxu0 0.0
    %3533 = vmatpush1.msra.mxu0 0.0
    %3534 = vmatprep.subr.mxu0 0.0
    %3535 = vmatpush1.msra.mxu0 0.0
    %3536 = vmatprep.subr.mxu0 0.0
    %3537 = vmatpush1.msra.mxu0 0.0
    %3538 = vmatprep.subr.mxu0 0.0
    %3539 = vmatpush1.msra.mxu0 0.0
    %3540 = vmatprep.subr.mxu0 0.0
    %3541 = vmatpush1.msra.mxu0 0.0
    %3542 = vmatprep.subr.mxu0 0.0
    %3543 = vmatpush1.msra.mxu0 0.0
    %3544 = vmatprep.subr.mxu0 0.0
    %3545 = vmatpush1.msra.mxu0 0.0
    %3546 = vmatprep.subr.mxu0 0.0
    %3547 = vmatpush1.msra.mxu0 0.0
    %3548 = vmatprep.subr.mxu0 0.0
    %3549 = vmatpush1.msra.mxu0 0.0
    %3550 = vmatprep.subr.mxu0 0.0
    %3551 = vmatpush1.msra.mxu0 0.0
    %3552 = vmatprep.subr.mxu0 0.0
    %3553 = vmatpush1.msra.mxu0 0.0
    %3554 = vmatprep.subr.mxu0 0.0
    %3555 = vmatpush1.msra.mxu0 0.0
    %3556 = vmatprep.subr.mxu0 0.0
    %3557 = vmatpush1.msra.mxu0 0.0
    %3558 = vmatprep.subr.mxu0 0.0
    %3559 = vmatpush1.msra.mxu0 0.0
    %3560 = vmatprep.subr.mxu0 0.0
    %3561 = vmatpush1.msra.mxu0 0.0
    %3562 = vmatprep.subr.mxu0 0.0
    %3563 = vmatpush1.msra.mxu0 0.0
    %3564 = vmatprep.mubr.f32.mxu0 0.0
    %3565 = vmatmul.mubr.f32.gmra.mrb[0].mxu0 %v3382
    %v3566 = vpop.f32.mrb[0].mxu0
    %v3567 = vadd.f32 0.0, %v3566
    %v3568 = vpop.f32.mrb[0].mxu0
    %3569 = vmatprep.mubr.f32.mxu0 0.0
    %3570 = vmatmul.mubr.f32.gmra.mrb[0].mxu0 %v3385
    %v3571 = vpop.f32.mrb[0].mxu0
    %v3572 = vadd.f32 0.0, %v3571
    %v3573 = vpop.f32.mrb[0].mxu0
    %3574 = vmatprep.mubr.f32.mxu0 0.0
    %3575 = vmatmul.mubr.f32.gmra.mrb[0].mxu0 %v3388
    %v3576 = vpop.f32.mrb[0].mxu0
    %v3577 = vadd.f32 0.0, %v3576
    %v3578 = vpop.f32.mrb[0].mxu0
    %3579 = vmatprep.mubr.f32.mxu0 0.0
    %3580 = vmatmul.mubr.f32.gmra.mrb[0].mxu0 %v3391
    %v3581 = vpop.f32.mrb[0].mxu0
    %v3582 = vadd.f32 0.0, %v3581
    %v3583 = vpop.f32.mrb[0].mxu0
    %3584 = vmatprep.mubr.f32.mxu0 0.0
    %3585 = vmatmul.mubr.f32.gmra.mrb[0].mxu0 %v3394
    %v3586 = vpop.f32.mrb[0].mxu0
    %v3587 = vadd.f32 0.0, %v3586
    %v3588 = vpop.f32.mrb[0].mxu0
    %3589 = vmatprep.mubr.f32.mxu0 0.0
    %3590 = vmatmul.mubr.f32.gmra.mrb[0].mxu0 %v3397
    %v3591 = vpop.f32.mrb[0].mxu0
    %v3592 = vadd.f32 0.0, %v3591
    %v3593 = vpop.f32.mrb[0].mxu0
    %3594 = vdwg.mxu0
    %v3595 = vmax.f32 %v3469, %v3567
    %v3596 = vmax.f32 %v3474, %v3572
    %v3597 = vmax.f32 %v3479, %v3577
    %v3598 = vmax.f32 %v3484, %v3582
    %v3599 = vmax.f32 %v3489, %v3587
    %v3600 = vmax.f32 %v3494, %v3592
    %vm3601 = vcmask 384000
    %v3602 = vsel %vm3601, %v429, 0
    %v3604 = vsel %vm3601, %v430, 0
    %v3606 = vsel %vm3601, %v431, 0
    %v3609 = vsel %vm1933, %v3600, 0
    %3611 = vmatprep.subr.mxu0 0.0
    %3612 = vmatpush1.msra.mxu0 %v3595
    %3613 = vmatprep.subr.mxu0 0.0
    %3614 = vmatpush1.msra.mxu0 %v3596
    %3615 = vmatprep.subr.mxu0 0.0
    %3616 = vmatpush1.msra.mxu0 %v3597
    %3617 = vmatprep.subr.mxu0 0.0
    %3618 = vmatpush1.msra.mxu0 %v3598
    %3619 = vmatprep.subr.mxu0 0.0
    %3620 = vmatpush1.msra.mxu0 %v3599
    %3621 = vmatprep.subr.mxu0 0.0
    %3622 = vmatpush1.msra.mxu0 %v3609
    %3623 = vmatprep.subr.mxu0 0.0
    %3624 = vmatpush1.msra.mxu0 0.0
    %3625 = vmatprep.subr.mxu0 0.0
    %3626 = vmatpush1.msra.mxu0 0.0
    %3627 = vmatprep.subr.mxu0 0.0
    %3628 = vmatpush1.msra.mxu0 0.0
    %3629 = vmatprep.subr.mxu0 0.0
    %3630 = vmatpush1.msra.mxu0 0.0
    %3631 = vmatprep.subr.mxu0 0.0
    %3632 = vmatpush1.msra.mxu0 0.0
    %3633 = vmatprep.subr.mxu0 0.0
    %3634 = vmatpush1.msra.mxu0 0.0
    %3635 = vmatprep.subr.mxu0 0.0
    %3636 = vmatpush1.msra.mxu0 0.0
    %3637 = vmatprep.subr.mxu0 0.0
    %3638 = vmatpush1.msra.mxu0 0.0
    %3639 = vmatprep.subr.mxu0 0.0
    %3640 = vmatpush1.msra.mxu0 0.0
    %3641 = vmatprep.subr.mxu0 0.0
    %3642 = vmatpush1.msra.mxu0 0.0
    %3643 = vmatprep.subr.mxu0 0.0
    %3644 = vmatpush1.msra.mxu0 0.0
    %3645 = vmatprep.subr.mxu0 0.0
    %3646 = vmatpush1.msra.mxu0 0.0
    %3647 = vmatprep.subr.mxu0 0.0
    %3648 = vmatpush1.msra.mxu0 0.0
    %3649 = vmatprep.subr.mxu0 0.0
    %3650 = vmatpush1.msra.mxu0 0.0
    %3651 = vmatprep.subr.mxu0 0.0
    %3652 = vmatpush1.msra.mxu0 0.0
    %3653 = vmatprep.subr.mxu0 0.0
    %3654 = vmatpush1.msra.mxu0 0.0
    %3655 = vmatprep.subr.mxu0 0.0
    %3656 = vmatpush1.msra.mxu0 0.0
    %3657 = vmatprep.subr.mxu0 0.0
    %3658 = vmatpush1.msra.mxu0 0.0
    %3659 = vmatprep.subr.mxu0 0.0
    %3660 = vmatpush1.msra.mxu0 0.0
    %3661 = vmatprep.subr.mxu0 0.0
    %3662 = vmatpush1.msra.mxu0 0.0
    %3663 = vmatprep.subr.mxu0 0.0
    %3664 = vmatpush1.msra.mxu0 0.0
    %3665 = vmatprep.subr.mxu0 0.0
    %3666 = vmatpush1.msra.mxu0 0.0
    %3667 = vmatprep.subr.mxu0 0.0
    %3668 = vmatpush1.msra.mxu0 0.0
    %3669 = vmatprep.subr.mxu0 0.0
    %3670 = vmatpush1.msra.mxu0 0.0
    %3671 = vmatprep.subr.mxu0 0.0
    %3672 = vmatpush1.msra.mxu0 0.0
    %3673 = vmatprep.subr.mxu0 0.0
    %3674 = vmatpush1.msra.mxu0 0.0
    %3675 = vmatprep.mubr.f32.mxu0 0.0
    %3676 = vmatmul.mubr.f32.gmra.mrb[0].mxu0 %v3602
    %v3677 = vpop.f32.mrb[0].mxu0
    %v3678 = vadd.f32 0.0, %v3677
    %v3679 = vpop.f32.mrb[0].mxu0
    %3680 = vmatprep.mubr.f32.mxu0 0.0
    %3681 = vmatmul.mubr.f32.gmra.mrb[0].mxu0 %v3604
    %v3682 = vpop.f32.mrb[0].mxu0
    %v3683 = vadd.f32 0.0, %v3682
    %v3684 = vpop.f32.mrb[0].mxu0
    %3685 = vmatprep.mubr.f32.mxu0 0.0
    %3686 = vmatmul.mubr.f32.gmra.mrb[0].mxu0 %v3606
    %v3687 = vpop.f32.mrb[0].mxu0
    %v3688 = vadd.f32 0.0, %v3687
    %v3689 = vpop.f32.mrb[0].mxu0
    %3690 = vdwg.mxu0
    %v3691 = vsel %vm3601, %v453, 0
    %v3693 = vsel %vm3601, %v454, 0
    %v3695 = vsel %vm3601, %v455, 0
    %3697 = vmatprep.subr.mxu0 0.0
    %3698 = vmatpush1.msra.mxu0 %v3595
    %3699 = vmatprep.subr.mxu0 0.0
    %3700 = vmatpush1.msra.mxu0 %v3596
    %3701 = vmatprep.subr.mxu0 0.0
    %3702 = vmatpush1.msra.mxu0 %v3597
    %3703 = vmatprep.subr.mxu0 0.0
    %3704 = vmatpush1.msra.mxu0 %v3598
    %3705 = vmatprep.subr.mxu0 0.0
    %3706 = vmatpush1.msra.mxu0 %v3599
    %3707 = vmatprep.subr.mxu0 0.0
    %3708 = vmatpush1.msra.mxu0 %v3609
    %3709 = vmatprep.subr.mxu0 0.0
    %3710 = vmatpush1.msra.mxu0 0.0
    %3711 = vmatprep.subr.mxu0 0.0
    %3712 = vmatpush1.msra.mxu0 0.0
    %3713 = vmatprep.subr.mxu0 0.0
    %3714 = vmatpush1.msra.mxu0 0.0
    %3715 = vmatprep.subr.mxu0 0.0
    %3716 = vmatpush1.msra.mxu0 0.0
    %3717 = vmatprep.subr.mxu0 0.0
    %3718 = vmatpush1.msra.mxu0 0.0
    %3719 = vmatprep.subr.mxu0 0.0
    %3720 = vmatpush1.msra.mxu0 0.0
    %3721 = vmatprep.subr.mxu0 0.0
    %3722 = vmatpush1.msra.mxu0 0.0
    %3723 = vmatprep.subr.mxu0 0.0
    %3724 = vmatpush1.msra.mxu0 0.0
    %3725 = vmatprep.subr.mxu0 0.0
    %3726 = vmatpush1.msra.mxu0 0.0
    %3727 = vmatprep.subr.mxu0 0.0
    %3728 = vmatpush1.msra.mxu0 0.0
    %3729 = vmatprep.subr.mxu0 0.0
    %3730 = vmatpush1.msra.mxu0 0.0
    %3731 = vmatprep.subr.mxu0 0.0
    %3732 = vmatpush1.msra.mxu0 0.0
    %3733 = vmatprep.subr.mxu0 0.0
    %3734 = vmatpush1.msra.mxu0 0.0
    %3735 = vmatprep.subr.mxu0 0.0
    %3736 = vmatpush1.msra.mxu0 0.0
    %3737 = vmatprep.subr.mxu0 0.0
    %3738 = vmatpush1.msra.mxu0 0.0
    %3739 = vmatprep.subr.mxu0 0.0
    %3740 = vmatpush1.msra.mxu0 0.0
    %3741 = vmatprep.subr.mxu0 0.0
    %3742 = vmatpush1.msra.mxu0 0.0
    %3743 = vmatprep.subr.mxu0 0.0
    %3744 = vmatpush1.msra.mxu0 0.0
    %3745 = vmatprep.subr.mxu0 0.0
    %3746 = vmatpush1.msra.mxu0 0.0
    %3747 = vmatprep.subr.mxu0 0.0
    %3748 = vmatpush1.msra.mxu0 0.0
    %3749 = vmatprep.subr.mxu0 0.0
    %3750 = vmatpush1.msra.mxu0 0.0
    %3751 = vmatprep.subr.mxu0 0.0
    %3752 = vmatpush1.msra.mxu0 0.0
    %3753 = vmatprep.subr.mxu0 0.0
    %3754 = vmatpush1.msra.mxu0 0.0
    %3755 = vmatprep.subr.mxu0 0.0
    %3756 = vmatpush1.msra.mxu0 0.0
    %3757 = vmatprep.subr.mxu0 0.0
    %3758 = vmatpush1.msra.mxu0 0.0
    %3759 = vmatprep.subr.mxu0 0.0
    %3760 = vmatpush1.msra.mxu0 0.0
    %3761 = vmatprep.mubr.f32.mxu0 0.0
    %3762 = vmatmul.mubr.f32.gmra.mrb[0].mxu0 %v3691
    %v3763 = vpop.f32.mrb[0].mxu0
    %v3764 = vadd.f32 0.0, %v3763
    %v3765 = vpop.f32.mrb[0].mxu0
    %3766 = vmatprep.mubr.f32.mxu0 0.0
    %3767 = vmatmul.mubr.f32.gmra.mrb[0].mxu0 %v3693
    %v3768 = vpop.f32.mrb[0].mxu0
    %v3769 = vadd.f32 0.0, %v3768
    %v3770 = vpop.f32.mrb[0].mxu0
    %3771 = vmatprep.mubr.f32.mxu0 0.0
    %3772 = vmatmul.mubr.f32.gmra.mrb[0].mxu0 %v3695
    %v3773 = vpop.f32.mrb[0].mxu0
    %v3774 = vadd.f32 0.0, %v3773
    %v3775 = vpop.f32.mrb[0].mxu0
    %3776 = vdwg.mxu0
    %v3777 = vmax.f32 %v3678, %v3764
    %v3778 = vmax.f32 %v3683, %v3769
    %v3779 = vmax.f32 %v3688, %v3774
    %v3781 = vsel %vm3601, %v3777, 0
    %v3784 = vsel %vm3601, %v3778, 0
    %v3787 = vsel %vm3601, %v3779, 0
    %v3790 = vsel %vm1933, %v488, 0
    %3792 = vmatprep.subr.mxu0 0.0
    %3793 = vmatpush1.msra.mxu0 %v483
    %3794 = vmatprep.subr.mxu0 0.0
    %3795 = vmatpush1.msra.mxu0 %v484
    %3796 = vmatprep.subr.mxu0 0.0
    %3797 = vmatpush1.msra.mxu0 %v485
    %3798 = vmatprep.subr.mxu0 0.0
    %3799 = vmatpush1.msra.mxu0 %v486
    %3800 = vmatprep.subr.mxu0 0.0
    %3801 = vmatpush1.msra.mxu0 %v487
    %3802 = vmatprep.subr.mxu0 0.0
    %3803 = vmatpush1.msra.mxu0 %v3790
    %3804 = vmatprep.subr.mxu0 0.0
    %3805 = vmatpush1.msra.mxu0 0.0
    %3806 = vmatprep.subr.mxu0 0.0
    %3807 = vmatpush1.msra.mxu0 0.0
    %3808 = vmatprep.subr.mxu0 0.0
    %3809 = vmatpush1.msra.mxu0 0.0
    %3810 = vmatprep.subr.mxu0 0.0
    %3811 = vmatpush1.msra.mxu0 0.0
    %3812 = vmatprep.subr.mxu0 0.0
    %3813 = vmatpush1.msra.mxu0 0.0
    %3814 = vmatprep.subr.mxu0 0.0
    %3815 = vmatpush1.msra.mxu0 0.0
    %3816 = vmatprep.subr.mxu0 0.0
    %3817 = vmatpush1.msra.mxu0 0.0
    %3818 = vmatprep.subr.mxu0 0.0
    %3819 = vmatpush1.msra.mxu0 0.0
    %3820 = vmatprep.subr.mxu0 0.0
    %3821 = vmatpush1.msra.mxu0 0.0
    %3822 = vmatprep.subr.mxu0 0.0
    %3823 = vmatpush1.msra.mxu0 0.0
    %3824 = vmatprep.subr.mxu0 0.0
    %3825 = vmatpush1.msra.mxu0 0.0
    %3826 = vmatprep.subr.mxu0 0.0
    %3827 = vmatpush1.msra.mxu0 0.0
    %3828 = vmatprep.subr.mxu0 0.0
    %3829 = vmatpush1.msra.mxu0 0.0
    %3830 = vmatprep.subr.mxu0 0.0
    %3831 = vmatpush1.msra.mxu0 0.0
    %3832 = vmatprep.subr.mxu0 0.0
    %3833 = vmatpush1.msra.mxu0 0.0
    %3834 = vmatprep.subr.mxu0 0.0
    %3835 = vmatpush1.msra.mxu0 0.0
    %3836 = vmatprep.subr.mxu0 0.0
    %3837 = vmatpush1.msra.mxu0 0.0
    %3838 = vmatprep.subr.mxu0 0.0
    %3839 = vmatpush1.msra.mxu0 0.0
    %3840 = vmatprep.subr.mxu0 0.0
    %3841 = vmatpush1.msra.mxu0 0.0
    %3842 = vmatprep.subr.mxu0 0.0
    %3843 = vmatpush1.msra.mxu0 0.0
    %3844 = vmatprep.subr.mxu0 0.0
    %3845 = vmatpush1.msra.mxu0 0.0
    %3846 = vmatprep.subr.mxu0 0.0
    %3847 = vmatpush1.msra.mxu0 0.0
    %3848 = vmatprep.subr.mxu0 0.0
    %3849 = vmatpush1.msra.mxu0 0.0
    %3850 = vmatprep.subr.mxu0 0.0
    %3851 = vmatpush1.msra.mxu0 0.0
    %3852 = vmatprep.subr.mxu0 0.0
    %3853 = vmatpush1.msra.mxu0 0.0
    %3854 = vmatprep.subr.mxu0 0.0
    %3855 = vmatpush1.msra.mxu0 0.0
    %3856 = vmatprep.mubr.f32.mxu0 0.0
    %3857 = vmatmul.mubr.f32.gmra.mrb[0].mxu0 %v3781
    %v3858 = vpop.f32.mrb[0].mxu0
    %v3859 = vadd.f32 0.0, %v3858
    %v3860 = vpop.f32.mrb[0].mxu0
    %3861 = vmatprep.mubr.f32.mxu0 0.0
    %3862 = vmatmul.mubr.f32.gmra.mrb[0].mxu0 %v3784
    %v3863 = vpop.f32.mrb[0].mxu0
    %v3864 = vadd.f32 0.0, %v3863
    %v3865 = vpop.f32.mrb[0].mxu0
    %3866 = vmatprep.mubr.f32.mxu0 0.0
    %3867 = vmatmul.mubr.f32.gmra.mrb[0].mxu0 %v3787
    %v3868 = vpop.f32.mrb[0].mxu0
    %v3869 = vadd.f32 0.0, %v3868
    %v3870 = vpop.f32.mrb[0].mxu0
    %3871 = vdwg.mxu0
    %v3873 = vsel %vm1933, %v525, 0
    %3875 = vmatprep.subr.mxu0 0.0
    %3876 = vmatpush1.msra.mxu0 %v520
    %3877 = vmatprep.subr.mxu0 0.0
    %3878 = vmatpush1.msra.mxu0 %v521
    %3879 = vmatprep.subr.mxu0 0.0
    %3880 = vmatpush1.msra.mxu0 %v522
    %3881 = vmatprep.subr.mxu0 0.0
    %3882 = vmatpush1.msra.mxu0 %v523
    %3883 = vmatprep.subr.mxu0 0.0
    %3884 = vmatpush1.msra.mxu0 %v524
    %3885 = vmatprep.subr.mxu0 0.0
    %3886 = vmatpush1.msra.mxu0 %v3873
    %3887 = vmatprep.subr.mxu0 0.0
    %3888 = vmatpush1.msra.mxu0 0.0
    %3889 = vmatprep.subr.mxu0 0.0
    %3890 = vmatpush1.msra.mxu0 0.0
    %3891 = vmatprep.subr.mxu0 0.0
    %3892 = vmatpush1.msra.mxu0 0.0
    %3893 = vmatprep.subr.mxu0 0.0
    %3894 = vmatpush1.msra.mxu0 0.0
    %3895 = vmatprep.subr.mxu0 0.0
    %3896 = vmatpush1.msra.mxu0 0.0
    %3897 = vmatprep.subr.mxu0 0.0
    %3898 = vmatpush1.msra.mxu0 0.0
    %3899 = vmatprep.subr.mxu0 0.0
    %3900 = vmatpush1.msra.mxu0 0.0
    %3901 = vmatprep.subr.mxu0 0.0
    %3902 = vmatpush1.msra.mxu0 0.0
    %3903 = vmatprep.subr.mxu0 0.0
    %3904 = vmatpush1.msra.mxu0 0.0
    %3905 = vmatprep.subr.mxu0 0.0
    %3906 = vmatpush1.msra.mxu0 0.0
    %3907 = vmatprep.subr.mxu0 0.0
    %3908 = vmatpush1.msra.mxu0 0.0
    %3909 = vmatprep.subr.mxu0 0.0
    %3910 = vmatpush1.msra.mxu0 0.0
    %3911 = vmatprep.subr.mxu0 0.0
    %3912 = vmatpush1.msra.mxu0 0.0
    %3913 = vmatprep.subr.mxu0 0.0
    %3914 = vmatpush1.msra.mxu0 0.0
    %3915 = vmatprep.subr.mxu0 0.0
    %3916 = vmatpush1.msra.mxu0 0.0
    %3917 = vmatprep.subr.mxu0 0.0
    %3918 = vmatpush1.msra.mxu0 0.0
    %3919 = vmatprep.subr.mxu0 0.0
    %3920 = vmatpush1.msra.mxu0 0.0
    %3921 = vmatprep.subr.mxu0 0.0
    %3922 = vmatpush1.msra.mxu0 0.0
    %3923 = vmatprep.subr.mxu0 0.0
    %3924 = vmatpush1.msra.mxu0 0.0
    %3925 = vmatprep.subr.mxu0 0.0
    %3926 = vmatpush1.msra.mxu0 0.0
    %3927 = vmatprep.subr.mxu0 0.0
    %3928 = vmatpush1.msra.mxu0 0.0
    %3929 = vmatprep.subr.mxu0 0.0
    %3930 = vmatpush1.msra.mxu0 0.0
    %3931 = vmatprep.subr.mxu0 0.0
    %3932 = vmatpush1.msra.mxu0 0.0
    %3933 = vmatprep.subr.mxu0 0.0
    %3934 = vmatpush1.msra.mxu0 0.0
    %3935 = vmatprep.subr.mxu0 0.0
    %3936 = vmatpush1.msra.mxu0 0.0
    %3937 = vmatprep.subr.mxu0 0.0
    %3938 = vmatpush1.msra.mxu0 0.0
    %3939 = vmatprep.mubr.f32.mxu0 0.0
    %3940 = vmatmul.mubr.f32.gmra.mrb[0].mxu0 %v3781
    %v3941 = vpop.f32.mrb[0].mxu0
    %v3942 = vadd.f32 0.0, %v3941
    %v3943 = vpop.f32.mrb[0].mxu0
    %3944 = vmatprep.mubr.f32.mxu0 0.0
    %3945 = vmatmul.mubr.f32.gmra.mrb[0].mxu0 %v3784
    %v3946 = vpop.f32.mrb[0].mxu0
    %v3947 = vadd.f32 0.0, %v3946
    %v3948 = vpop.f32.mrb[0].mxu0
    %3949 = vmatprep.mubr.f32.mxu0 0.0
    %3950 = vmatmul.mubr.f32.gmra.mrb[0].mxu0 %v3787
    %v3951 = vpop.f32.mrb[0].mxu0
    %v3952 = vadd.f32 0.0, %v3951
    %v3953 = vpop.f32.mrb[0].mxu0
    %3954 = vdwg.mxu0
    %v3955 = vmax.f32 %v3859, %v3942
    %v3956 = vmax.f32 %v3864, %v3947
    %v3957 = vmax.f32 %v3869, %v3952
    %vm3958 = vcmask 187392
    %3959 = vst.msk [vmem:[%s3] sm:$0xff] %vm3958, %v3955
    %3960 = vst.msk [vmem:[%s3 + $0x8] sm:$0xff] %vm3958, %v3956
    %vm3961 = vcmask 186368
    %3962 = vst.msk [vmem:[%s3 + $0x10] sm:$0x7f] %vm3961, %v3957
    %s3963 = scalar_lea.vmem [#allocation3], 400
    %v3964 = vld [vmem:[%s3963] sm:$0xff]
    %v3965 = vld [vmem:[%s3963 + $0x8] sm:$0xff]
    %v3966 = vld [vmem:[%s3963 + $0x10] sm:$0xff]
    %v3967 = vld [vmem:[%s3963 + $0x18] sm:$0xff]
    %v3968 = vld [vmem:[%s3963 + $0x20] sm:$0xff]
    %v3969 = vld [vmem:[%s3963 + $0x28] sm:$0xff]
    %v3970 = vld [vmem:[%s3963 + $0x30] sm:$0xff]
    %v3971 = vld [vmem:[%s3963 + $0x38] sm:$0xff]
    %v3972 = vld [vmem:[%s3963 + $0x40] sm:$0xff]
    %v3973 = vld [vmem:[%s3963 + $0x48] sm:$0xff]
    %v3974 = vld [vmem:[%s3963 + $0x50] sm:$0xff]
    %v3975 = vld [vmem:[%s3963 + $0x58] sm:$0xff]
    %v3976 = vld [vmem:[%s3963 + $0x60] sm:$0xff]
    %v3977 = vld [vmem:[%s3963 + $0x68] sm:$0xff]
    %v3978 = vld [vmem:[%s3963 + $0x70] sm:$0xff]
    %v3979 = vld [vmem:[%s3963 + $0x78] sm:$0xff]
    %v3980 = vld [vmem:[%s3963 + $0x80] sm:$0xff]
    %v3981 = vld [vmem:[%s3963 + $0x88] sm:$0xff]
    %v3982 = vld [vmem:[%s3963 + $0x90] sm:$0xff]
    %v3983 = vld [vmem:[%s3963 + $0x98] sm:$0xff]
    %v3984 = vld [vmem:[%s3963 + $0xa0] sm:$0xff]
    %v3985 = vld [vmem:[%s3963 + $0xa8] sm:$0xff]
    %v3986 = vld [vmem:[%s3963 + $0xb0] sm:$0xff]
    %v3987 = vld [vmem:[%s3963 + $0xb8] sm:$0xff]
    %v3988 = vld [vmem:[%s3963 + $0xc0] sm:$0xff]
    %v3989 = vld [vmem:[%s3963 + $0xc8] sm:$0xff]
    %v3990 = vld [vmem:[%s3963 + $0xd0] sm:$0xff]
    %v3991 = vld [vmem:[%s3963 + $0xd8] sm:$0xff]
    %v3992 = vld [vmem:[%s3963 + $0xe0] sm:$0xff]
    %v3993 = vld [vmem:[%s3963 + $0xe8] sm:$0xff]
    %v3994 = vld [vmem:[%s3963 + $0xf0] sm:$0xff]
    %v3995 = vld [vmem:[%s3963 + $0xf8] sm:$0xff]
    %v3996 = vld [vmem:[%s3963 + $0x100] sm:$0xff]
    %v3997 = vld [vmem:[%s3963 + $0x108] sm:$0xff]
    %v3998 = vld [vmem:[%s3963 + $0x110] sm:$0xff]
    %v3999 = vld [vmem:[%s3963 + $0x118] sm:$0xff]
    %v4000 = vld [vmem:[%s3963 + $0x120] sm:$0xff]
    %v4001 = vld [vmem:[%s3963 + $0x128] sm:$0xff]
    %v4002 = vld [vmem:[%s3963 + $0x130] sm:$0xff]
    %v4003 = vld [vmem:[%s3963 + $0x138] sm:$0xff]
    %v4004 = vld [vmem:[%s3963 + $0x140] sm:$0xff]
    %v4005 = vld [vmem:[%s3963 + $0x148] sm:$0xff]
    %v4006 = vld [vmem:[%s3963 + $0x150] sm:$0xff]
    %v4007 = vld [vmem:[%s3963 + $0x158] sm:$0xff]
    %v4008 = vld [vmem:[%s3963 + $0x160] sm:$0xff]
    %v4009 = vld [vmem:[%s3963 + $0x168] sm:$0xff]
    %v4010 = vld [vmem:[%s3963 + $0x170] sm:$0xff]
    %v4011 = vld [vmem:[%s3963 + $0x178] sm:$0xff]
    %v4012 = vld [vmem:[%s3963 + $0x180] sm:$0xff]
    %v4013 = vld [vmem:[%s3963 + $0x188] sm:$0xff]
    %4014 = vmatprep.subr.mxu0 %v3965
    %4015 = vmatpush1.msra.mxu0 %v3964
    %4016 = vmatprep.subr.mxu0 %v3967
    %4017 = vmatpush1.msra.mxu0 %v3966
    %4018 = vmatprep.subr.mxu0 %v3969
    %4019 = vmatpush1.msra.mxu0 %v3968
    %4020 = vmatprep.subr.mxu0 %v3971
    %4021 = vmatpush1.msra.mxu0 %v3970
    %4022 = vmatprep.subr.mxu0 %v3973
    %4023 = vmatpush1.msra.mxu0 %v3972
    %4024 = vmatprep.subr.mxu0 %v3975
    %4025 = vmatpush1.msra.mxu0 %v3974
    %4026 = vmatprep.subr.mxu0 %v3977
    %4027 = vmatpush1.msra.mxu0 %v3976
    %4028 = vmatprep.subr.mxu0 %v3979
    %4029 = vmatpush1.msra.mxu0 %v3978
    %4030 = vmatprep.subr.mxu0 %v3981
    %4031 = vmatpush1.msra.mxu0 %v3980
    %4032 = vmatprep.subr.mxu0 %v3983
    %4033 = vmatpush1.msra.mxu0 %v3982
    %4034 = vmatprep.subr.mxu0 %v3985
    %4035 = vmatpush1.msra.mxu0 %v3984
    %4036 = vmatprep.subr.mxu0 %v3987
    %4037 = vmatpush1.msra.mxu0 %v3986
    %4038 = vmatprep.subr.mxu0 %v3989
    %4039 = vmatpush1.msra.mxu0 %v3988
    %4040 = vmatprep.subr.mxu0 %v3991
    %4041 = vmatpush1.msra.mxu0 %v3990
    %4042 = vmatprep.subr.mxu0 %v3993
    %4043 = vmatpush1.msra.mxu0 %v3992
    %4044 = vmatprep.subr.mxu0 %v3995
    %4045 = vmatpush1.msra.mxu0 %v3994
    %4046 = vmatprep.subr.mxu0 %v3997
    %4047 = vmatpush1.msra.mxu0 %v3996
    %4048 = vmatprep.subr.mxu0 %v3999
    %4049 = vmatpush1.msra.mxu0 %v3998
    %4050 = vmatprep.subr.mxu0 %v4001
    %4051 = vmatpush1.msra.mxu0 %v4000
    %4052 = vmatprep.subr.mxu0 %v4003
    %4053 = vmatpush1.msra.mxu0 %v4002
    %4054 = vmatprep.subr.mxu0 %v4005
    %4055 = vmatpush1.msra.mxu0 %v4004
    %4056 = vmatprep.subr.mxu0 %v4007
    %4057 = vmatpush1.msra.mxu0 %v4006
    %4058 = vmatprep.subr.mxu0 %v4009
    %4059 = vmatpush1.msra.mxu0 %v4008
    %4060 = vmatprep.subr.mxu0 %v4011
    %4061 = vmatpush1.msra.mxu0 %v4010
    %4062 = vmatprep.subr.mxu0 %v4013
    %4063 = vmatpush1.msra.mxu0 %v4012
    %4064 = vmatprep.subr.mxu0 0.0
    %4065 = vmatpush1.msra.mxu0 0.0
    %4066 = vmatprep.subr.mxu0 0.0
    %4067 = vmatpush1.msra.mxu0 0.0
    %4068 = vmatprep.subr.mxu0 0.0
    %4069 = vmatpush1.msra.mxu0 0.0
    %4070 = vmatprep.subr.mxu0 0.0
    %4071 = vmatpush1.msra.mxu0 0.0
    %4072 = vmatprep.subr.mxu0 0.0
    %4073 = vmatpush1.msra.mxu0 0.0
    %4074 = vmatprep.subr.mxu0 0.0
    %4075 = vmatpush1.msra.mxu0 0.0
    %4076 = vmatprep.subr.mxu0 0.0
    %4077 = vmatpush1.msra.mxu0 0.0
    %4078 = vmatprep.mubr.f32.mxu0 %v610
    %4079 = vmatmul.mubr.f32.gmra.mrb[0].mxu0 %v135
    %v4080 = vpop.f32.mrb[0].mxu0
    %v4081 = vadd.f32 0.0, %v4080
    %v4082 = vpop.f32.mrb[0].mxu0
    %v4083 = vadd.f32 0.0, %v4082
    %4084 = vmatprep.mubr.f32.mxu0 %v613
    %4085 = vmatmul.mubr.f32.gmra.mrb[0].mxu0 %v137
    %v4086 = vpop.f32.mrb[0].mxu0
    %v4087 = vadd.f32 0.0, %v4086
    %v4088 = vpop.f32.mrb[0].mxu0
    %v4089 = vadd.f32 0.0, %v4088
    %4090 = vmatprep.mubr.f32.mxu0 %v616
    %4091 = vmatmul.mubr.f32.gmra.mrb[0].mxu0 %v139
    %v4092 = vpop.f32.mrb[0].mxu0
    %v4093 = vadd.f32 0.0, %v4092
    %v4094 = vpop.f32.mrb[0].mxu0
    %v4095 = vadd.f32 0.0, %v4094
    %4096 = vmatprep.mubr.f32.mxu0 %v619
    %4097 = vmatmul.mubr.f32.gmra.mrb[0].mxu0 %v141
    %v4098 = vpop.f32.mrb[0].mxu0
    %v4099 = vadd.f32 0.0, %v4098
    %v4100 = vpop.f32.mrb[0].mxu0
    %v4101 = vadd.f32 0.0, %v4100
    %4102 = vmatprep.mubr.f32.mxu0 %v622
    %4103 = vmatmul.mubr.f32.gmra.mrb[0].mxu0 %v143
    %v4104 = vpop.f32.mrb[0].mxu0
    %v4105 = vadd.f32 0.0, %v4104
    %v4106 = vpop.f32.mrb[0].mxu0
    %v4107 = vadd.f32 0.0, %v4106
    %4108 = vmatprep.mubr.f32.mxu0 %v625
    %4109 = vmatmul.mubr.f32.gmra.mrb[0].mxu0 %v145
    %v4110 = vpop.f32.mrb[0].mxu0
    %v4111 = vadd.f32 0.0, %v4110
    %v4112 = vpop.f32.mrb[0].mxu0
    %v4113 = vadd.f32 0.0, %v4112
    %4114 = vmatprep.mubr.f32.mxu0 %v628
    %4115 = vmatmul.mubr.f32.gmra.mrb[0].mxu0 %v147
    %v4116 = vpop.f32.mrb[0].mxu0
    %v4117 = vadd.f32 0.0, %v4116
    %v4118 = vpop.f32.mrb[0].mxu0
    %v4119 = vadd.f32 0.0, %v4118
    %4120 = vmatprep.mubr.f32.mxu0 %v631
    %4121 = vmatmul.mubr.f32.gmra.mrb[0].mxu0 %v149
    %v4122 = vpop.f32.mrb[0].mxu0
    %v4123 = vadd.f32 0.0, %v4122
    %v4124 = vpop.f32.mrb[0].mxu0
    %v4125 = vadd.f32 0.0, %v4124
    %4126 = vmatprep.mubr.f32.mxu0 %v634
    %4127 = vmatmul.mubr.f32.gmra.mrb[0].mxu0 %v151
    %v4128 = vpop.f32.mrb[0].mxu0
    %v4129 = vadd.f32 0.0, %v4128
    %v4130 = vpop.f32.mrb[0].mxu0
    %v4131 = vadd.f32 0.0, %v4130
    %4132 = vmatprep.mubr.f32.mxu0 %v637
    %4133 = vmatmul.mubr.f32.gmra.mrb[0].mxu0 %v153
    %v4134 = vpop.f32.mrb[0].mxu0
    %v4135 = vadd.f32 0.0, %v4134
    %v4136 = vpop.f32.mrb[0].mxu0
    %v4137 = vadd.f32 0.0, %v4136
    %4138 = vmatprep.mubr.f32.mxu0 %v640
    %4139 = vmatmul.mubr.f32.gmra.mrb[0].mxu0 %v155
    %v4140 = vpop.f32.mrb[0].mxu0
    %v4141 = vadd.f32 0.0, %v4140
    %v4142 = vpop.f32.mrb[0].mxu0
    %v4143 = vadd.f32 0.0, %v4142
    %4144 = vmatprep.mubr.f32.mxu0 %v643
    %4145 = vmatmul.mubr.f32.gmra.mrb[0].mxu0 %v157
    %v4146 = vpop.f32.mrb[0].mxu0
    %v4147 = vadd.f32 0.0, %v4146
    %v4148 = vpop.f32.mrb[0].mxu0
    %v4149 = vadd.f32 0.0, %v4148
    %4150 = vmatprep.mubr.f32.mxu0 %v646
    %4151 = vmatmul.mubr.f32.gmra.mrb[0].mxu0 %v159
    %v4152 = vpop.f32.mrb[0].mxu0
    %v4153 = vadd.f32 0.0, %v4152
    %v4154 = vpop.f32.mrb[0].mxu0
    %v4155 = vadd.f32 0.0, %v4154
    %4156 = vdwg.mxu0
    %4157 = vmatprep.subr.mxu0 %v3965
    %4158 = vmatpush1.msra.mxu0 %v3964
    %4159 = vmatprep.subr.mxu0 %v3967
    %4160 = vmatpush1.msra.mxu0 %v3966
    %4161 = vmatprep.subr.mxu0 %v3969
    %4162 = vmatpush1.msra.mxu0 %v3968
    %4163 = vmatprep.subr.mxu0 %v3971
    %4164 = vmatpush1.msra.mxu0 %v3970
    %4165 = vmatprep.subr.mxu0 %v3973
    %4166 = vmatpush1.msra.mxu0 %v3972
    %4167 = vmatprep.subr.mxu0 %v3975
    %4168 = vmatpush1.msra.mxu0 %v3974
    %4169 = vmatprep.subr.mxu0 %v3977
    %4170 = vmatpush1.msra.mxu0 %v3976
    %4171 = vmatprep.subr.mxu0 %v3979
    %4172 = vmatpush1.msra.mxu0 %v3978
    %4173 = vmatprep.subr.mxu0 %v3981
    %4174 = vmatpush1.msra.mxu0 %v3980
    %4175 = vmatprep.subr.mxu0 %v3983
    %4176 = vmatpush1.msra.mxu0 %v3982
    %4177 = vmatprep.subr.mxu0 %v3985
    %4178 = vmatpush1.msra.mxu0 %v3984
    %4179 = vmatprep.subr.mxu0 %v3987
    %4180 = vmatpush1.msra.mxu0 %v3986
    %4181 = vmatprep.subr.mxu0 %v3989
    %4182 = vmatpush1.msra.mxu0 %v3988
    %4183 = vmatprep.subr.mxu0 %v3991
    %4184 = vmatpush1.msra.mxu0 %v3990
    %4185 = vmatprep.subr.mxu0 %v3993
    %4186 = vmatpush1.msra.mxu0 %v3992
    %4187 = vmatprep.subr.mxu0 %v3995
    %4188 = vmatpush1.msra.mxu0 %v3994
    %4189 = vmatprep.subr.mxu0 %v3997
    %4190 = vmatpush1.msra.mxu0 %v3996
    %4191 = vmatprep.subr.mxu0 %v3999
    %4192 = vmatpush1.msra.mxu0 %v3998
    %4193 = vmatprep.subr.mxu0 %v4001
    %4194 = vmatpush1.msra.mxu0 %v4000
    %4195 = vmatprep.subr.mxu0 %v4003
    %4196 = vmatpush1.msra.mxu0 %v4002
    %4197 = vmatprep.subr.mxu0 %v4005
    %4198 = vmatpush1.msra.mxu0 %v4004
    %4199 = vmatprep.subr.mxu0 %v4007
    %4200 = vmatpush1.msra.mxu0 %v4006
    %4201 = vmatprep.subr.mxu0 %v4009
    %4202 = vmatpush1.msra.mxu0 %v4008
    %4203 = vmatprep.subr.mxu0 %v4011
    %4204 = vmatpush1.msra.mxu0 %v4010
    %4205 = vmatprep.subr.mxu0 %v4013
    %4206 = vmatpush1.msra.mxu0 %v4012
    %4207 = vmatprep.subr.mxu0 0.0
    %4208 = vmatpush1.msra.mxu0 0.0
    %4209 = vmatprep.subr.mxu0 0.0
    %4210 = vmatpush1.msra.mxu0 0.0
    %4211 = vmatprep.subr.mxu0 0.0
    %4212 = vmatpush1.msra.mxu0 0.0
    %4213 = vmatprep.subr.mxu0 0.0
    %4214 = vmatpush1.msra.mxu0 0.0
    %4215 = vmatprep.subr.mxu0 0.0
    %4216 = vmatpush1.msra.mxu0 0.0
    %4217 = vmatprep.subr.mxu0 0.0
    %4218 = vmatpush1.msra.mxu0 0.0
    %4219 = vmatprep.subr.mxu0 0.0
    %4220 = vmatpush1.msra.mxu0 0.0
    %4221 = vmatprep.mubr.f32.mxu0 %v792
    %4222 = vmatmul.mubr.f32.gmra.mrb[0].mxu0 %v226
    %v4223 = vpop.f32.mrb[0].mxu0
    %v4224 = vadd.f32 0.0, %v4223
    %v4225 = vpop.f32.mrb[0].mxu0
    %v4226 = vadd.f32 0.0, %v4225
    %4227 = vmatprep.mubr.f32.mxu0 %v795
    %4228 = vmatmul.mubr.f32.gmra.mrb[0].mxu0 %v228
    %v4229 = vpop.f32.mrb[0].mxu0
    %v4230 = vadd.f32 0.0, %v4229
    %v4231 = vpop.f32.mrb[0].mxu0
    %v4232 = vadd.f32 0.0, %v4231
    %4233 = vmatprep.mubr.f32.mxu0 %v798
    %4234 = vmatmul.mubr.f32.gmra.mrb[0].mxu0 %v230
    %v4235 = vpop.f32.mrb[0].mxu0
    %v4236 = vadd.f32 0.0, %v4235
    %v4237 = vpop.f32.mrb[0].mxu0
    %v4238 = vadd.f32 0.0, %v4237
    %4239 = vmatprep.mubr.f32.mxu0 %v801
    %4240 = vmatmul.mubr.f32.gmra.mrb[0].mxu0 %v232
    %v4241 = vpop.f32.mrb[0].mxu0
    %v4242 = vadd.f32 0.0, %v4241
    %v4243 = vpop.f32.mrb[0].mxu0
    %v4244 = vadd.f32 0.0, %v4243
    %4245 = vmatprep.mubr.f32.mxu0 %v804
    %4246 = vmatmul.mubr.f32.gmra.mrb[0].mxu0 %v234
    %v4247 = vpop.f32.mrb[0].mxu0
    %v4248 = vadd.f32 0.0, %v4247
    %v4249 = vpop.f32.mrb[0].mxu0
    %v4250 = vadd.f32 0.0, %v4249
    %4251 = vmatprep.mubr.f32.mxu0 %v807
    %4252 = vmatmul.mubr.f32.gmra.mrb[0].mxu0 %v236
    %v4253 = vpop.f32.mrb[0].mxu0
    %v4254 = vadd.f32 0.0, %v4253
    %v4255 = vpop.f32.mrb[0].mxu0
    %v4256 = vadd.f32 0.0, %v4255
    %4257 = vmatprep.mubr.f32.mxu0 %v810
    %4258 = vmatmul.mubr.f32.gmra.mrb[0].mxu0 %v238
    %v4259 = vpop.f32.mrb[0].mxu0
    %v4260 = vadd.f32 0.0, %v4259
    %v4261 = vpop.f32.mrb[0].mxu0
    %v4262 = vadd.f32 0.0, %v4261
    %4263 = vmatprep.mubr.f32.mxu0 %v813
    %4264 = vmatmul.mubr.f32.gmra.mrb[0].mxu0 %v240
    %v4265 = vpop.f32.mrb[0].mxu0
    %v4266 = vadd.f32 0.0, %v4265
    %v4267 = vpop.f32.mrb[0].mxu0
    %v4268 = vadd.f32 0.0, %v4267
    %4269 = vmatprep.mubr.f32.mxu0 %v816
    %4270 = vmatmul.mubr.f32.gmra.mrb[0].mxu0 %v242
    %v4271 = vpop.f32.mrb[0].mxu0
    %v4272 = vadd.f32 0.0, %v4271
    %v4273 = vpop.f32.mrb[0].mxu0
    %v4274 = vadd.f32 0.0, %v4273
    %4275 = vmatprep.mubr.f32.mxu0 %v819
    %4276 = vmatmul.mubr.f32.gmra.mrb[0].mxu0 %v244
    %v4277 = vpop.f32.mrb[0].mxu0
    %v4278 = vadd.f32 0.0, %v4277
    %v4279 = vpop.f32.mrb[0].mxu0
    %v4280 = vadd.f32 0.0, %v4279
    %4281 = vmatprep.mubr.f32.mxu0 %v822
    %4282 = vmatmul.mubr.f32.gmra.mrb[0].mxu0 %v246
    %v4283 = vpop.f32.mrb[0].mxu0
    %v4284 = vadd.f32 0.0, %v4283
    %v4285 = vpop.f32.mrb[0].mxu0
    %v4286 = vadd.f32 0.0, %v4285
    %4287 = vmatprep.mubr.f32.mxu0 %v825
    %4288 = vmatmul.mubr.f32.gmra.mrb[0].mxu0 %v248
    %v4289 = vpop.f32.mrb[0].mxu0
    %v4290 = vadd.f32 0.0, %v4289
    %v4291 = vpop.f32.mrb[0].mxu0
    %v4292 = vadd.f32 0.0, %v4291
    %4293 = vmatprep.mubr.f32.mxu0 %v828
    %4294 = vmatmul.mubr.f32.gmra.mrb[0].mxu0 %v250
    %v4295 = vpop.f32.mrb[0].mxu0
    %v4296 = vadd.f32 0.0, %v4295
    %v4297 = vpop.f32.mrb[0].mxu0
    %v4298 = vadd.f32 0.0, %v4297
    %4299 = vdwg.mxu0
    %v4300 = vmax.f32 %v4081, %v4224
    %v4301 = vmax.f32 %v4083, %v4226
    %v4302 = vmax.f32 %v4087, %v4230
    %v4303 = vmax.f32 %v4089, %v4232
    %v4304 = vmax.f32 %v4093, %v4236
    %v4305 = vmax.f32 %v4095, %v4238
    %v4306 = vmax.f32 %v4099, %v4242
    %v4307 = vmax.f32 %v4101, %v4244
    %v4308 = vmax.f32 %v4105, %v4248
    %v4309 = vmax.f32 %v4107, %v4250
    %v4310 = vmax.f32 %v4111, %v4254
    %v4311 = vmax.f32 %v4113, %v4256
    %v4312 = vmax.f32 %v4117, %v4260
    %v4313 = vmax.f32 %v4119, %v4262
    %v4314 = vmax.f32 %v4123, %v4266
    %v4315 = vmax.f32 %v4125, %v4268
    %v4316 = vmax.f32 %v4129, %v4272
    %v4317 = vmax.f32 %v4131, %v4274
    %v4318 = vmax.f32 %v4135, %v4278
    %v4319 = vmax.f32 %v4137, %v4280
    %v4320 = vmax.f32 %v4141, %v4284
    %v4321 = vmax.f32 %v4143, %v4286
    %v4322 = vmax.f32 %v4147, %v4290
    %v4323 = vmax.f32 %v4149, %v4292
    %v4324 = vmax.f32 %v4153, %v4296
    %v4325 = vmax.f32 %v4155, %v4298
    %v4327 = vsel %vm608, %v4301, 0
    %v4330 = vsel %vm608, %v4303, 0
    %v4333 = vsel %vm608, %v4305, 0
    %v4336 = vsel %vm608, %v4307, 0
    %v4339 = vsel %vm608, %v4309, 0
    %v4342 = vsel %vm608, %v4311, 0
    %v4345 = vsel %vm608, %v4313, 0
    %v4348 = vsel %vm608, %v4315, 0
    %v4351 = vsel %vm608, %v4317, 0
    %v4354 = vsel %vm608, %v4319, 0
    %v4357 = vsel %vm608, %v4321, 0
    %v4360 = vsel %vm608, %v4323, 0
    %v4363 = vsel %vm608, %v4325, 0
    %4365 = vmatprep.subr.mxu0 0.0
    %4366 = vmatpush1.msra.mxu0 %v316
    %4367 = vmatprep.subr.mxu0 0.0
    %4368 = vmatpush1.msra.mxu0 %v317
    %4369 = vmatprep.subr.mxu0 0.0
    %4370 = vmatpush1.msra.mxu0 %v318
    %4371 = vmatprep.subr.mxu0 0.0
    %4372 = vmatpush1.msra.mxu0 %v319
    %4373 = vmatprep.subr.mxu0 0.0
    %4374 = vmatpush1.msra.mxu0 %v320
    %4375 = vmatprep.subr.mxu0 0.0
    %4376 = vmatpush1.msra.mxu0 %v321
    %4377 = vmatprep.subr.mxu0 0.0
    %4378 = vmatpush1.msra.mxu0 %v322
    %4379 = vmatprep.subr.mxu0 0.0
    %4380 = vmatpush1.msra.mxu0 %v323
    %4381 = vmatprep.subr.mxu0 0.0
    %4382 = vmatpush1.msra.mxu0 %v324
    %4383 = vmatprep.subr.mxu0 0.0
    %4384 = vmatpush1.msra.mxu0 %v325
    %4385 = vmatprep.subr.mxu0 0.0
    %4386 = vmatpush1.msra.mxu0 %v326
    %4387 = vmatprep.subr.mxu0 0.0
    %4388 = vmatpush1.msra.mxu0 %v327
    %4389 = vmatprep.subr.mxu0 0.0
    %4390 = vmatpush1.msra.mxu0 %v328
    %4391 = vmatprep.subr.mxu0 0.0
    %4392 = vmatpush1.msra.mxu0 %v329
    %4393 = vmatprep.subr.mxu0 0.0
    %4394 = vmatpush1.msra.mxu0 %v330
    %4395 = vmatprep.subr.mxu0 0.0
    %4396 = vmatpush1.msra.mxu0 %v331
    %4397 = vmatprep.subr.mxu0 0.0
    %4398 = vmatpush1.msra.mxu0 %v332
    %4399 = vmatprep.subr.mxu0 0.0
    %4400 = vmatpush1.msra.mxu0 %v333
    %4401 = vmatprep.subr.mxu0 0.0
    %4402 = vmatpush1.msra.mxu0 %v334
    %4403 = vmatprep.subr.mxu0 0.0
    %4404 = vmatpush1.msra.mxu0 %v335
    %4405 = vmatprep.subr.mxu0 0.0
    %4406 = vmatpush1.msra.mxu0 %v336
    %4407 = vmatprep.subr.mxu0 0.0
    %4408 = vmatpush1.msra.mxu0 %v337
    %4409 = vmatprep.subr.mxu0 0.0
    %4410 = vmatpush1.msra.mxu0 %v338
    %4411 = vmatprep.subr.mxu0 0.0
    %4412 = vmatpush1.msra.mxu0 %v339
    %4413 = vmatprep.subr.mxu0 0.0
    %4414 = vmatpush1.msra.mxu0 %v340
    %4415 = vmatprep.subr.mxu0 0.0
    %4416 = vmatpush1.msra.mxu0 0.0
    %4417 = vmatprep.subr.mxu0 0.0
    %4418 = vmatpush1.msra.mxu0 0.0
    %4419 = vmatprep.subr.mxu0 0.0
    %4420 = vmatpush1.msra.mxu0 0.0
    %4421 = vmatprep.subr.mxu0 0.0
    %4422 = vmatpush1.msra.mxu0 0.0
    %4423 = vmatprep.subr.mxu0 0.0
    %4424 = vmatpush1.msra.mxu0 0.0
    %4425 = vmatprep.subr.mxu0 0.0
    %4426 = vmatpush1.msra.mxu0 0.0
    %4427 = vmatprep.subr.mxu0 0.0
    %4428 = vmatpush1.msra.mxu0 0.0
    %4429 = vmatprep.mubr.f32.mxu0 %v4327
    %4430 = vmatmul.mubr.f32.gmra.mrb[0].mxu0 %v4300
    %v4431 = vpop.f32.mrb[0].mxu0
    %v4432 = vadd.f32 0.0, %v4431
    %v4433 = vpop.f32.mrb[0].mxu0
    %4434 = vmatprep.mubr.f32.mxu0 %v4330
    %4435 = vmatmul.mubr.f32.gmra.mrb[0].mxu0 %v4302
    %v4436 = vpop.f32.mrb[0].mxu0
    %v4437 = vadd.f32 0.0, %v4436
    %v4438 = vpop.f32.mrb[0].mxu0
    %4439 = vmatprep.mubr.f32.mxu0 %v4333
    %4440 = vmatmul.mubr.f32.gmra.mrb[0].mxu0 %v4304
    %v4441 = vpop.f32.mrb[0].mxu0
    %v4442 = vadd.f32 0.0, %v4441
    %v4443 = vpop.f32.mrb[0].mxu0
    %4444 = vmatprep.mubr.f32.mxu0 %v4336
    %4445 = vmatmul.mubr.f32.gmra.mrb[0].mxu0 %v4306
    %v4446 = vpop.f32.mrb[0].mxu0
    %v4447 = vadd.f32 0.0, %v4446
    %v4448 = vpop.f32.mrb[0].mxu0
    %4449 = vmatprep.mubr.f32.mxu0 %v4339
    %4450 = vmatmul.mubr.f32.gmra.mrb[0].mxu0 %v4308
    %v4451 = vpop.f32.mrb[0].mxu0
    %v4452 = vadd.f32 0.0, %v4451
    %v4453 = vpop.f32.mrb[0].mxu0
    %4454 = vmatprep.mubr.f32.mxu0 %v4342
    %4455 = vmatmul.mubr.f32.gmra.mrb[0].mxu0 %v4310
    %v4456 = vpop.f32.mrb[0].mxu0
    %v4457 = vadd.f32 0.0, %v4456
    %v4458 = vpop.f32.mrb[0].mxu0
    %4459 = vmatprep.mubr.f32.mxu0 %v4345
    %4460 = vmatmul.mubr.f32.gmra.mrb[0].mxu0 %v4312
    %v4461 = vpop.f32.mrb[0].mxu0
    %v4462 = vadd.f32 0.0, %v4461
    %v4463 = vpop.f32.mrb[0].mxu0
    %4464 = vmatprep.mubr.f32.mxu0 %v4348
    %4465 = vmatmul.mubr.f32.gmra.mrb[0].mxu0 %v4314
    %v4466 = vpop.f32.mrb[0].mxu0
    %v4467 = vadd.f32 0.0, %v4466
    %v4468 = vpop.f32.mrb[0].mxu0
    %4469 = vmatprep.mubr.f32.mxu0 %v4351
    %4470 = vmatmul.mubr.f32.gmra.mrb[0].mxu0 %v4316
    %v4471 = vpop.f32.mrb[0].mxu0
    %v4472 = vadd.f32 0.0, %v4471
    %v4473 = vpop.f32.mrb[0].mxu0
    %4474 = vmatprep.mubr.f32.mxu0 %v4354
    %4475 = vmatmul.mubr.f32.gmra.mrb[0].mxu0 %v4318
    %v4476 = vpop.f32.mrb[0].mxu0
    %v4477 = vadd.f32 0.0, %v4476
    %v4478 = vpop.f32.mrb[0].mxu0
    %4479 = vmatprep.mubr.f32.mxu0 %v4357
    %4480 = vmatmul.mubr.f32.gmra.mrb[0].mxu0 %v4320
    %v4481 = vpop.f32.mrb[0].mxu0
    %v4482 = vadd.f32 0.0, %v4481
    %v4483 = vpop.f32.mrb[0].mxu0
    %4484 = vmatprep.mubr.f32.mxu0 %v4360
    %4485 = vmatmul.mubr.f32.gmra.mrb[0].mxu0 %v4322
    %v4486 = vpop.f32.mrb[0].mxu0
    %v4487 = vadd.f32 0.0, %v4486
    %v4488 = vpop.f32.mrb[0].mxu0
    %4489 = vmatprep.mubr.f32.mxu0 %v4363
    %4490 = vmatmul.mubr.f32.gmra.mrb[0].mxu0 %v4324
    %v4491 = vpop.f32.mrb[0].mxu0
    %v4492 = vadd.f32 0.0, %v4491
    %v4493 = vpop.f32.mrb[0].mxu0
    %4494 = vdwg.mxu0
    %4495 = vmatprep.subr.mxu0 0.0
    %4496 = vmatpush1.msra.mxu0 %v392
    %4497 = vmatprep.subr.mxu0 0.0
    %4498 = vmatpush1.msra.mxu0 %v393
    %4499 = vmatprep.subr.mxu0 0.0
    %4500 = vmatpush1.msra.mxu0 %v394
    %4501 = vmatprep.subr.mxu0 0.0
    %4502 = vmatpush1.msra.mxu0 %v395
    %4503 = vmatprep.subr.mxu0 0.0
    %4504 = vmatpush1.msra.mxu0 %v396
    %4505 = vmatprep.subr.mxu0 0.0
    %4506 = vmatpush1.msra.mxu0 %v397
    %4507 = vmatprep.subr.mxu0 0.0
    %4508 = vmatpush1.msra.mxu0 %v398
    %4509 = vmatprep.subr.mxu0 0.0
    %4510 = vmatpush1.msra.mxu0 %v399
    %4511 = vmatprep.subr.mxu0 0.0
    %4512 = vmatpush1.msra.mxu0 %v400
    %4513 = vmatprep.subr.mxu0 0.0
    %4514 = vmatpush1.msra.mxu0 %v401
    %4515 = vmatprep.subr.mxu0 0.0
    %4516 = vmatpush1.msra.mxu0 %v402
    %4517 = vmatprep.subr.mxu0 0.0
    %4518 = vmatpush1.msra.mxu0 %v403
    %4519 = vmatprep.subr.mxu0 0.0
    %4520 = vmatpush1.msra.mxu0 %v404
    %4521 = vmatprep.subr.mxu0 0.0
    %4522 = vmatpush1.msra.mxu0 %v405
    %4523 = vmatprep.subr.mxu0 0.0
    %4524 = vmatpush1.msra.mxu0 %v406
    %4525 = vmatprep.subr.mxu0 0.0
    %4526 = vmatpush1.msra.mxu0 %v407
    %4527 = vmatprep.subr.mxu0 0.0
    %4528 = vmatpush1.msra.mxu0 %v408
    %4529 = vmatprep.subr.mxu0 0.0
    %4530 = vmatpush1.msra.mxu0 %v409
    %4531 = vmatprep.subr.mxu0 0.0
    %4532 = vmatpush1.msra.mxu0 %v410
    %4533 = vmatprep.subr.mxu0 0.0
    %4534 = vmatpush1.msra.mxu0 %v411
    %4535 = vmatprep.subr.mxu0 0.0
    %4536 = vmatpush1.msra.mxu0 %v412
    %4537 = vmatprep.subr.mxu0 0.0
    %4538 = vmatpush1.msra.mxu0 %v413
    %4539 = vmatprep.subr.mxu0 0.0
    %4540 = vmatpush1.msra.mxu0 %v414
    %4541 = vmatprep.subr.mxu0 0.0
    %4542 = vmatpush1.msra.mxu0 %v415
    %4543 = vmatprep.subr.mxu0 0.0
    %4544 = vmatpush1.msra.mxu0 %v416
    %4545 = vmatprep.subr.mxu0 0.0
    %4546 = vmatpush1.msra.mxu0 0.0
    %4547 = vmatprep.subr.mxu0 0.0
    %4548 = vmatpush1.msra.mxu0 0.0
    %4549 = vmatprep.subr.mxu0 0.0
    %4550 = vmatpush1.msra.mxu0 0.0
    %4551 = vmatprep.subr.mxu0 0.0
    %4552 = vmatpush1.msra.mxu0 0.0
    %4553 = vmatprep.subr.mxu0 0.0
    %4554 = vmatpush1.msra.mxu0 0.0
    %4555 = vmatprep.subr.mxu0 0.0
    %4556 = vmatpush1.msra.mxu0 0.0
    %4557 = vmatprep.subr.mxu0 0.0
    %4558 = vmatpush1.msra.mxu0 0.0
    %4559 = vmatprep.mubr.f32.mxu0 %v4327
    %4560 = vmatmul.mubr.f32.gmra.mrb[0].mxu0 %v4300
    %v4561 = vpop.f32.mrb[0].mxu0
    %v4562 = vadd.f32 0.0, %v4561
    %v4563 = vpop.f32.mrb[0].mxu0
    %4564 = vmatprep.mubr.f32.mxu0 %v4330
    %4565 = vmatmul.mubr.f32.gmra.mrb[0].mxu0 %v4302
    %v4566 = vpop.f32.mrb[0].mxu0
    %v4567 = vadd.f32 0.0, %v4566
    %v4568 = vpop.f32.mrb[0].mxu0
    %4569 = vmatprep.mubr.f32.mxu0 %v4333
    %4570 = vmatmul.mubr.f32.gmra.mrb[0].mxu0 %v4304
    %v4571 = vpop.f32.mrb[0].mxu0
    %v4572 = vadd.f32 0.0, %v4571
    %v4573 = vpop.f32.mrb[0].mxu0
    %4574 = vmatprep.mubr.f32.mxu0 %v4336
    %4575 = vmatmul.mubr.f32.gmra.mrb[0].mxu0 %v4306
    %v4576 = vpop.f32.mrb[0].mxu0
    %v4577 = vadd.f32 0.0, %v4576
    %v4578 = vpop.f32.mrb[0].mxu0
    %4579 = vmatprep.mubr.f32.mxu0 %v4339
    %4580 = vmatmul.mubr.f32.gmra.mrb[0].mxu0 %v4308
    %v4581 = vpop.f32.mrb[0].mxu0
    %v4582 = vadd.f32 0.0, %v4581
    %v4583 = vpop.f32.mrb[0].mxu0
    %4584 = vmatprep.mubr.f32.mxu0 %v4342
    %4585 = vmatmul.mubr.f32.gmra.mrb[0].mxu0 %v4310
    %v4586 = vpop.f32.mrb[0].mxu0
    %v4587 = vadd.f32 0.0, %v4586
    %v4588 = vpop.f32.mrb[0].mxu0
    %4589 = vmatprep.mubr.f32.mxu0 %v4345
    %4590 = vmatmul.mubr.f32.gmra.mrb[0].mxu0 %v4312
    %v4591 = vpop.f32.mrb[0].mxu0
    %v4592 = vadd.f32 0.0, %v4591
    %v4593 = vpop.f32.mrb[0].mxu0
    %4594 = vmatprep.mubr.f32.mxu0 %v4348
    %4595 = vmatmul.mubr.f32.gmra.mrb[0].mxu0 %v4314
    %v4596 = vpop.f32.mrb[0].mxu0
    %v4597 = vadd.f32 0.0, %v4596
    %v4598 = vpop.f32.mrb[0].mxu0
    %4599 = vmatprep.mubr.f32.mxu0 %v4351
    %4600 = vmatmul.mubr.f32.gmra.mrb[0].mxu0 %v4316
    %v4601 = vpop.f32.mrb[0].mxu0
    %v4602 = vadd.f32 0.0, %v4601
    %v4603 = vpop.f32.mrb[0].mxu0
    %4604 = vmatprep.mubr.f32.mxu0 %v4354
    %4605 = vmatmul.mubr.f32.gmra.mrb[0].mxu0 %v4318
    %v4606 = vpop.f32.mrb[0].mxu0
    %v4607 = vadd.f32 0.0, %v4606
    %v4608 = vpop.f32.mrb[0].mxu0
    %4609 = vmatprep.mubr.f32.mxu0 %v4357
    %4610 = vmatmul.mubr.f32.gmra.mrb[0].mxu0 %v4320
    %v4611 = vpop.f32.mrb[0].mxu0
    %v4612 = vadd.f32 0.0, %v4611
    %v4613 = vpop.f32.mrb[0].mxu0
    %4614 = vmatprep.mubr.f32.mxu0 %v4360
    %4615 = vmatmul.mubr.f32.gmra.mrb[0].mxu0 %v4322
    %v4616 = vpop.f32.mrb[0].mxu0
    %v4617 = vadd.f32 0.0, %v4616
    %v4618 = vpop.f32.mrb[0].mxu0
    %4619 = vmatprep.mubr.f32.mxu0 %v4363
    %4620 = vmatmul.mubr.f32.gmra.mrb[0].mxu0 %v4324
    %v4621 = vpop.f32.mrb[0].mxu0
    %v4622 = vadd.f32 0.0, %v4621
    %v4623 = vpop.f32.mrb[0].mxu0
    %4624 = vdwg.mxu0
    %v4625 = vmax.f32 %v4432, %v4562
    %v4626 = vmax.f32 %v4437, %v4567
    %v4627 = vmax.f32 %v4442, %v4572
    %v4628 = vmax.f32 %v4447, %v4577
    %v4629 = vmax.f32 %v4452, %v4582
    %v4630 = vmax.f32 %v4457, %v4587
    %v4631 = vmax.f32 %v4462, %v4592
    %v4632 = vmax.f32 %v4467, %v4597
    %v4633 = vmax.f32 %v4472, %v4602
    %v4634 = vmax.f32 %v4477, %v4607
    %v4635 = vmax.f32 %v4482, %v4612
    %v4636 = vmax.f32 %v4487, %v4617
    %v4637 = vmax.f32 %v4492, %v4622
    %v4638 = vmul.f32 %v1311, %v4625
    %v4639 = vmul.f32 %v1311, %v4626
    %v4640 = vmul.f32 %v1311, %v4627
    %v4641 = vmul.f32 %v1311, %v4628
    %v4642 = vmul.f32 %v1311, %v4629
    %v4643 = vmul.f32 %v1311, %v4630
    %v4644 = vmul.f32 %v1311, %v4631
    %v4645 = vmul.f32 %v1311, %v4632
    %v4646 = vmul.f32 %v1311, %v4633
    %v4647 = vmul.f32 %v1311, %v4634
    %v4648 = vmul.f32 %v1311, %v4635
    %v4649 = vmul.f32 %v1311, %v4636
    %v4650 = vmul.f32 %v1324, %v4625
    %v4651 = vmul.f32 %v1324, %v4626
    %v4652 = vmul.f32 %v1324, %v4627
    %v4653 = vmul.f32 %v1324, %v4628
    %v4654 = vmul.f32 %v1324, %v4629
    %v4655 = vmul.f32 %v1324, %v4630
    %v4656 = vmul.f32 %v1324, %v4631
    %v4657 = vmul.f32 %v1324, %v4632
    %v4658 = vmul.f32 %v1324, %v4633
    %v4659 = vmul.f32 %v1324, %v4634
    %v4660 = vmul.f32 %v1324, %v4635
    %v4661 = vmul.f32 %v1324, %v4636
    %4674 = vrot.lane.b32.xlu0 %v4650, 127
    %v4675 = vpop.permute.xlu0 %4674
    %4676 = vrot.lane.b32.xlu0 %v4651, 127
    %v4677 = vpop.permute.xlu0 %4676
    %4678 = vrot.lane.b32.xlu0 %v4652, 127
    %v4679 = vpop.permute.xlu0 %4678
    %4680 = vrot.lane.b32.xlu0 %v4653, 127
    %v4681 = vpop.permute.xlu0 %4680
    %4682 = vrot.lane.b32.xlu0 %v4654, 127
    %v4683 = vpop.permute.xlu0 %4682
    %4684 = vrot.lane.b32.xlu0 %v4655, 127
    %v4685 = vpop.permute.xlu0 %4684
    %4686 = vrot.lane.b32.xlu0 %v4656, 127
    %v4687 = vpop.permute.xlu0 %4686
    %4688 = vrot.lane.b32.xlu0 %v4657, 127
    %v4689 = vpop.permute.xlu0 %4688
    %4690 = vrot.lane.b32.xlu0 %v4658, 127
    %v4691 = vpop.permute.xlu0 %4690
    %4692 = vrot.lane.b32.xlu0 %v4659, 127
    %v4693 = vpop.permute.xlu0 %4692
    %4694 = vrot.lane.b32.xlu0 %v4660, 127
    %v4695 = vpop.permute.xlu0 %4694
    %4696 = vrot.lane.b32.xlu0 %v4661, 127
    %v4697 = vpop.permute.xlu0 %4696
    %v4710 = vadd.f32 %v4638, %v4675
    %v4711 = vadd.f32 %v4639, %v4677
    %v4712 = vadd.f32 %v4640, %v4679
    %v4713 = vadd.f32 %v4641, %v4681
    %v4714 = vadd.f32 %v4642, %v4683
    %v4715 = vadd.f32 %v4643, %v4685
    %v4716 = vadd.f32 %v4644, %v4687
    %v4717 = vadd.f32 %v4645, %v4689
    %v4718 = vadd.f32 %v4646, %v4691
    %v4719 = vadd.f32 %v4647, %v4693
    %v4720 = vadd.f32 %v4648, %v4695
    %v4721 = vadd.f32 %v4649, %v4697
    %v4722 = vmul.f32 %v1397, %v4625
    %v4723 = vmul.f32 %v1397, %v4626
    %v4724 = vmul.f32 %v1397, %v4627
    %v4725 = vmul.f32 %v1397, %v4628
    %v4726 = vmul.f32 %v1397, %v4629
    %v4727 = vmul.f32 %v1397, %v4630
    %v4728 = vmul.f32 %v1397, %v4631
    %v4729 = vmul.f32 %v1397, %v4632
    %v4730 = vmul.f32 %v1397, %v4633
    %v4731 = vmul.f32 %v1397, %v4634
    %v4732 = vmul.f32 %v1397, %v4635
    %v4733 = vmul.f32 %v1397, %v4636
    %4746 = vrot.lane.b32.xlu0 %v4722, 126
    %v4747 = vpop.permute.xlu0 %4746
    %4748 = vrot.lane.b32.xlu0 %v4723, 126
    %v4749 = vpop.permute.xlu0 %4748
    %4750 = vrot.lane.b32.xlu0 %v4724, 126
    %v4751 = vpop.permute.xlu0 %4750
    %4752 = vrot.lane.b32.xlu0 %v4725, 126
    %v4753 = vpop.permute.xlu0 %4752
    %4754 = vrot.lane.b32.xlu0 %v4726, 126
    %v4755 = vpop.permute.xlu0 %4754
    %4756 = vrot.lane.b32.xlu0 %v4727, 126
    %v4757 = vpop.permute.xlu0 %4756
    %4758 = vrot.lane.b32.xlu0 %v4728, 126
    %v4759 = vpop.permute.xlu0 %4758
    %4760 = vrot.lane.b32.xlu0 %v4729, 126
    %v4761 = vpop.permute.xlu0 %4760
    %4762 = vrot.lane.b32.xlu0 %v4730, 126
    %v4763 = vpop.permute.xlu0 %4762
    %4764 = vrot.lane.b32.xlu0 %v4731, 126
    %v4765 = vpop.permute.xlu0 %4764
    %4766 = vrot.lane.b32.xlu0 %v4732, 126
    %v4767 = vpop.permute.xlu0 %4766
    %4768 = vrot.lane.b32.xlu0 %v4733, 126
    %v4769 = vpop.permute.xlu0 %4768
    %v4782 = vadd.f32 %v4710, %v4747
    %v4783 = vadd.f32 %v4711, %v4749
    %v4784 = vadd.f32 %v4712, %v4751
    %v4785 = vadd.f32 %v4713, %v4753
    %v4786 = vadd.f32 %v4714, %v4755
    %v4787 = vadd.f32 %v4715, %v4757
    %v4788 = vadd.f32 %v4716, %v4759
    %v4789 = vadd.f32 %v4717, %v4761
    %v4790 = vadd.f32 %v4718, %v4763
    %v4791 = vadd.f32 %v4719, %v4765
    %v4792 = vadd.f32 %v4720, %v4767
    %v4793 = vadd.f32 %v4721, %v4769
    %v4794 = vmul.f32 %v1470, %v4625
    %v4795 = vmul.f32 %v1470, %v4626
    %v4796 = vmul.f32 %v1470, %v4627
    %v4797 = vmul.f32 %v1470, %v4628
    %v4798 = vmul.f32 %v1470, %v4629
    %v4799 = vmul.f32 %v1470, %v4630
    %v4800 = vmul.f32 %v1470, %v4631
    %v4801 = vmul.f32 %v1470, %v4632
    %v4802 = vmul.f32 %v1470, %v4633
    %v4803 = vmul.f32 %v1470, %v4634
    %v4804 = vmul.f32 %v1470, %v4635
    %v4805 = vmul.f32 %v1470, %v4636
    %4818 = vrot.lane.b32.xlu0 %v4794, 125
    %v4819 = vpop.permute.xlu0 %4818
    %4820 = vrot.lane.b32.xlu0 %v4795, 125
    %v4821 = vpop.permute.xlu0 %4820
    %4822 = vrot.lane.b32.xlu0 %v4796, 125
    %v4823 = vpop.permute.xlu0 %4822
    %4824 = vrot.lane.b32.xlu0 %v4797, 125
    %v4825 = vpop.permute.xlu0 %4824
    %4826 = vrot.lane.b32.xlu0 %v4798, 125
    %v4827 = vpop.permute.xlu0 %4826
    %4828 = vrot.lane.b32.xlu0 %v4799, 125
    %v4829 = vpop.permute.xlu0 %4828
    %4830 = vrot.lane.b32.xlu0 %v4800, 125
    %v4831 = vpop.permute.xlu0 %4830
    %4832 = vrot.lane.b32.xlu0 %v4801, 125
    %v4833 = vpop.permute.xlu0 %4832
    %4834 = vrot.lane.b32.xlu0 %v4802, 125
    %v4835 = vpop.permute.xlu0 %4834
    %4836 = vrot.lane.b32.xlu0 %v4803, 125
    %v4837 = vpop.permute.xlu0 %4836
    %4838 = vrot.lane.b32.xlu0 %v4804, 125
    %v4839 = vpop.permute.xlu0 %4838
    %4840 = vrot.lane.b32.xlu0 %v4805, 125
    %v4841 = vpop.permute.xlu0 %4840
    %v4854 = vadd.f32 %v4782, %v4819
    %v4855 = vadd.f32 %v4783, %v4821
    %v4856 = vadd.f32 %v4784, %v4823
    %v4857 = vadd.f32 %v4785, %v4825
    %v4858 = vadd.f32 %v4786, %v4827
    %v4859 = vadd.f32 %v4787, %v4829
    %v4860 = vadd.f32 %v4788, %v4831
    %v4861 = vadd.f32 %v4789, %v4833
    %v4862 = vadd.f32 %v4790, %v4835
    %v4863 = vadd.f32 %v4791, %v4837
    %v4864 = vadd.f32 %v4792, %v4839
    %v4865 = vadd.f32 %v4793, %v4841
    %v4866 = vmul.f32 %v1543, %v4625
    %v4867 = vmul.f32 %v1543, %v4626
    %v4868 = vmul.f32 %v1543, %v4627
    %v4869 = vmul.f32 %v1543, %v4628
    %v4870 = vmul.f32 %v1543, %v4629
    %v4871 = vmul.f32 %v1543, %v4630
    %v4872 = vmul.f32 %v1543, %v4631
    %v4873 = vmul.f32 %v1543, %v4632
    %v4874 = vmul.f32 %v1543, %v4633
    %v4875 = vmul.f32 %v1543, %v4634
    %v4876 = vmul.f32 %v1543, %v4635
    %v4877 = vmul.f32 %v1543, %v4636
    %4890 = vrot.lane.b32.xlu0 %v4866, 124
    %v4891 = vpop.permute.xlu0 %4890
    %4892 = vrot.lane.b32.xlu0 %v4867, 124
    %v4893 = vpop.permute.xlu0 %4892
    %4894 = vrot.lane.b32.xlu0 %v4868, 124
    %v4895 = vpop.permute.xlu0 %4894
    %4896 = vrot.lane.b32.xlu0 %v4869, 124
    %v4897 = vpop.permute.xlu0 %4896
    %4898 = vrot.lane.b32.xlu0 %v4870, 124
    %v4899 = vpop.permute.xlu0 %4898
    %4900 = vrot.lane.b32.xlu0 %v4871, 124
    %v4901 = vpop.permute.xlu0 %4900
    %4902 = vrot.lane.b32.xlu0 %v4872, 124
    %v4903 = vpop.permute.xlu0 %4902
    %4904 = vrot.lane.b32.xlu0 %v4873, 124
    %v4905 = vpop.permute.xlu0 %4904
    %4906 = vrot.lane.b32.xlu0 %v4874, 124
    %v4907 = vpop.permute.xlu0 %4906
    %4908 = vrot.lane.b32.xlu0 %v4875, 124
    %v4909 = vpop.permute.xlu0 %4908
    %4910 = vrot.lane.b32.xlu0 %v4876, 124
    %v4911 = vpop.permute.xlu0 %4910
    %4912 = vrot.lane.b32.xlu0 %v4877, 124
    %v4913 = vpop.permute.xlu0 %4912
    %v4926 = vadd.f32 %v4854, %v4891
    %v4927 = vadd.f32 %v4855, %v4893
    %v4928 = vadd.f32 %v4856, %v4895
    %v4929 = vadd.f32 %v4857, %v4897
    %v4930 = vadd.f32 %v4858, %v4899
    %v4931 = vadd.f32 %v4859, %v4901
    %v4932 = vadd.f32 %v4860, %v4903
    %v4933 = vadd.f32 %v4861, %v4905
    %v4934 = vadd.f32 %v4862, %v4907
    %v4935 = vadd.f32 %v4863, %v4909
    %v4936 = vadd.f32 %v4864, %v4911
    %v4937 = vadd.f32 %v4865, %v4913
    %v4938 = vmul.f32 %v1616, %v4625
    %v4939 = vmul.f32 %v1616, %v4626
    %v4940 = vmul.f32 %v1616, %v4627
    %v4941 = vmul.f32 %v1616, %v4628
    %v4942 = vmul.f32 %v1616, %v4629
    %v4943 = vmul.f32 %v1616, %v4630
    %v4944 = vmul.f32 %v1616, %v4631
    %v4945 = vmul.f32 %v1616, %v4632
    %v4946 = vmul.f32 %v1616, %v4633
    %v4947 = vmul.f32 %v1616, %v4634
    %v4948 = vmul.f32 %v1616, %v4635
    %v4949 = vmul.f32 %v1616, %v4636
    %v4950 = vmul.f32 %v1629, %v4625
    %v4951 = vmul.f32 %v1629, %v4626
    %v4952 = vmul.f32 %v1629, %v4627
    %v4953 = vmul.f32 %v1629, %v4628
    %v4954 = vmul.f32 %v1629, %v4629
    %v4955 = vmul.f32 %v1629, %v4630
    %v4956 = vmul.f32 %v1629, %v4631
    %v4957 = vmul.f32 %v1629, %v4632
    %v4958 = vmul.f32 %v1629, %v4633
    %v4959 = vmul.f32 %v1629, %v4634
    %v4960 = vmul.f32 %v1629, %v4635
    %v4961 = vmul.f32 %v1629, %v4636
    %4974 = vrot.lane.b32.xlu0 %v4950, 127
    %v4975 = vpop.permute.xlu0 %4974
    %4976 = vrot.lane.b32.xlu0 %v4951, 127
    %v4977 = vpop.permute.xlu0 %4976
    %4978 = vrot.lane.b32.xlu0 %v4952, 127
    %v4979 = vpop.permute.xlu0 %4978
    %4980 = vrot.lane.b32.xlu0 %v4953, 127
    %v4981 = vpop.permute.xlu0 %4980
    %4982 = vrot.lane.b32.xlu0 %v4954, 127
    %v4983 = vpop.permute.xlu0 %4982
    %4984 = vrot.lane.b32.xlu0 %v4955, 127
    %v4985 = vpop.permute.xlu0 %4984
    %4986 = vrot.lane.b32.xlu0 %v4956, 127
    %v4987 = vpop.permute.xlu0 %4986
    %4988 = vrot.lane.b32.xlu0 %v4957, 127
    %v4989 = vpop.permute.xlu0 %4988
    %4990 = vrot.lane.b32.xlu0 %v4958, 127
    %v4991 = vpop.permute.xlu0 %4990
    %4992 = vrot.lane.b32.xlu0 %v4959, 127
    %v4993 = vpop.permute.xlu0 %4992
    %4994 = vrot.lane.b32.xlu0 %v4960, 127
    %v4995 = vpop.permute.xlu0 %4994
    %4996 = vrot.lane.b32.xlu0 %v4961, 127
    %v4997 = vpop.permute.xlu0 %4996
    %v5010 = vadd.f32 %v4938, %v4975
    %v5011 = vadd.f32 %v4939, %v4977
    %v5012 = vadd.f32 %v4940, %v4979
    %v5013 = vadd.f32 %v4941, %v4981
    %v5014 = vadd.f32 %v4942, %v4983
    %v5015 = vadd.f32 %v4943, %v4985
    %v5016 = vadd.f32 %v4944, %v4987
    %v5017 = vadd.f32 %v4945, %v4989
    %v5018 = vadd.f32 %v4946, %v4991
    %v5019 = vadd.f32 %v4947, %v4993
    %v5020 = vadd.f32 %v4948, %v4995
    %v5021 = vadd.f32 %v4949, %v4997
    %v5022 = vmul.f32 %v1702, %v4625
    %v5023 = vmul.f32 %v1702, %v4626
    %v5024 = vmul.f32 %v1702, %v4627
    %v5025 = vmul.f32 %v1702, %v4628
    %v5026 = vmul.f32 %v1702, %v4629
    %v5027 = vmul.f32 %v1702, %v4630
    %v5028 = vmul.f32 %v1702, %v4631
    %v5029 = vmul.f32 %v1702, %v4632
    %v5030 = vmul.f32 %v1702, %v4633
    %v5031 = vmul.f32 %v1702, %v4634
    %v5032 = vmul.f32 %v1702, %v4635
    %v5033 = vmul.f32 %v1702, %v4636
    %5046 = vrot.lane.b32.xlu0 %v5022, 126
    %v5047 = vpop.permute.xlu0 %5046
    %5048 = vrot.lane.b32.xlu0 %v5023, 126
    %v5049 = vpop.permute.xlu0 %5048
    %5050 = vrot.lane.b32.xlu0 %v5024, 126
    %v5051 = vpop.permute.xlu0 %5050
    %5052 = vrot.lane.b32.xlu0 %v5025, 126
    %v5053 = vpop.permute.xlu0 %5052
    %5054 = vrot.lane.b32.xlu0 %v5026, 126
    %v5055 = vpop.permute.xlu0 %5054
    %5056 = vrot.lane.b32.xlu0 %v5027, 126
    %v5057 = vpop.permute.xlu0 %5056
    %5058 = vrot.lane.b32.xlu0 %v5028, 126
    %v5059 = vpop.permute.xlu0 %5058
    %5060 = vrot.lane.b32.xlu0 %v5029, 126
    %v5061 = vpop.permute.xlu0 %5060
    %5062 = vrot.lane.b32.xlu0 %v5030, 126
    %v5063 = vpop.permute.xlu0 %5062
    %5064 = vrot.lane.b32.xlu0 %v5031, 126
    %v5065 = vpop.permute.xlu0 %5064
    %5066 = vrot.lane.b32.xlu0 %v5032, 126
    %v5067 = vpop.permute.xlu0 %5066
    %5068 = vrot.lane.b32.xlu0 %v5033, 126
    %v5069 = vpop.permute.xlu0 %5068
    %v5082 = vadd.f32 %v5010, %v5047
    %v5083 = vadd.f32 %v5011, %v5049
    %v5084 = vadd.f32 %v5012, %v5051
    %v5085 = vadd.f32 %v5013, %v5053
    %v5086 = vadd.f32 %v5014, %v5055
    %v5087 = vadd.f32 %v5015, %v5057
    %v5088 = vadd.f32 %v5016, %v5059
    %v5089 = vadd.f32 %v5017, %v5061
    %v5090 = vadd.f32 %v5018, %v5063
    %v5091 = vadd.f32 %v5019, %v5065
    %v5092 = vadd.f32 %v5020, %v5067
    %v5093 = vadd.f32 %v5021, %v5069
    %v5094 = vmul.f32 %v1775, %v4625
    %v5095 = vmul.f32 %v1775, %v4626
    %v5096 = vmul.f32 %v1775, %v4627
    %v5097 = vmul.f32 %v1775, %v4628
    %v5098 = vmul.f32 %v1775, %v4629
    %v5099 = vmul.f32 %v1775, %v4630
    %v5100 = vmul.f32 %v1775, %v4631
    %v5101 = vmul.f32 %v1775, %v4632
    %v5102 = vmul.f32 %v1775, %v4633
    %v5103 = vmul.f32 %v1775, %v4634
    %v5104 = vmul.f32 %v1775, %v4635
    %v5105 = vmul.f32 %v1775, %v4636
    %5118 = vrot.lane.b32.xlu0 %v5094, 125
    %v5119 = vpop.permute.xlu0 %5118
    %5120 = vrot.lane.b32.xlu0 %v5095, 125
    %v5121 = vpop.permute.xlu0 %5120
    %5122 = vrot.lane.b32.xlu0 %v5096, 125
    %v5123 = vpop.permute.xlu0 %5122
    %5124 = vrot.lane.b32.xlu0 %v5097, 125
    %v5125 = vpop.permute.xlu0 %5124
    %5126 = vrot.lane.b32.xlu0 %v5098, 125
    %v5127 = vpop.permute.xlu0 %5126
    %5128 = vrot.lane.b32.xlu0 %v5099, 125
    %v5129 = vpop.permute.xlu0 %5128
    %5130 = vrot.lane.b32.xlu0 %v5100, 125
    %v5131 = vpop.permute.xlu0 %5130
    %5132 = vrot.lane.b32.xlu0 %v5101, 125
    %v5133 = vpop.permute.xlu0 %5132
    %5134 = vrot.lane.b32.xlu0 %v5102, 125
    %v5135 = vpop.permute.xlu0 %5134
    %5136 = vrot.lane.b32.xlu0 %v5103, 125
    %v5137 = vpop.permute.xlu0 %5136
    %5138 = vrot.lane.b32.xlu0 %v5104, 125
    %v5139 = vpop.permute.xlu0 %5138
    %5140 = vrot.lane.b32.xlu0 %v5105, 125
    %v5141 = vpop.permute.xlu0 %5140
    %v5154 = vadd.f32 %v5082, %v5119
    %v5155 = vadd.f32 %v5083, %v5121
    %v5156 = vadd.f32 %v5084, %v5123
    %v5157 = vadd.f32 %v5085, %v5125
    %v5158 = vadd.f32 %v5086, %v5127
    %v5159 = vadd.f32 %v5087, %v5129
    %v5160 = vadd.f32 %v5088, %v5131
    %v5161 = vadd.f32 %v5089, %v5133
    %v5162 = vadd.f32 %v5090, %v5135
    %v5163 = vadd.f32 %v5091, %v5137
    %v5164 = vadd.f32 %v5092, %v5139
    %v5165 = vadd.f32 %v5093, %v5141
    %v5166 = vmul.f32 %v1848, %v4625
    %v5167 = vmul.f32 %v1848, %v4626
    %v5168 = vmul.f32 %v1848, %v4627
    %v5169 = vmul.f32 %v1848, %v4628
    %v5170 = vmul.f32 %v1848, %v4629
    %v5171 = vmul.f32 %v1848, %v4630
    %v5172 = vmul.f32 %v1848, %v4631
    %v5173 = vmul.f32 %v1848, %v4632
    %v5174 = vmul.f32 %v1848, %v4633
    %v5175 = vmul.f32 %v1848, %v4634
    %v5176 = vmul.f32 %v1848, %v4635
    %v5177 = vmul.f32 %v1848, %v4636
    %5190 = vrot.lane.b32.xlu0 %v5166, 124
    %v5191 = vpop.permute.xlu0 %5190
    %5192 = vrot.lane.b32.xlu0 %v5167, 124
    %v5193 = vpop.permute.xlu0 %5192
    %5194 = vrot.lane.b32.xlu0 %v5168, 124
    %v5195 = vpop.permute.xlu0 %5194
    %5196 = vrot.lane.b32.xlu0 %v5169, 124
    %v5197 = vpop.permute.xlu0 %5196
    %5198 = vrot.lane.b32.xlu0 %v5170, 124
    %v5199 = vpop.permute.xlu0 %5198
    %5200 = vrot.lane.b32.xlu0 %v5171, 124
    %v5201 = vpop.permute.xlu0 %5200
    %5202 = vrot.lane.b32.xlu0 %v5172, 124
    %v5203 = vpop.permute.xlu0 %5202
    %5204 = vrot.lane.b32.xlu0 %v5173, 124
    %v5205 = vpop.permute.xlu0 %5204
    %5206 = vrot.lane.b32.xlu0 %v5174, 124
    %v5207 = vpop.permute.xlu0 %5206
    %5208 = vrot.lane.b32.xlu0 %v5175, 124
    %v5209 = vpop.permute.xlu0 %5208
    %5210 = vrot.lane.b32.xlu0 %v5176, 124
    %v5211 = vpop.permute.xlu0 %5210
    %5212 = vrot.lane.b32.xlu0 %v5177, 124
    %v5213 = vpop.permute.xlu0 %5212
    %v5226 = vadd.f32 %v5154, %v5191
    %v5227 = vadd.f32 %v5155, %v5193
    %v5228 = vadd.f32 %v5156, %v5195
    %v5229 = vadd.f32 %v5157, %v5197
    %v5230 = vadd.f32 %v5158, %v5199
    %v5231 = vadd.f32 %v5159, %v5201
    %v5232 = vadd.f32 %v5160, %v5203
    %v5233 = vadd.f32 %v5161, %v5205
    %v5234 = vadd.f32 %v5162, %v5207
    %v5235 = vadd.f32 %v5163, %v5209
    %v5236 = vadd.f32 %v5164, %v5211
    %v5237 = vadd.f32 %v5165, %v5213
    %v5250 = vrot.slane %v5226, 1
    %v5251 = vrot.slane %v5227, 1
    %v5252 = vsel %vm1933, %v5250, %v5251
    %v5253 = vrot.slane %v5228, 1
    %v5254 = vsel %vm1933, %v5251, %v5253
    %v5255 = vrot.slane %v5229, 1
    %v5256 = vsel %vm1933, %v5253, %v5255
    %v5257 = vrot.slane %v5230, 1
    %v5258 = vsel %vm1933, %v5255, %v5257
    %v5259 = vrot.slane %v5231, 1
    %v5260 = vsel %vm1933, %v5257, %v5259
    %v5261 = vrot.slane %v5232, 1
    %v5262 = vsel %vm1933, %v5259, %v5261
    %v5263 = vrot.slane %v5233, 1
    %v5264 = vsel %vm1933, %v5261, %v5263
    %v5265 = vrot.slane %v5234, 1
    %v5266 = vsel %vm1933, %v5263, %v5265
    %v5267 = vrot.slane %v5235, 1
    %v5268 = vsel %vm1933, %v5265, %v5267
    %v5269 = vrot.slane %v5236, 1
    %v5270 = vsel %vm1933, %v5267, %v5269
    %v5271 = vrot.slane %v5237, 1
    %v5272 = vsel %vm1933, %v5269, %v5271
    %v5285 = vadd.f32 %v4926, %v5252
    %v5286 = vadd.f32 %v4927, %v5254
    %v5287 = vadd.f32 %v4928, %v5256
    %v5288 = vadd.f32 %v4929, %v5258
    %v5289 = vadd.f32 %v4930, %v5260
    %v5290 = vadd.f32 %v4931, %v5262
    %v5291 = vadd.f32 %v4932, %v5264
    %v5292 = vadd.f32 %v4933, %v5266
    %v5293 = vadd.f32 %v4934, %v5268
    %v5294 = vadd.f32 %v4935, %v5270
    %v5295 = vadd.f32 %v4936, %v5272
    %v5296 = vadd.f32 %v4937, %v5271
    %v5297 = vmul.f32 %v1981, %v4625
    %v5298 = vmul.f32 %v1981, %v4626
    %v5299 = vmul.f32 %v1981, %v4627
    %v5300 = vmul.f32 %v1981, %v4628
    %v5301 = vmul.f32 %v1981, %v4629
    %v5302 = vmul.f32 %v1981, %v4630
    %v5303 = vmul.f32 %v1981, %v4631
    %v5304 = vmul.f32 %v1981, %v4632
    %v5305 = vmul.f32 %v1981, %v4633
    %v5306 = vmul.f32 %v1981, %v4634
    %v5307 = vmul.f32 %v1981, %v4635
    %v5308 = vmul.f32 %v1981, %v4636
    %v5309 = vmul.f32 %v1994, %v4625
    %v5310 = vmul.f32 %v1994, %v4626
    %v5311 = vmul.f32 %v1994, %v4627
    %v5312 = vmul.f32 %v1994, %v4628
    %v5313 = vmul.f32 %v1994, %v4629
    %v5314 = vmul.f32 %v1994, %v4630
    %v5315 = vmul.f32 %v1994, %v4631
    %v5316 = vmul.f32 %v1994, %v4632
    %v5317 = vmul.f32 %v1994, %v4633
    %v5318 = vmul.f32 %v1994, %v4634
    %v5319 = vmul.f32 %v1994, %v4635
    %v5320 = vmul.f32 %v1994, %v4636
    %5333 = vrot.lane.b32.xlu0 %v5309, 127
    %v5334 = vpop.permute.xlu0 %5333
    %5335 = vrot.lane.b32.xlu0 %v5310, 127
    %v5336 = vpop.permute.xlu0 %5335
    %5337 = vrot.lane.b32.xlu0 %v5311, 127
    %v5338 = vpop.permute.xlu0 %5337
    %5339 = vrot.lane.b32.xlu0 %v5312, 127
    %v5340 = vpop.permute.xlu0 %5339
    %5341 = vrot.lane.b32.xlu0 %v5313, 127
    %v5342 = vpop.permute.xlu0 %5341
    %5343 = vrot.lane.b32.xlu0 %v5314, 127
    %v5344 = vpop.permute.xlu0 %5343
    %5345 = vrot.lane.b32.xlu0 %v5315, 127
    %v5346 = vpop.permute.xlu0 %5345
    %5347 = vrot.lane.b32.xlu0 %v5316, 127
    %v5348 = vpop.permute.xlu0 %5347
    %5349 = vrot.lane.b32.xlu0 %v5317, 127
    %v5350 = vpop.permute.xlu0 %5349
    %5351 = vrot.lane.b32.xlu0 %v5318, 127
    %v5352 = vpop.permute.xlu0 %5351
    %5353 = vrot.lane.b32.xlu0 %v5319, 127
    %v5354 = vpop.permute.xlu0 %5353
    %5355 = vrot.lane.b32.xlu0 %v5320, 127
    %v5356 = vpop.permute.xlu0 %5355
    %v5369 = vadd.f32 %v5297, %v5334
    %v5370 = vadd.f32 %v5298, %v5336
    %v5371 = vadd.f32 %v5299, %v5338
    %v5372 = vadd.f32 %v5300, %v5340
    %v5373 = vadd.f32 %v5301, %v5342
    %v5374 = vadd.f32 %v5302, %v5344
    %v5375 = vadd.f32 %v5303, %v5346
    %v5376 = vadd.f32 %v5304, %v5348
    %v5377 = vadd.f32 %v5305, %v5350
    %v5378 = vadd.f32 %v5306, %v5352
    %v5379 = vadd.f32 %v5307, %v5354
    %v5380 = vadd.f32 %v5308, %v5356
    %v5381 = vmul.f32 %v2067, %v4625
    %v5382 = vmul.f32 %v2067, %v4626
    %v5383 = vmul.f32 %v2067, %v4627
    %v5384 = vmul.f32 %v2067, %v4628
    %v5385 = vmul.f32 %v2067, %v4629
    %v5386 = vmul.f32 %v2067, %v4630
    %v5387 = vmul.f32 %v2067, %v4631
    %v5388 = vmul.f32 %v2067, %v4632
    %v5389 = vmul.f32 %v2067, %v4633
    %v5390 = vmul.f32 %v2067, %v4634
    %v5391 = vmul.f32 %v2067, %v4635
    %v5392 = vmul.f32 %v2067, %v4636
    %5405 = vrot.lane.b32.xlu0 %v5381, 126
    %v5406 = vpop.permute.xlu0 %5405
    %5407 = vrot.lane.b32.xlu0 %v5382, 126
    %v5408 = vpop.permute.xlu0 %5407
    %5409 = vrot.lane.b32.xlu0 %v5383, 126
    %v5410 = vpop.permute.xlu0 %5409
    %5411 = vrot.lane.b32.xlu0 %v5384, 126
    %v5412 = vpop.permute.xlu0 %5411
    %5413 = vrot.lane.b32.xlu0 %v5385, 126
    %v5414 = vpop.permute.xlu0 %5413
    %5415 = vrot.lane.b32.xlu0 %v5386, 126
    %v5416 = vpop.permute.xlu0 %5415
    %5417 = vrot.lane.b32.xlu0 %v5387, 126
    %v5418 = vpop.permute.xlu0 %5417
    %5419 = vrot.lane.b32.xlu0 %v5388, 126
    %v5420 = vpop.permute.xlu0 %5419
    %5421 = vrot.lane.b32.xlu0 %v5389, 126
    %v5422 = vpop.permute.xlu0 %5421
    %5423 = vrot.lane.b32.xlu0 %v5390, 126
    %v5424 = vpop.permute.xlu0 %5423
    %5425 = vrot.lane.b32.xlu0 %v5391, 126
    %v5426 = vpop.permute.xlu0 %5425
    %5427 = vrot.lane.b32.xlu0 %v5392, 126
    %v5428 = vpop.permute.xlu0 %5427
    %v5441 = vadd.f32 %v5369, %v5406
    %v5442 = vadd.f32 %v5370, %v5408
    %v5443 = vadd.f32 %v5371, %v5410
    %v5444 = vadd.f32 %v5372, %v5412
    %v5445 = vadd.f32 %v5373, %v5414
    %v5446 = vadd.f32 %v5374, %v5416
    %v5447 = vadd.f32 %v5375, %v5418
    %v5448 = vadd.f32 %v5376, %v5420
    %v5449 = vadd.f32 %v5377, %v5422
    %v5450 = vadd.f32 %v5378, %v5424
    %v5451 = vadd.f32 %v5379, %v5426
    %v5452 = vadd.f32 %v5380, %v5428
    %v5453 = vmul.f32 %v2140, %v4625
    %v5454 = vmul.f32 %v2140, %v4626
    %v5455 = vmul.f32 %v2140, %v4627
    %v5456 = vmul.f32 %v2140, %v4628
    %v5457 = vmul.f32 %v2140, %v4629
    %v5458 = vmul.f32 %v2140, %v4630
    %v5459 = vmul.f32 %v2140, %v4631
    %v5460 = vmul.f32 %v2140, %v4632
    %v5461 = vmul.f32 %v2140, %v4633
    %v5462 = vmul.f32 %v2140, %v4634
    %v5463 = vmul.f32 %v2140, %v4635
    %v5464 = vmul.f32 %v2140, %v4636
    %5477 = vrot.lane.b32.xlu0 %v5453, 125
    %v5478 = vpop.permute.xlu0 %5477
    %5479 = vrot.lane.b32.xlu0 %v5454, 125
    %v5480 = vpop.permute.xlu0 %5479
    %5481 = vrot.lane.b32.xlu0 %v5455, 125
    %v5482 = vpop.permute.xlu0 %5481
    %5483 = vrot.lane.b32.xlu0 %v5456, 125
    %v5484 = vpop.permute.xlu0 %5483
    %5485 = vrot.lane.b32.xlu0 %v5457, 125
    %v5486 = vpop.permute.xlu0 %5485
    %5487 = vrot.lane.b32.xlu0 %v5458, 125
    %v5488 = vpop.permute.xlu0 %5487
    %5489 = vrot.lane.b32.xlu0 %v5459, 125
    %v5490 = vpop.permute.xlu0 %5489
    %5491 = vrot.lane.b32.xlu0 %v5460, 125
    %v5492 = vpop.permute.xlu0 %5491
    %5493 = vrot.lane.b32.xlu0 %v5461, 125
    %v5494 = vpop.permute.xlu0 %5493
    %5495 = vrot.lane.b32.xlu0 %v5462, 125
    %v5496 = vpop.permute.xlu0 %5495
    %5497 = vrot.lane.b32.xlu0 %v5463, 125
    %v5498 = vpop.permute.xlu0 %5497
    %5499 = vrot.lane.b32.xlu0 %v5464, 125
    %v5500 = vpop.permute.xlu0 %5499
    %v5513 = vadd.f32 %v5441, %v5478
    %v5514 = vadd.f32 %v5442, %v5480
    %v5515 = vadd.f32 %v5443, %v5482
    %v5516 = vadd.f32 %v5444, %v5484
    %v5517 = vadd.f32 %v5445, %v5486
    %v5518 = vadd.f32 %v5446, %v5488
    %v5519 = vadd.f32 %v5447, %v5490
    %v5520 = vadd.f32 %v5448, %v5492
    %v5521 = vadd.f32 %v5449, %v5494
    %v5522 = vadd.f32 %v5450, %v5496
    %v5523 = vadd.f32 %v5451, %v5498
    %v5524 = vadd.f32 %v5452, %v5500
    %v5525 = vmul.f32 %v2213, %v4625
    %v5526 = vmul.f32 %v2213, %v4626
    %v5527 = vmul.f32 %v2213, %v4627
    %v5528 = vmul.f32 %v2213, %v4628
    %v5529 = vmul.f32 %v2213, %v4629
    %v5530 = vmul.f32 %v2213, %v4630
    %v5531 = vmul.f32 %v2213, %v4631
    %v5532 = vmul.f32 %v2213, %v4632
    %v5533 = vmul.f32 %v2213, %v4633
    %v5534 = vmul.f32 %v2213, %v4634
    %v5535 = vmul.f32 %v2213, %v4635
    %v5536 = vmul.f32 %v2213, %v4636
    %5549 = vrot.lane.b32.xlu0 %v5525, 124
    %v5550 = vpop.permute.xlu0 %5549
    %5551 = vrot.lane.b32.xlu0 %v5526, 124
    %v5552 = vpop.permute.xlu0 %5551
    %5553 = vrot.lane.b32.xlu0 %v5527, 124
    %v5554 = vpop.permute.xlu0 %5553
    %5555 = vrot.lane.b32.xlu0 %v5528, 124
    %v5556 = vpop.permute.xlu0 %5555
    %5557 = vrot.lane.b32.xlu0 %v5529, 124
    %v5558 = vpop.permute.xlu0 %5557
    %5559 = vrot.lane.b32.xlu0 %v5530, 124
    %v5560 = vpop.permute.xlu0 %5559
    %5561 = vrot.lane.b32.xlu0 %v5531, 124
    %v5562 = vpop.permute.xlu0 %5561
    %5563 = vrot.lane.b32.xlu0 %v5532, 124
    %v5564 = vpop.permute.xlu0 %5563
    %5565 = vrot.lane.b32.xlu0 %v5533, 124
    %v5566 = vpop.permute.xlu0 %5565
    %5567 = vrot.lane.b32.xlu0 %v5534, 124
    %v5568 = vpop.permute.xlu0 %5567
    %5569 = vrot.lane.b32.xlu0 %v5535, 124
    %v5570 = vpop.permute.xlu0 %5569
    %5571 = vrot.lane.b32.xlu0 %v5536, 124
    %v5572 = vpop.permute.xlu0 %5571
    %v5585 = vadd.f32 %v5513, %v5550
    %v5586 = vadd.f32 %v5514, %v5552
    %v5587 = vadd.f32 %v5515, %v5554
    %v5588 = vadd.f32 %v5516, %v5556
    %v5589 = vadd.f32 %v5517, %v5558
    %v5590 = vadd.f32 %v5518, %v5560
    %v5591 = vadd.f32 %v5519, %v5562
    %v5592 = vadd.f32 %v5520, %v5564
    %v5593 = vadd.f32 %v5521, %v5566
    %v5594 = vadd.f32 %v5522, %v5568
    %v5595 = vadd.f32 %v5523, %v5570
    %v5596 = vadd.f32 %v5524, %v5572
    %v5609 = vrot.slane %v5585, 2
    %v5610 = vrot.slane %v5586, 2
    %v5611 = vsel %vm2298, %v5609, %v5610
    %v5612 = vrot.slane %v5587, 2
    %v5613 = vsel %vm2298, %v5610, %v5612
    %v5614 = vrot.slane %v5588, 2
    %v5615 = vsel %vm2298, %v5612, %v5614
    %v5616 = vrot.slane %v5589, 2
    %v5617 = vsel %vm2298, %v5614, %v5616
    %v5618 = vrot.slane %v5590, 2
    %v5619 = vsel %vm2298, %v5616, %v5618
    %v5620 = vrot.slane %v5591, 2
    %v5621 = vsel %vm2298, %v5618, %v5620
    %v5622 = vrot.slane %v5592, 2
    %v5623 = vsel %vm2298, %v5620, %v5622
    %v5624 = vrot.slane %v5593, 2
    %v5625 = vsel %vm2298, %v5622, %v5624
    %v5626 = vrot.slane %v5594, 2
    %v5627 = vsel %vm2298, %v5624, %v5626
    %v5628 = vrot.slane %v5595, 2
    %v5629 = vsel %vm2298, %v5626, %v5628
    %v5630 = vrot.slane %v5596, 2
    %v5631 = vsel %vm2298, %v5628, %v5630
    %v5644 = vadd.f32 %v5285, %v5611
    %v5645 = vadd.f32 %v5286, %v5613
    %v5646 = vadd.f32 %v5287, %v5615
    %v5647 = vadd.f32 %v5288, %v5617
    %v5648 = vadd.f32 %v5289, %v5619
    %v5649 = vadd.f32 %v5290, %v5621
    %v5650 = vadd.f32 %v5291, %v5623
    %v5651 = vadd.f32 %v5292, %v5625
    %v5652 = vadd.f32 %v5293, %v5627
    %v5653 = vadd.f32 %v5294, %v5629
    %v5654 = vadd.f32 %v5295, %v5631
    %v5655 = vadd.f32 %v5296, %v5630
    %v5656 = vmul.f32 %v2346, %v4625
    %v5657 = vmul.f32 %v2346, %v4626
    %v5658 = vmul.f32 %v2346, %v4627
    %v5659 = vmul.f32 %v2346, %v4628
    %v5660 = vmul.f32 %v2346, %v4629
    %v5661 = vmul.f32 %v2346, %v4630
    %v5662 = vmul.f32 %v2346, %v4631
    %v5663 = vmul.f32 %v2346, %v4632
    %v5664 = vmul.f32 %v2346, %v4633
    %v5665 = vmul.f32 %v2346, %v4634
    %v5666 = vmul.f32 %v2346, %v4635
    %v5667 = vmul.f32 %v2346, %v4636
    %v5668 = vmul.f32 %v2346, %v4637
    %v5669 = vmul.f32 %v2360, %v4625
    %v5670 = vmul.f32 %v2360, %v4626
    %v5671 = vmul.f32 %v2360, %v4627
    %v5672 = vmul.f32 %v2360, %v4628
    %v5673 = vmul.f32 %v2360, %v4629
    %v5674 = vmul.f32 %v2360, %v4630
    %v5675 = vmul.f32 %v2360, %v4631
    %v5676 = vmul.f32 %v2360, %v4632
    %v5677 = vmul.f32 %v2360, %v4633
    %v5678 = vmul.f32 %v2360, %v4634
    %v5679 = vmul.f32 %v2360, %v4635
    %v5680 = vmul.f32 %v2360, %v4636
    %v5681 = vmul.f32 %v2360, %v4637
    %5695 = vrot.lane.b32.xlu0 %v5669, 127
    %v5696 = vpop.permute.xlu0 %5695
    %5697 = vrot.lane.b32.xlu0 %v5670, 127
    %v5698 = vpop.permute.xlu0 %5697
    %5699 = vrot.lane.b32.xlu0 %v5671, 127
    %v5700 = vpop.permute.xlu0 %5699
    %5701 = vrot.lane.b32.xlu0 %v5672, 127
    %v5702 = vpop.permute.xlu0 %5701
    %5703 = vrot.lane.b32.xlu0 %v5673, 127
    %v5704 = vpop.permute.xlu0 %5703
    %5705 = vrot.lane.b32.xlu0 %v5674, 127
    %v5706 = vpop.permute.xlu0 %5705
    %5707 = vrot.lane.b32.xlu0 %v5675, 127
    %v5708 = vpop.permute.xlu0 %5707
    %5709 = vrot.lane.b32.xlu0 %v5676, 127
    %v5710 = vpop.permute.xlu0 %5709
    %5711 = vrot.lane.b32.xlu0 %v5677, 127
    %v5712 = vpop.permute.xlu0 %5711
    %5713 = vrot.lane.b32.xlu0 %v5678, 127
    %v5714 = vpop.permute.xlu0 %5713
    %5715 = vrot.lane.b32.xlu0 %v5679, 127
    %v5716 = vpop.permute.xlu0 %5715
    %5717 = vrot.lane.b32.xlu0 %v5680, 127
    %v5718 = vpop.permute.xlu0 %5717
    %5719 = vrot.lane.b32.xlu0 %v5681, 127
    %v5720 = vpop.permute.xlu0 %5719
    %v5734 = vadd.f32 %v5656, %v5696
    %v5735 = vadd.f32 %v5657, %v5698
    %v5736 = vadd.f32 %v5658, %v5700
    %v5737 = vadd.f32 %v5659, %v5702
    %v5738 = vadd.f32 %v5660, %v5704
    %v5739 = vadd.f32 %v5661, %v5706
    %v5740 = vadd.f32 %v5662, %v5708
    %v5741 = vadd.f32 %v5663, %v5710
    %v5742 = vadd.f32 %v5664, %v5712
    %v5743 = vadd.f32 %v5665, %v5714
    %v5744 = vadd.f32 %v5666, %v5716
    %v5745 = vadd.f32 %v5667, %v5718
    %v5746 = vadd.f32 %v5668, %v5720
    %v5747 = vmul.f32 %v2439, %v4625
    %v5748 = vmul.f32 %v2439, %v4626
    %v5749 = vmul.f32 %v2439, %v4627
    %v5750 = vmul.f32 %v2439, %v4628
    %v5751 = vmul.f32 %v2439, %v4629
    %v5752 = vmul.f32 %v2439, %v4630
    %v5753 = vmul.f32 %v2439, %v4631
    %v5754 = vmul.f32 %v2439, %v4632
    %v5755 = vmul.f32 %v2439, %v4633
    %v5756 = vmul.f32 %v2439, %v4634
    %v5757 = vmul.f32 %v2439, %v4635
    %v5758 = vmul.f32 %v2439, %v4636
    %v5759 = vmul.f32 %v2439, %v4637
    %5773 = vrot.lane.b32.xlu0 %v5747, 126
    %v5774 = vpop.permute.xlu0 %5773
    %5775 = vrot.lane.b32.xlu0 %v5748, 126
    %v5776 = vpop.permute.xlu0 %5775
    %5777 = vrot.lane.b32.xlu0 %v5749, 126
    %v5778 = vpop.permute.xlu0 %5777
    %5779 = vrot.lane.b32.xlu0 %v5750, 126
    %v5780 = vpop.permute.xlu0 %5779
    %5781 = vrot.lane.b32.xlu0 %v5751, 126
    %v5782 = vpop.permute.xlu0 %5781
    %5783 = vrot.lane.b32.xlu0 %v5752, 126
    %v5784 = vpop.permute.xlu0 %5783
    %5785 = vrot.lane.b32.xlu0 %v5753, 126
    %v5786 = vpop.permute.xlu0 %5785
    %5787 = vrot.lane.b32.xlu0 %v5754, 126
    %v5788 = vpop.permute.xlu0 %5787
    %5789 = vrot.lane.b32.xlu0 %v5755, 126
    %v5790 = vpop.permute.xlu0 %5789
    %5791 = vrot.lane.b32.xlu0 %v5756, 126
    %v5792 = vpop.permute.xlu0 %5791
    %5793 = vrot.lane.b32.xlu0 %v5757, 126
    %v5794 = vpop.permute.xlu0 %5793
    %5795 = vrot.lane.b32.xlu0 %v5758, 126
    %v5796 = vpop.permute.xlu0 %5795
    %5797 = vrot.lane.b32.xlu0 %v5759, 126
    %v5798 = vpop.permute.xlu0 %5797
    %v5812 = vadd.f32 %v5734, %v5774
    %v5813 = vadd.f32 %v5735, %v5776
    %v5814 = vadd.f32 %v5736, %v5778
    %v5815 = vadd.f32 %v5737, %v5780
    %v5816 = vadd.f32 %v5738, %v5782
    %v5817 = vadd.f32 %v5739, %v5784
    %v5818 = vadd.f32 %v5740, %v5786
    %v5819 = vadd.f32 %v5741, %v5788
    %v5820 = vadd.f32 %v5742, %v5790
    %v5821 = vadd.f32 %v5743, %v5792
    %v5822 = vadd.f32 %v5744, %v5794
    %v5823 = vadd.f32 %v5745, %v5796
    %v5824 = vadd.f32 %v5746, %v5798
    %v5825 = vmul.f32 %v2518, %v4625
    %v5826 = vmul.f32 %v2518, %v4626
    %v5827 = vmul.f32 %v2518, %v4627
    %v5828 = vmul.f32 %v2518, %v4628
    %v5829 = vmul.f32 %v2518, %v4629
    %v5830 = vmul.f32 %v2518, %v4630
    %v5831 = vmul.f32 %v2518, %v4631
    %v5832 = vmul.f32 %v2518, %v4632
    %v5833 = vmul.f32 %v2518, %v4633
    %v5834 = vmul.f32 %v2518, %v4634
    %v5835 = vmul.f32 %v2518, %v4635
    %v5836 = vmul.f32 %v2518, %v4636
    %v5837 = vmul.f32 %v2518, %v4637
    %5851 = vrot.lane.b32.xlu0 %v5825, 125
    %v5852 = vpop.permute.xlu0 %5851
    %5853 = vrot.lane.b32.xlu0 %v5826, 125
    %v5854 = vpop.permute.xlu0 %5853
    %5855 = vrot.lane.b32.xlu0 %v5827, 125
    %v5856 = vpop.permute.xlu0 %5855
    %5857 = vrot.lane.b32.xlu0 %v5828, 125
    %v5858 = vpop.permute.xlu0 %5857
    %5859 = vrot.lane.b32.xlu0 %v5829, 125
    %v5860 = vpop.permute.xlu0 %5859
    %5861 = vrot.lane.b32.xlu0 %v5830, 125
    %v5862 = vpop.permute.xlu0 %5861
    %5863 = vrot.lane.b32.xlu0 %v5831, 125
    %v5864 = vpop.permute.xlu0 %5863
    %5865 = vrot.lane.b32.xlu0 %v5832, 125
    %v5866 = vpop.permute.xlu0 %5865
    %5867 = vrot.lane.b32.xlu0 %v5833, 125
    %v5868 = vpop.permute.xlu0 %5867
    %5869 = vrot.lane.b32.xlu0 %v5834, 125
    %v5870 = vpop.permute.xlu0 %5869
    %5871 = vrot.lane.b32.xlu0 %v5835, 125
    %v5872 = vpop.permute.xlu0 %5871
    %5873 = vrot.lane.b32.xlu0 %v5836, 125
    %v5874 = vpop.permute.xlu0 %5873
    %5875 = vrot.lane.b32.xlu0 %v5837, 125
    %v5876 = vpop.permute.xlu0 %5875
    %v5890 = vadd.f32 %v5812, %v5852
    %v5891 = vadd.f32 %v5813, %v5854
    %v5892 = vadd.f32 %v5814, %v5856
    %v5893 = vadd.f32 %v5815, %v5858
    %v5894 = vadd.f32 %v5816, %v5860
    %v5895 = vadd.f32 %v5817, %v5862
    %v5896 = vadd.f32 %v5818, %v5864
    %v5897 = vadd.f32 %v5819, %v5866
    %v5898 = vadd.f32 %v5820, %v5868
    %v5899 = vadd.f32 %v5821, %v5870
    %v5900 = vadd.f32 %v5822, %v5872
    %v5901 = vadd.f32 %v5823, %v5874
    %v5902 = vadd.f32 %v5824, %v5876
    %v5903 = vmul.f32 %v2597, %v4625
    %v5904 = vmul.f32 %v2597, %v4626
    %v5905 = vmul.f32 %v2597, %v4627
    %v5906 = vmul.f32 %v2597, %v4628
    %v5907 = vmul.f32 %v2597, %v4629
    %v5908 = vmul.f32 %v2597, %v4630
    %v5909 = vmul.f32 %v2597, %v4631
    %v5910 = vmul.f32 %v2597, %v4632
    %v5911 = vmul.f32 %v2597, %v4633
    %v5912 = vmul.f32 %v2597, %v4634
    %v5913 = vmul.f32 %v2597, %v4635
    %v5914 = vmul.f32 %v2597, %v4636
    %v5915 = vmul.f32 %v2597, %v4637
    %5929 = vrot.lane.b32.xlu0 %v5903, 124
    %v5930 = vpop.permute.xlu0 %5929
    %5931 = vrot.lane.b32.xlu0 %v5904, 124
    %v5932 = vpop.permute.xlu0 %5931
    %5933 = vrot.lane.b32.xlu0 %v5905, 124
    %v5934 = vpop.permute.xlu0 %5933
    %5935 = vrot.lane.b32.xlu0 %v5906, 124
    %v5936 = vpop.permute.xlu0 %5935
    %5937 = vrot.lane.b32.xlu0 %v5907, 124
    %v5938 = vpop.permute.xlu0 %5937
    %5939 = vrot.lane.b32.xlu0 %v5908, 124
    %v5940 = vpop.permute.xlu0 %5939
    %5941 = vrot.lane.b32.xlu0 %v5909, 124
    %v5942 = vpop.permute.xlu0 %5941
    %5943 = vrot.lane.b32.xlu0 %v5910, 124
    %v5944 = vpop.permute.xlu0 %5943
    %5945 = vrot.lane.b32.xlu0 %v5911, 124
    %v5946 = vpop.permute.xlu0 %5945
    %5947 = vrot.lane.b32.xlu0 %v5912, 124
    %v5948 = vpop.permute.xlu0 %5947
    %5949 = vrot.lane.b32.xlu0 %v5913, 124
    %v5950 = vpop.permute.xlu0 %5949
    %5951 = vrot.lane.b32.xlu0 %v5914, 124
    %v5952 = vpop.permute.xlu0 %5951
    %5953 = vrot.lane.b32.xlu0 %v5915, 124
    %v5954 = vpop.permute.xlu0 %5953
    %v5968 = vadd.f32 %v5890, %v5930
    %v5969 = vadd.f32 %v5891, %v5932
    %v5970 = vadd.f32 %v5892, %v5934
    %v5971 = vadd.f32 %v5893, %v5936
    %v5972 = vadd.f32 %v5894, %v5938
    %v5973 = vadd.f32 %v5895, %v5940
    %v5974 = vadd.f32 %v5896, %v5942
    %v5975 = vadd.f32 %v5897, %v5944
    %v5976 = vadd.f32 %v5898, %v5946
    %v5977 = vadd.f32 %v5899, %v5948
    %v5978 = vadd.f32 %v5900, %v5950
    %v5979 = vadd.f32 %v5901, %v5952
    %v5980 = vadd.f32 %v5902, %v5954
    %v5994 = vrot.slane %v5968, 3
    %v5995 = vrot.slane %v5969, 3
    %v5996 = vsel %vm2689, %v5994, %v5995
    %v5997 = vrot.slane %v5970, 3
    %v5998 = vsel %vm2689, %v5995, %v5997
    %v5999 = vrot.slane %v5971, 3
    %v6000 = vsel %vm2689, %v5997, %v5999
    %v6001 = vrot.slane %v5972, 3
    %v6002 = vsel %vm2689, %v5999, %v6001
    %v6003 = vrot.slane %v5973, 3
    %v6004 = vsel %vm2689, %v6001, %v6003
    %v6005 = vrot.slane %v5974, 3
    %v6006 = vsel %vm2689, %v6003, %v6005
    %v6007 = vrot.slane %v5975, 3
    %v6008 = vsel %vm2689, %v6005, %v6007
    %v6009 = vrot.slane %v5976, 3
    %v6010 = vsel %vm2689, %v6007, %v6009
    %v6011 = vrot.slane %v5977, 3
    %v6012 = vsel %vm2689, %v6009, %v6011
    %v6013 = vrot.slane %v5978, 3
    %v6014 = vsel %vm2689, %v6011, %v6013
    %v6015 = vrot.slane %v5979, 3
    %v6016 = vsel %vm2689, %v6013, %v6015
    %v6017 = vrot.slane %v5980, 3
    %v6018 = vsel %vm2689, %v6015, %v6017
    %v6031 = vadd.f32 %v5644, %v5996
    %v6032 = vadd.f32 %v5645, %v5998
    %v6033 = vadd.f32 %v5646, %v6000
    %v6034 = vadd.f32 %v5647, %v6002
    %v6035 = vadd.f32 %v5648, %v6004
    %v6036 = vadd.f32 %v5649, %v6006
    %v6037 = vadd.f32 %v5650, %v6008
    %v6038 = vadd.f32 %v5651, %v6010
    %v6039 = vadd.f32 %v5652, %v6012
    %v6040 = vadd.f32 %v5653, %v6014
    %v6041 = vadd.f32 %v5654, %v6016
    %v6042 = vadd.f32 %v5655, %v6018
    %v6043 = vmul.f32 %v2739, %v4625
    %v6044 = vmul.f32 %v2739, %v4626
    %v6045 = vmul.f32 %v2739, %v4627
    %v6046 = vmul.f32 %v2739, %v4628
    %v6047 = vmul.f32 %v2739, %v4629
    %v6048 = vmul.f32 %v2739, %v4630
    %v6049 = vmul.f32 %v2739, %v4631
    %v6050 = vmul.f32 %v2739, %v4632
    %v6051 = vmul.f32 %v2739, %v4633
    %v6052 = vmul.f32 %v2739, %v4634
    %v6053 = vmul.f32 %v2739, %v4635
    %v6054 = vmul.f32 %v2739, %v4636
    %v6055 = vmul.f32 %v2739, %v4637
    %v6056 = vmul.f32 %v2753, %v4625
    %v6057 = vmul.f32 %v2753, %v4626
    %v6058 = vmul.f32 %v2753, %v4627
    %v6059 = vmul.f32 %v2753, %v4628
    %v6060 = vmul.f32 %v2753, %v4629
    %v6061 = vmul.f32 %v2753, %v4630
    %v6062 = vmul.f32 %v2753, %v4631
    %v6063 = vmul.f32 %v2753, %v4632
    %v6064 = vmul.f32 %v2753, %v4633
    %v6065 = vmul.f32 %v2753, %v4634
    %v6066 = vmul.f32 %v2753, %v4635
    %v6067 = vmul.f32 %v2753, %v4636
    %v6068 = vmul.f32 %v2753, %v4637
    %6082 = vrot.lane.b32.xlu0 %v6056, 127
    %v6083 = vpop.permute.xlu0 %6082
    %6084 = vrot.lane.b32.xlu0 %v6057, 127
    %v6085 = vpop.permute.xlu0 %6084
    %6086 = vrot.lane.b32.xlu0 %v6058, 127
    %v6087 = vpop.permute.xlu0 %6086
    %6088 = vrot.lane.b32.xlu0 %v6059, 127
    %v6089 = vpop.permute.xlu0 %6088
    %6090 = vrot.lane.b32.xlu0 %v6060, 127
    %v6091 = vpop.permute.xlu0 %6090
    %6092 = vrot.lane.b32.xlu0 %v6061, 127
    %v6093 = vpop.permute.xlu0 %6092
    %6094 = vrot.lane.b32.xlu0 %v6062, 127
    %v6095 = vpop.permute.xlu0 %6094
    %6096 = vrot.lane.b32.xlu0 %v6063, 127
    %v6097 = vpop.permute.xlu0 %6096
    %6098 = vrot.lane.b32.xlu0 %v6064, 127
    %v6099 = vpop.permute.xlu0 %6098
    %6100 = vrot.lane.b32.xlu0 %v6065, 127
    %v6101 = vpop.permute.xlu0 %6100
    %6102 = vrot.lane.b32.xlu0 %v6066, 127
    %v6103 = vpop.permute.xlu0 %6102
    %6104 = vrot.lane.b32.xlu0 %v6067, 127
    %v6105 = vpop.permute.xlu0 %6104
    %6106 = vrot.lane.b32.xlu0 %v6068, 127
    %v6107 = vpop.permute.xlu0 %6106
    %v6121 = vadd.f32 %v6043, %v6083
    %v6122 = vadd.f32 %v6044, %v6085
    %v6123 = vadd.f32 %v6045, %v6087
    %v6124 = vadd.f32 %v6046, %v6089
    %v6125 = vadd.f32 %v6047, %v6091
    %v6126 = vadd.f32 %v6048, %v6093
    %v6127 = vadd.f32 %v6049, %v6095
    %v6128 = vadd.f32 %v6050, %v6097
    %v6129 = vadd.f32 %v6051, %v6099
    %v6130 = vadd.f32 %v6052, %v6101
    %v6131 = vadd.f32 %v6053, %v6103
    %v6132 = vadd.f32 %v6054, %v6105
    %v6133 = vadd.f32 %v6055, %v6107
    %v6134 = vmul.f32 %v2832, %v4625
    %v6135 = vmul.f32 %v2832, %v4626
    %v6136 = vmul.f32 %v2832, %v4627
    %v6137 = vmul.f32 %v2832, %v4628
    %v6138 = vmul.f32 %v2832, %v4629
    %v6139 = vmul.f32 %v2832, %v4630
    %v6140 = vmul.f32 %v2832, %v4631
    %v6141 = vmul.f32 %v2832, %v4632
    %v6142 = vmul.f32 %v2832, %v4633
    %v6143 = vmul.f32 %v2832, %v4634
    %v6144 = vmul.f32 %v2832, %v4635
    %v6145 = vmul.f32 %v2832, %v4636
    %v6146 = vmul.f32 %v2832, %v4637
    %6160 = vrot.lane.b32.xlu0 %v6134, 126
    %v6161 = vpop.permute.xlu0 %6160
    %6162 = vrot.lane.b32.xlu0 %v6135, 126
    %v6163 = vpop.permute.xlu0 %6162
    %6164 = vrot.lane.b32.xlu0 %v6136, 126
    %v6165 = vpop.permute.xlu0 %6164
    %6166 = vrot.lane.b32.xlu0 %v6137, 126
    %v6167 = vpop.permute.xlu0 %6166
    %6168 = vrot.lane.b32.xlu0 %v6138, 126
    %v6169 = vpop.permute.xlu0 %6168
    %6170 = vrot.lane.b32.xlu0 %v6139, 126
    %v6171 = vpop.permute.xlu0 %6170
    %6172 = vrot.lane.b32.xlu0 %v6140, 126
    %v6173 = vpop.permute.xlu0 %6172
    %6174 = vrot.lane.b32.xlu0 %v6141, 126
    %v6175 = vpop.permute.xlu0 %6174
    %6176 = vrot.lane.b32.xlu0 %v6142, 126
    %v6177 = vpop.permute.xlu0 %6176
    %6178 = vrot.lane.b32.xlu0 %v6143, 126
    %v6179 = vpop.permute.xlu0 %6178
    %6180 = vrot.lane.b32.xlu0 %v6144, 126
    %v6181 = vpop.permute.xlu0 %6180
    %6182 = vrot.lane.b32.xlu0 %v6145, 126
    %v6183 = vpop.permute.xlu0 %6182
    %6184 = vrot.lane.b32.xlu0 %v6146, 126
    %v6185 = vpop.permute.xlu0 %6184
    %v6199 = vadd.f32 %v6121, %v6161
    %v6200 = vadd.f32 %v6122, %v6163
    %v6201 = vadd.f32 %v6123, %v6165
    %v6202 = vadd.f32 %v6124, %v6167
    %v6203 = vadd.f32 %v6125, %v6169
    %v6204 = vadd.f32 %v6126, %v6171
    %v6205 = vadd.f32 %v6127, %v6173
    %v6206 = vadd.f32 %v6128, %v6175
    %v6207 = vadd.f32 %v6129, %v6177
    %v6208 = vadd.f32 %v6130, %v6179
    %v6209 = vadd.f32 %v6131, %v6181
    %v6210 = vadd.f32 %v6132, %v6183
    %v6211 = vadd.f32 %v6133, %v6185
    %v6212 = vmul.f32 %v2911, %v4625
    %v6213 = vmul.f32 %v2911, %v4626
    %v6214 = vmul.f32 %v2911, %v4627
    %v6215 = vmul.f32 %v2911, %v4628
    %v6216 = vmul.f32 %v2911, %v4629
    %v6217 = vmul.f32 %v2911, %v4630
    %v6218 = vmul.f32 %v2911, %v4631
    %v6219 = vmul.f32 %v2911, %v4632
    %v6220 = vmul.f32 %v2911, %v4633
    %v6221 = vmul.f32 %v2911, %v4634
    %v6222 = vmul.f32 %v2911, %v4635
    %v6223 = vmul.f32 %v2911, %v4636
    %v6224 = vmul.f32 %v2911, %v4637
    %6238 = vrot.lane.b32.xlu0 %v6212, 125
    %v6239 = vpop.permute.xlu0 %6238
    %6240 = vrot.lane.b32.xlu0 %v6213, 125
    %v6241 = vpop.permute.xlu0 %6240
    %6242 = vrot.lane.b32.xlu0 %v6214, 125
    %v6243 = vpop.permute.xlu0 %6242
    %6244 = vrot.lane.b32.xlu0 %v6215, 125
    %v6245 = vpop.permute.xlu0 %6244
    %6246 = vrot.lane.b32.xlu0 %v6216, 125
    %v6247 = vpop.permute.xlu0 %6246
    %6248 = vrot.lane.b32.xlu0 %v6217, 125
    %v6249 = vpop.permute.xlu0 %6248
    %6250 = vrot.lane.b32.xlu0 %v6218, 125
    %v6251 = vpop.permute.xlu0 %6250
    %6252 = vrot.lane.b32.xlu0 %v6219, 125
    %v6253 = vpop.permute.xlu0 %6252
    %6254 = vrot.lane.b32.xlu0 %v6220, 125
    %v6255 = vpop.permute.xlu0 %6254
    %6256 = vrot.lane.b32.xlu0 %v6221, 125
    %v6257 = vpop.permute.xlu0 %6256
    %6258 = vrot.lane.b32.xlu0 %v6222, 125
    %v6259 = vpop.permute.xlu0 %6258
    %6260 = vrot.lane.b32.xlu0 %v6223, 125
    %v6261 = vpop.permute.xlu0 %6260
    %6262 = vrot.lane.b32.xlu0 %v6224, 125
    %v6263 = vpop.permute.xlu0 %6262
    %v6277 = vadd.f32 %v6199, %v6239
    %v6278 = vadd.f32 %v6200, %v6241
    %v6279 = vadd.f32 %v6201, %v6243
    %v6280 = vadd.f32 %v6202, %v6245
    %v6281 = vadd.f32 %v6203, %v6247
    %v6282 = vadd.f32 %v6204, %v6249
    %v6283 = vadd.f32 %v6205, %v6251
    %v6284 = vadd.f32 %v6206, %v6253
    %v6285 = vadd.f32 %v6207, %v6255
    %v6286 = vadd.f32 %v6208, %v6257
    %v6287 = vadd.f32 %v6209, %v6259
    %v6288 = vadd.f32 %v6210, %v6261
    %v6289 = vadd.f32 %v6211, %v6263
    %v6290 = vmul.f32 %v2990, %v4625
    %v6291 = vmul.f32 %v2990, %v4626
    %v6292 = vmul.f32 %v2990, %v4627
    %v6293 = vmul.f32 %v2990, %v4628
    %v6294 = vmul.f32 %v2990, %v4629
    %v6295 = vmul.f32 %v2990, %v4630
    %v6296 = vmul.f32 %v2990, %v4631
    %v6297 = vmul.f32 %v2990, %v4632
    %v6298 = vmul.f32 %v2990, %v4633
    %v6299 = vmul.f32 %v2990, %v4634
    %v6300 = vmul.f32 %v2990, %v4635
    %v6301 = vmul.f32 %v2990, %v4636
    %v6302 = vmul.f32 %v2990, %v4637
    %6316 = vrot.lane.b32.xlu0 %v6290, 124
    %v6317 = vpop.permute.xlu0 %6316
    %6318 = vrot.lane.b32.xlu0 %v6291, 124
    %v6319 = vpop.permute.xlu0 %6318
    %6320 = vrot.lane.b32.xlu0 %v6292, 124
    %v6321 = vpop.permute.xlu0 %6320
    %6322 = vrot.lane.b32.xlu0 %v6293, 124
    %v6323 = vpop.permute.xlu0 %6322
    %6324 = vrot.lane.b32.xlu0 %v6294, 124
    %v6325 = vpop.permute.xlu0 %6324
    %6326 = vrot.lane.b32.xlu0 %v6295, 124
    %v6327 = vpop.permute.xlu0 %6326
    %6328 = vrot.lane.b32.xlu0 %v6296, 124
    %v6329 = vpop.permute.xlu0 %6328
    %6330 = vrot.lane.b32.xlu0 %v6297, 124
    %v6331 = vpop.permute.xlu0 %6330
    %6332 = vrot.lane.b32.xlu0 %v6298, 124
    %v6333 = vpop.permute.xlu0 %6332
    %6334 = vrot.lane.b32.xlu0 %v6299, 124
    %v6335 = vpop.permute.xlu0 %6334
    %6336 = vrot.lane.b32.xlu0 %v6300, 124
    %v6337 = vpop.permute.xlu0 %6336
    %6338 = vrot.lane.b32.xlu0 %v6301, 124
    %v6339 = vpop.permute.xlu0 %6338
    %6340 = vrot.lane.b32.xlu0 %v6302, 124
    %v6341 = vpop.permute.xlu0 %6340
    %v6355 = vadd.f32 %v6277, %v6317
    %v6356 = vadd.f32 %v6278, %v6319
    %v6357 = vadd.f32 %v6279, %v6321
    %v6358 = vadd.f32 %v6280, %v6323
    %v6359 = vadd.f32 %v6281, %v6325
    %v6360 = vadd.f32 %v6282, %v6327
    %v6361 = vadd.f32 %v6283, %v6329
    %v6362 = vadd.f32 %v6284, %v6331
    %v6363 = vadd.f32 %v6285, %v6333
    %v6364 = vadd.f32 %v6286, %v6335
    %v6365 = vadd.f32 %v6287, %v6337
    %v6366 = vadd.f32 %v6288, %v6339
    %v6367 = vadd.f32 %v6289, %v6341
    %v6381 = vrot.slane %v6355, 4
    %v6382 = vrot.slane %v6356, 4
    %v6383 = vsel %vm3082, %v6381, %v6382
    %v6384 = vrot.slane %v6357, 4
    %v6385 = vsel %vm3082, %v6382, %v6384
    %v6386 = vrot.slane %v6358, 4
    %v6387 = vsel %vm3082, %v6384, %v6386
    %v6388 = vrot.slane %v6359, 4
    %v6389 = vsel %vm3082, %v6386, %v6388
    %v6390 = vrot.slane %v6360, 4
    %v6391 = vsel %vm3082, %v6388, %v6390
    %v6392 = vrot.slane %v6361, 4
    %v6393 = vsel %vm3082, %v6390, %v6392
    %v6394 = vrot.slane %v6362, 4
    %v6395 = vsel %vm3082, %v6392, %v6394
    %v6396 = vrot.slane %v6363, 4
    %v6397 = vsel %vm3082, %v6394, %v6396
    %v6398 = vrot.slane %v6364, 4
    %v6399 = vsel %vm3082, %v6396, %v6398
    %v6400 = vrot.slane %v6365, 4
    %v6401 = vsel %vm3082, %v6398, %v6400
    %v6402 = vrot.slane %v6366, 4
    %v6403 = vsel %vm3082, %v6400, %v6402
    %v6404 = vrot.slane %v6367, 4
    %v6405 = vsel %vm3082, %v6402, %v6404
    %v6418 = vadd.f32 %v6031, %v6383
    %v6419 = vadd.f32 %v6032, %v6385
    %v6420 = vadd.f32 %v6033, %v6387
    %v6421 = vadd.f32 %v6034, %v6389
    %v6422 = vadd.f32 %v6035, %v6391
    %v6423 = vadd.f32 %v6036, %v6393
    %v6424 = vadd.f32 %v6037, %v6395
    %v6425 = vadd.f32 %v6038, %v6397
    %v6426 = vadd.f32 %v6039, %v6399
    %v6427 = vadd.f32 %v6040, %v6401
    %v6428 = vadd.f32 %v6041, %v6403
    %v6429 = vadd.f32 %v6042, %v6405
    %v6430 = vadd.f32 %v6418, %v3132
    %v6431 = vadd.f32 %v6419, %v3132
    %v6432 = vadd.f32 %v6420, %v3132
    %v6433 = vadd.f32 %v6421, %v3132
    %v6434 = vadd.f32 %v6422, %v3132
    %v6435 = vadd.f32 %v6423, %v3132
    %v6436 = vadd.f32 %v6424, %v3132
    %v6437 = vadd.f32 %v6425, %v3132
    %v6438 = vadd.f32 %v6426, %v3132
    %v6439 = vadd.f32 %v6427, %v3132
    %v6440 = vadd.f32 %v6428, %v3132
    %v6441 = vadd.f32 %v6429, %v3132
    %v6443 = vsel %vm2298, %v6441, 0
    %6445 = vmatprep.subr.mxu0 0.0
    %6446 = vmatpush1.msra.mxu0 %v6430
    %6447 = vmatprep.subr.mxu0 0.0
    %6448 = vmatpush1.msra.mxu0 %v6431
    %6449 = vmatprep.subr.mxu0 0.0
    %6450 = vmatpush1.msra.mxu0 %v6432
    %6451 = vmatprep.subr.mxu0 0.0
    %6452 = vmatpush1.msra.mxu0 %v6433
    %6453 = vmatprep.subr.mxu0 0.0
    %6454 = vmatpush1.msra.mxu0 %v6434
    %6455 = vmatprep.subr.mxu0 0.0
    %6456 = vmatpush1.msra.mxu0 %v6435
    %6457 = vmatprep.subr.mxu0 0.0
    %6458 = vmatpush1.msra.mxu0 %v6436
    %6459 = vmatprep.subr.mxu0 0.0
    %6460 = vmatpush1.msra.mxu0 %v6437
    %6461 = vmatprep.subr.mxu0 0.0
    %6462 = vmatpush1.msra.mxu0 %v6438
    %6463 = vmatprep.subr.mxu0 0.0
    %6464 = vmatpush1.msra.mxu0 %v6439
    %6465 = vmatprep.subr.mxu0 0.0
    %6466 = vmatpush1.msra.mxu0 %v6440
    %6467 = vmatprep.subr.mxu0 0.0
    %6468 = vmatpush1.msra.mxu0 %v6443
    %6469 = vmatprep.subr.mxu0 0.0
    %6470 = vmatpush1.msra.mxu0 0.0
    %6471 = vmatprep.subr.mxu0 0.0
    %6472 = vmatpush1.msra.mxu0 0.0
    %6473 = vmatprep.subr.mxu0 0.0
    %6474 = vmatpush1.msra.mxu0 0.0
    %6475 = vmatprep.subr.mxu0 0.0
    %6476 = vmatpush1.msra.mxu0 0.0
    %6477 = vmatprep.subr.mxu0 0.0
    %6478 = vmatpush1.msra.mxu0 0.0
    %6479 = vmatprep.subr.mxu0 0.0
    %6480 = vmatpush1.msra.mxu0 0.0
    %6481 = vmatprep.subr.mxu0 0.0
    %6482 = vmatpush1.msra.mxu0 0.0
    %6483 = vmatprep.subr.mxu0 0.0
    %6484 = vmatpush1.msra.mxu0 0.0
    %6485 = vmatprep.subr.mxu0 0.0
    %6486 = vmatpush1.msra.mxu0 0.0
    %6487 = vmatprep.subr.mxu0 0.0
    %6488 = vmatpush1.msra.mxu0 0.0
    %6489 = vmatprep.subr.mxu0 0.0
    %6490 = vmatpush1.msra.mxu0 0.0
    %6491 = vmatprep.subr.mxu0 0.0
    %6492 = vmatpush1.msra.mxu0 0.0
    %6493 = vmatprep.subr.mxu0 0.0
    %6494 = vmatpush1.msra.mxu0 0.0
    %6495 = vmatprep.subr.mxu0 0.0
    %6496 = vmatpush1.msra.mxu0 0.0
    %6497 = vmatprep.subr.mxu0 0.0
    %6498 = vmatpush1.msra.mxu0 0.0
    %6499 = vmatprep.subr.mxu0 0.0
    %6500 = vmatpush1.msra.mxu0 0.0
    %6501 = vmatprep.subr.mxu0 0.0
    %6502 = vmatpush1.msra.mxu0 0.0
    %6503 = vmatprep.subr.mxu0 0.0
    %6504 = vmatpush1.msra.mxu0 0.0
    %6505 = vmatprep.subr.mxu0 0.0
    %6506 = vmatpush1.msra.mxu0 0.0
    %6507 = vmatprep.subr.mxu0 0.0
    %6508 = vmatpush1.msra.mxu0 0.0
    %6509 = vmatprep.mubr.f32.mxu0 0.0
    %6510 = vmatmul.mubr.f32.gmra.mrb[0].mxu0 %v3147
    %v6511 = vpop.f32.mrb[0].mxu0
    %v6512 = vadd.f32 0.0, %v6511
    %v6513 = vpop.f32.mrb[0].mxu0
    %6514 = vmatprep.mubr.f32.mxu0 0.0
    %6515 = vmatmul.mubr.f32.gmra.mrb[0].mxu0 %v3150
    %v6516 = vpop.f32.mrb[0].mxu0
    %v6517 = vadd.f32 0.0, %v6516
    %v6518 = vpop.f32.mrb[0].mxu0
    %6519 = vmatprep.mubr.f32.mxu0 0.0
    %6520 = vmatmul.mubr.f32.gmra.mrb[0].mxu0 %v3153
    %v6521 = vpop.f32.mrb[0].mxu0
    %v6522 = vadd.f32 0.0, %v6521
    %v6523 = vpop.f32.mrb[0].mxu0
    %6524 = vmatprep.mubr.f32.mxu0 0.0
    %6525 = vmatmul.mubr.f32.gmra.mrb[0].mxu0 %v3156
    %v6526 = vpop.f32.mrb[0].mxu0
    %v6527 = vadd.f32 0.0, %v6526
    %v6528 = vpop.f32.mrb[0].mxu0
    %6529 = vmatprep.mubr.f32.mxu0 0.0
    %6530 = vmatmul.mubr.f32.gmra.mrb[0].mxu0 %v3159
    %v6531 = vpop.f32.mrb[0].mxu0
    %v6532 = vadd.f32 0.0, %v6531
    %v6533 = vpop.f32.mrb[0].mxu0
    %6534 = vmatprep.mubr.f32.mxu0 0.0
    %6535 = vmatmul.mubr.f32.gmra.mrb[0].mxu0 %v3162
    %v6536 = vpop.f32.mrb[0].mxu0
    %v6537 = vadd.f32 0.0, %v6536
    %v6538 = vpop.f32.mrb[0].mxu0
    %6539 = vdwg.mxu0
    %6540 = vmatprep.subr.mxu0 0.0
    %6541 = vmatpush1.msra.mxu0 %v6430
    %6542 = vmatprep.subr.mxu0 0.0
    %6543 = vmatpush1.msra.mxu0 %v6431
    %6544 = vmatprep.subr.mxu0 0.0
    %6545 = vmatpush1.msra.mxu0 %v6432
    %6546 = vmatprep.subr.mxu0 0.0
    %6547 = vmatpush1.msra.mxu0 %v6433
    %6548 = vmatprep.subr.mxu0 0.0
    %6549 = vmatpush1.msra.mxu0 %v6434
    %6550 = vmatprep.subr.mxu0 0.0
    %6551 = vmatpush1.msra.mxu0 %v6435
    %6552 = vmatprep.subr.mxu0 0.0
    %6553 = vmatpush1.msra.mxu0 %v6436
    %6554 = vmatprep.subr.mxu0 0.0
    %6555 = vmatpush1.msra.mxu0 %v6437
    %6556 = vmatprep.subr.mxu0 0.0
    %6557 = vmatpush1.msra.mxu0 %v6438
    %6558 = vmatprep.subr.mxu0 0.0
    %6559 = vmatpush1.msra.mxu0 %v6439
    %6560 = vmatprep.subr.mxu0 0.0
    %6561 = vmatpush1.msra.mxu0 %v6440
    %6562 = vmatprep.subr.mxu0 0.0
    %6563 = vmatpush1.msra.mxu0 %v6443
    %6564 = vmatprep.subr.mxu0 0.0
    %6565 = vmatpush1.msra.mxu0 0.0
    %6566 = vmatprep.subr.mxu0 0.0
    %6567 = vmatpush1.msra.mxu0 0.0
    %6568 = vmatprep.subr.mxu0 0.0
    %6569 = vmatpush1.msra.mxu0 0.0
    %6570 = vmatprep.subr.mxu0 0.0
    %6571 = vmatpush1.msra.mxu0 0.0
    %6572 = vmatprep.subr.mxu0 0.0
    %6573 = vmatpush1.msra.mxu0 0.0
    %6574 = vmatprep.subr.mxu0 0.0
    %6575 = vmatpush1.msra.mxu0 0.0
    %6576 = vmatprep.subr.mxu0 0.0
    %6577 = vmatpush1.msra.mxu0 0.0
    %6578 = vmatprep.subr.mxu0 0.0
    %6579 = vmatpush1.msra.mxu0 0.0
    %6580 = vmatprep.subr.mxu0 0.0
    %6581 = vmatpush1.msra.mxu0 0.0
    %6582 = vmatprep.subr.mxu0 0.0
    %6583 = vmatpush1.msra.mxu0 0.0
    %6584 = vmatprep.subr.mxu0 0.0
    %6585 = vmatpush1.msra.mxu0 0.0
    %6586 = vmatprep.subr.mxu0 0.0
    %6587 = vmatpush1.msra.mxu0 0.0
    %6588 = vmatprep.subr.mxu0 0.0
    %6589 = vmatpush1.msra.mxu0 0.0
    %6590 = vmatprep.subr.mxu0 0.0
    %6591 = vmatpush1.msra.mxu0 0.0
    %6592 = vmatprep.subr.mxu0 0.0
    %6593 = vmatpush1.msra.mxu0 0.0
    %6594 = vmatprep.subr.mxu0 0.0
    %6595 = vmatpush1.msra.mxu0 0.0
    %6596 = vmatprep.subr.mxu0 0.0
    %6597 = vmatpush1.msra.mxu0 0.0
    %6598 = vmatprep.subr.mxu0 0.0
    %6599 = vmatpush1.msra.mxu0 0.0
    %6600 = vmatprep.subr.mxu0 0.0
    %6601 = vmatpush1.msra.mxu0 0.0
    %6602 = vmatprep.subr.mxu0 0.0
    %6603 = vmatpush1.msra.mxu0 0.0
    %6604 = vmatprep.mubr.f32.mxu0 0.0
    %6605 = vmatmul.mubr.f32.gmra.mrb[0].mxu0 %v3263
    %v6606 = vpop.f32.mrb[0].mxu0
    %v6607 = vadd.f32 0.0, %v6606
    %v6608 = vpop.f32.mrb[0].mxu0
    %6609 = vmatprep.mubr.f32.mxu0 0.0
    %6610 = vmatmul.mubr.f32.gmra.mrb[0].mxu0 %v3266
    %v6611 = vpop.f32.mrb[0].mxu0
    %v6612 = vadd.f32 0.0, %v6611
    %v6613 = vpop.f32.mrb[0].mxu0
    %6614 = vmatprep.mubr.f32.mxu0 0.0
    %6615 = vmatmul.mubr.f32.gmra.mrb[0].mxu0 %v3269
    %v6616 = vpop.f32.mrb[0].mxu0
    %v6617 = vadd.f32 0.0, %v6616
    %v6618 = vpop.f32.mrb[0].mxu0
    %6619 = vmatprep.mubr.f32.mxu0 0.0
    %6620 = vmatmul.mubr.f32.gmra.mrb[0].mxu0 %v3272
    %v6621 = vpop.f32.mrb[0].mxu0
    %v6622 = vadd.f32 0.0, %v6621
    %v6623 = vpop.f32.mrb[0].mxu0
    %6624 = vmatprep.mubr.f32.mxu0 0.0
    %6625 = vmatmul.mubr.f32.gmra.mrb[0].mxu0 %v3275
    %v6626 = vpop.f32.mrb[0].mxu0
    %v6627 = vadd.f32 0.0, %v6626
    %v6628 = vpop.f32.mrb[0].mxu0
    %6629 = vmatprep.mubr.f32.mxu0 0.0
    %6630 = vmatmul.mubr.f32.gmra.mrb[0].mxu0 %v3278
    %v6631 = vpop.f32.mrb[0].mxu0
    %v6632 = vadd.f32 0.0, %v6631
    %v6633 = vpop.f32.mrb[0].mxu0
    %6634 = vdwg.mxu0
    %v6635 = vmax.f32 %v6512, %v6607
    %v6636 = vmax.f32 %v6517, %v6612
    %v6637 = vmax.f32 %v6522, %v6617
    %v6638 = vmax.f32 %v6527, %v6622
    %v6639 = vmax.f32 %v6532, %v6627
    %v6640 = vmax.f32 %v6537, %v6632
    %v6642 = vsel %vm3145, %v6635, 0
    %v6645 = vsel %vm3145, %v6636, 0
    %v6648 = vsel %vm3145, %v6637, 0
    %v6651 = vsel %vm3145, %v6638, 0
    %v6654 = vsel %vm3145, %v6639, 0
    %v6657 = vsel %vm3145, %v6640, 0
    %6659 = vmatprep.subr.mxu0 0.0
    %6660 = vmatpush1.msra.mxu0 %v483
    %6661 = vmatprep.subr.mxu0 0.0
    %6662 = vmatpush1.msra.mxu0 %v484
    %6663 = vmatprep.subr.mxu0 0.0
    %6664 = vmatpush1.msra.mxu0 %v485
    %6665 = vmatprep.subr.mxu0 0.0
    %6666 = vmatpush1.msra.mxu0 %v486
    %6667 = vmatprep.subr.mxu0 0.0
    %6668 = vmatpush1.msra.mxu0 %v487
    %6669 = vmatprep.subr.mxu0 0.0
    %6670 = vmatpush1.msra.mxu0 %v488
    %6671 = vmatprep.subr.mxu0 0.0
    %6672 = vmatpush1.msra.mxu0 %v489
    %6673 = vmatprep.subr.mxu0 0.0
    %6674 = vmatpush1.msra.mxu0 %v490
    %6675 = vmatprep.subr.mxu0 0.0
    %6676 = vmatpush1.msra.mxu0 %v491
    %6677 = vmatprep.subr.mxu0 0.0
    %6678 = vmatpush1.msra.mxu0 %v492
    %6679 = vmatprep.subr.mxu0 0.0
    %6680 = vmatpush1.msra.mxu0 %v493
    %6681 = vmatprep.subr.mxu0 0.0
    %6682 = vmatpush1.msra.mxu0 %v3400
    %6683 = vmatprep.subr.mxu0 0.0
    %6684 = vmatpush1.msra.mxu0 0.0
    %6685 = vmatprep.subr.mxu0 0.0
    %6686 = vmatpush1.msra.mxu0 0.0
    %6687 = vmatprep.subr.mxu0 0.0
    %6688 = vmatpush1.msra.mxu0 0.0
    %6689 = vmatprep.subr.mxu0 0.0
    %6690 = vmatpush1.msra.mxu0 0.0
    %6691 = vmatprep.subr.mxu0 0.0
    %6692 = vmatpush1.msra.mxu0 0.0
    %6693 = vmatprep.subr.mxu0 0.0
    %6694 = vmatpush1.msra.mxu0 0.0
    %6695 = vmatprep.subr.mxu0 0.0
    %6696 = vmatpush1.msra.mxu0 0.0
    %6697 = vmatprep.subr.mxu0 0.0
    %6698 = vmatpush1.msra.mxu0 0.0
    %6699 = vmatprep.subr.mxu0 0.0
    %6700 = vmatpush1.msra.mxu0 0.0
    %6701 = vmatprep.subr.mxu0 0.0
    %6702 = vmatpush1.msra.mxu0 0.0
    %6703 = vmatprep.subr.mxu0 0.0
    %6704 = vmatpush1.msra.mxu0 0.0
    %6705 = vmatprep.subr.mxu0 0.0
    %6706 = vmatpush1.msra.mxu0 0.0
    %6707 = vmatprep.subr.mxu0 0.0
    %6708 = vmatpush1.msra.mxu0 0.0
    %6709 = vmatprep.subr.mxu0 0.0
    %6710 = vmatpush1.msra.mxu0 0.0
    %6711 = vmatprep.subr.mxu0 0.0
    %6712 = vmatpush1.msra.mxu0 0.0
    %6713 = vmatprep.subr.mxu0 0.0
    %6714 = vmatpush1.msra.mxu0 0.0
    %6715 = vmatprep.subr.mxu0 0.0
    %6716 = vmatpush1.msra.mxu0 0.0
    %6717 = vmatprep.subr.mxu0 0.0
    %6718 = vmatpush1.msra.mxu0 0.0
    %6719 = vmatprep.subr.mxu0 0.0
    %6720 = vmatpush1.msra.mxu0 0.0
    %6721 = vmatprep.subr.mxu0 0.0
    %6722 = vmatpush1.msra.mxu0 0.0
    %6723 = vmatprep.mubr.f32.mxu0 0.0
    %6724 = vmatmul.mubr.f32.gmra.mrb[0].mxu0 %v6642
    %v6725 = vpop.f32.mrb[0].mxu0
    %v6726 = vadd.f32 0.0, %v6725
    %v6727 = vpop.f32.mrb[0].mxu0
    %6728 = vmatprep.mubr.f32.mxu0 0.0
    %6729 = vmatmul.mubr.f32.gmra.mrb[0].mxu0 %v6645
    %v6730 = vpop.f32.mrb[0].mxu0
    %v6731 = vadd.f32 0.0, %v6730
    %v6732 = vpop.f32.mrb[0].mxu0
    %6733 = vmatprep.mubr.f32.mxu0 0.0
    %6734 = vmatmul.mubr.f32.gmra.mrb[0].mxu0 %v6648
    %v6735 = vpop.f32.mrb[0].mxu0
    %v6736 = vadd.f32 0.0, %v6735
    %v6737 = vpop.f32.mrb[0].mxu0
    %6738 = vmatprep.mubr.f32.mxu0 0.0
    %6739 = vmatmul.mubr.f32.gmra.mrb[0].mxu0 %v6651
    %v6740 = vpop.f32.mrb[0].mxu0
    %v6741 = vadd.f32 0.0, %v6740
    %v6742 = vpop.f32.mrb[0].mxu0
    %6743 = vmatprep.mubr.f32.mxu0 0.0
    %6744 = vmatmul.mubr.f32.gmra.mrb[0].mxu0 %v6654
    %v6745 = vpop.f32.mrb[0].mxu0
    %v6746 = vadd.f32 0.0, %v6745
    %v6747 = vpop.f32.mrb[0].mxu0
    %6748 = vmatprep.mubr.f32.mxu0 0.0
    %6749 = vmatmul.mubr.f32.gmra.mrb[0].mxu0 %v6657
    %v6750 = vpop.f32.mrb[0].mxu0
    %v6751 = vadd.f32 0.0, %v6750
    %v6752 = vpop.f32.mrb[0].mxu0
    %6753 = vdwg.mxu0
    %6754 = vmatprep.subr.mxu0 0.0
    %6755 = vmatpush1.msra.mxu0 %v520
    %6756 = vmatprep.subr.mxu0 0.0
    %6757 = vmatpush1.msra.mxu0 %v521
    %6758 = vmatprep.subr.mxu0 0.0
    %6759 = vmatpush1.msra.mxu0 %v522
    %6760 = vmatprep.subr.mxu0 0.0
    %6761 = vmatpush1.msra.mxu0 %v523
    %6762 = vmatprep.subr.mxu0 0.0
    %6763 = vmatpush1.msra.mxu0 %v524
    %6764 = vmatprep.subr.mxu0 0.0
    %6765 = vmatpush1.msra.mxu0 %v525
    %6766 = vmatprep.subr.mxu0 0.0
    %6767 = vmatpush1.msra.mxu0 %v526
    %6768 = vmatprep.subr.mxu0 0.0
    %6769 = vmatpush1.msra.mxu0 %v527
    %6770 = vmatprep.subr.mxu0 0.0
    %6771 = vmatpush1.msra.mxu0 %v528
    %6772 = vmatprep.subr.mxu0 0.0
    %6773 = vmatpush1.msra.mxu0 %v529
    %6774 = vmatprep.subr.mxu0 0.0
    %6775 = vmatpush1.msra.mxu0 %v530
    %6776 = vmatprep.subr.mxu0 0.0
    %6777 = vmatpush1.msra.mxu0 %v3498
    %6778 = vmatprep.subr.mxu0 0.0
    %6779 = vmatpush1.msra.mxu0 0.0
    %6780 = vmatprep.subr.mxu0 0.0
    %6781 = vmatpush1.msra.mxu0 0.0
    %6782 = vmatprep.subr.mxu0 0.0
    %6783 = vmatpush1.msra.mxu0 0.0
    %6784 = vmatprep.subr.mxu0 0.0
    %6785 = vmatpush1.msra.mxu0 0.0
    %6786 = vmatprep.subr.mxu0 0.0
    %6787 = vmatpush1.msra.mxu0 0.0
    %6788 = vmatprep.subr.mxu0 0.0
    %6789 = vmatpush1.msra.mxu0 0.0
    %6790 = vmatprep.subr.mxu0 0.0
    %6791 = vmatpush1.msra.mxu0 0.0
    %6792 = vmatprep.subr.mxu0 0.0
    %6793 = vmatpush1.msra.mxu0 0.0
    %6794 = vmatprep.subr.mxu0 0.0
    %6795 = vmatpush1.msra.mxu0 0.0
    %6796 = vmatprep.subr.mxu0 0.0
    %6797 = vmatpush1.msra.mxu0 0.0
    %6798 = vmatprep.subr.mxu0 0.0
    %6799 = vmatpush1.msra.mxu0 0.0
    %6800 = vmatprep.subr.mxu0 0.0
    %6801 = vmatpush1.msra.mxu0 0.0
    %6802 = vmatprep.subr.mxu0 0.0
    %6803 = vmatpush1.msra.mxu0 0.0
    %6804 = vmatprep.subr.mxu0 0.0
    %6805 = vmatpush1.msra.mxu0 0.0
    %6806 = vmatprep.subr.mxu0 0.0
    %6807 = vmatpush1.msra.mxu0 0.0
    %6808 = vmatprep.subr.mxu0 0.0
    %6809 = vmatpush1.msra.mxu0 0.0
    %6810 = vmatprep.subr.mxu0 0.0
    %6811 = vmatpush1.msra.mxu0 0.0
    %6812 = vmatprep.subr.mxu0 0.0
    %6813 = vmatpush1.msra.mxu0 0.0
    %6814 = vmatprep.subr.mxu0 0.0
    %6815 = vmatpush1.msra.mxu0 0.0
    %6816 = vmatprep.subr.mxu0 0.0
    %6817 = vmatpush1.msra.mxu0 0.0
    %6818 = vmatprep.mubr.f32.mxu0 0.0
    %6819 = vmatmul.mubr.f32.gmra.mrb[0].mxu0 %v6642
    %v6820 = vpop.f32.mrb[0].mxu0
    %v6821 = vadd.f32 0.0, %v6820
    %v6822 = vpop.f32.mrb[0].mxu0
    %6823 = vmatprep.mubr.f32.mxu0 0.0
    %6824 = vmatmul.mubr.f32.gmra.mrb[0].mxu0 %v6645
    %v6825 = vpop.f32.mrb[0].mxu0
    %v6826 = vadd.f32 0.0, %v6825
    %v6827 = vpop.f32.mrb[0].mxu0
    %6828 = vmatprep.mubr.f32.mxu0 0.0
    %6829 = vmatmul.mubr.f32.gmra.mrb[0].mxu0 %v6648
    %v6830 = vpop.f32.mrb[0].mxu0
    %v6831 = vadd.f32 0.0, %v6830
    %v6832 = vpop.f32.mrb[0].mxu0
    %6833 = vmatprep.mubr.f32.mxu0 0.0
    %6834 = vmatmul.mubr.f32.gmra.mrb[0].mxu0 %v6651
    %v6835 = vpop.f32.mrb[0].mxu0
    %v6836 = vadd.f32 0.0, %v6835
    %v6837 = vpop.f32.mrb[0].mxu0
    %6838 = vmatprep.mubr.f32.mxu0 0.0
    %6839 = vmatmul.mubr.f32.gmra.mrb[0].mxu0 %v6654
    %v6840 = vpop.f32.mrb[0].mxu0
    %v6841 = vadd.f32 0.0, %v6840
    %v6842 = vpop.f32.mrb[0].mxu0
    %6843 = vmatprep.mubr.f32.mxu0 0.0
    %6844 = vmatmul.mubr.f32.gmra.mrb[0].mxu0 %v6657
    %v6845 = vpop.f32.mrb[0].mxu0
    %v6846 = vadd.f32 0.0, %v6845
    %v6847 = vpop.f32.mrb[0].mxu0
    %6848 = vdwg.mxu0
    %v6849 = vmax.f32 %v6726, %v6821
    %v6850 = vmax.f32 %v6731, %v6826
    %v6851 = vmax.f32 %v6736, %v6831
    %v6852 = vmax.f32 %v6741, %v6836
    %v6853 = vmax.f32 %v6746, %v6841
    %v6854 = vmax.f32 %v6751, %v6846
    %v6856 = vsel %vm1933, %v6854, 0
    %6858 = vmatprep.subr.mxu0 0.0
    %6859 = vmatpush1.msra.mxu0 %v6849
    %6860 = vmatprep.subr.mxu0 0.0
    %6861 = vmatpush1.msra.mxu0 %v6850
    %6862 = vmatprep.subr.mxu0 0.0
    %6863 = vmatpush1.msra.mxu0 %v6851
    %6864 = vmatprep.subr.mxu0 0.0
    %6865 = vmatpush1.msra.mxu0 %v6852
    %6866 = vmatprep.subr.mxu0 0.0
    %6867 = vmatpush1.msra.mxu0 %v6853
    %6868 = vmatprep.subr.mxu0 0.0
    %6869 = vmatpush1.msra.mxu0 %v6856
    %6870 = vmatprep.subr.mxu0 0.0
    %6871 = vmatpush1.msra.mxu0 0.0
    %6872 = vmatprep.subr.mxu0 0.0
    %6873 = vmatpush1.msra.mxu0 0.0
    %6874 = vmatprep.subr.mxu0 0.0
    %6875 = vmatpush1.msra.mxu0 0.0
    %6876 = vmatprep.subr.mxu0 0.0
    %6877 = vmatpush1.msra.mxu0 0.0
    %6878 = vmatprep.subr.mxu0 0.0
    %6879 = vmatpush1.msra.mxu0 0.0
    %6880 = vmatprep.subr.mxu0 0.0
    %6881 = vmatpush1.msra.mxu0 0.0
    %6882 = vmatprep.subr.mxu0 0.0
    %6883 = vmatpush1.msra.mxu0 0.0
    %6884 = vmatprep.subr.mxu0 0.0
    %6885 = vmatpush1.msra.mxu0 0.0
    %6886 = vmatprep.subr.mxu0 0.0
    %6887 = vmatpush1.msra.mxu0 0.0
    %6888 = vmatprep.subr.mxu0 0.0
    %6889 = vmatpush1.msra.mxu0 0.0
    %6890 = vmatprep.subr.mxu0 0.0
    %6891 = vmatpush1.msra.mxu0 0.0
    %6892 = vmatprep.subr.mxu0 0.0
    %6893 = vmatpush1.msra.mxu0 0.0
    %6894 = vmatprep.subr.mxu0 0.0
    %6895 = vmatpush1.msra.mxu0 0.0
    %6896 = vmatprep.subr.mxu0 0.0
    %6897 = vmatpush1.msra.mxu0 0.0
    %6898 = vmatprep.subr.mxu0 0.0
    %6899 = vmatpush1.msra.mxu0 0.0
    %6900 = vmatprep.subr.mxu0 0.0
    %6901 = vmatpush1.msra.mxu0 0.0
    %6902 = vmatprep.subr.mxu0 0.0
    %6903 = vmatpush1.msra.mxu0 0.0
    %6904 = vmatprep.subr.mxu0 0.0
    %6905 = vmatpush1.msra.mxu0 0.0
    %6906 = vmatprep.subr.mxu0 0.0
    %6907 = vmatpush1.msra.mxu0 0.0
    %6908 = vmatprep.subr.mxu0 0.0
    %6909 = vmatpush1.msra.mxu0 0.0
    %6910 = vmatprep.subr.mxu0 0.0
    %6911 = vmatpush1.msra.mxu0 0.0
    %6912 = vmatprep.subr.mxu0 0.0
    %6913 = vmatpush1.msra.mxu0 0.0
    %6914 = vmatprep.subr.mxu0 0.0
    %6915 = vmatpush1.msra.mxu0 0.0
    %6916 = vmatprep.subr.mxu0 0.0
    %6917 = vmatpush1.msra.mxu0 0.0
    %6918 = vmatprep.subr.mxu0 0.0
    %6919 = vmatpush1.msra.mxu0 0.0
    %6920 = vmatprep.subr.mxu0 0.0
    %6921 = vmatpush1.msra.mxu0 0.0
    %6922 = vmatprep.mubr.f32.mxu0 0.0
    %6923 = vmatmul.mubr.f32.gmra.mrb[0].mxu0 %v3602
    %v6924 = vpop.f32.mrb[0].mxu0
    %v6925 = vadd.f32 0.0, %v6924
    %v6926 = vpop.f32.mrb[0].mxu0
    %6927 = vmatprep.mubr.f32.mxu0 0.0
    %6928 = vmatmul.mubr.f32.gmra.mrb[0].mxu0 %v3604
    %v6929 = vpop.f32.mrb[0].mxu0
    %v6930 = vadd.f32 0.0, %v6929
    %v6931 = vpop.f32.mrb[0].mxu0
    %6932 = vmatprep.mubr.f32.mxu0 0.0
    %6933 = vmatmul.mubr.f32.gmra.mrb[0].mxu0 %v3606
    %v6934 = vpop.f32.mrb[0].mxu0
    %v6935 = vadd.f32 0.0, %v6934
    %v6936 = vpop.f32.mrb[0].mxu0
    %6937 = vdwg.mxu0
    %6938 = vmatprep.subr.mxu0 0.0
    %6939 = vmatpush1.msra.mxu0 %v6849
    %6940 = vmatprep.subr.mxu0 0.0
    %6941 = vmatpush1.msra.mxu0 %v6850
    %6942 = vmatprep.subr.mxu0 0.0
    %6943 = vmatpush1.msra.mxu0 %v6851
    %6944 = vmatprep.subr.mxu0 0.0
    %6945 = vmatpush1.msra.mxu0 %v6852
    %6946 = vmatprep.subr.mxu0 0.0
    %6947 = vmatpush1.msra.mxu0 %v6853
    %6948 = vmatprep.subr.mxu0 0.0
    %6949 = vmatpush1.msra.mxu0 %v6856
    %6950 = vmatprep.subr.mxu0 0.0
    %6951 = vmatpush1.msra.mxu0 0.0
    %6952 = vmatprep.subr.mxu0 0.0
    %6953 = vmatpush1.msra.mxu0 0.0
    %6954 = vmatprep.subr.mxu0 0.0
    %6955 = vmatpush1.msra.mxu0 0.0
    %6956 = vmatprep.subr.mxu0 0.0
    %6957 = vmatpush1.msra.mxu0 0.0
    %6958 = vmatprep.subr.mxu0 0.0
    %6959 = vmatpush1.msra.mxu0 0.0
    %6960 = vmatprep.subr.mxu0 0.0
    %6961 = vmatpush1.msra.mxu0 0.0
    %6962 = vmatprep.subr.mxu0 0.0
    %6963 = vmatpush1.msra.mxu0 0.0
    %6964 = vmatprep.subr.mxu0 0.0
    %6965 = vmatpush1.msra.mxu0 0.0
    %6966 = vmatprep.subr.mxu0 0.0
    %6967 = vmatpush1.msra.mxu0 0.0
    %6968 = vmatprep.subr.mxu0 0.0
    %6969 = vmatpush1.msra.mxu0 0.0
    %6970 = vmatprep.subr.mxu0 0.0
    %6971 = vmatpush1.msra.mxu0 0.0
    %6972 = vmatprep.subr.mxu0 0.0
    %6973 = vmatpush1.msra.mxu0 0.0
    %6974 = vmatprep.subr.mxu0 0.0
    %6975 = vmatpush1.msra.mxu0 0.0
    %6976 = vmatprep.subr.mxu0 0.0
    %6977 = vmatpush1.msra.mxu0 0.0
    %6978 = vmatprep.subr.mxu0 0.0
    %6979 = vmatpush1.msra.mxu0 0.0
    %6980 = vmatprep.subr.mxu0 0.0
    %6981 = vmatpush1.msra.mxu0 0.0
    %6982 = vmatprep.subr.mxu0 0.0
    %6983 = vmatpush1.msra.mxu0 0.0
    %6984 = vmatprep.subr.mxu0 0.0
    %6985 = vmatpush1.msra.mxu0 0.0
    %6986 = vmatprep.subr.mxu0 0.0
    %6987 = vmatpush1.msra.mxu0 0.0
    %6988 = vmatprep.subr.mxu0 0.0
    %6989 = vmatpush1.msra.mxu0 0.0
    %6990 = vmatprep.subr.mxu0 0.0
    %6991 = vmatpush1.msra.mxu0 0.0
    %6992 = vmatprep.subr.mxu0 0.0
    %6993 = vmatpush1.msra.mxu0 0.0
    %6994 = vmatprep.subr.mxu0 0.0
    %6995 = vmatpush1.msra.mxu0 0.0
    %6996 = vmatprep.subr.mxu0 0.0
    %6997 = vmatpush1.msra.mxu0 0.0
    %6998 = vmatprep.subr.mxu0 0.0
    %6999 = vmatpush1.msra.mxu0 0.0
    %7000 = vmatprep.subr.mxu0 0.0
    %7001 = vmatpush1.msra.mxu0 0.0
    %7002 = vmatprep.mubr.f32.mxu0 0.0
    %7003 = vmatmul.mubr.f32.gmra.mrb[0].mxu0 %v3691
    %v7004 = vpop.f32.mrb[0].mxu0
    %v7005 = vadd.f32 0.0, %v7004
    %v7006 = vpop.f32.mrb[0].mxu0
    %7007 = vmatprep.mubr.f32.mxu0 0.0
    %7008 = vmatmul.mubr.f32.gmra.mrb[0].mxu0 %v3693
    %v7009 = vpop.f32.mrb[0].mxu0
    %v7010 = vadd.f32 0.0, %v7009
    %v7011 = vpop.f32.mrb[0].mxu0
    %7012 = vmatprep.mubr.f32.mxu0 0.0
    %7013 = vmatmul.mubr.f32.gmra.mrb[0].mxu0 %v3695
    %v7014 = vpop.f32.mrb[0].mxu0
    %v7015 = vadd.f32 0.0, %v7014
    %v7016 = vpop.f32.mrb[0].mxu0
    %7017 = vdwg.mxu0
    %v7018 = vmax.f32 %v6925, %v7005
    %v7019 = vmax.f32 %v6930, %v7010
    %v7020 = vmax.f32 %v6935, %v7015
    %v7022 = vsel %vm3601, %v7018, 0
    %v7025 = vsel %vm3601, %v7019, 0
    %v7028 = vsel %vm3601, %v7020, 0
    %7030 = vmatprep.subr.mxu0 0.0
    %7031 = vmatpush1.msra.mxu0 %v483
    %7032 = vmatprep.subr.mxu0 0.0
    %7033 = vmatpush1.msra.mxu0 %v484
    %7034 = vmatprep.subr.mxu0 0.0
    %7035 = vmatpush1.msra.mxu0 %v485
    %7036 = vmatprep.subr.mxu0 0.0
    %7037 = vmatpush1.msra.mxu0 %v486
    %7038 = vmatprep.subr.mxu0 0.0
    %7039 = vmatpush1.msra.mxu0 %v487
    %7040 = vmatprep.subr.mxu0 0.0
    %7041 = vmatpush1.msra.mxu0 %v3790
    %7042 = vmatprep.subr.mxu0 0.0
    %7043 = vmatpush1.msra.mxu0 0.0
    %7044 = vmatprep.subr.mxu0 0.0
    %7045 = vmatpush1.msra.mxu0 0.0
    %7046 = vmatprep.subr.mxu0 0.0
    %7047 = vmatpush1.msra.mxu0 0.0
    %7048 = vmatprep.subr.mxu0 0.0
    %7049 = vmatpush1.msra.mxu0 0.0
    %7050 = vmatprep.subr.mxu0 0.0
    %7051 = vmatpush1.msra.mxu0 0.0
    %7052 = vmatprep.subr.mxu0 0.0
    %7053 = vmatpush1.msra.mxu0 0.0
    %7054 = vmatprep.subr.mxu0 0.0
    %7055 = vmatpush1.msra.mxu0 0.0
    %7056 = vmatprep.subr.mxu0 0.0
    %7057 = vmatpush1.msra.mxu0 0.0
    %7058 = vmatprep.subr.mxu0 0.0
    %7059 = vmatpush1.msra.mxu0 0.0
    %7060 = vmatprep.subr.mxu0 0.0
    %7061 = vmatpush1.msra.mxu0 0.0
    %7062 = vmatprep.subr.mxu0 0.0
    %7063 = vmatpush1.msra.mxu0 0.0
    %7064 = vmatprep.subr.mxu0 0.0
    %7065 = vmatpush1.msra.mxu0 0.0
    %7066 = vmatprep.subr.mxu0 0.0
    %7067 = vmatpush1.msra.mxu0 0.0
    %7068 = vmatprep.subr.mxu0 0.0
    %7069 = vmatpush1.msra.mxu0 0.0
    %7070 = vmatprep.subr.mxu0 0.0
    %7071 = vmatpush1.msra.mxu0 0.0
    %7072 = vmatprep.subr.mxu0 0.0
    %7073 = vmatpush1.msra.mxu0 0.0
    %7074 = vmatprep.subr.mxu0 0.0
    %7075 = vmatpush1.msra.mxu0 0.0
    %7076 = vmatprep.subr.mxu0 0.0
    %7077 = vmatpush1.msra.mxu0 0.0
    %7078 = vmatprep.subr.mxu0 0.0
    %7079 = vmatpush1.msra.mxu0 0.0
    %7080 = vmatprep.subr.mxu0 0.0
    %7081 = vmatpush1.msra.mxu0 0.0
    %7082 = vmatprep.subr.mxu0 0.0
    %7083 = vmatpush1.msra.mxu0 0.0
    %7084 = vmatprep.subr.mxu0 0.0
    %7085 = vmatpush1.msra.mxu0 0.0
    %7086 = vmatprep.subr.mxu0 0.0
    %7087 = vmatpush1.msra.mxu0 0.0
    %7088 = vmatprep.subr.mxu0 0.0
    %7089 = vmatpush1.msra.mxu0 0.0
    %7090 = vmatprep.subr.mxu0 0.0
    %7091 = vmatpush1.msra.mxu0 0.0
    %7092 = vmatprep.subr.mxu0 0.0
    %7093 = vmatpush1.msra.mxu0 0.0
    %7094 = vmatprep.mubr.f32.mxu0 0.0
    %7095 = vmatmul.mubr.f32.gmra.mrb[0].mxu0 %v7022
    %v7096 = vpop.f32.mrb[0].mxu0
    %v7097 = vadd.f32 0.0, %v7096
    %v7098 = vpop.f32.mrb[0].mxu0
    %7099 = vmatprep.mubr.f32.mxu0 0.0
    %7100 = vmatmul.mubr.f32.gmra.mrb[0].mxu0 %v7025
    %v7101 = vpop.f32.mrb[0].mxu0
    %v7102 = vadd.f32 0.0, %v7101
    %v7103 = vpop.f32.mrb[0].mxu0
    %7104 = vmatprep.mubr.f32.mxu0 0.0
    %7105 = vmatmul.mubr.f32.gmra.mrb[0].mxu0 %v7028
    %v7106 = vpop.f32.mrb[0].mxu0
    %v7107 = vadd.f32 0.0, %v7106
    %v7108 = vpop.f32.mrb[0].mxu0
    %7109 = vdwg.mxu0
    %7110 = vmatprep.subr.mxu0 0.0
    %7111 = vmatpush1.msra.mxu0 %v520
    %7112 = vmatprep.subr.mxu0 0.0
    %7113 = vmatpush1.msra.mxu0 %v521
    %7114 = vmatprep.subr.mxu0 0.0
    %7115 = vmatpush1.msra.mxu0 %v522
    %7116 = vmatprep.subr.mxu0 0.0
    %7117 = vmatpush1.msra.mxu0 %v523
    %7118 = vmatprep.subr.mxu0 0.0
    %7119 = vmatpush1.msra.mxu0 %v524
    %7120 = vmatprep.subr.mxu0 0.0
    %7121 = vmatpush1.msra.mxu0 %v3873
    %7122 = vmatprep.subr.mxu0 0.0
    %7123 = vmatpush1.msra.mxu0 0.0
    %7124 = vmatprep.subr.mxu0 0.0
    %7125 = vmatpush1.msra.mxu0 0.0
    %7126 = vmatprep.subr.mxu0 0.0
    %7127 = vmatpush1.msra.mxu0 0.0
    %7128 = vmatprep.subr.mxu0 0.0
    %7129 = vmatpush1.msra.mxu0 0.0
    %7130 = vmatprep.subr.mxu0 0.0
    %7131 = vmatpush1.msra.mxu0 0.0
    %7132 = vmatprep.subr.mxu0 0.0
    %7133 = vmatpush1.msra.mxu0 0.0
    %7134 = vmatprep.subr.mxu0 0.0
    %7135 = vmatpush1.msra.mxu0 0.0
    %7136 = vmatprep.subr.mxu0 0.0
    %7137 = vmatpush1.msra.mxu0 0.0
    %7138 = vmatprep.subr.mxu0 0.0
    %7139 = vmatpush1.msra.mxu0 0.0
    %7140 = vmatprep.subr.mxu0 0.0
    %7141 = vmatpush1.msra.mxu0 0.0
    %7142 = vmatprep.subr.mxu0 0.0
    %7143 = vmatpush1.msra.mxu0 0.0
    %7144 = vmatprep.subr.mxu0 0.0
    %7145 = vmatpush1.msra.mxu0 0.0
    %7146 = vmatprep.subr.mxu0 0.0
    %7147 = vmatpush1.msra.mxu0 0.0
    %7148 = vmatprep.subr.mxu0 0.0
    %7149 = vmatpush1.msra.mxu0 0.0
    %7150 = vmatprep.subr.mxu0 0.0
    %7151 = vmatpush1.msra.mxu0 0.0
    %7152 = vmatprep.subr.mxu0 0.0
    %7153 = vmatpush1.msra.mxu0 0.0
    %7154 = vmatprep.subr.mxu0 0.0
    %7155 = vmatpush1.msra.mxu0 0.0
    %7156 = vmatprep.subr.mxu0 0.0
    %7157 = vmatpush1.msra.mxu0 0.0
    %7158 = vmatprep.subr.mxu0 0.0
    %7159 = vmatpush1.msra.mxu0 0.0
    %7160 = vmatprep.subr.mxu0 0.0
    %7161 = vmatpush1.msra.mxu0 0.0
    %7162 = vmatprep.subr.mxu0 0.0
    %7163 = vmatpush1.msra.mxu0 0.0
    %7164 = vmatprep.subr.mxu0 0.0
    %7165 = vmatpush1.msra.mxu0 0.0
    %7166 = vmatprep.subr.mxu0 0.0
    %7167 = vmatpush1.msra.mxu0 0.0
    %7168 = vmatprep.subr.mxu0 0.0
    %7169 = vmatpush1.msra.mxu0 0.0
    %7170 = vmatprep.subr.mxu0 0.0
    %7171 = vmatpush1.msra.mxu0 0.0
    %7172 = vmatprep.subr.mxu0 0.0
    %7173 = vmatpush1.msra.mxu0 0.0
    %7174 = vmatprep.mubr.f32.mxu0 0.0
    %7175 = vmatmul.mubr.f32.gmra.mrb[0].mxu0 %v7022
    %v7176 = vpop.f32.mrb[0].mxu0
    %v7177 = vadd.f32 0.0, %v7176
    %v7178 = vpop.f32.mrb[0].mxu0
    %7179 = vmatprep.mubr.f32.mxu0 0.0
    %7180 = vmatmul.mubr.f32.gmra.mrb[0].mxu0 %v7025
    %v7181 = vpop.f32.mrb[0].mxu0
    %v7182 = vadd.f32 0.0, %v7181
    %v7183 = vpop.f32.mrb[0].mxu0
    %7184 = vmatprep.mubr.f32.mxu0 0.0
    %7185 = vmatmul.mubr.f32.gmra.mrb[0].mxu0 %v7028
    %v7186 = vpop.f32.mrb[0].mxu0
    %v7187 = vadd.f32 0.0, %v7186
    %v7188 = vpop.f32.mrb[0].mxu0
    %7189 = vdwg.mxu0
    %v7190 = vmax.f32 %v7097, %v7177
    %v7191 = vmax.f32 %v7102, %v7182
    %v7192 = vmax.f32 %v7107, %v7187
    %s7193 = scalar_lea.vmem %s3, 24
    %7194 = vst.msk [vmem:[%s7193] sm:$0xff] %vm3958, %v7190
    %7195 = vst.msk [vmem:[%s7193 + $0x8] sm:$0xff] %vm3958, %v7191
    %7196 = vst.msk [vmem:[%s7193 + $0x10] sm:$0x7f] %vm3961, %v7192
    // Predicated region
    $region22: #{net3_forward.2} parent=1 // pred_check
      _
    $region23: #{net3_forward.2} parent=1 // pred_check_branch
      %7198 = sbr.rel (0) target = $region25
    $region24: #{net3_forward.2} parent=1 // pred_region
      _
    $region25: #{net3_forward.2} parent=1 // pred_fallthru
      _
    // Predicated region
    $region26: #{net3_forward.2} parent=1 // pred_check
      _
    $region27: #{net3_forward.2} parent=1 // pred_check_branch
      %7200 = sbr.rel (0) target = $region29
    $region28: #{net3_forward.2} parent=1 // pred_region
      _
    $region29: #{net3_forward.2} parent=1 // pred_fallthru
      _
    %7201 = vsyncpa [#allocation4], 1
    %7202 = vsyncpa [#allocation5], 1

</llo_original>
